<compile_context>
chip_gen: v6e
topology: v6e:2x2x1
jax: 0.10.0
libtpu: 0.0.40
codegen_flags: <defaults>
</compile_context>

<pallas_src>
import math

import numpy as np
import jax
import jax.numpy as jnp
from jax.experimental import pallas as pl
from jax.experimental.pallas import tpu as pltpu


# -----------------------------------------------------------------------------
# Global kernel configuration
# -----------------------------------------------------------------------------
MXU_DTYPE = jnp.bfloat16            # matmul-input dtype; accumulation stays f32
VMEM_LIMIT_BYTES = 32 * 1024 * 1024  # safe scoped-VMEM budget on v5e/v6e/v7x
BH_TILE = 16                        # batch*heads processed per attention grid step


def _pick_tm():
    """Token-tile size for the linears: 512 on v5e/v6e (128 MiB VMEM), 256 otherwise
    (v7x has only 64 MiB physical / 32 MiB scoped)."""
    try:
        kind = jax.devices()[0].device_kind.lower()
    except Exception:  # pragma: no cover
        return 256
    if "v5" in kind or "v6" in kind:
        return 512
    return 256


TM_DEFAULT = _pick_tm()


# -----------------------------------------------------------------------------
# In-kernel math helpers (f32)
# -----------------------------------------------------------------------------
_SQRT1_2 = 1.0 / math.sqrt(2.0)


def _erf_f32(x):
    # Abramowitz & Stegun 7.1.26 polynomial (max abs err ~1.5e-7): exact-GELU
    # parity at f32 using only exp/mul/add, so it is guaranteed to lower on Mosaic.
    # TODO(synk): switch to lax.erf once its Mosaic lowering is guaranteed.
    a1, a2, a3, a4, a5 = (0.254829592, -0.284496736, 1.421413741,
                          -1.453152027, 1.061405429)
    p = 0.3275911
    z = jnp.abs(x)
    t = 1.0 / (1.0 + p * z)
    poly = ((((a5 * t + a4) * t + a3) * t + a2) * t + a1) * t
    y = 1.0 - poly * jnp.exp(-z * z)
    return jnp.where(x < 0.0, -y, y)


def _gelu_exact(x):
    return x * 0.5 * (1.0 + _erf_f32(x * _SQRT1_2))


def _matmul_bias_act(x_f32, w_ref, b_ref, activation):
    y = jnp.dot(x_f32.astype(MXU_DTYPE), w_ref[...].astype(MXU_DTYPE),
                preferred_element_type=jnp.float32)
    y = y + b_ref[...].astype(jnp.float32)
    if activation == "tanh":
        y = jnp.tanh(y)
    elif activation == "gelu":
        y = _gelu_exact(y)
    return y


# -----------------------------------------------------------------------------
# Pallas kernels
# -----------------------------------------------------------------------------
def _make_linear_kernel(activation):
    def kernel(x_ref, w_ref, b_ref, o_ref):
        x = x_ref[...].astype(jnp.float32)
        o_ref[...] = _matmul_bias_act(x, w_ref, b_ref, activation).astype(o_ref.dtype)
    return kernel


def _make_ln_linear_kernel(activation, eps=1e-5):
    # Fused LayerNorm (f32 stats) + matmul + bias (+ optional activation).
    def kernel(x_ref, g_ref, beta_ref, w_ref, b_ref, o_ref):
        x = x_ref[...].astype(jnp.float32)
        mu = jnp.mean(x, axis=-1, keepdims=True)
        xc = x - mu
        var = jnp.mean(xc * xc, axis=-1, keepdims=True)
        xn = xc * jax.lax.rsqrt(var + eps)
        xn = xn * g_ref[...].astype(jnp.float32) + beta_ref[...].astype(jnp.float32)
        o_ref[...] = _matmul_bias_act(xn, w_ref, b_ref, activation).astype(o_ref.dtype)
    return kernel


def pallas_linear(x, lin_p, activation="none", ln_p=None, tm=None):
    """(optional fused LayerNorm) -> x @ w + b -> optional activation.

    Tiled over the flattened token dimension M; weights are re-used across the
    grid so only the (TM, K)/(TM, N) activation tiles stream through VMEM.
    """
    if tm is None:
        tm = TM_DEFAULT
    orig_shape = x.shape
    K = orig_shape[-1]
    M = int(np.prod(orig_shape[:-1]))
    x2 = x.reshape(M, K)
    w = lin_p["w"]
    N = w.shape[1]
    b2 = lin_p["b"].reshape(1, N)

    TM = min(tm, M)
    if TM < M:
        TM = max(8, (TM // 8) * 8)        # second-minor block dim must be 8-aligned
    grid = (pl.cdiv(M, TM),)

    x_spec = pl.BlockSpec((TM, K), lambda i: (i, 0))
    w_spec = pl.BlockSpec((K, N), lambda i: (0, 0))
    b_spec = pl.BlockSpec((1, N), lambda i: (0, 0))
    out_spec = pl.BlockSpec((TM, N), lambda i: (i, 0))
    cparams = pltpu.CompilerParams(
        dimension_semantics=("parallel",),
        vmem_limit_bytes=VMEM_LIMIT_BYTES,
    )

    if ln_p is None:
        kernel = _make_linear_kernel(activation)
        in_specs = [x_spec, w_spec, b_spec]
        args = (x2, w, b2)
    else:
        kernel = _make_ln_linear_kernel(activation)
        g2 = ln_p["g"].reshape(1, K)
        be2 = ln_p["b"].reshape(1, K)
        ln_spec = pl.BlockSpec((1, K), lambda i: (0, 0))
        in_specs = [x_spec, ln_spec, ln_spec, w_spec, b_spec]
        args = (x2, g2, be2, w, b2)

    out = pl.pallas_call(
        kernel,
        out_shape=jax.ShapeDtypeStruct((M, N), jnp.float32),
        grid=grid,
        in_specs=in_specs,
        out_specs=out_spec,
        compiler_params=cparams,
    )(*args)
    return out.reshape(orig_shape[:-1] + (N,))


def _make_attn_kernel(scale):
    def kernel(q_ref, k_ref, v_ref, o_ref):
        # scale folded into q (one small mul instead of a full-score mul)
        q = q_ref[...].astype(jnp.float32) * scale
        k = k_ref[...]
        v = v_ref[...]
        # batched QK^T without materializing k.T (contract last dims directly)
        s = jax.lax.dot_general(
            q.astype(MXU_DTYPE), k.astype(MXU_DTYPE),
            dimension_numbers=(((2,), (2,)), ((0,), (0,))),
            preferred_element_type=jnp.float32)
        m = jnp.max(s, axis=-1, keepdims=True)
        p = jnp.exp(s - m)
        l = jnp.sum(p, axis=-1, keepdims=True)
        o = jax.lax.dot_general(
            p.astype(MXU_DTYPE), v.astype(MXU_DTYPE),
            dimension_numbers=(((2,), (1,)), ((0,), (0,))),
            preferred_element_type=jnp.float32)
        o_ref[...] = (o * pl.reciprocal(l, approx=True)).astype(o_ref.dtype)
    return kernel


def pallas_attention(q, k, v, scale, bh_tile=BH_TILE):
    """q, k, v: (Bh, N, hd). Grid tiles the batch*heads axis (BH_TILE per step)."""
    Bh, N, hd = q.shape
    T = min(bh_tile, Bh)
    grid = (pl.cdiv(Bh, T),)
    spec = pl.BlockSpec((T, N, hd), lambda b: (b, 0, 0))
    return pl.pallas_call(
        _make_attn_kernel(scale),
        out_shape=jax.ShapeDtypeStruct((Bh, N, hd), jnp.float32),
        grid=grid,
        in_specs=[spec, spec, spec],
        out_specs=spec,
        compiler_params=pltpu.CompilerParams(
            dimension_semantics=("parallel",),
            vmem_limit_bytes=VMEM_LIMIT_BYTES,
        ),
    )(q, k, v)


def _ts_mix_kernel(xs_ref, xt_ref, ws_ref, wt_ref, b_ref, o_ref):
    # Fused: alpha = softmax([x_st, x_ts] @ W + b); out = x_st*a0 + x_ts*a1.
    # The narrow (TM, 2) logits never leave VMEM; the only HBM output is the
    # lane-dense (TM, C) mixed tensor.
    xs = xs_ref[...].astype(jnp.float32)
    xt = xt_ref[...].astype(jnp.float32)
    s = (jnp.dot(xs.astype(MXU_DTYPE), ws_ref[...].astype(MXU_DTYPE),
                 preferred_element_type=jnp.float32)
         + jnp.dot(xt.astype(MXU_DTYPE), wt_ref[...].astype(MXU_DTYPE),
                   preferred_element_type=jnp.float32)
         + b_ref[...].astype(jnp.float32))                    # (TM, 2)
    s0 = s[:, 0:1]
    s1 = s[:, 1:2]
    m = jnp.maximum(s0, s1)
    e0 = jnp.exp(s0 - m)
    e1 = jnp.exp(s1 - m)
    inv = 1.0 / (e0 + e1)
    o_ref[...] = (xs * (e0 * inv) + xt * (e1 * inv)).astype(o_ref.dtype)


def pallas_ts_fuse(x_st, x_ts, p, tm=None):
    if tm is None:
        tm = TM_DEFAULT
    orig_shape = x_st.shape
    C = orig_shape[-1]
    M = int(np.prod(orig_shape[:-1]))
    xs2 = x_st.reshape(M, C)
    xt2 = x_ts.reshape(M, C)
    w = p["w"]                       # (2C, 2), concat order [x_st, x_ts]
    ws = w[:C, :]
    wt = w[C:, :]
    b2 = p["b"].reshape(1, 2)

    TM = min(tm, M)
    if TM < M:
        TM = max(8, (TM // 8) * 8)
    grid = (pl.cdiv(M, TM),)

    out = pl.pallas_call(
        _ts_mix_kernel,
        out_shape=jax.ShapeDtypeStruct((M, C), jnp.float32),
        grid=grid,
        in_specs=[
            pl.BlockSpec((TM, C), lambda i: (i, 0)),
            pl.BlockSpec((TM, C), lambda i: (i, 0)),
            pl.BlockSpec((C, 2), lambda i: (0, 0)),
            pl.BlockSpec((C, 2), lambda i: (0, 0)),
            pl.BlockSpec((1, 2), lambda i: (0, 0)),
        ],
        out_specs=pl.BlockSpec((TM, C), lambda i: (i, 0)),
        compiler_params=pltpu.CompilerParams(
            dimension_semantics=("parallel",),
            vmem_limit_bytes=VMEM_LIMIT_BYTES,
        ),
    )(xs2, xt2, ws, wt, b2)
    return out.reshape(orig_shape)


# -----------------------------------------------------------------------------
# Model components (glue around Pallas kernels)
# -----------------------------------------------------------------------------
def mlp_forward(p, ln_p, x):
    # LN + fc1 + GELU fused in one kernel; fc2 in a second kernel.
    h = pallas_linear(x, p["fc1"], activation="gelu", ln_p=ln_p)
    return pallas_linear(h, p["fc2"])


def attention_forward(p, ln_p, x, num_heads, mode, seqlen):
    B, N, C = x.shape
    hd = C // num_heads
    scale = hd ** (-0.5)
    qkv = pallas_linear(x, p["qkv"], ln_p=ln_p)          # fused LN + qkv: (B, N, 3C)
    # TODO(synk): emit q/k/v directly in head-major layout from the fused qkv
    # kernel's out_specs so the XLA transposes below disappear entirely.
    qkv = qkv.reshape(B, N, 3, num_heads, hd).transpose(2, 0, 3, 1, 4)
    q, k, v = qkv[0], qkv[1], qkv[2]                     # (B, H, N, hd)
    if mode == "spatial":
        qb = q.reshape(B * num_heads, N, hd)
        kb = k.reshape(B * num_heads, N, hd)
        vb = v.reshape(B * num_heads, N, hd)
        o = pallas_attention(qb, kb, vb, scale)          # (B*H, N, hd)
        o = o.reshape(B, num_heads, N, hd).transpose(0, 2, 1, 3).reshape(B, N, C)
    elif mode == "temporal":
        B_ = B // seqlen

        def to_temporal(t):
            return (t.reshape(B_, seqlen, num_heads, N, hd)
                     .transpose(0, 2, 3, 1, 4)
                     .reshape(B_ * num_heads * N, seqlen, hd))

        o = pallas_attention(to_temporal(q), to_temporal(k), to_temporal(v), scale)
        o = (o.reshape(B_, num_heads, N, seqlen, hd)
              .transpose(0, 3, 2, 1, 4)
              .reshape(B, N, C))
    else:
        raise NotImplementedError(mode)
    return pallas_linear(o, p["proj"])


def block_forward(p, x, seqlen, st_mode, num_heads):
    if st_mode == "stage_st":
        x = x + attention_forward(p["attn_s"], p["norm1_s"], x, num_heads, "spatial", seqlen)
        x = x + mlp_forward(p["mlp_s"], p["norm2_s"], x)
        x = x + attention_forward(p["attn_t"], p["norm1_t"], x, num_heads, "temporal", seqlen)
        x = x + mlp_forward(p["mlp_t"], p["norm2_t"], x)
    elif st_mode == "stage_ts":
        x = x + attention_forward(p["attn_t"], p["norm1_t"], x, num_heads, "temporal", seqlen)
        x = x + mlp_forward(p["mlp_t"], p["norm2_t"], x)
        x = x + attention_forward(p["attn_s"], p["norm1_s"], x, num_heads, "spatial", seqlen)
        x = x + mlp_forward(p["mlp_s"], p["norm2_s"], x)
    else:
        raise NotImplementedError(st_mode)
    return x


def dstformer_forward(params, x, cfg):
    # x: (B, F, J, C_in). Dropout / droppath rates are 0 (eval) -> identities.
    num_heads = cfg["num_heads"]
    depth = cfg["depth"]
    B, F_, J, _ = x.shape

    # joints_embed (K = dim_in = 3) is lane-sparse -> plain XLA per perf review.
    x = jnp.einsum("bfjc,cd->bfjd", x, params["joints_embed"]["w"]) \
        + params["joints_embed"]["b"]
    C = x.shape[-1]
    x = x + params["pos_embed"].reshape(1, 1, J, C)
    x = x + params["temp_embed"][:, :F_, :, :]
    x = x.reshape(B * F_, J, C)

    for idx in range(depth):
        x_st = block_forward(params["blocks_st"][idx], x, F_, "stage_st", num_heads)
        x_ts = block_forward(params["blocks_ts"][idx], x, F_, "stage_ts", num_heads)
        # fused ts_attn: concat -> linear(2) -> softmax -> weighted mix
        x = pallas_ts_fuse(x_st, x_ts, params["ts_attn"][idx])

    # final LayerNorm fused into the tanh pre_logits projection
    x = pallas_linear(x, params["pre_logits"], activation="tanh", ln_p=params["norm"])
    x = x.reshape(B, F_, J, -1)
    # head (N = dim_out = 3) is lane-sparse -> plain XLA per perf review.
    x = jnp.einsum("bfjd,de->bfje", x, params["head"]["w"]) + params["head"]["b"]
    return x


# -----------------------------------------------------------------------------
# Deterministic parameter init (trunc-normal weights, zero bias, as in __init__)
# -----------------------------------------------------------------------------
class KeyGen:
    def __init__(self, key):
        self.key = key

    def __call__(self):
        self.key, sub = jax.random.split(self.key)
        return sub


def linear_params(kg, in_dim, out_dim):
    w = jax.random.truncated_normal(kg(), -2.0, 2.0, (in_dim, out_dim), jnp.float32) * 0.02
    return {"w": w, "b": jnp.zeros((out_dim,), jnp.float32)}


def ln_params(dim):
    return {"g": jnp.ones((dim,), jnp.float32), "b": jnp.zeros((dim,), jnp.float32)}


def attn_params(kg, dim):
    return {"qkv": linear_params(kg, dim, 3 * dim), "proj": linear_params(kg, dim, dim)}


def mlp_params(kg, dim, hidden):
    return {"fc1": linear_params(kg, dim, hidden), "fc2": linear_params(kg, hidden, dim)}


def block_params(kg, dim, mlp_ratio):
    hidden = int(dim * mlp_ratio)
    return {
        "norm1_s": ln_params(dim), "norm1_t": ln_params(dim),
        "attn_s": attn_params(kg, dim), "attn_t": attn_params(kg, dim),
        "norm2_s": ln_params(dim), "norm2_t": ln_params(dim),
        "mlp_s": mlp_params(kg, dim, hidden), "mlp_t": mlp_params(kg, dim, hidden),
    }


def init_dstformer(key, cfg):
    kg = KeyGen(key)
    dim = cfg["dim_feat"]
    params = {
        "joints_embed": linear_params(kg, cfg["dim_in"], dim),
        "pos_embed": jax.random.truncated_normal(
            kg(), -2.0, 2.0, (1, cfg["num_joints"], dim), jnp.float32) * 0.02,
        "temp_embed": jax.random.truncated_normal(
            kg(), -2.0, 2.0, (1, cfg["maxlen"], 1, dim), jnp.float32) * 0.02,
        "blocks_st": [block_params(kg, dim, cfg["mlp_ratio"]) for _ in range(cfg["depth"])],
        "blocks_ts": [block_params(kg, dim, cfg["mlp_ratio"]) for _ in range(cfg["depth"])],
        "norm": ln_params(dim),
        "pre_logits": linear_params(kg, dim, cfg["dim_rep"]),
        "head": linear_params(kg, cfg["dim_rep"], cfg["dim_out"]),
        # ts_attn fuse heads: weight=0, bias=0.5 (as in the PyTorch __init__)
        "ts_attn": [
            {"w": jnp.zeros((2 * dim, 2), jnp.float32),
             "b": jnp.full((2,), 0.5, jnp.float32)}
            for _ in range(cfg["depth"])
        ],
    }
    return params


# -----------------------------------------------------------------------------
# Main
# -----------------------------------------------------------------------------
if __name__ == "__main__":
    cfg = dict(dim_in=3, dim_out=3, dim_feat=32, dim_rep=64, depth=2,
               num_heads=4, mlp_ratio=4, num_joints=8, maxlen=16)

    key = jax.random.PRNGKey(0)
    pkey, xkey = jax.random.split(key)
    params = init_dstformer(pkey, cfg)

    B, F_, J, Cin = 2, 4, cfg["num_joints"], cfg["dim_in"]
    x = jax.random.normal(xkey, (B, F_, J, Cin), jnp.float32)

    fwd = jax.jit(lambda p, xx: dstformer_forward(p, xx, cfg))
    out = fwd(params, x)
    out = jax.block_until_ready(out)

    assert out.shape == (B, F_, J, cfg["dim_out"]), out.shape
    assert bool(jnp.all(jnp.isfinite(out)))
    print("KERNEL_OK")
</pallas_src>

<mosaic_0001>
module attributes {stable_mosaic.version = 11 : i64} {
  func.func @kernel(%arg0: i32, %arg1: memref<64x32xf32, #tpu.memory_space<vmem>>, %arg2: memref<1x32xf32, #tpu.memory_space<vmem>>, %arg3: memref<1x32xf32, #tpu.memory_space<vmem>>, %arg4: memref<32x96xf32, #tpu.memory_space<vmem>>, %arg5: memref<1x96xf32, #tpu.memory_space<vmem>>, %arg6: memref<64x96xf32, #tpu.memory_space<vmem>>) attributes {dimension_semantics = [#tpu.dimension_semantics<parallel>], iteration_bounds = array<i64: 1>, scalar_prefetch = 0 : i64, scratch_operands = 0 : i64, tpu.core_type = #tpu.core_type<tc>, window_params = [{transform_indices = @transform_0, window_bounds = array<i64: 64, 32>}, {pipeline_mode = #tpu.pipeline_mode<synchronous>, transform_indices = @transform_1, window_bounds = array<i64: 1, 32>}, {pipeline_mode = #tpu.pipeline_mode<synchronous>, transform_indices = @transform_2, window_bounds = array<i64: 1, 32>}, {pipeline_mode = #tpu.pipeline_mode<synchronous>, transform_indices = @transform_3, window_bounds = array<i64: 32, 96>}, {pipeline_mode = #tpu.pipeline_mode<synchronous>, transform_indices = @transform_4, window_bounds = array<i64: 1, 96>}, {transform_indices = @transform_5, window_bounds = array<i64: 64, 96>}]} {
    %c0 = arith.constant 0 : index
    %c0_0 = arith.constant 0 : index
    %0 = vector.load %arg1[%c0, %c0_0] : memref<64x32xf32, #tpu.memory_space<vmem>>, vector<64x32xf32>
    %cst = arith.constant dense<0.000000e+00> : vector<64xf32>
    %1 = vector.multi_reduction <add>, %0, %cst [1] : vector<64x32xf32> to vector<64xf32>
    %2 = vector.shape_cast %1 : vector<64xf32> to vector<64x1xf32>
    %cst_1 = arith.constant 3.200000e+01 : f32
    %3 = vector.broadcast %cst_1 : f32 to vector<64x1xf32>
    %4 = arith.divf %2, %3 : vector<64x1xf32>
    %5 = vector.broadcast %4 : vector<64x1xf32> to vector<64x32xf32>
    %6 = arith.subf %0, %5 : vector<64x32xf32>
    %7 = arith.mulf %6, %6 : vector<64x32xf32>
    %cst_2 = arith.constant dense<0.000000e+00> : vector<64xf32>
    %8 = vector.multi_reduction <add>, %7, %cst_2 [1] : vector<64x32xf32> to vector<64xf32>
    %9 = vector.shape_cast %8 : vector<64xf32> to vector<64x1xf32>
    %cst_3 = arith.constant 3.200000e+01 : f32
    %10 = vector.broadcast %cst_3 : f32 to vector<64x1xf32>
    %11 = arith.divf %9, %10 : vector<64x1xf32>
    %cst_4 = arith.constant 9.99999974E-6 : f32
    %12 = vector.broadcast %cst_4 : f32 to vector<64x1xf32>
    %13 = arith.addf %11, %12 : vector<64x1xf32>
    %14 = math.rsqrt %13 : vector<64x1xf32>
    %15 = vector.broadcast %14 : vector<64x1xf32> to vector<64x32xf32>
    %16 = arith.mulf %6, %15 : vector<64x32xf32>
    %c0_5 = arith.constant 0 : index
    %c0_6 = arith.constant 0 : index
    %17 = vector.load %arg2[%c0_5, %c0_6] : memref<1x32xf32, #tpu.memory_space<vmem>>, vector<1x32xf32>
    %18 = vector.broadcast %17 : vector<1x32xf32> to vector<64x32xf32>
    %19 = arith.mulf %16, %18 : vector<64x32xf32>
    %c0_7 = arith.constant 0 : index
    %c0_8 = arith.constant 0 : index
    %20 = vector.load %arg3[%c0_7, %c0_8] : memref<1x32xf32, #tpu.memory_space<vmem>>, vector<1x32xf32>
    %21 = vector.broadcast %20 : vector<1x32xf32> to vector<64x32xf32>
    %22 = arith.addf %19, %21 : vector<64x32xf32>
    %23 = arith.truncf %22 : vector<64x32xf32> to vector<64x32xbf16>
    %c0_9 = arith.constant 0 : index
    %c0_10 = arith.constant 0 : index
    %24 = vector.load %arg4[%c0_9, %c0_10] : memref<32x96xf32, #tpu.memory_space<vmem>>, vector<32x96xf32>
    %25 = arith.truncf %24 : vector<32x96xf32> to vector<32x96xbf16>
    %cst_11 = arith.constant dense<0.000000e+00> : vector<64x96xf32>
    %26 = tpu.matmul %23, %25, %cst_11 {dimension_numbers = #tpu.dot_dimension_numbers<[1], [0], [0], [1], [0, 0, 1, 1], [], []>} : vector<64x32xbf16>, vector<32x96xbf16>, vector<64x96xf32> -> vector<64x96xf32>
    %c0_12 = arith.constant 0 : index
    %c0_13 = arith.constant 0 : index
    %27 = vector.load %arg5[%c0_12, %c0_13] : memref<1x96xf32, #tpu.memory_space<vmem>>, vector<1x96xf32>
    %28 = vector.broadcast %27 : vector<1x96xf32> to vector<64x96xf32>
    %29 = arith.addf %26, %28 : vector<64x96xf32>
    %c0_14 = arith.constant 0 : index
    %c0_15 = arith.constant 0 : index
    %30 = vector.load %arg6[%c0_14, %c0_15] : memref<64x96xf32, #tpu.memory_space<vmem>>, vector<64x96xf32>
    tpu.vector_store %arg6[%c0_14, %c0_15], %29 {strides = array<i32>} : memref<64x96xf32, #tpu.memory_space<vmem>>, vector<64x96xf32>,
    return
  }
  func.func @transform_0(%arg0: i32) -> (i32, i32) {
    %c0_i32 = arith.constant 0 : i32
    %c0_i32_0 = arith.constant 0 : i32
    return %arg0, %c0_i32 : i32, i32
  }
  func.func @transform_1(%arg0: i32) -> (i32, i32) {
    %c0_i32 = arith.constant 0 : i32
    %c0_i32_0 = arith.constant 0 : i32
    %c0_i32_1 = arith.constant 0 : i32
    return %c0_i32, %c0_i32_0 : i32, i32
  }
  func.func @transform_2(%arg0: i32) -> (i32, i32) {
    %c0_i32 = arith.constant 0 : i32
    %c0_i32_0 = arith.constant 0 : i32
    %c0_i32_1 = arith.constant 0 : i32
    return %c0_i32, %c0_i32_0 : i32, i32
  }
  func.func @transform_3(%arg0: i32) -> (i32, i32) {
    %c0_i32 = arith.constant 0 : i32
    %c0_i32_0 = arith.constant 0 : i32
    %c0_i32_1 = arith.constant 0 : i32
    return %c0_i32, %c0_i32_0 : i32, i32
  }
  func.func @transform_4(%arg0: i32) -> (i32, i32) {
    %c0_i32 = arith.constant 0 : i32
    %c0_i32_0 = arith.constant 0 : i32
    %c0_i32_1 = arith.constant 0 : i32
    return %c0_i32, %c0_i32_0 : i32, i32
  }
  func.func @transform_5(%arg0: i32) -> (i32, i32) {
    %c0_i32 = arith.constant 0 : i32
    %c0_i32_0 = arith.constant 0 : i32
    return %arg0, %c0_i32 : i32, i32
  }
}

module attributes {stable_mosaic.version = 11 : i64} {
  func.func @kernel(%arg0: i32, %arg1: memref<16x8x8xf32, #tpu.memory_space<vmem>>, %arg2: memref<16x8x8xf32, #tpu.memory_space<vmem>>, %arg3: memref<16x8x8xf32, #tpu.memory_space<vmem>>, %arg4: memref<16x8x8xf32, #tpu.memory_space<vmem>>) attributes {dimension_semantics = [#tpu.dimension_semantics<parallel>], iteration_bounds = array<i64: 2>, scalar_prefetch = 0 : i64, scratch_operands = 0 : i64, tpu.core_type = #tpu.core_type<tc>, window_params = [{transform_indices = @transform_0, window_bounds = array<i64: 16, 8, 8>}, {transform_indices = @transform_1, window_bounds = array<i64: 16, 8, 8>}, {transform_indices = @transform_2, window_bounds = array<i64: 16, 8, 8>}, {transform_indices = @transform_3, window_bounds = array<i64: 16, 8, 8>}]} {
    %c0 = arith.constant 0 : index
    %c0_0 = arith.constant 0 : index
    %c0_1 = arith.constant 0 : index
    %0 = vector.load %arg1[%c0, %c0_0, %c0_1] : memref<16x8x8xf32, #tpu.memory_space<vmem>>, vector<16x8x8xf32>
    %cst = arith.constant 0.353553385 : f32
    %1 = vector.broadcast %cst : f32 to vector<16x8x8xf32>
    %2 = arith.mulf %0, %1 : vector<16x8x8xf32>
    %c0_2 = arith.constant 0 : index
    %c0_3 = arith.constant 0 : index
    %c0_4 = arith.constant 0 : index
    %3 = vector.load %arg2[%c0_2, %c0_3, %c0_4] : memref<16x8x8xf32, #tpu.memory_space<vmem>>, vector<16x8x8xf32>
    %c0_5 = arith.constant 0 : index
    %c0_6 = arith.constant 0 : index
    %c0_7 = arith.constant 0 : index
    %4 = vector.load %arg3[%c0_5, %c0_6, %c0_7] : memref<16x8x8xf32, #tpu.memory_space<vmem>>, vector<16x8x8xf32>
    %5 = arith.truncf %2 : vector<16x8x8xf32> to vector<16x8x8xbf16>
    %6 = arith.truncf %3 : vector<16x8x8xf32> to vector<16x8x8xbf16>
    %cst_8 = arith.constant dense<0.000000e+00> : vector<16x8x8xf32>
    %7 = tpu.matmul %5, %6, %cst_8 {dimension_numbers = #tpu.dot_dimension_numbers<[2], [2], [1], [1], [0, 0, 0, 1, 1, 1], [0], [0]>} : vector<16x8x8xbf16>, vector<16x8x8xbf16>, vector<16x8x8xf32> -> vector<16x8x8xf32>
    %cst_9 = arith.constant dense<0xFF800000> : vector<16x8xf32>
    %8 = vector.multi_reduction <maximumf>, %7, %cst_9 [2] : vector<16x8x8xf32> to vector<16x8xf32>
    %9 = vector.shape_cast %8 : vector<16x8xf32> to vector<16x8x1xf32>
    %10 = vector.broadcast %9 : vector<16x8x1xf32> to vector<16x8x8xf32>
    %11 = arith.subf %7, %10 : vector<16x8x8xf32>
    %12 = math.exp %11 : vector<16x8x8xf32>
    %cst_10 = arith.constant dense<0.000000e+00> : vector<16x8xf32>
    %13 = vector.multi_reduction <add>, %12, %cst_10 [2] : vector<16x8x8xf32> to vector<16x8xf32>
    %14 = vector.shape_cast %13 : vector<16x8xf32> to vector<16x8x1xf32>
    %15 = arith.truncf %12 : vector<16x8x8xf32> to vector<16x8x8xbf16>
    %16 = arith.truncf %4 : vector<16x8x8xf32> to vector<16x8x8xbf16>
    %cst_11 = arith.constant dense<0.000000e+00> : vector<16x8x8xf32>
    %17 = tpu.matmul %15, %16, %cst_11 {dimension_numbers = #tpu.dot_dimension_numbers<[2], [1], [1], [2], [0, 0, 0, 1, 1, 2], [0], [0]>} : vector<16x8x8xbf16>, vector<16x8x8xbf16>, vector<16x8x8xf32> -> vector<16x8x8xf32>
    %18 = tpu.reciprocal %14 {approx = true} : vector<16x8x1xf32> -> vector<16x8x1xf32>
    %19 = vector.broadcast %18 : vector<16x8x1xf32> to vector<16x8x8xf32>
    %20 = arith.mulf %17, %19 : vector<16x8x8xf32>
    %c0_12 = arith.constant 0 : index
    %c0_13 = arith.constant 0 : index
    %c0_14 = arith.constant 0 : index
    %21 = vector.load %arg4[%c0_12, %c0_13, %c0_14] : memref<16x8x8xf32, #tpu.memory_space<vmem>>, vector<16x8x8xf32>
    tpu.vector_store %arg4[%c0_12, %c0_13, %c0_14], %20 {strides = array<i32>} : memref<16x8x8xf32, #tpu.memory_space<vmem>>, vector<16x8x8xf32>,
    return
  }
  func.func @transform_0(%arg0: i32) -> (i32, i32, i32) {
    %c0_i32 = arith.constant 0 : i32
    %c0_i32_0 = arith.constant 0 : i32
    %c0_i32_1 = arith.constant 0 : i32
    return %arg0, %c0_i32, %c0_i32_0 : i32, i32, i32
  }
  func.func @transform_1(%arg0: i32) -> (i32, i32, i32) {
    %c0_i32 = arith.constant 0 : i32
    %c0_i32_0 = arith.constant 0 : i32
    %c0_i32_1 = arith.constant 0 : i32
    return %arg0, %c0_i32, %c0_i32_0 : i32, i32, i32
  }
  func.func @transform_2(%arg0: i32) -> (i32, i32, i32) {
    %c0_i32 = arith.constant 0 : i32
    %c0_i32_0 = arith.constant 0 : i32
    %c0_i32_1 = arith.constant 0 : i32
    return %arg0, %c0_i32, %c0_i32_0 : i32, i32, i32
  }
  func.func @transform_3(%arg0: i32) -> (i32, i32, i32) {
    %c0_i32 = arith.constant 0 : i32
    %c0_i32_0 = arith.constant 0 : i32
    %c0_i32_1 = arith.constant 0 : i32
    return %arg0, %c0_i32, %c0_i32_0 : i32, i32, i32
  }
}

module attributes {stable_mosaic.version = 11 : i64} {
  func.func @kernel(%arg0: i32, %arg1: memref<64x32xf32, #tpu.memory_space<vmem>>, %arg2: memref<32x32xf32, #tpu.memory_space<vmem>>, %arg3: memref<1x32xf32, #tpu.memory_space<vmem>>, %arg4: memref<64x32xf32, #tpu.memory_space<vmem>>) attributes {dimension_semantics = [#tpu.dimension_semantics<parallel>], iteration_bounds = array<i64: 1>, scalar_prefetch = 0 : i64, scratch_operands = 0 : i64, tpu.core_type = #tpu.core_type<tc>, window_params = [{transform_indices = @transform_0, window_bounds = array<i64: 64, 32>}, {pipeline_mode = #tpu.pipeline_mode<synchronous>, transform_indices = @transform_1, window_bounds = array<i64: 32, 32>}, {pipeline_mode = #tpu.pipeline_mode<synchronous>, transform_indices = @transform_2, window_bounds = array<i64: 1, 32>}, {transform_indices = @transform_3, window_bounds = array<i64: 64, 32>}]} {
    %c0 = arith.constant 0 : index
    %c0_0 = arith.constant 0 : index
    %0 = vector.load %arg1[%c0, %c0_0] : memref<64x32xf32, #tpu.memory_space<vmem>>, vector<64x32xf32>
    %1 = arith.truncf %0 : vector<64x32xf32> to vector<64x32xbf16>
    %c0_1 = arith.constant 0 : index
    %c0_2 = arith.constant 0 : index
    %2 = vector.load %arg2[%c0_1, %c0_2] : memref<32x32xf32, #tpu.memory_space<vmem>>, vector<32x32xf32>
    %3 = arith.truncf %2 : vector<32x32xf32> to vector<32x32xbf16>
    %cst = arith.constant dense<0.000000e+00> : vector<64x32xf32>
    %4 = tpu.matmul %1, %3, %cst {dimension_numbers = #tpu.dot_dimension_numbers<[1], [0], [0], [1], [0, 0, 1, 1], [], []>} : vector<64x32xbf16>, vector<32x32xbf16>, vector<64x32xf32> -> vector<64x32xf32>
    %c0_3 = arith.constant 0 : index
    %c0_4 = arith.constant 0 : index
    %5 = vector.load %arg3[%c0_3, %c0_4] : memref<1x32xf32, #tpu.memory_space<vmem>>, vector<1x32xf32>
    %6 = vector.broadcast %5 : vector<1x32xf32> to vector<64x32xf32>
    %7 = arith.addf %4, %6 : vector<64x32xf32>
    %c0_5 = arith.constant 0 : index
    %c0_6 = arith.constant 0 : index
    %8 = vector.load %arg4[%c0_5, %c0_6] : memref<64x32xf32, #tpu.memory_space<vmem>>, vector<64x32xf32>
    tpu.vector_store %arg4[%c0_5, %c0_6], %7 {strides = array<i32>} : memref<64x32xf32, #tpu.memory_space<vmem>>, vector<64x32xf32>,
    return
  }
  func.func @transform_0(%arg0: i32) -> (i32, i32) {
    %c0_i32 = arith.constant 0 : i32
    %c0_i32_0 = arith.constant 0 : i32
    return %arg0, %c0_i32 : i32, i32
  }
  func.func @transform_1(%arg0: i32) -> (i32, i32) {
    %c0_i32 = arith.constant 0 : i32
    %c0_i32_0 = arith.constant 0 : i32
    %c0_i32_1 = arith.constant 0 : i32
    return %c0_i32, %c0_i32_0 : i32, i32
  }
  func.func @transform_2(%arg0: i32) -> (i32, i32) {
    %c0_i32 = arith.constant 0 : i32
    %c0_i32_0 = arith.constant 0 : i32
    %c0_i32_1 = arith.constant 0 : i32
    return %c0_i32, %c0_i32_0 : i32, i32
  }
  func.func @transform_3(%arg0: i32) -> (i32, i32) {
    %c0_i32 = arith.constant 0 : i32
    %c0_i32_0 = arith.constant 0 : i32
    return %arg0, %c0_i32 : i32, i32
  }
}

module attributes {stable_mosaic.version = 11 : i64} {
  func.func @kernel(%arg0: i32, %arg1: memref<16x4x8xf32, #tpu.memory_space<vmem>>, %arg2: memref<16x4x8xf32, #tpu.memory_space<vmem>>, %arg3: memref<16x4x8xf32, #tpu.memory_space<vmem>>, %arg4: memref<16x4x8xf32, #tpu.memory_space<vmem>>) attributes {dimension_semantics = [#tpu.dimension_semantics<parallel>], iteration_bounds = array<i64: 4>, scalar_prefetch = 0 : i64, scratch_operands = 0 : i64, tpu.core_type = #tpu.core_type<tc>, window_params = [{transform_indices = @transform_0, window_bounds = array<i64: 16, 4, 8>}, {transform_indices = @transform_1, window_bounds = array<i64: 16, 4, 8>}, {transform_indices = @transform_2, window_bounds = array<i64: 16, 4, 8>}, {transform_indices = @transform_3, window_bounds = array<i64: 16, 4, 8>}]} {
    %c0 = arith.constant 0 : index
    %c0_0 = arith.constant 0 : index
    %c0_1 = arith.constant 0 : index
    %0 = vector.load %arg1[%c0, %c0_0, %c0_1] : memref<16x4x8xf32, #tpu.memory_space<vmem>>, vector<16x4x8xf32>
    %cst = arith.constant 0.353553385 : f32
    %1 = vector.broadcast %cst : f32 to vector<16x4x8xf32>
    %2 = arith.mulf %0, %1 : vector<16x4x8xf32>
    %c0_2 = arith.constant 0 : index
    %c0_3 = arith.constant 0 : index
    %c0_4 = arith.constant 0 : index
    %3 = vector.load %arg2[%c0_2, %c0_3, %c0_4] : memref<16x4x8xf32, #tpu.memory_space<vmem>>, vector<16x4x8xf32>
    %c0_5 = arith.constant 0 : index
    %c0_6 = arith.constant 0 : index
    %c0_7 = arith.constant 0 : index
    %4 = vector.load %arg3[%c0_5, %c0_6, %c0_7] : memref<16x4x8xf32, #tpu.memory_space<vmem>>, vector<16x4x8xf32>
    %5 = arith.truncf %2 : vector<16x4x8xf32> to vector<16x4x8xbf16>
    %6 = arith.truncf %3 : vector<16x4x8xf32> to vector<16x4x8xbf16>
    %cst_8 = arith.constant dense<0.000000e+00> : vector<16x4x4xf32>
    %7 = tpu.matmul %5, %6, %cst_8 {dimension_numbers = #tpu.dot_dimension_numbers<[2], [2], [1], [1], [0, 0, 0, 1, 1, 1], [0], [0]>} : vector<16x4x8xbf16>, vector<16x4x8xbf16>, vector<16x4x4xf32> -> vector<16x4x4xf32>
    %cst_9 = arith.constant dense<0xFF800000> : vector<16x4xf32>
    %8 = vector.multi_reduction <maximumf>, %7, %cst_9 [2] : vector<16x4x4xf32> to vector<16x4xf32>
    %9 = vector.shape_cast %8 : vector<16x4xf32> to vector<16x4x1xf32>
    %10 = vector.broadcast %9 : vector<16x4x1xf32> to vector<16x4x4xf32>
    %11 = arith.subf %7, %10 : vector<16x4x4xf32>
    %12 = math.exp %11 : vector<16x4x4xf32>
    %cst_10 = arith.constant dense<0.000000e+00> : vector<16x4xf32>
    %13 = vector.multi_reduction <add>, %12, %cst_10 [2] : vector<16x4x4xf32> to vector<16x4xf32>
    %14 = vector.shape_cast %13 : vector<16x4xf32> to vector<16x4x1xf32>
    %15 = arith.truncf %12 : vector<16x4x4xf32> to vector<16x4x4xbf16>
    %16 = arith.truncf %4 : vector<16x4x8xf32> to vector<16x4x8xbf16>
    %cst_11 = arith.constant dense<0.000000e+00> : vector<16x4x8xf32>
    %17 = tpu.matmul %15, %16, %cst_11 {dimension_numbers = #tpu.dot_dimension_numbers<[2], [1], [1], [2], [0, 0, 0, 1, 1, 2], [0], [0]>} : vector<16x4x4xbf16>, vector<16x4x8xbf16>, vector<16x4x8xf32> -> vector<16x4x8xf32>
    %18 = tpu.reciprocal %14 {approx = true} : vector<16x4x1xf32> -> vector<16x4x1xf32>
    %19 = vector.broadcast %18 : vector<16x4x1xf32> to vector<16x4x8xf32>
    %20 = arith.mulf %17, %19 : vector<16x4x8xf32>
    %c0_12 = arith.constant 0 : index
    %c0_13 = arith.constant 0 : index
    %c0_14 = arith.constant 0 : index
    %21 = vector.load %arg4[%c0_12, %c0_13, %c0_14] : memref<16x4x8xf32, #tpu.memory_space<vmem>>, vector<16x4x8xf32>
    tpu.vector_store %arg4[%c0_12, %c0_13, %c0_14], %20 {strides = array<i32>} : memref<16x4x8xf32, #tpu.memory_space<vmem>>, vector<16x4x8xf32>,
    return
  }
  func.func @transform_0(%arg0: i32) -> (i32, i32, i32) {
    %c0_i32 = arith.constant 0 : i32
    %c0_i32_0 = arith.constant 0 : i32
    %c0_i32_1 = arith.constant 0 : i32
    return %arg0, %c0_i32, %c0_i32_0 : i32, i32, i32
  }
  func.func @transform_1(%arg0: i32) -> (i32, i32, i32) {
    %c0_i32 = arith.constant 0 : i32
    %c0_i32_0 = arith.constant 0 : i32
    %c0_i32_1 = arith.constant 0 : i32
    return %arg0, %c0_i32, %c0_i32_0 : i32, i32, i32
  }
  func.func @transform_2(%arg0: i32) -> (i32, i32, i32) {
    %c0_i32 = arith.constant 0 : i32
    %c0_i32_0 = arith.constant 0 : i32
    %c0_i32_1 = arith.constant 0 : i32
    return %arg0, %c0_i32, %c0_i32_0 : i32, i32, i32
  }
  func.func @transform_3(%arg0: i32) -> (i32, i32, i32) {
    %c0_i32 = arith.constant 0 : i32
    %c0_i32_0 = arith.constant 0 : i32
    %c0_i32_1 = arith.constant 0 : i32
    return %arg0, %c0_i32, %c0_i32_0 : i32, i32, i32
  }
}

module attributes {stable_mosaic.version = 11 : i64} {
  func.func @kernel(%arg0: i32, %arg1: memref<64x32xf32, #tpu.memory_space<vmem>>, %arg2: memref<1x32xf32, #tpu.memory_space<vmem>>, %arg3: memref<1x32xf32, #tpu.memory_space<vmem>>, %arg4: memref<32x128xf32, #tpu.memory_space<vmem>>, %arg5: memref<1x128xf32, #tpu.memory_space<vmem>>, %arg6: memref<64x128xf32, #tpu.memory_space<vmem>>) attributes {dimension_semantics = [#tpu.dimension_semantics<parallel>], iteration_bounds = array<i64: 1>, scalar_prefetch = 0 : i64, scratch_operands = 0 : i64, tpu.core_type = #tpu.core_type<tc>, window_params = [{transform_indices = @transform_0, window_bounds = array<i64: 64, 32>}, {pipeline_mode = #tpu.pipeline_mode<synchronous>, transform_indices = @transform_1, window_bounds = array<i64: 1, 32>}, {pipeline_mode = #tpu.pipeline_mode<synchronous>, transform_indices = @transform_2, window_bounds = array<i64: 1, 32>}, {pipeline_mode = #tpu.pipeline_mode<synchronous>, transform_indices = @transform_3, window_bounds = array<i64: 32, 128>}, {pipeline_mode = #tpu.pipeline_mode<synchronous>, transform_indices = @transform_4, window_bounds = array<i64: 1, 128>}, {transform_indices = @transform_5, window_bounds = array<i64: 64, 128>}]} {
    %c0 = arith.constant 0 : index
    %c0_0 = arith.constant 0 : index
    %0 = vector.load %arg1[%c0, %c0_0] : memref<64x32xf32, #tpu.memory_space<vmem>>, vector<64x32xf32>
    %cst = arith.constant dense<0.000000e+00> : vector<64xf32>
    %1 = vector.multi_reduction <add>, %0, %cst [1] : vector<64x32xf32> to vector<64xf32>
    %2 = vector.shape_cast %1 : vector<64xf32> to vector<64x1xf32>
    %cst_1 = arith.constant 3.200000e+01 : f32
    %3 = vector.broadcast %cst_1 : f32 to vector<64x1xf32>
    %4 = arith.divf %2, %3 : vector<64x1xf32>
    %5 = vector.broadcast %4 : vector<64x1xf32> to vector<64x32xf32>
    %6 = arith.subf %0, %5 : vector<64x32xf32>
    %7 = arith.mulf %6, %6 : vector<64x32xf32>
    %cst_2 = arith.constant dense<0.000000e+00> : vector<64xf32>
    %8 = vector.multi_reduction <add>, %7, %cst_2 [1] : vector<64x32xf32> to vector<64xf32>
    %9 = vector.shape_cast %8 : vector<64xf32> to vector<64x1xf32>
    %cst_3 = arith.constant 3.200000e+01 : f32
    %10 = vector.broadcast %cst_3 : f32 to vector<64x1xf32>
    %11 = arith.divf %9, %10 : vector<64x1xf32>
    %cst_4 = arith.constant 9.99999974E-6 : f32
    %12 = vector.broadcast %cst_4 : f32 to vector<64x1xf32>
    %13 = arith.addf %11, %12 : vector<64x1xf32>
    %14 = math.rsqrt %13 : vector<64x1xf32>
    %15 = vector.broadcast %14 : vector<64x1xf32> to vector<64x32xf32>
    %16 = arith.mulf %6, %15 : vector<64x32xf32>
    %c0_5 = arith.constant 0 : index
    %c0_6 = arith.constant 0 : index
    %17 = vector.load %arg2[%c0_5, %c0_6] : memref<1x32xf32, #tpu.memory_space<vmem>>, vector<1x32xf32>
    %18 = vector.broadcast %17 : vector<1x32xf32> to vector<64x32xf32>
    %19 = arith.mulf %16, %18 : vector<64x32xf32>
    %c0_7 = arith.constant 0 : index
    %c0_8 = arith.constant 0 : index
    %20 = vector.load %arg3[%c0_7, %c0_8] : memref<1x32xf32, #tpu.memory_space<vmem>>, vector<1x32xf32>
    %21 = vector.broadcast %20 : vector<1x32xf32> to vector<64x32xf32>
    %22 = arith.addf %19, %21 : vector<64x32xf32>
    %23 = arith.truncf %22 : vector<64x32xf32> to vector<64x32xbf16>
    %c0_9 = arith.constant 0 : index
    %c0_10 = arith.constant 0 : index
    %24 = vector.load %arg4[%c0_9, %c0_10] : memref<32x128xf32, #tpu.memory_space<vmem>>, vector<32x128xf32>
    %25 = arith.truncf %24 : vector<32x128xf32> to vector<32x128xbf16>
    %cst_11 = arith.constant dense<0.000000e+00> : vector<64x128xf32>
    %26 = tpu.matmul %23, %25, %cst_11 {dimension_numbers = #tpu.dot_dimension_numbers<[1], [0], [0], [1], [0, 0, 1, 1], [], []>} : vector<64x32xbf16>, vector<32x128xbf16>, vector<64x128xf32> -> vector<64x128xf32>
    %c0_12 = arith.constant 0 : index
    %c0_13 = arith.constant 0 : index
    %27 = vector.load %arg5[%c0_12, %c0_13] : memref<1x128xf32, #tpu.memory_space<vmem>>, vector<1x128xf32>
    %28 = vector.broadcast %27 : vector<1x128xf32> to vector<64x128xf32>
    %29 = arith.addf %26, %28 : vector<64x128xf32>
    %cst_14 = arith.constant 5.000000e-01 : f32
    %30 = vector.broadcast %cst_14 : f32 to vector<64x128xf32>
    %31 = arith.mulf %29, %30 : vector<64x128xf32>
    %cst_15 = arith.constant 0.707106769 : f32
    %32 = vector.broadcast %cst_15 : f32 to vector<64x128xf32>
    %33 = arith.mulf %29, %32 : vector<64x128xf32>
    %34 = math.absf %33 : vector<64x128xf32>
    %cst_16 = arith.constant 0.327591091 : f32
    %35 = vector.broadcast %cst_16 : f32 to vector<64x128xf32>
    %36 = arith.mulf %35, %34 : vector<64x128xf32>
    %cst_17 = arith.constant 1.000000e+00 : f32
    %37 = vector.broadcast %cst_17 : f32 to vector<64x128xf32>
    %38 = arith.addf %37, %36 : vector<64x128xf32>
    %cst_18 = arith.constant 1.000000e+00 : f32
    %39 = vector.broadcast %cst_18 : f32 to vector<64x128xf32>
    %40 = arith.divf %39, %38 : vector<64x128xf32>
    %cst_19 = arith.constant 1.06140542 : f32
    %41 = vector.broadcast %cst_19 : f32 to vector<64x128xf32>
    %42 = arith.mulf %41, %40 : vector<64x128xf32>
    %cst_20 = arith.constant -1.45315206 : f32
    %43 = vector.broadcast %cst_20 : f32 to vector<64x128xf32>
    %44 = arith.addf %42, %43 : vector<64x128xf32>
    %45 = arith.mulf %44, %40 : vector<64x128xf32>
    %cst_21 = arith.constant 1.42141378 : f32
    %46 = vector.broadcast %cst_21 : f32 to vector<64x128xf32>
    %47 = arith.addf %45, %46 : vector<64x128xf32>
    %48 = arith.mulf %47, %40 : vector<64x128xf32>
    %cst_22 = arith.constant -0.284496725 : f32
    %49 = vector.broadcast %cst_22 : f32 to vector<64x128xf32>
    %50 = arith.addf %48, %49 : vector<64x128xf32>
    %51 = arith.mulf %50, %40 : vector<64x128xf32>
    %cst_23 = arith.constant 0.254829586 : f32
    %52 = vector.broadcast %cst_23 : f32 to vector<64x128xf32>
    %53 = arith.addf %51, %52 : vector<64x128xf32>
    %54 = arith.mulf %53, %40 : vector<64x128xf32>
    %cst_24 = arith.constant 0.000000e+00 : f32
    %55 = vector.broadcast %cst_24 : f32 to vector<64x128xf32>
    %56 = arith.subf %55, %34 : vector<64x128xf32>
    %57 = arith.mulf %56, %34 : vector<64x128xf32>
    %58 = math.exp %57 : vector<64x128xf32>
    %59 = arith.mulf %54, %58 : vector<64x128xf32>
    %cst_25 = arith.constant 1.000000e+00 : f32
    %60 = vector.broadcast %cst_25 : f32 to vector<64x128xf32>
    %61 = arith.subf %60, %59 : vector<64x128xf32>
    %cst_26 = arith.constant 0.000000e+00 : f32
    %62 = vector.broadcast %cst_26 : f32 to vector<64x128xf32>
    %63 = arith.cmpf olt, %33, %62 : vector<64x128xf32>
    %cst_27 = arith.constant 0.000000e+00 : f32
    %64 = vector.broadcast %cst_27 : f32 to vector<64x128xf32>
    %65 = arith.subf %64, %61 : vector<64x128xf32>
    %66 = arith.select %63, %65, %61 : vector<64x128xi1>, vector<64x128xf32>
    %cst_28 = arith.constant 1.000000e+00 : f32
    %67 = vector.broadcast %cst_28 : f32 to vector<64x128xf32>
    %68 = arith.addf %67, %66 : vector<64x128xf32>
    %69 = arith.mulf %31, %68 : vector<64x128xf32>
    %c0_29 = arith.constant 0 : index
    %c0_30 = arith.constant 0 : index
    %70 = vector.load %arg6[%c0_29, %c0_30] : memref<64x128xf32, #tpu.memory_space<vmem>>, vector<64x128xf32>
    tpu.vector_store %arg6[%c0_29, %c0_30], %69 {strides = array<i32>} : memref<64x128xf32, #tpu.memory_space<vmem>>, vector<64x128xf32>,
    return
  }
  func.func @transform_0(%arg0: i32) -> (i32, i32) {
    %c0_i32 = arith.constant 0 : i32
    %c0_i32_0 = arith.constant 0 : i32
    return %arg0, %c0_i32 : i32, i32
  }
  func.func @transform_1(%arg0: i32) -> (i32, i32) {
    %c0_i32 = arith.constant 0 : i32
    %c0_i32_0 = arith.constant 0 : i32
    %c0_i32_1 = arith.constant 0 : i32
    return %c0_i32, %c0_i32_0 : i32, i32
  }
  func.func @transform_2(%arg0: i32) -> (i32, i32) {
    %c0_i32 = arith.constant 0 : i32
    %c0_i32_0 = arith.constant 0 : i32
    %c0_i32_1 = arith.constant 0 : i32
    return %c0_i32, %c0_i32_0 : i32, i32
  }
  func.func @transform_3(%arg0: i32) -> (i32, i32) {
    %c0_i32 = arith.constant 0 : i32
    %c0_i32_0 = arith.constant 0 : i32
    %c0_i32_1 = arith.constant 0 : i32
    return %c0_i32, %c0_i32_0 : i32, i32
  }
  func.func @transform_4(%arg0: i32) -> (i32, i32) {
    %c0_i32 = arith.constant 0 : i32
    %c0_i32_0 = arith.constant 0 : i32
    %c0_i32_1 = arith.constant 0 : i32
    return %c0_i32, %c0_i32_0 : i32, i32
  }
  func.func @transform_5(%arg0: i32) -> (i32, i32) {
    %c0_i32 = arith.constant 0 : i32
    %c0_i32_0 = arith.constant 0 : i32
    return %arg0, %c0_i32 : i32, i32
  }
}

module attributes {stable_mosaic.version = 11 : i64} {
  func.func @kernel(%arg0: i32, %arg1: memref<64x128xf32, #tpu.memory_space<vmem>>, %arg2: memref<128x32xf32, #tpu.memory_space<vmem>>, %arg3: memref<1x32xf32, #tpu.memory_space<vmem>>, %arg4: memref<64x32xf32, #tpu.memory_space<vmem>>) attributes {dimension_semantics = [#tpu.dimension_semantics<parallel>], iteration_bounds = array<i64: 1>, scalar_prefetch = 0 : i64, scratch_operands = 0 : i64, tpu.core_type = #tpu.core_type<tc>, window_params = [{transform_indices = @transform_0, window_bounds = array<i64: 64, 128>}, {pipeline_mode = #tpu.pipeline_mode<synchronous>, transform_indices = @transform_1, window_bounds = array<i64: 128, 32>}, {pipeline_mode = #tpu.pipeline_mode<synchronous>, transform_indices = @transform_2, window_bounds = array<i64: 1, 32>}, {transform_indices = @transform_3, window_bounds = array<i64: 64, 32>}]} {
    %c0 = arith.constant 0 : index
    %c0_0 = arith.constant 0 : index
    %0 = vector.load %arg1[%c0, %c0_0] : memref<64x128xf32, #tpu.memory_space<vmem>>, vector<64x128xf32>
    %1 = arith.truncf %0 : vector<64x128xf32> to vector<64x128xbf16>
    %c0_1 = arith.constant 0 : index
    %c0_2 = arith.constant 0 : index
    %2 = vector.load %arg2[%c0_1, %c0_2] : memref<128x32xf32, #tpu.memory_space<vmem>>, vector<128x32xf32>
    %3 = arith.truncf %2 : vector<128x32xf32> to vector<128x32xbf16>
    %cst = arith.constant dense<0.000000e+00> : vector<64x32xf32>
    %4 = tpu.matmul %1, %3, %cst {dimension_numbers = #tpu.dot_dimension_numbers<[1], [0], [0], [1], [0, 0, 1, 1], [], []>} : vector<64x128xbf16>, vector<128x32xbf16>, vector<64x32xf32> -> vector<64x32xf32>
    %c0_3 = arith.constant 0 : index
    %c0_4 = arith.constant 0 : index
    %5 = vector.load %arg3[%c0_3, %c0_4] : memref<1x32xf32, #tpu.memory_space<vmem>>, vector<1x32xf32>
    %6 = vector.broadcast %5 : vector<1x32xf32> to vector<64x32xf32>
    %7 = arith.addf %4, %6 : vector<64x32xf32>
    %c0_5 = arith.constant 0 : index
    %c0_6 = arith.constant 0 : index
    %8 = vector.load %arg4[%c0_5, %c0_6] : memref<64x32xf32, #tpu.memory_space<vmem>>, vector<64x32xf32>
    tpu.vector_store %arg4[%c0_5, %c0_6], %7 {strides = array<i32>} : memref<64x32xf32, #tpu.memory_space<vmem>>, vector<64x32xf32>,
    return
  }
  func.func @transform_0(%arg0: i32) -> (i32, i32) {
    %c0_i32 = arith.constant 0 : i32
    %c0_i32_0 = arith.constant 0 : i32
    return %arg0, %c0_i32 : i32, i32
  }
  func.func @transform_1(%arg0: i32) -> (i32, i32) {
    %c0_i32 = arith.constant 0 : i32
    %c0_i32_0 = arith.constant 0 : i32
    %c0_i32_1 = arith.constant 0 : i32
    return %c0_i32, %c0_i32_0 : i32, i32
  }
  func.func @transform_2(%arg0: i32) -> (i32, i32) {
    %c0_i32 = arith.constant 0 : i32
    %c0_i32_0 = arith.constant 0 : i32
    %c0_i32_1 = arith.constant 0 : i32
    return %c0_i32, %c0_i32_0 : i32, i32
  }
  func.func @transform_3(%arg0: i32) -> (i32, i32) {
    %c0_i32 = arith.constant 0 : i32
    %c0_i32_0 = arith.constant 0 : i32
    return %arg0, %c0_i32 : i32, i32
  }
}

module attributes {stable_mosaic.version = 11 : i64} {
  func.func @kernel(%arg0: i32, %arg1: memref<64x32xf32, #tpu.memory_space<vmem>>, %arg2: memref<1x32xf32, #tpu.memory_space<vmem>>, %arg3: memref<1x32xf32, #tpu.memory_space<vmem>>, %arg4: memref<32x64xf32, #tpu.memory_space<vmem>>, %arg5: memref<1x64xf32, #tpu.memory_space<vmem>>, %arg6: memref<64x64xf32, #tpu.memory_space<vmem>>) attributes {dimension_semantics = [#tpu.dimension_semantics<parallel>], iteration_bounds = array<i64: 1>, scalar_prefetch = 0 : i64, scratch_operands = 0 : i64, tpu.core_type = #tpu.core_type<tc>, window_params = [{transform_indices = @transform_0, window_bounds = array<i64: 64, 32>}, {pipeline_mode = #tpu.pipeline_mode<synchronous>, transform_indices = @transform_1, window_bounds = array<i64: 1, 32>}, {pipeline_mode = #tpu.pipeline_mode<synchronous>, transform_indices = @transform_2, window_bounds = array<i64: 1, 32>}, {pipeline_mode = #tpu.pipeline_mode<synchronous>, transform_indices = @transform_3, window_bounds = array<i64: 32, 64>}, {pipeline_mode = #tpu.pipeline_mode<synchronous>, transform_indices = @transform_4, window_bounds = array<i64: 1, 64>}, {transform_indices = @transform_5, window_bounds = array<i64: 64, 64>}]} {
    %c0 = arith.constant 0 : index
    %c0_0 = arith.constant 0 : index
    %0 = vector.load %arg1[%c0, %c0_0] : memref<64x32xf32, #tpu.memory_space<vmem>>, vector<64x32xf32>
    %cst = arith.constant dense<0.000000e+00> : vector<64xf32>
    %1 = vector.multi_reduction <add>, %0, %cst [1] : vector<64x32xf32> to vector<64xf32>
    %2 = vector.shape_cast %1 : vector<64xf32> to vector<64x1xf32>
    %cst_1 = arith.constant 3.200000e+01 : f32
    %3 = vector.broadcast %cst_1 : f32 to vector<64x1xf32>
    %4 = arith.divf %2, %3 : vector<64x1xf32>
    %5 = vector.broadcast %4 : vector<64x1xf32> to vector<64x32xf32>
    %6 = arith.subf %0, %5 : vector<64x32xf32>
    %7 = arith.mulf %6, %6 : vector<64x32xf32>
    %cst_2 = arith.constant dense<0.000000e+00> : vector<64xf32>
    %8 = vector.multi_reduction <add>, %7, %cst_2 [1] : vector<64x32xf32> to vector<64xf32>
    %9 = vector.shape_cast %8 : vector<64xf32> to vector<64x1xf32>
    %cst_3 = arith.constant 3.200000e+01 : f32
    %10 = vector.broadcast %cst_3 : f32 to vector<64x1xf32>
    %11 = arith.divf %9, %10 : vector<64x1xf32>
    %cst_4 = arith.constant 9.99999974E-6 : f32
    %12 = vector.broadcast %cst_4 : f32 to vector<64x1xf32>
    %13 = arith.addf %11, %12 : vector<64x1xf32>
    %14 = math.rsqrt %13 : vector<64x1xf32>
    %15 = vector.broadcast %14 : vector<64x1xf32> to vector<64x32xf32>
    %16 = arith.mulf %6, %15 : vector<64x32xf32>
    %c0_5 = arith.constant 0 : index
    %c0_6 = arith.constant 0 : index
    %17 = vector.load %arg2[%c0_5, %c0_6] : memref<1x32xf32, #tpu.memory_space<vmem>>, vector<1x32xf32>
    %18 = vector.broadcast %17 : vector<1x32xf32> to vector<64x32xf32>
    %19 = arith.mulf %16, %18 : vector<64x32xf32>
    %c0_7 = arith.constant 0 : index
    %c0_8 = arith.constant 0 : index
    %20 = vector.load %arg3[%c0_7, %c0_8] : memref<1x32xf32, #tpu.memory_space<vmem>>, vector<1x32xf32>
    %21 = vector.broadcast %20 : vector<1x32xf32> to vector<64x32xf32>
    %22 = arith.addf %19, %21 : vector<64x32xf32>
    %23 = arith.truncf %22 : vector<64x32xf32> to vector<64x32xbf16>
    %c0_9 = arith.constant 0 : index
    %c0_10 = arith.constant 0 : index
    %24 = vector.load %arg4[%c0_9, %c0_10] : memref<32x64xf32, #tpu.memory_space<vmem>>, vector<32x64xf32>
    %25 = arith.truncf %24 : vector<32x64xf32> to vector<32x64xbf16>
    %cst_11 = arith.constant dense<0.000000e+00> : vector<64x64xf32>
    %26 = tpu.matmul %23, %25, %cst_11 {dimension_numbers = #tpu.dot_dimension_numbers<[1], [0], [0], [1], [0, 0, 1, 1], [], []>} : vector<64x32xbf16>, vector<32x64xbf16>, vector<64x64xf32> -> vector<64x64xf32>
    %c0_12 = arith.constant 0 : index
    %c0_13 = arith.constant 0 : index
    %27 = vector.load %arg5[%c0_12, %c0_13] : memref<1x64xf32, #tpu.memory_space<vmem>>, vector<1x64xf32>
    %28 = vector.broadcast %27 : vector<1x64xf32> to vector<64x64xf32>
    %29 = arith.addf %26, %28 : vector<64x64xf32>
    %30 = math.tanh %29 : vector<64x64xf32>
    %c0_14 = arith.constant 0 : index
    %c0_15 = arith.constant 0 : index
    %31 = vector.load %arg6[%c0_14, %c0_15] : memref<64x64xf32, #tpu.memory_space<vmem>>, vector<64x64xf32>
    tpu.vector_store %arg6[%c0_14, %c0_15], %30 {strides = array<i32>} : memref<64x64xf32, #tpu.memory_space<vmem>>, vector<64x64xf32>,
    return
  }
  func.func @transform_0(%arg0: i32) -> (i32, i32) {
    %c0_i32 = arith.constant 0 : i32
    %c0_i32_0 = arith.constant 0 : i32
    return %arg0, %c0_i32 : i32, i32
  }
  func.func @transform_1(%arg0: i32) -> (i32, i32) {
    %c0_i32 = arith.constant 0 : i32
    %c0_i32_0 = arith.constant 0 : i32
    %c0_i32_1 = arith.constant 0 : i32
    return %c0_i32, %c0_i32_0 : i32, i32
  }
  func.func @transform_2(%arg0: i32) -> (i32, i32) {
    %c0_i32 = arith.constant 0 : i32
    %c0_i32_0 = arith.constant 0 : i32
    %c0_i32_1 = arith.constant 0 : i32
    return %c0_i32, %c0_i32_0 : i32, i32
  }
  func.func @transform_3(%arg0: i32) -> (i32, i32) {
    %c0_i32 = arith.constant 0 : i32
    %c0_i32_0 = arith.constant 0 : i32
    %c0_i32_1 = arith.constant 0 : i32
    return %c0_i32, %c0_i32_0 : i32, i32
  }
  func.func @transform_4(%arg0: i32) -> (i32, i32) {
    %c0_i32 = arith.constant 0 : i32
    %c0_i32_0 = arith.constant 0 : i32
    %c0_i32_1 = arith.constant 0 : i32
    return %c0_i32, %c0_i32_0 : i32, i32
  }
  func.func @transform_5(%arg0: i32) -> (i32, i32) {
    %c0_i32 = arith.constant 0 : i32
    %c0_i32_0 = arith.constant 0 : i32
    return %arg0, %c0_i32 : i32, i32
  }
}

module attributes {stable_mosaic.version = 11 : i64} {
  func.func @_ts_mix_kernel(%arg0: i32, %arg1: memref<64x32xf32, #tpu.memory_space<vmem>>, %arg2: memref<64x32xf32, #tpu.memory_space<vmem>>, %arg3: memref<32x2xf32, #tpu.memory_space<vmem>>, %arg4: memref<32x2xf32, #tpu.memory_space<vmem>>, %arg5: memref<1x2xf32, #tpu.memory_space<vmem>>, %arg6: memref<64x32xf32, #tpu.memory_space<vmem>>) attributes {dimension_semantics = [#tpu.dimension_semantics<parallel>], iteration_bounds = array<i64: 1>, scalar_prefetch = 0 : i64, scratch_operands = 0 : i64, tpu.core_type = #tpu.core_type<tc>, window_params = [{transform_indices = @transform_0, window_bounds = array<i64: 64, 32>}, {transform_indices = @transform_1, window_bounds = array<i64: 64, 32>}, {pipeline_mode = #tpu.pipeline_mode<synchronous>, transform_indices = @transform_2, window_bounds = array<i64: 32, 2>}, {pipeline_mode = #tpu.pipeline_mode<synchronous>, transform_indices = @transform_3, window_bounds = array<i64: 32, 2>}, {pipeline_mode = #tpu.pipeline_mode<synchronous>, transform_indices = @transform_4, window_bounds = array<i64: 1, 2>}, {transform_indices = @transform_5, window_bounds = array<i64: 64, 32>}]} {
    %c0 = arith.constant 0 : index
    %c0_0 = arith.constant 0 : index
    %0 = vector.load %arg1[%c0, %c0_0] : memref<64x32xf32, #tpu.memory_space<vmem>>, vector<64x32xf32>
    %c0_1 = arith.constant 0 : index
    %c0_2 = arith.constant 0 : index
    %1 = vector.load %arg2[%c0_1, %c0_2] : memref<64x32xf32, #tpu.memory_space<vmem>>, vector<64x32xf32>
    %2 = arith.truncf %0 : vector<64x32xf32> to vector<64x32xbf16>
    %c0_3 = arith.constant 0 : index
    %c0_4 = arith.constant 0 : index
    %3 = vector.load %arg3[%c0_3, %c0_4] : memref<32x2xf32, #tpu.memory_space<vmem>>, vector<32x2xf32>
    %4 = arith.truncf %3 : vector<32x2xf32> to vector<32x2xbf16>
    %cst = arith.constant dense<0.000000e+00> : vector<64x2xf32>
    %5 = tpu.matmul %2, %4, %cst {dimension_numbers = #tpu.dot_dimension_numbers<[1], [0], [0], [1], [0, 0, 1, 1], [], []>} : vector<64x32xbf16>, vector<32x2xbf16>, vector<64x2xf32> -> vector<64x2xf32>
    %6 = arith.truncf %1 : vector<64x32xf32> to vector<64x32xbf16>
    %c0_5 = arith.constant 0 : index
    %c0_6 = arith.constant 0 : index
    %7 = vector.load %arg4[%c0_5, %c0_6] : memref<32x2xf32, #tpu.memory_space<vmem>>, vector<32x2xf32>
    %8 = arith.truncf %7 : vector<32x2xf32> to vector<32x2xbf16>
    %cst_7 = arith.constant dense<0.000000e+00> : vector<64x2xf32>
    %9 = tpu.matmul %6, %8, %cst_7 {dimension_numbers = #tpu.dot_dimension_numbers<[1], [0], [0], [1], [0, 0, 1, 1], [], []>} : vector<64x32xbf16>, vector<32x2xbf16>, vector<64x2xf32> -> vector<64x2xf32>
    %10 = arith.addf %5, %9 : vector<64x2xf32>
    %c0_8 = arith.constant 0 : index
    %c0_9 = arith.constant 0 : index
    %11 = vector.load %arg5[%c0_8, %c0_9] : memref<1x2xf32, #tpu.memory_space<vmem>>, vector<1x2xf32>
    %12 = vector.broadcast %11 : vector<1x2xf32> to vector<64x2xf32>
    %13 = arith.addf %10, %12 : vector<64x2xf32>
    %14 = vector.extract_strided_slice %13 {offsets = [0, 0], sizes = [64, 1], strides = [1, 1]} : vector<64x2xf32> to vector<64x1xf32>
    %15 = vector.extract_strided_slice %13 {offsets = [0, 1], sizes = [64, 1], strides = [1, 1]} : vector<64x2xf32> to vector<64x1xf32>
    %16 = arith.maximumf %14, %15 : vector<64x1xf32>
    %17 = arith.subf %14, %16 : vector<64x1xf32>
    %18 = math.exp %17 : vector<64x1xf32>
    %19 = arith.subf %15, %16 : vector<64x1xf32>
    %20 = math.exp %19 : vector<64x1xf32>
    %21 = arith.addf %18, %20 : vector<64x1xf32>
    %cst_10 = arith.constant 1.000000e+00 : f32
    %22 = vector.broadcast %cst_10 : f32 to vector<64x1xf32>
    %23 = arith.divf %22, %21 : vector<64x1xf32>
    %24 = arith.mulf %18, %23 : vector<64x1xf32>
    %25 = vector.broadcast %24 : vector<64x1xf32> to vector<64x32xf32>
    %26 = arith.mulf %0, %25 : vector<64x32xf32>
    %27 = arith.mulf %20, %23 : vector<64x1xf32>
    %28 = vector.broadcast %27 : vector<64x1xf32> to vector<64x32xf32>
    %29 = arith.mulf %1, %28 : vector<64x32xf32>
    %30 = arith.addf %26, %29 : vector<64x32xf32>
    %c0_11 = arith.constant 0 : index
    %c0_12 = arith.constant 0 : index
    %31 = vector.load %arg6[%c0_11, %c0_12] : memref<64x32xf32, #tpu.memory_space<vmem>>, vector<64x32xf32>
    tpu.vector_store %arg6[%c0_11, %c0_12], %30 {strides = array<i32>} : memref<64x32xf32, #tpu.memory_space<vmem>>, vector<64x32xf32>,
    return
  }
  func.func @transform_0(%arg0: i32) -> (i32, i32) {
    %c0_i32 = arith.constant 0 : i32
    %c0_i32_0 = arith.constant 0 : i32
    return %arg0, %c0_i32 : i32, i32
  }
  func.func @transform_1(%arg0: i32) -> (i32, i32) {
    %c0_i32 = arith.constant 0 : i32
    %c0_i32_0 = arith.constant 0 : i32
    return %arg0, %c0_i32 : i32, i32
  }
  func.func @transform_2(%arg0: i32) -> (i32, i32) {
    %c0_i32 = arith.constant 0 : i32
    %c0_i32_0 = arith.constant 0 : i32
    %c0_i32_1 = arith.constant 0 : i32
    return %c0_i32, %c0_i32_0 : i32, i32
  }
  func.func @transform_3(%arg0: i32) -> (i32, i32) {
    %c0_i32 = arith.constant 0 : i32
    %c0_i32_0 = arith.constant 0 : i32
    %c0_i32_1 = arith.constant 0 : i32
    return %c0_i32, %c0_i32_0 : i32, i32
  }
  func.func @transform_4(%arg0: i32) -> (i32, i32) {
    %c0_i32 = arith.constant 0 : i32
    %c0_i32_0 = arith.constant 0 : i32
    %c0_i32_1 = arith.constant 0 : i32
    return %c0_i32, %c0_i32_0 : i32, i32
  }
  func.func @transform_5(%arg0: i32) -> (i32, i32) {
    %c0_i32 = arith.constant 0 : i32
    %c0_i32_0 = arith.constant 0 : i32
    return %arg0, %c0_i32 : i32, i32
  }
}

</mosaic_0001>

<llo_original>
// kernel: _lambda_.43
$region0: #{_lambda_.43}
  #allocation0 [shape = 'u32[]', space=smem, size = 0x4, offset = 0x4, fixed_abs, tag = 'smem constant byte address 0x4 - core index']
  #allocation1 [shape = 'u32[144,128]{1,0:T(1,128)}', space=vmem, size = 0x12000, scoped, tag = 'internal scratch']
  %s0 = inlined_call_operand.vmem [shape: f32[64,32], index: 0, kind: input, shape index: {}]
  %s1 = inlined_call_operand.vmem [shape: f32[1,32], index: 1, kind: input, shape index: {}]
  %s2 = inlined_call_operand.vmem [shape: f32[1,32], index: 2, kind: input, shape index: {}]
  %s3 = inlined_call_operand.vmem [shape: f32[32,96], index: 3, kind: input, shape index: {}]
  %s4 = inlined_call_operand.vmem [shape: f32[1,96], index: 4, kind: input, shape index: {}]
  %s5 = inlined_call_operand.vmem [shape: f32[64,96], index: 5, kind: output, shape index: {}]
  %s6 = sld [smem:[#allocation0]]
  $region30: #{_lambda_.43} parent=0
    _
  %s8 = ssub.s32 1, %s6
  %s9 = scalar_select 0, %s8, %s6
  // Predicated region
  $region2: #{_lambda_.43} parent=0 // pred_check
    _
  $region3: #{_lambda_.43} parent=0 // pred_check_branch
    %11 = sbr.rel (0) target = $region5
  $region4: #{_lambda_.43} parent=0 // pred_region
    _
  $region5: #{_lambda_.43} parent=0 // pred_fallthru
    _
  // Predicated region
  $region6: #{_lambda_.43} parent=0 // pred_check
    _
  $region7: #{_lambda_.43} parent=0 // pred_check_branch
    %13 = sbr.rel (0) target = $region9
  $region8: #{_lambda_.43} parent=0 // pred_region
    _
  $region9: #{_lambda_.43} parent=0 // pred_fallthru
    _
  // Predicated region
  $region10: #{_lambda_.43} parent=0 // pred_check
    _
  $region11: #{_lambda_.43} parent=0 // pred_check_branch
    %15 = sbr.rel (0) target = $region13
  $region12: #{_lambda_.43} parent=0 // pred_region
    _
  $region13: #{_lambda_.43} parent=0 // pred_fallthru
    _
  // Predicated region
  $region14: #{_lambda_.43} parent=0 // pred_check
    _
  $region15: #{_lambda_.43} parent=0 // pred_check_branch
    %17 = sbr.rel (0) target = $region17
  $region16: #{_lambda_.43} parent=0 // pred_region
    _
  $region17: #{_lambda_.43} parent=0 // pred_fallthru
    _
  // Predicated region
  $region18: #{_lambda_.43} parent=0 // pred_check
    _
  $region19: #{_lambda_.43} parent=0 // pred_check_branch
    %19 = sbr.rel (0) target = $region21
  $region20: #{_lambda_.43} parent=0 // pred_region
    _
  $region21: #{_lambda_.43} parent=0 // pred_fallthru
    _
  %v21 = vld [vmem:[%s0] sm:$0xff]
  %v22 = vld [vmem:[%s0 + $0x8] sm:$0xff]
  %v23 = vld [vmem:[%s0 + $0x10] sm:$0xff]
  %v24 = vld [vmem:[%s0 + $0x18] sm:$0xff]
  %v25 = vld [vmem:[%s0 + $0x20] sm:$0xff]
  %v26 = vld [vmem:[%s0 + $0x28] sm:$0xff]
  %v27 = vld [vmem:[%s0 + $0x30] sm:$0xff]
  %v28 = vld [vmem:[%s0 + $0x38] sm:$0xff]
  %vm29 = vcmask 261120
  %v30 = vsel %vm29, %v21, 0.0
  %31 = vadd.xlane.f32.xlu0 %v30
  %v32 = vpop.xlane.xlu0 %31
  %v33 = vsel %vm29, %v22, 0.0
  %34 = vadd.xlane.f32.xlu0 %v33
  %v35 = vpop.xlane.xlu0 %34
  %v36 = vsel %vm29, %v23, 0.0
  %37 = vadd.xlane.f32.xlu0 %v36
  %v38 = vpop.xlane.xlu0 %37
  %v39 = vsel %vm29, %v24, 0.0
  %40 = vadd.xlane.f32.xlu0 %v39
  %v41 = vpop.xlane.xlu0 %40
  %v42 = vsel %vm29, %v25, 0.0
  %43 = vadd.xlane.f32.xlu0 %v42
  %v44 = vpop.xlane.xlu0 %43
  %v45 = vsel %vm29, %v26, 0.0
  %46 = vadd.xlane.f32.xlu0 %v45
  %v47 = vpop.xlane.xlu0 %46
  %v48 = vsel %vm29, %v27, 0.0
  %49 = vadd.xlane.f32.xlu0 %v48
  %v50 = vpop.xlane.xlu0 %49
  %v51 = vsel %vm29, %v28, 0.0
  %52 = vadd.xlane.f32.xlu0 %v51
  %v53 = vpop.xlane.xlu0 %52
  %v54 = vrcp.pop 32.0
  %v55 = vmul.f32 %v32, %v54
  %v56 = vmul.f32 %v35, %v54
  %v57 = vmul.f32 %v38, %v54
  %v58 = vmul.f32 %v41, %v54
  %v59 = vmul.f32 %v44, %v54
  %v60 = vmul.f32 %v47, %v54
  %v61 = vmul.f32 %v50, %v54
  %v62 = vmul.f32 %v53, %v54
  %v63 = vsub.f32 %v21, %v55
  %v64 = vsub.f32 %v22, %v56
  %v65 = vsub.f32 %v23, %v57
  %v66 = vsub.f32 %v24, %v58
  %v67 = vsub.f32 %v25, %v59
  %v68 = vsub.f32 %v26, %v60
  %v69 = vsub.f32 %v27, %v61
  %v70 = vsub.f32 %v28, %v62
  %v71 = vmul.f32 %v63, %v63
  %v72 = vmul.f32 %v64, %v64
  %v73 = vmul.f32 %v65, %v65
  %v74 = vmul.f32 %v66, %v66
  %v75 = vmul.f32 %v67, %v67
  %v76 = vmul.f32 %v68, %v68
  %v77 = vmul.f32 %v69, %v69
  %v78 = vmul.f32 %v70, %v70
  %v79 = vsel %vm29, %v71, 0.0
  %80 = vadd.xlane.f32.xlu0 %v79
  %v81 = vpop.xlane.xlu0 %80
  %v82 = vsel %vm29, %v72, 0.0
  %83 = vadd.xlane.f32.xlu0 %v82
  %v84 = vpop.xlane.xlu0 %83
  %v85 = vsel %vm29, %v73, 0.0
  %86 = vadd.xlane.f32.xlu0 %v85
  %v87 = vpop.xlane.xlu0 %86
  %v88 = vsel %vm29, %v74, 0.0
  %89 = vadd.xlane.f32.xlu0 %v88
  %v90 = vpop.xlane.xlu0 %89
  %v91 = vsel %vm29, %v75, 0.0
  %92 = vadd.xlane.f32.xlu0 %v91
  %v93 = vpop.xlane.xlu0 %92
  %v94 = vsel %vm29, %v76, 0.0
  %95 = vadd.xlane.f32.xlu0 %v94
  %v96 = vpop.xlane.xlu0 %95
  %v97 = vsel %vm29, %v77, 0.0
  %98 = vadd.xlane.f32.xlu0 %v97
  %v99 = vpop.xlane.xlu0 %98
  %v100 = vsel %vm29, %v78, 0.0
  %101 = vadd.xlane.f32.xlu0 %v100
  %v102 = vpop.xlane.xlu0 %101
  %v103 = vmul.f32 %v81, %v54
  %v104 = vmul.f32 %v84, %v54
  %v105 = vmul.f32 %v87, %v54
  %v106 = vmul.f32 %v90, %v54
  %v107 = vmul.f32 %v93, %v54
  %v108 = vmul.f32 %v96, %v54
  %v109 = vmul.f32 %v99, %v54
  %v110 = vmul.f32 %v102, %v54
  %v111 = vadd.f32 %v103, 1e-05
  %v112 = vadd.f32 %v104, 1e-05
  %v113 = vadd.f32 %v105, 1e-05
  %v114 = vadd.f32 %v106, 1e-05
  %v115 = vadd.f32 %v107, 1e-05
  %v116 = vadd.f32 %v108, 1e-05
  %v117 = vadd.f32 %v109, 1e-05
  %v118 = vadd.f32 %v110, 1e-05
  %v119 = vrsqrt.pop %v111
  %v120 = vrsqrt.pop %v112
  %v121 = vrsqrt.pop %v113
  %v122 = vrsqrt.pop %v114
  %v123 = vrsqrt.pop %v115
  %v124 = vrsqrt.pop %v116
  %v125 = vrsqrt.pop %v117
  %v126 = vrsqrt.pop %v118
  %v127 = vmul.f32 %v63, %v119
  %v128 = vmul.f32 %v64, %v120
  %v129 = vmul.f32 %v65, %v121
  %v130 = vmul.f32 %v66, %v122
  %v131 = vmul.f32 %v67, %v123
  %v132 = vmul.f32 %v68, %v124
  %v133 = vmul.f32 %v69, %v125
  %v134 = vmul.f32 %v70, %v126
  %v135 = vld [vmem:[%s1] sm:$0x1]
  %v137 = vlaneseq
  %v138 = vshrl.u32 %v137, 7
  %v139 = vsub.s32 0, %v138
  %v140 = vrot.slane %v135, %v139
  %v142 = vmul.f32 %v127, %v140
  %v143 = vmul.f32 %v128, %v140
  %v144 = vmul.f32 %v129, %v140
  %v145 = vmul.f32 %v130, %v140
  %v146 = vmul.f32 %v131, %v140
  %v147 = vmul.f32 %v132, %v140
  %v148 = vmul.f32 %v133, %v140
  %v149 = vmul.f32 %v134, %v140
  %v150 = vld [vmem:[%s2] sm:$0x1]
  %v152 = vlaneseq
  %v153 = vshrl.u32 %v152, 7
  %v154 = vsub.s32 0, %v153
  %v155 = vrot.slane %v150, %v154
  %v157 = vadd.f32 %v142, %v155
  %v158 = vadd.f32 %v143, %v155
  %v159 = vadd.f32 %v144, %v155
  %v160 = vadd.f32 %v145, %v155
  %v161 = vadd.f32 %v146, %v155
  %v162 = vadd.f32 %v147, %v155
  %v163 = vadd.f32 %v148, %v155
  %v164 = vadd.f32 %v149, %v155
  %v165 = vpack.c.bf16 %v158, %v157
  %v166 = vpack.c.bf16 %v160, %v159
  %v167 = vpack.c.bf16 %v162, %v161
  %v168 = vpack.c.bf16 %v164, %v163
  %v169 = vld [vmem:[%s3] sm:$0xff]
  %v170 = vld [vmem:[%s3 + $0x8] sm:$0xff]
  %v171 = vld [vmem:[%s3 + $0x10] sm:$0xff]
  %v172 = vld [vmem:[%s3 + $0x18] sm:$0xff]
  %v173 = vpack.c.bf16 %v170, %v169
  %v174 = vpack.c.bf16 %v172, %v171
  %v175 = vld [vmem:[%s4] sm:$0x1]
  %v177 = vlaneseq
  %v178 = vshrl.u32 %v177, 7
  %v179 = vsub.s32 0, %v178
  %v180 = vrot.slane %v175, %v179
  %v183 = vsel %vm29, %v165, 0
  %v186 = vsel %vm29, %v166, 0
  %v189 = vsel %vm29, %v167, 0
  %v192 = vsel %vm29, %v168, 0
  %194 = vmatprep.subr.bf16.mxu0 0
  %195 = vmatpush1.bf16.msra.mxu0 0
  %196 = vmatprep.subr.bf16.mxu0 0
  %197 = vmatpush1.bf16.msra.mxu0 0
  %198 = vmatprep.subr.bf16.mxu0 0
  %199 = vmatpush1.bf16.msra.mxu0 0
  %200 = vmatprep.subr.bf16.mxu0 0
  %201 = vmatpush1.bf16.msra.mxu0 0
  %202 = vmatprep.subr.bf16.mxu0 0
  %203 = vmatpush1.bf16.msra.mxu0 0
  %204 = vmatprep.subr.bf16.mxu0 0
  %205 = vmatpush1.bf16.msra.mxu0 0
  %206 = vmatprep.subr.bf16.mxu0 0
  %207 = vmatpush1.bf16.msra.mxu0 %v174
  %208 = vmatprep.subr.bf16.mxu0 0
  %209 = vmatpush1.bf16.msra.mxu0 %v173
  %210 = vmatprep.subr.bf16.mxu0 0
  %211 = vmatpush2.bf16.msra.mxu0 0
  %212 = vmatprep.subr.bf16.mxu0 0
  %213 = vmatpush2.bf16.msra.mxu0 0
  %214 = vmatprep.subr.bf16.mxu0 0
  %215 = vmatpush2.bf16.msra.mxu0 0
  %216 = vmatprep.subr.bf16.mxu0 0
  %217 = vmatpush2.bf16.msra.mxu0 0
  %218 = vmatprep.subr.bf16.mxu0 0
  %219 = vmatpush2.bf16.msra.mxu0 0
  %220 = vmatprep.subr.bf16.mxu0 0
  %221 = vmatpush2.bf16.msra.mxu0 0
  %222 = vmatprep.subr.bf16.mxu0 0
  %223 = vmatpush2.bf16.msra.mxu0 0
  %224 = vmatprep.subr.bf16.mxu0 0
  %225 = vmatpush2.bf16.msra.mxu0 0
  %226 = vmatprep.mubr.bf16.mxu0 0
  %227 = vmatmul.mubr.bf16.gmra.mxu0 %v183
  %v228 = vpop.f32.mrf.mxu0
  %v229 = vadd.f32 %v180, %v228
  %v230 = vpop.f32.mrf.mxu0
  %v231 = vpop.f32.mrf.mxu0
  %v232 = vadd.f32 %v180, %v231
  %v233 = vpop.f32.mrf.mxu0
  %234 = vmatprep.mubr.bf16.mxu0 0
  %235 = vmatmul.mubr.bf16.gmra.mxu0 %v186
  %v236 = vpop.f32.mrf.mxu0
  %v237 = vadd.f32 %v180, %v236
  %v238 = vpop.f32.mrf.mxu0
  %v239 = vpop.f32.mrf.mxu0
  %v240 = vadd.f32 %v180, %v239
  %v241 = vpop.f32.mrf.mxu0
  %242 = vmatprep.mubr.bf16.mxu0 0
  %243 = vmatmul.mubr.bf16.gmra.mxu0 %v189
  %v244 = vpop.f32.mrf.mxu0
  %v245 = vadd.f32 %v180, %v244
  %v246 = vpop.f32.mrf.mxu0
  %v247 = vpop.f32.mrf.mxu0
  %v248 = vadd.f32 %v180, %v247
  %v249 = vpop.f32.mrf.mxu0
  %250 = vmatprep.mubr.bf16.mxu0 0
  %251 = vmatmul.mubr.bf16.gmra.mxu0 %v192
  %v252 = vpop.f32.mrf.mxu0
  %v253 = vadd.f32 %v180, %v252
  %v254 = vpop.f32.mrf.mxu0
  %v255 = vpop.f32.mrf.mxu0
  %v256 = vadd.f32 %v180, %v255
  %v257 = vpop.f32.mrf.mxu0
  %258 = vdwg.mxu0
  %vm259 = vcmask 785408
  %260 = vst.msk [vmem:[%s5] sm:$0xff] %vm259, %v229
  %261 = vst.msk [vmem:[%s5 + $0x8] sm:$0xff] %vm259, %v232
  %262 = vst.msk [vmem:[%s5 + $0x10] sm:$0xff] %vm259, %v237
  %263 = vst.msk [vmem:[%s5 + $0x18] sm:$0xff] %vm259, %v240
  %264 = vst.msk [vmem:[%s5 + $0x20] sm:$0xff] %vm259, %v245
  %265 = vst.msk [vmem:[%s5 + $0x28] sm:$0xff] %vm259, %v248
  %266 = vst.msk [vmem:[%s5 + $0x30] sm:$0xff] %vm259, %v253
  %267 = vst.msk [vmem:[%s5 + $0x38] sm:$0xff] %vm259, %v256
  // Predicated region
  $region22: #{_lambda_.43} parent=0 // pred_check
    _
  $region23: #{_lambda_.43} parent=0 // pred_check_branch
    %269 = sbr.rel (0) target = $region25
  $region24: #{_lambda_.43} parent=0 // pred_region
    _
  $region25: #{_lambda_.43} parent=0 // pred_fallthru
    _
  // Predicated region
  $region26: #{_lambda_.43} parent=0 // pred_check
    _
  $region27: #{_lambda_.43} parent=0 // pred_check_branch
    %271 = sbr.rel (0) target = $region29
  $region28: #{_lambda_.43} parent=0 // pred_region
    _
  $region29: #{_lambda_.43} parent=0 // pred_fallthru
    _

// kernel: _lambda_.45
$region0: #{_lambda_.45}
  #allocation0 [shape = 'u32[]', space=smem, size = 0x4, offset = 0x4, fixed_abs, tag = 'smem constant byte address 0x4 - core index']
  #allocation1 [shape = 'u32[144,128]{1,0:T(1,128)}', space=vmem, size = 0x12000, scoped, tag = 'internal scratch']
  %s0 = inlined_call_operand.vmem [shape: f32[64,32], index: 0, kind: input, shape index: {}]
  %s1 = inlined_call_operand.vmem [shape: f32[32,32], index: 1, kind: input, shape index: {}]
  %s2 = inlined_call_operand.vmem [shape: f32[1,32], index: 2, kind: input, shape index: {}]
  %s3 = inlined_call_operand.vmem [shape: f32[64,32], index: 3, kind: output, shape index: {}]
  %s4 = sld [smem:[#allocation0]]
  $region22: #{_lambda_.45} parent=0
    _
  %s6 = ssub.s32 1, %s4
  %s7 = scalar_select 0, %s6, %s4
  // Predicated region
  $region2: #{_lambda_.45} parent=0 // pred_check
    _
  $region3: #{_lambda_.45} parent=0 // pred_check_branch
    %9 = sbr.rel (0) target = $region5
  $region4: #{_lambda_.45} parent=0 // pred_region
    _
  $region5: #{_lambda_.45} parent=0 // pred_fallthru
    _
  // Predicated region
  $region6: #{_lambda_.45} parent=0 // pred_check
    _
  $region7: #{_lambda_.45} parent=0 // pred_check_branch
    %11 = sbr.rel (0) target = $region9
  $region8: #{_lambda_.45} parent=0 // pred_region
    _
  $region9: #{_lambda_.45} parent=0 // pred_fallthru
    _
  // Predicated region
  $region10: #{_lambda_.45} parent=0 // pred_check
    _
  $region11: #{_lambda_.45} parent=0 // pred_check_branch
    %13 = sbr.rel (0) target = $region13
  $region12: #{_lambda_.45} parent=0 // pred_region
    _
  $region13: #{_lambda_.45} parent=0 // pred_fallthru
    _
  %v15 = vld [vmem:[%s0] sm:$0xff]
  %v16 = vld [vmem:[%s0 + $0x8] sm:$0xff]
  %v17 = vld [vmem:[%s0 + $0x10] sm:$0xff]
  %v18 = vld [vmem:[%s0 + $0x18] sm:$0xff]
  %v19 = vld [vmem:[%s0 + $0x20] sm:$0xff]
  %v20 = vld [vmem:[%s0 + $0x28] sm:$0xff]
  %v21 = vld [vmem:[%s0 + $0x30] sm:$0xff]
  %v22 = vld [vmem:[%s0 + $0x38] sm:$0xff]
  %v23 = vpack.c.bf16 %v16, %v15
  %v24 = vpack.c.bf16 %v18, %v17
  %v25 = vpack.c.bf16 %v20, %v19
  %v26 = vpack.c.bf16 %v22, %v21
  %v27 = vld [vmem:[%s1] sm:$0xff]
  %v28 = vld [vmem:[%s1 + $0x8] sm:$0xff]
  %v29 = vld [vmem:[%s1 + $0x10] sm:$0xff]
  %v30 = vld [vmem:[%s1 + $0x18] sm:$0xff]
  %v31 = vpack.c.bf16 %v28, %v27
  %v32 = vpack.c.bf16 %v30, %v29
  %v33 = vld [vmem:[%s2] sm:$0x1]
  %v35 = vlaneseq
  %v36 = vshrl.u32 %v35, 7
  %v37 = vsub.s32 0, %v36
  %v38 = vrot.slane %v33, %v37
  %vm40 = vcmask 261120
  %v42 = vsel %vm40, %v23, 0
  %v45 = vsel %vm40, %v24, 0
  %v48 = vsel %vm40, %v25, 0
  %v51 = vsel %vm40, %v26, 0
  %53 = vmatprep.subr.bf16.mxu0 0
  %54 = vmatpush1.bf16.msra.mxu0 0
  %55 = vmatprep.subr.bf16.mxu0 0
  %56 = vmatpush1.bf16.msra.mxu0 0
  %57 = vmatprep.subr.bf16.mxu0 0
  %58 = vmatpush1.bf16.msra.mxu0 0
  %59 = vmatprep.subr.bf16.mxu0 0
  %60 = vmatpush1.bf16.msra.mxu0 0
  %61 = vmatprep.subr.bf16.mxu0 0
  %62 = vmatpush1.bf16.msra.mxu0 0
  %63 = vmatprep.subr.bf16.mxu0 0
  %64 = vmatpush1.bf16.msra.mxu0 0
  %65 = vmatprep.subr.bf16.mxu0 0
  %66 = vmatpush1.bf16.msra.mxu0 %v32
  %67 = vmatprep.subr.bf16.mxu0 0
  %68 = vmatpush1.bf16.msra.mxu0 %v31
  %69 = vmatprep.subr.bf16.mxu0 0
  %70 = vmatpush2.bf16.msra.mxu0 0
  %71 = vmatprep.subr.bf16.mxu0 0
  %72 = vmatpush2.bf16.msra.mxu0 0
  %73 = vmatprep.subr.bf16.mxu0 0
  %74 = vmatpush2.bf16.msra.mxu0 0
  %75 = vmatprep.subr.bf16.mxu0 0
  %76 = vmatpush2.bf16.msra.mxu0 0
  %77 = vmatprep.subr.bf16.mxu0 0
  %78 = vmatpush2.bf16.msra.mxu0 0
  %79 = vmatprep.subr.bf16.mxu0 0
  %80 = vmatpush2.bf16.msra.mxu0 0
  %81 = vmatprep.subr.bf16.mxu0 0
  %82 = vmatpush2.bf16.msra.mxu0 0
  %83 = vmatprep.subr.bf16.mxu0 0
  %84 = vmatpush2.bf16.msra.mxu0 0
  %85 = vmatprep.mubr.bf16.mxu0 0
  %86 = vmatmul.mubr.bf16.gmra.mxu0 %v42
  %v87 = vpop.f32.mrf.mxu0
  %v88 = vadd.f32 %v38, %v87
  %v89 = vpop.f32.mrf.mxu0
  %v90 = vpop.f32.mrf.mxu0
  %v91 = vadd.f32 %v38, %v90
  %v92 = vpop.f32.mrf.mxu0
  %93 = vmatprep.mubr.bf16.mxu0 0
  %94 = vmatmul.mubr.bf16.gmra.mxu0 %v45
  %v95 = vpop.f32.mrf.mxu0
  %v96 = vadd.f32 %v38, %v95
  %v97 = vpop.f32.mrf.mxu0
  %v98 = vpop.f32.mrf.mxu0
  %v99 = vadd.f32 %v38, %v98
  %v100 = vpop.f32.mrf.mxu0
  %101 = vmatprep.mubr.bf16.mxu0 0
  %102 = vmatmul.mubr.bf16.gmra.mxu0 %v48
  %v103 = vpop.f32.mrf.mxu0
  %v104 = vadd.f32 %v38, %v103
  %v105 = vpop.f32.mrf.mxu0
  %v106 = vpop.f32.mrf.mxu0
  %v107 = vadd.f32 %v38, %v106
  %v108 = vpop.f32.mrf.mxu0
  %109 = vmatprep.mubr.bf16.mxu0 0
  %110 = vmatmul.mubr.bf16.gmra.mxu0 %v51
  %v111 = vpop.f32.mrf.mxu0
  %v112 = vadd.f32 %v38, %v111
  %v113 = vpop.f32.mrf.mxu0
  %v114 = vpop.f32.mrf.mxu0
  %v115 = vadd.f32 %v38, %v114
  %v116 = vpop.f32.mrf.mxu0
  %117 = vdwg.mxu0
  %118 = vst.msk [vmem:[%s3] sm:$0xff] %vm40, %v88
  %119 = vst.msk [vmem:[%s3 + $0x8] sm:$0xff] %vm40, %v91
  %120 = vst.msk [vmem:[%s3 + $0x10] sm:$0xff] %vm40, %v96
  %121 = vst.msk [vmem:[%s3 + $0x18] sm:$0xff] %vm40, %v99
  %122 = vst.msk [vmem:[%s3 + $0x20] sm:$0xff] %vm40, %v104
  %123 = vst.msk [vmem:[%s3 + $0x28] sm:$0xff] %vm40, %v107
  %124 = vst.msk [vmem:[%s3 + $0x30] sm:$0xff] %vm40, %v112
  %125 = vst.msk [vmem:[%s3 + $0x38] sm:$0xff] %vm40, %v115
  // Predicated region
  $region14: #{_lambda_.45} parent=0 // pred_check
    _
  $region15: #{_lambda_.45} parent=0 // pred_check_branch
    %127 = sbr.rel (0) target = $region17
  $region16: #{_lambda_.45} parent=0 // pred_region
    _
  $region17: #{_lambda_.45} parent=0 // pred_fallthru
    _
  // Predicated region
  $region18: #{_lambda_.45} parent=0 // pred_check
    _
  $region19: #{_lambda_.45} parent=0 // pred_check_branch
    %129 = sbr.rel (0) target = $region21
  $region20: #{_lambda_.45} parent=0 // pred_region
    _
  $region21: #{_lambda_.45} parent=0 // pred_fallthru
    _

// kernel: _lambda_.44
$region0: #{_lambda_.44}
  #allocation0 [shape = 'u32[]', space=smem, size = 0x4, offset = 0x4, fixed_abs, tag = 'smem constant byte address 0x4 - core index']
  #allocation1 [shape = 'u32[144,128]{1,0:T(1,128)}', space=vmem, size = 0x12000, scoped, tag = 'internal scratch']
  %s0 = inlined_call_operand.vmem [shape: f32[32,8,8], index: 0, kind: input, shape index: {}]
  %s1 = inlined_call_operand.vmem [shape: f32[32,8,8], index: 1, kind: input, shape index: {}]
  %s2 = inlined_call_operand.vmem [shape: f32[32,8,8], index: 2, kind: input, shape index: {}]
  %s3 = inlined_call_operand.vmem [shape: f32[32,8,8], index: 3, kind: output, shape index: {}]
  %s4 = sld [smem:[#allocation0]]
  $region45: #{_lambda_.44} parent=0
    _
  %s6 = ssub.s32 1, %s4
  %s7 = scalar_select 0, %s6, %s4
  loop: start=0, step=1, limit=4
  $region2: #{_lambda_.44} parent=0 // loop_pre_header
    _
  $region3: #{_lambda_.44} parent=0 // loop_header
    %s9 = sphi 0, %s13
    %p10 = scmp.ge.s32.totalorder %s9, 4
    %s19 = sphi 0, %s21
    %s22 = sphi 0, %s19
    %s23 = sphi 0, %s22
    %s39 = sphi 0, %s23
    %s45 = sphi 0, %s47
    %s48 = sphi 0, %s45
    %s49 = sphi 0, %s48
    %s65 = sphi 0, %s49
    %s71 = sphi 0, %s73
    %s74 = sphi 0, %s71
    %s75 = sphi 0, %s74
    %s91 = sphi 0, %s75
    %s97 = sphi 0, %s99
    %s100 = sphi 0, %s97
    %s101 = sphi 0, %s100
    %s117 = sphi 0, %s101
  $region4: #{_lambda_.44} parent=0 // loop_header_branch
    %12 = sbr.rel (%p10) target = $region8
  $region5: #{_lambda_.44} parent=0 // loop_body
    %s14 = ssub.s32 %s9, 1
    %s15 = ssub.s32 %s9, 2
    %s16 = sadd.s32 %s9, 1
    %s17 = ssub.s32 %s9, %s16
    %p18 = scmp.eq.s32.totalorder %s17, 0
    %s20 = sadd.s32 %s19, 1
    %s21 = scalar_select %p18, %s19, %s20
    %p24 = pneg %p18
    %p25 = scmp.eq.s32.totalorder %s9, 1
    %p26 = por %p24, %p25
    %p27 = scmp.ne.s32.totalorder %s19, %s22
    %p28 = scmp.eq.s32.totalorder %s9, 0
    %p29 = por %p27, %p28
    %p30 = scmp.ne.s32.totalorder %s19, %s22
    %p31 = scmp.eq.s32.totalorder %s14, 1
    %p32 = por %p30, %p31
    %p33 = scmp.ne.s32.totalorder %s22, %s23
    %p34 = scmp.eq.s32.totalorder %s14, 0
    %p35 = por %p33, %p34
    %p36 = scmp.ne.s32.totalorder %s22, %s23
    %p37 = scmp.eq.s32.totalorder %s15, 1
    %p38 = por %p36, %p37
    %p40 = scmp.ne.s32.totalorder %s23, %s39
    %p41 = scmp.eq.s32.totalorder %s15, 0
    %p42 = por %p40, %p41
    %s43 = ssub.s32 %s9, %s16
    %p44 = scmp.eq.s32.totalorder %s43, 0
    %s46 = sadd.s32 %s45, 1
    %s47 = scalar_select %p44, %s45, %s46
    %p50 = pneg %p44
    %p51 = scmp.eq.s32.totalorder %s9, 1
    %p52 = por %p50, %p51
    %p53 = scmp.ne.s32.totalorder %s45, %s48
    %p54 = scmp.eq.s32.totalorder %s9, 0
    %p55 = por %p53, %p54
    %p56 = scmp.ne.s32.totalorder %s45, %s48
    %p57 = scmp.eq.s32.totalorder %s14, 1
    %p58 = por %p56, %p57
    %p59 = scmp.ne.s32.totalorder %s48, %s49
    %p60 = scmp.eq.s32.totalorder %s14, 0
    %p61 = por %p59, %p60
    %p62 = scmp.ne.s32.totalorder %s48, %s49
    %p63 = scmp.eq.s32.totalorder %s15, 1
    %p64 = por %p62, %p63
    %p66 = scmp.ne.s32.totalorder %s49, %s65
    %p67 = scmp.eq.s32.totalorder %s15, 0
    %p68 = por %p66, %p67
    %s69 = ssub.s32 %s9, %s16
    %p70 = scmp.eq.s32.totalorder %s69, 0
    %s72 = sadd.s32 %s71, 1
    %s73 = scalar_select %p70, %s71, %s72
    %p76 = pneg %p70
    %p77 = scmp.eq.s32.totalorder %s9, 1
    %p78 = por %p76, %p77
    %p79 = scmp.ne.s32.totalorder %s71, %s74
    %p80 = scmp.eq.s32.totalorder %s9, 0
    %p81 = por %p79, %p80
    %p82 = scmp.ne.s32.totalorder %s71, %s74
    %p83 = scmp.eq.s32.totalorder %s14, 1
    %p84 = por %p82, %p83
    %p85 = scmp.ne.s32.totalorder %s74, %s75
    %p86 = scmp.eq.s32.totalorder %s14, 0
    %p87 = por %p85, %p86
    %p88 = scmp.ne.s32.totalorder %s74, %s75
    %p89 = scmp.eq.s32.totalorder %s15, 1
    %p90 = por %p88, %p89
    %p92 = scmp.ne.s32.totalorder %s75, %s91
    %p93 = scmp.eq.s32.totalorder %s15, 0
    %p94 = por %p92, %p93
    %s95 = ssub.s32 %s9, %s16
    %p96 = scmp.eq.s32.totalorder %s95, 0
    %s98 = sadd.s32 %s97, 1
    %s99 = scalar_select %p96, %s97, %s98
    %p102 = pneg %p96
    %p103 = scmp.eq.s32.totalorder %s9, 1
    %p104 = por %p102, %p103
    %p105 = scmp.ne.s32.totalorder %s97, %s100
    %p106 = scmp.eq.s32.totalorder %s9, 0
    %p107 = por %p105, %p106
    %p108 = scmp.ne.s32.totalorder %s97, %s100
    %p109 = scmp.eq.s32.totalorder %s14, 1
    %p110 = por %p108, %p109
    %p111 = scmp.ne.s32.totalorder %s100, %s101
    %p112 = scmp.eq.s32.totalorder %s14, 0
    %p113 = por %p111, %p112
    %p114 = scmp.ne.s32.totalorder %s100, %s101
    %p115 = scmp.eq.s32.totalorder %s15, 1
    %p116 = por %p114, %p115
    %p118 = scmp.ne.s32.totalorder %s101, %s117
    %p119 = scmp.eq.s32.totalorder %s15, 0
    %p120 = por %p118, %p119
    %p121 = scmp.le.s32.totalorder 1, %s9
    %p122 = scmp.lt.s32.totalorder %s9, 3
    %p123 = pnand %p121, %p122
    %p124 = pneg %p123
    // Predicated region
    $region9: #{_lambda_.44} parent=5 // pred_check
      _
    $region10: #{_lambda_.44} parent=5 // pred_check_branch
      %126 = sbr.rel (%p123) target = $region12
    $region11: #{_lambda_.44} parent=5 // pred_region
      %s127 = ssub.s32 %s9, 1
    $region12: #{_lambda_.44} parent=5 // pred_fallthru
      _
    %p128 = scmp.lt.s32.totalorder %s9, 2
    // Predicated region
    $region13: #{_lambda_.44} parent=5 // pred_check
      %p129 = pneg %p128
    $region14: #{_lambda_.44} parent=5 // pred_check_branch
      %131 = sbr.rel (%p129) target = $region16
    $region15: #{_lambda_.44} parent=5 // pred_region
      // Predicated region
      $region17: #{_lambda_.44} parent=15 // pred_check
        %p132 = pneg %p29
      $region18: #{_lambda_.44} parent=15 // pred_check_branch
        %134 = sbr.rel (%p132) target = $region20
      $region19: #{_lambda_.44} parent=15 // pred_region
        %s135 = smul.u32 16, %s9
        %p136 = scmp.lt.s32.totalorder %s135, 31
        %s137 = scalar_select %p136, %s135, 31
        %s138 = smul.addr %s137, 8
        %s139 = scalar_lea.vmem %s0, %s138
        %s140 = smul.u32 16, %s9
      $region20: #{_lambda_.44} parent=15 // pred_fallthru
        _
      // Predicated region
      $region21: #{_lambda_.44} parent=15 // pred_check
        %p141 = pneg %p55
      $region22: #{_lambda_.44} parent=15 // pred_check_branch
        %143 = sbr.rel (%p141) target = $region24
      $region23: #{_lambda_.44} parent=15 // pred_region
        %s144 = smul.u32 16, %s9
        %p145 = scmp.lt.s32.totalorder %s144, 31
        %s146 = scalar_select %p145, %s144, 31
        %s147 = smul.addr %s146, 8
        %s148 = scalar_lea.vmem %s1, %s147
        %s149 = smul.u32 16, %s9
      $region24: #{_lambda_.44} parent=15 // pred_fallthru
        _
      // Predicated region
      $region25: #{_lambda_.44} parent=15 // pred_check
        %p150 = pneg %p81
      $region26: #{_lambda_.44} parent=15 // pred_check_branch
        %152 = sbr.rel (%p150) target = $region28
      $region27: #{_lambda_.44} parent=15 // pred_region
        %s153 = smul.u32 16, %s9
        %p154 = scmp.lt.s32.totalorder %s153, 31
        %s155 = scalar_select %p154, %s153, 31
        %s156 = smul.addr %s155, 8
        %s157 = scalar_lea.vmem %s2, %s156
        %s158 = smul.u32 16, %s9
      $region28: #{_lambda_.44} parent=15 // pred_fallthru
        _
    $region16: #{_lambda_.44} parent=5 // pred_fallthru
      _
    %p159 = scmp.le.s32.totalorder 1, %s9
    %p160 = scmp.lt.s32.totalorder %s9, 3
    %p161 = pnand %p159, %p160
    %p162 = pneg %p161
    // Predicated region
    $region29: #{_lambda_.44} parent=5 // pred_check
      _
    $region30: #{_lambda_.44} parent=5 // pred_check_branch
      %164 = sbr.rel (%p161) target = $region32
    $region31: #{_lambda_.44} parent=5 // pred_region
      %s165 = ssub.s32 %s9, 1
      %s166 = smul.u32 16, %s14
      %p167 = scmp.lt.s32.totalorder %s166, 31
      %s168 = scalar_select %p167, %s166, 31
      %s169 = smul.addr %s168, 8
      %s170 = scalar_lea.vmem %s0, %s169
      %p171 = pneg %p35
      %p172 = pneg %p32
      %s173 = smul.u32 16, %s14
      %p174 = scmp.lt.s32.totalorder %s173, 31
      %s175 = scalar_select %p174, %s173, 31
      %s176 = smul.addr %s175, 8
      %s177 = scalar_lea.vmem %s1, %s176
      %p178 = pneg %p61
      %p179 = pneg %p58
      %s180 = smul.u32 16, %s14
      %p181 = scmp.lt.s32.totalorder %s180, 31
      %s182 = scalar_select %p181, %s180, 31
      %s183 = smul.addr %s182, 8
      %s184 = scalar_lea.vmem %s2, %s183
      %p185 = pneg %p87
      %p186 = pneg %p84
      %p187 = pneg %p113
      %p188 = pneg %p110
      %s189 = smul.u32 16, %s14
      %p190 = scmp.lt.s32.totalorder %s189, 31
      %s191 = scalar_select %p190, %s189, 31
      %s192 = smul.addr %s191, 8
      %s193 = scalar_lea.vmem %s3, %s192
      %s194 = smul.u32 16, %s14
      %p195 = scmp.lt.s32.totalorder %s194, 31
      %s196 = scalar_select %p195, %s194, 31
      %s197 = smul.addr %s196, 8
      %s198 = scalar_lea.vmem %s0, %s197
      %s199 = smul.u32 16, %s14
      %s200 = smul.u32 16, %s14
      %p201 = scmp.lt.s32.totalorder %s200, 31
      %s202 = scalar_select %p201, %s200, 31
      %s203 = smul.addr %s202, 8
      %s204 = scalar_lea.vmem %s1, %s203
      %s205 = smul.u32 16, %s14
      %s206 = smul.u32 16, %s14
      %p207 = scmp.lt.s32.totalorder %s206, 31
      %s208 = scalar_select %p207, %s206, 31
      %s209 = smul.addr %s208, 8
      %s210 = scalar_lea.vmem %s2, %s209
      %s211 = smul.u32 16, %s14
      %s212 = smul.u32 16, %s14
      %p213 = scmp.lt.s32.totalorder %s212, 31
      %s214 = scalar_select %p213, %s212, 31
      %s215 = smul.addr %s214, 8
      %s216 = scalar_lea.vmem %s3, %s215
      %s217 = smul.u32 16, %s14
      %v219 = vld [vmem:[%s198] sm:$0xff]
      %v220 = vld [vmem:[%s198 + $0x8] sm:$0xff]
      %v221 = vld [vmem:[%s198 + $0x10] sm:$0xff]
      %v222 = vld [vmem:[%s198 + $0x18] sm:$0xff]
      %v223 = vld [vmem:[%s198 + $0x20] sm:$0xff]
      %v224 = vld [vmem:[%s198 + $0x28] sm:$0xff]
      %v225 = vld [vmem:[%s198 + $0x30] sm:$0xff]
      %v226 = vld [vmem:[%s198 + $0x38] sm:$0xff]
      %v227 = vld [vmem:[%s198 + $0x40] sm:$0xff]
      %v228 = vld [vmem:[%s198 + $0x48] sm:$0xff]
      %v229 = vld [vmem:[%s198 + $0x50] sm:$0xff]
      %v230 = vld [vmem:[%s198 + $0x58] sm:$0xff]
      %v231 = vld [vmem:[%s198 + $0x60] sm:$0xff]
      %v232 = vld [vmem:[%s198 + $0x68] sm:$0xff]
      %v233 = vld [vmem:[%s198 + $0x70] sm:$0xff]
      %v234 = vld [vmem:[%s198 + $0x78] sm:$0xff]
      %v235 = vmul.f32 %v219, 0.35355338
      %v236 = vmul.f32 %v220, 0.35355338
      %v237 = vmul.f32 %v221, 0.35355338
      %v238 = vmul.f32 %v222, 0.35355338
      %v239 = vmul.f32 %v223, 0.35355338
      %v240 = vmul.f32 %v224, 0.35355338
      %v241 = vmul.f32 %v225, 0.35355338
      %v242 = vmul.f32 %v226, 0.35355338
      %v243 = vmul.f32 %v227, 0.35355338
      %v244 = vmul.f32 %v228, 0.35355338
      %v245 = vmul.f32 %v229, 0.35355338
      %v246 = vmul.f32 %v230, 0.35355338
      %v247 = vmul.f32 %v231, 0.35355338
      %v248 = vmul.f32 %v232, 0.35355338
      %v249 = vmul.f32 %v233, 0.35355338
      %v250 = vmul.f32 %v234, 0.35355338
      %v251 = vld [vmem:[%s204] sm:$0xff]
      %v252 = vld [vmem:[%s204 + $0x8] sm:$0xff]
      %v253 = vld [vmem:[%s204 + $0x10] sm:$0xff]
      %v254 = vld [vmem:[%s204 + $0x18] sm:$0xff]
      %v255 = vld [vmem:[%s204 + $0x20] sm:$0xff]
      %v256 = vld [vmem:[%s204 + $0x28] sm:$0xff]
      %v257 = vld [vmem:[%s204 + $0x30] sm:$0xff]
      %v258 = vld [vmem:[%s204 + $0x38] sm:$0xff]
      %v259 = vld [vmem:[%s204 + $0x40] sm:$0xff]
      %v260 = vld [vmem:[%s204 + $0x48] sm:$0xff]
      %v261 = vld [vmem:[%s204 + $0x50] sm:$0xff]
      %v262 = vld [vmem:[%s204 + $0x58] sm:$0xff]
      %v263 = vld [vmem:[%s204 + $0x60] sm:$0xff]
      %v264 = vld [vmem:[%s204 + $0x68] sm:$0xff]
      %v265 = vld [vmem:[%s204 + $0x70] sm:$0xff]
      %v266 = vld [vmem:[%s204 + $0x78] sm:$0xff]
      %v267 = vld [vmem:[%s210] sm:$0xff]
      %v268 = vld [vmem:[%s210 + $0x8] sm:$0xff]
      %v269 = vld [vmem:[%s210 + $0x10] sm:$0xff]
      %v270 = vld [vmem:[%s210 + $0x18] sm:$0xff]
      %v271 = vld [vmem:[%s210 + $0x20] sm:$0xff]
      %v272 = vld [vmem:[%s210 + $0x28] sm:$0xff]
      %v273 = vld [vmem:[%s210 + $0x30] sm:$0xff]
      %v274 = vld [vmem:[%s210 + $0x38] sm:$0xff]
      %v275 = vld [vmem:[%s210 + $0x40] sm:$0xff]
      %v276 = vld [vmem:[%s210 + $0x48] sm:$0xff]
      %v277 = vld [vmem:[%s210 + $0x50] sm:$0xff]
      %v278 = vld [vmem:[%s210 + $0x58] sm:$0xff]
      %v279 = vld [vmem:[%s210 + $0x60] sm:$0xff]
      %v280 = vld [vmem:[%s210 + $0x68] sm:$0xff]
      %v281 = vld [vmem:[%s210 + $0x70] sm:$0xff]
      %v282 = vld [vmem:[%s210 + $0x78] sm:$0xff]
      %v283 = vpack.c.bf16 %v235, %v235
      %v284 = vpack.c.bf16 %v236, %v236
      %v285 = vpack.c.bf16 %v237, %v237
      %v286 = vpack.c.bf16 %v238, %v238
      %v287 = vpack.c.bf16 %v239, %v239
      %v288 = vpack.c.bf16 %v240, %v240
      %v289 = vpack.c.bf16 %v241, %v241
      %v290 = vpack.c.bf16 %v242, %v242
      %v291 = vpack.c.bf16 %v243, %v243
      %v292 = vpack.c.bf16 %v244, %v244
      %v293 = vpack.c.bf16 %v245, %v245
      %v294 = vpack.c.bf16 %v246, %v246
      %v295 = vpack.c.bf16 %v247, %v247
      %v296 = vpack.c.bf16 %v248, %v248
      %v297 = vpack.c.bf16 %v249, %v249
      %v298 = vpack.c.bf16 %v250, %v250
      %v299 = vpack.c.bf16 %v251, %v251
      %v300 = vpack.c.bf16 %v252, %v252
      %v301 = vpack.c.bf16 %v253, %v253
      %v302 = vpack.c.bf16 %v254, %v254
      %v303 = vpack.c.bf16 %v255, %v255
      %v304 = vpack.c.bf16 %v256, %v256
      %v305 = vpack.c.bf16 %v257, %v257
      %v306 = vpack.c.bf16 %v258, %v258
      %v307 = vpack.c.bf16 %v259, %v259
      %v308 = vpack.c.bf16 %v260, %v260
      %v309 = vpack.c.bf16 %v261, %v261
      %v310 = vpack.c.bf16 %v262, %v262
      %v311 = vpack.c.bf16 %v263, %v263
      %v312 = vpack.c.bf16 %v264, %v264
      %v313 = vpack.c.bf16 %v265, %v265
      %v314 = vpack.c.bf16 %v266, %v266
      %vm315 = vcmask 64512
      %v317 = vsel %vm315, %v283, 0
      %v320 = vsel %vm315, %v299, 0
      %322 = vmatprep.subr.bf16.mxu0 0
      %323 = vmatpush1.bf16.xpose.msra.mxu0 0
      %324 = vmatprep.subr.bf16.mxu0 0
      %325 = vmatpush1.bf16.xpose.msra.mxu0 0
      %326 = vmatprep.subr.bf16.mxu0 0
      %327 = vmatpush1.bf16.xpose.msra.mxu0 0
      %328 = vmatprep.subr.bf16.mxu0 0
      %329 = vmatpush1.bf16.xpose.msra.mxu0 0
      %330 = vmatprep.subr.bf16.mxu0 0
      %331 = vmatpush1.bf16.xpose.msra.mxu0 0
      %332 = vmatprep.subr.bf16.mxu0 0
      %333 = vmatpush1.bf16.xpose.msra.mxu0 0
      %334 = vmatprep.subr.bf16.mxu0 0
      %335 = vmatpush1.bf16.xpose.msra.mxu0 0
      %336 = vmatprep.subr.bf16.mxu0 0
      %337 = vmatpush1.bf16.xpose.msra.mxu0 %v320
      %338 = vmatprep.subr.bf16.mxu0 0
      %339 = vmatpush2.bf16.xpose.msra.mxu0 0
      %340 = vmatprep.subr.bf16.mxu0 0
      %341 = vmatpush2.bf16.xpose.msra.mxu0 0
      %342 = vmatprep.subr.bf16.mxu0 0
      %343 = vmatpush2.bf16.xpose.msra.mxu0 0
      %344 = vmatprep.subr.bf16.mxu0 0
      %345 = vmatpush2.bf16.xpose.msra.mxu0 0
      %346 = vmatprep.subr.bf16.mxu0 0
      %347 = vmatpush2.bf16.xpose.msra.mxu0 0
      %348 = vmatprep.subr.bf16.mxu0 0
      %349 = vmatpush2.bf16.xpose.msra.mxu0 0
      %350 = vmatprep.subr.bf16.mxu0 0
      %351 = vmatpush2.bf16.xpose.msra.mxu0 0
      %352 = vmatprep.subr.bf16.mxu0 0
      %353 = vmatpush2.bf16.xpose.msra.mxu0 0
      %354 = vmatprep.mubr.bf16.mxu0 0
      %355 = vmatmul.mubr.bf16.gmra.mxu0 %v317
      %v356 = vpop.f32.mrf.mxu0
      %v357 = vadd.f32 0.0, %v356
      %v358 = vpop.f32.mrf.mxu0
      %v359 = vpop.f32.mrf.mxu0
      %v360 = vpop.f32.mrf.mxu0
      %361 = vdwg.mxu0
      %v363 = vsel %vm315, %v284, 0
      %v366 = vsel %vm315, %v300, 0
      %368 = vmatprep.subr.bf16.mxu0 0
      %369 = vmatpush1.bf16.xpose.msra.mxu0 0
      %370 = vmatprep.subr.bf16.mxu0 0
      %371 = vmatpush1.bf16.xpose.msra.mxu0 0
      %372 = vmatprep.subr.bf16.mxu0 0
      %373 = vmatpush1.bf16.xpose.msra.mxu0 0
      %374 = vmatprep.subr.bf16.mxu0 0
      %375 = vmatpush1.bf16.xpose.msra.mxu0 0
      %376 = vmatprep.subr.bf16.mxu0 0
      %377 = vmatpush1.bf16.xpose.msra.mxu0 0
      %378 = vmatprep.subr.bf16.mxu0 0
      %379 = vmatpush1.bf16.xpose.msra.mxu0 0
      %380 = vmatprep.subr.bf16.mxu0 0
      %381 = vmatpush1.bf16.xpose.msra.mxu0 0
      %382 = vmatprep.subr.bf16.mxu0 0
      %383 = vmatpush1.bf16.xpose.msra.mxu0 %v366
      %384 = vmatprep.subr.bf16.mxu0 0
      %385 = vmatpush2.bf16.xpose.msra.mxu0 0
      %386 = vmatprep.subr.bf16.mxu0 0
      %387 = vmatpush2.bf16.xpose.msra.mxu0 0
      %388 = vmatprep.subr.bf16.mxu0 0
      %389 = vmatpush2.bf16.xpose.msra.mxu0 0
      %390 = vmatprep.subr.bf16.mxu0 0
      %391 = vmatpush2.bf16.xpose.msra.mxu0 0
      %392 = vmatprep.subr.bf16.mxu0 0
      %393 = vmatpush2.bf16.xpose.msra.mxu0 0
      %394 = vmatprep.subr.bf16.mxu0 0
      %395 = vmatpush2.bf16.xpose.msra.mxu0 0
      %396 = vmatprep.subr.bf16.mxu0 0
      %397 = vmatpush2.bf16.xpose.msra.mxu0 0
      %398 = vmatprep.subr.bf16.mxu0 0
      %399 = vmatpush2.bf16.xpose.msra.mxu0 0
      %400 = vmatprep.mubr.bf16.mxu0 0
      %401 = vmatmul.mubr.bf16.gmra.mxu0 %v363
      %v402 = vpop.f32.mrf.mxu0
      %v403 = vadd.f32 0.0, %v402
      %v404 = vpop.f32.mrf.mxu0
      %v405 = vpop.f32.mrf.mxu0
      %v406 = vpop.f32.mrf.mxu0
      %407 = vdwg.mxu0
      %v409 = vsel %vm315, %v285, 0
      %v412 = vsel %vm315, %v301, 0
      %414 = vmatprep.subr.bf16.mxu0 0
      %415 = vmatpush1.bf16.xpose.msra.mxu0 0
      %416 = vmatprep.subr.bf16.mxu0 0
      %417 = vmatpush1.bf16.xpose.msra.mxu0 0
      %418 = vmatprep.subr.bf16.mxu0 0
      %419 = vmatpush1.bf16.xpose.msra.mxu0 0
      %420 = vmatprep.subr.bf16.mxu0 0
      %421 = vmatpush1.bf16.xpose.msra.mxu0 0
      %422 = vmatprep.subr.bf16.mxu0 0
      %423 = vmatpush1.bf16.xpose.msra.mxu0 0
      %424 = vmatprep.subr.bf16.mxu0 0
      %425 = vmatpush1.bf16.xpose.msra.mxu0 0
      %426 = vmatprep.subr.bf16.mxu0 0
      %427 = vmatpush1.bf16.xpose.msra.mxu0 0
      %428 = vmatprep.subr.bf16.mxu0 0
      %429 = vmatpush1.bf16.xpose.msra.mxu0 %v412
      %430 = vmatprep.subr.bf16.mxu0 0
      %431 = vmatpush2.bf16.xpose.msra.mxu0 0
      %432 = vmatprep.subr.bf16.mxu0 0
      %433 = vmatpush2.bf16.xpose.msra.mxu0 0
      %434 = vmatprep.subr.bf16.mxu0 0
      %435 = vmatpush2.bf16.xpose.msra.mxu0 0
      %436 = vmatprep.subr.bf16.mxu0 0
      %437 = vmatpush2.bf16.xpose.msra.mxu0 0
      %438 = vmatprep.subr.bf16.mxu0 0
      %439 = vmatpush2.bf16.xpose.msra.mxu0 0
      %440 = vmatprep.subr.bf16.mxu0 0
      %441 = vmatpush2.bf16.xpose.msra.mxu0 0
      %442 = vmatprep.subr.bf16.mxu0 0
      %443 = vmatpush2.bf16.xpose.msra.mxu0 0
      %444 = vmatprep.subr.bf16.mxu0 0
      %445 = vmatpush2.bf16.xpose.msra.mxu0 0
      %446 = vmatprep.mubr.bf16.mxu0 0
      %447 = vmatmul.mubr.bf16.gmra.mxu0 %v409
      %v448 = vpop.f32.mrf.mxu0
      %v449 = vadd.f32 0.0, %v448
      %v450 = vpop.f32.mrf.mxu0
      %v451 = vpop.f32.mrf.mxu0
      %v452 = vpop.f32.mrf.mxu0
      %453 = vdwg.mxu0
      %v455 = vsel %vm315, %v286, 0
      %v458 = vsel %vm315, %v302, 0
      %460 = vmatprep.subr.bf16.mxu0 0
      %461 = vmatpush1.bf16.xpose.msra.mxu0 0
      %462 = vmatprep.subr.bf16.mxu0 0
      %463 = vmatpush1.bf16.xpose.msra.mxu0 0
      %464 = vmatprep.subr.bf16.mxu0 0
      %465 = vmatpush1.bf16.xpose.msra.mxu0 0
      %466 = vmatprep.subr.bf16.mxu0 0
      %467 = vmatpush1.bf16.xpose.msra.mxu0 0
      %468 = vmatprep.subr.bf16.mxu0 0
      %469 = vmatpush1.bf16.xpose.msra.mxu0 0
      %470 = vmatprep.subr.bf16.mxu0 0
      %471 = vmatpush1.bf16.xpose.msra.mxu0 0
      %472 = vmatprep.subr.bf16.mxu0 0
      %473 = vmatpush1.bf16.xpose.msra.mxu0 0
      %474 = vmatprep.subr.bf16.mxu0 0
      %475 = vmatpush1.bf16.xpose.msra.mxu0 %v458
      %476 = vmatprep.subr.bf16.mxu0 0
      %477 = vmatpush2.bf16.xpose.msra.mxu0 0
      %478 = vmatprep.subr.bf16.mxu0 0
      %479 = vmatpush2.bf16.xpose.msra.mxu0 0
      %480 = vmatprep.subr.bf16.mxu0 0
      %481 = vmatpush2.bf16.xpose.msra.mxu0 0
      %482 = vmatprep.subr.bf16.mxu0 0
      %483 = vmatpush2.bf16.xpose.msra.mxu0 0
      %484 = vmatprep.subr.bf16.mxu0 0
      %485 = vmatpush2.bf16.xpose.msra.mxu0 0
      %486 = vmatprep.subr.bf16.mxu0 0
      %487 = vmatpush2.bf16.xpose.msra.mxu0 0
      %488 = vmatprep.subr.bf16.mxu0 0
      %489 = vmatpush2.bf16.xpose.msra.mxu0 0
      %490 = vmatprep.subr.bf16.mxu0 0
      %491 = vmatpush2.bf16.xpose.msra.mxu0 0
      %492 = vmatprep.mubr.bf16.mxu0 0
      %493 = vmatmul.mubr.bf16.gmra.mxu0 %v455
      %v494 = vpop.f32.mrf.mxu0
      %v495 = vadd.f32 0.0, %v494
      %v496 = vpop.f32.mrf.mxu0
      %v497 = vpop.f32.mrf.mxu0
      %v498 = vpop.f32.mrf.mxu0
      %499 = vdwg.mxu0
      %v501 = vsel %vm315, %v287, 0
      %v504 = vsel %vm315, %v303, 0
      %506 = vmatprep.subr.bf16.mxu0 0
      %507 = vmatpush1.bf16.xpose.msra.mxu0 0
      %508 = vmatprep.subr.bf16.mxu0 0
      %509 = vmatpush1.bf16.xpose.msra.mxu0 0
      %510 = vmatprep.subr.bf16.mxu0 0
      %511 = vmatpush1.bf16.xpose.msra.mxu0 0
      %512 = vmatprep.subr.bf16.mxu0 0
      %513 = vmatpush1.bf16.xpose.msra.mxu0 0
      %514 = vmatprep.subr.bf16.mxu0 0
      %515 = vmatpush1.bf16.xpose.msra.mxu0 0
      %516 = vmatprep.subr.bf16.mxu0 0
      %517 = vmatpush1.bf16.xpose.msra.mxu0 0
      %518 = vmatprep.subr.bf16.mxu0 0
      %519 = vmatpush1.bf16.xpose.msra.mxu0 0
      %520 = vmatprep.subr.bf16.mxu0 0
      %521 = vmatpush1.bf16.xpose.msra.mxu0 %v504
      %522 = vmatprep.subr.bf16.mxu0 0
      %523 = vmatpush2.bf16.xpose.msra.mxu0 0
      %524 = vmatprep.subr.bf16.mxu0 0
      %525 = vmatpush2.bf16.xpose.msra.mxu0 0
      %526 = vmatprep.subr.bf16.mxu0 0
      %527 = vmatpush2.bf16.xpose.msra.mxu0 0
      %528 = vmatprep.subr.bf16.mxu0 0
      %529 = vmatpush2.bf16.xpose.msra.mxu0 0
      %530 = vmatprep.subr.bf16.mxu0 0
      %531 = vmatpush2.bf16.xpose.msra.mxu0 0
      %532 = vmatprep.subr.bf16.mxu0 0
      %533 = vmatpush2.bf16.xpose.msra.mxu0 0
      %534 = vmatprep.subr.bf16.mxu0 0
      %535 = vmatpush2.bf16.xpose.msra.mxu0 0
      %536 = vmatprep.subr.bf16.mxu0 0
      %537 = vmatpush2.bf16.xpose.msra.mxu0 0
      %538 = vmatprep.mubr.bf16.mxu0 0
      %539 = vmatmul.mubr.bf16.gmra.mxu0 %v501
      %v540 = vpop.f32.mrf.mxu0
      %v541 = vadd.f32 0.0, %v540
      %v542 = vpop.f32.mrf.mxu0
      %v543 = vpop.f32.mrf.mxu0
      %v544 = vpop.f32.mrf.mxu0
      %545 = vdwg.mxu0
      %v547 = vsel %vm315, %v288, 0
      %v550 = vsel %vm315, %v304, 0
      %552 = vmatprep.subr.bf16.mxu0 0
      %553 = vmatpush1.bf16.xpose.msra.mxu0 0
      %554 = vmatprep.subr.bf16.mxu0 0
      %555 = vmatpush1.bf16.xpose.msra.mxu0 0
      %556 = vmatprep.subr.bf16.mxu0 0
      %557 = vmatpush1.bf16.xpose.msra.mxu0 0
      %558 = vmatprep.subr.bf16.mxu0 0
      %559 = vmatpush1.bf16.xpose.msra.mxu0 0
      %560 = vmatprep.subr.bf16.mxu0 0
      %561 = vmatpush1.bf16.xpose.msra.mxu0 0
      %562 = vmatprep.subr.bf16.mxu0 0
      %563 = vmatpush1.bf16.xpose.msra.mxu0 0
      %564 = vmatprep.subr.bf16.mxu0 0
      %565 = vmatpush1.bf16.xpose.msra.mxu0 0
      %566 = vmatprep.subr.bf16.mxu0 0
      %567 = vmatpush1.bf16.xpose.msra.mxu0 %v550
      %568 = vmatprep.subr.bf16.mxu0 0
      %569 = vmatpush2.bf16.xpose.msra.mxu0 0
      %570 = vmatprep.subr.bf16.mxu0 0
      %571 = vmatpush2.bf16.xpose.msra.mxu0 0
      %572 = vmatprep.subr.bf16.mxu0 0
      %573 = vmatpush2.bf16.xpose.msra.mxu0 0
      %574 = vmatprep.subr.bf16.mxu0 0
      %575 = vmatpush2.bf16.xpose.msra.mxu0 0
      %576 = vmatprep.subr.bf16.mxu0 0
      %577 = vmatpush2.bf16.xpose.msra.mxu0 0
      %578 = vmatprep.subr.bf16.mxu0 0
      %579 = vmatpush2.bf16.xpose.msra.mxu0 0
      %580 = vmatprep.subr.bf16.mxu0 0
      %581 = vmatpush2.bf16.xpose.msra.mxu0 0
      %582 = vmatprep.subr.bf16.mxu0 0
      %583 = vmatpush2.bf16.xpose.msra.mxu0 0
      %584 = vmatprep.mubr.bf16.mxu0 0
      %585 = vmatmul.mubr.bf16.gmra.mxu0 %v547
      %v586 = vpop.f32.mrf.mxu0
      %v587 = vadd.f32 0.0, %v586
      %v588 = vpop.f32.mrf.mxu0
      %v589 = vpop.f32.mrf.mxu0
      %v590 = vpop.f32.mrf.mxu0
      %591 = vdwg.mxu0
      %v593 = vsel %vm315, %v289, 0
      %v596 = vsel %vm315, %v305, 0
      %598 = vmatprep.subr.bf16.mxu0 0
      %599 = vmatpush1.bf16.xpose.msra.mxu0 0
      %600 = vmatprep.subr.bf16.mxu0 0
      %601 = vmatpush1.bf16.xpose.msra.mxu0 0
      %602 = vmatprep.subr.bf16.mxu0 0
      %603 = vmatpush1.bf16.xpose.msra.mxu0 0
      %604 = vmatprep.subr.bf16.mxu0 0
      %605 = vmatpush1.bf16.xpose.msra.mxu0 0
      %606 = vmatprep.subr.bf16.mxu0 0
      %607 = vmatpush1.bf16.xpose.msra.mxu0 0
      %608 = vmatprep.subr.bf16.mxu0 0
      %609 = vmatpush1.bf16.xpose.msra.mxu0 0
      %610 = vmatprep.subr.bf16.mxu0 0
      %611 = vmatpush1.bf16.xpose.msra.mxu0 0
      %612 = vmatprep.subr.bf16.mxu0 0
      %613 = vmatpush1.bf16.xpose.msra.mxu0 %v596
      %614 = vmatprep.subr.bf16.mxu0 0
      %615 = vmatpush2.bf16.xpose.msra.mxu0 0
      %616 = vmatprep.subr.bf16.mxu0 0
      %617 = vmatpush2.bf16.xpose.msra.mxu0 0
      %618 = vmatprep.subr.bf16.mxu0 0
      %619 = vmatpush2.bf16.xpose.msra.mxu0 0
      %620 = vmatprep.subr.bf16.mxu0 0
      %621 = vmatpush2.bf16.xpose.msra.mxu0 0
      %622 = vmatprep.subr.bf16.mxu0 0
      %623 = vmatpush2.bf16.xpose.msra.mxu0 0
      %624 = vmatprep.subr.bf16.mxu0 0
      %625 = vmatpush2.bf16.xpose.msra.mxu0 0
      %626 = vmatprep.subr.bf16.mxu0 0
      %627 = vmatpush2.bf16.xpose.msra.mxu0 0
      %628 = vmatprep.subr.bf16.mxu0 0
      %629 = vmatpush2.bf16.xpose.msra.mxu0 0
      %630 = vmatprep.mubr.bf16.mxu0 0
      %631 = vmatmul.mubr.bf16.gmra.mxu0 %v593
      %v632 = vpop.f32.mrf.mxu0
      %v633 = vadd.f32 0.0, %v632
      %v634 = vpop.f32.mrf.mxu0
      %v635 = vpop.f32.mrf.mxu0
      %v636 = vpop.f32.mrf.mxu0
      %637 = vdwg.mxu0
      %v639 = vsel %vm315, %v290, 0
      %v642 = vsel %vm315, %v306, 0
      %644 = vmatprep.subr.bf16.mxu0 0
      %645 = vmatpush1.bf16.xpose.msra.mxu0 0
      %646 = vmatprep.subr.bf16.mxu0 0
      %647 = vmatpush1.bf16.xpose.msra.mxu0 0
      %648 = vmatprep.subr.bf16.mxu0 0
      %649 = vmatpush1.bf16.xpose.msra.mxu0 0
      %650 = vmatprep.subr.bf16.mxu0 0
      %651 = vmatpush1.bf16.xpose.msra.mxu0 0
      %652 = vmatprep.subr.bf16.mxu0 0
      %653 = vmatpush1.bf16.xpose.msra.mxu0 0
      %654 = vmatprep.subr.bf16.mxu0 0
      %655 = vmatpush1.bf16.xpose.msra.mxu0 0
      %656 = vmatprep.subr.bf16.mxu0 0
      %657 = vmatpush1.bf16.xpose.msra.mxu0 0
      %658 = vmatprep.subr.bf16.mxu0 0
      %659 = vmatpush1.bf16.xpose.msra.mxu0 %v642
      %660 = vmatprep.subr.bf16.mxu0 0
      %661 = vmatpush2.bf16.xpose.msra.mxu0 0
      %662 = vmatprep.subr.bf16.mxu0 0
      %663 = vmatpush2.bf16.xpose.msra.mxu0 0
      %664 = vmatprep.subr.bf16.mxu0 0
      %665 = vmatpush2.bf16.xpose.msra.mxu0 0
      %666 = vmatprep.subr.bf16.mxu0 0
      %667 = vmatpush2.bf16.xpose.msra.mxu0 0
      %668 = vmatprep.subr.bf16.mxu0 0
      %669 = vmatpush2.bf16.xpose.msra.mxu0 0
      %670 = vmatprep.subr.bf16.mxu0 0
      %671 = vmatpush2.bf16.xpose.msra.mxu0 0
      %672 = vmatprep.subr.bf16.mxu0 0
      %673 = vmatpush2.bf16.xpose.msra.mxu0 0
      %674 = vmatprep.subr.bf16.mxu0 0
      %675 = vmatpush2.bf16.xpose.msra.mxu0 0
      %676 = vmatprep.mubr.bf16.mxu0 0
      %677 = vmatmul.mubr.bf16.gmra.mxu0 %v639
      %v678 = vpop.f32.mrf.mxu0
      %v679 = vadd.f32 0.0, %v678
      %v680 = vpop.f32.mrf.mxu0
      %v681 = vpop.f32.mrf.mxu0
      %v682 = vpop.f32.mrf.mxu0
      %683 = vdwg.mxu0
      %v685 = vsel %vm315, %v291, 0
      %v688 = vsel %vm315, %v307, 0
      %690 = vmatprep.subr.bf16.mxu0 0
      %691 = vmatpush1.bf16.xpose.msra.mxu0 0
      %692 = vmatprep.subr.bf16.mxu0 0
      %693 = vmatpush1.bf16.xpose.msra.mxu0 0
      %694 = vmatprep.subr.bf16.mxu0 0
      %695 = vmatpush1.bf16.xpose.msra.mxu0 0
      %696 = vmatprep.subr.bf16.mxu0 0
      %697 = vmatpush1.bf16.xpose.msra.mxu0 0
      %698 = vmatprep.subr.bf16.mxu0 0
      %699 = vmatpush1.bf16.xpose.msra.mxu0 0
      %700 = vmatprep.subr.bf16.mxu0 0
      %701 = vmatpush1.bf16.xpose.msra.mxu0 0
      %702 = vmatprep.subr.bf16.mxu0 0
      %703 = vmatpush1.bf16.xpose.msra.mxu0 0
      %704 = vmatprep.subr.bf16.mxu0 0
      %705 = vmatpush1.bf16.xpose.msra.mxu0 %v688
      %706 = vmatprep.subr.bf16.mxu0 0
      %707 = vmatpush2.bf16.xpose.msra.mxu0 0
      %708 = vmatprep.subr.bf16.mxu0 0
      %709 = vmatpush2.bf16.xpose.msra.mxu0 0
      %710 = vmatprep.subr.bf16.mxu0 0
      %711 = vmatpush2.bf16.xpose.msra.mxu0 0
      %712 = vmatprep.subr.bf16.mxu0 0
      %713 = vmatpush2.bf16.xpose.msra.mxu0 0
      %714 = vmatprep.subr.bf16.mxu0 0
      %715 = vmatpush2.bf16.xpose.msra.mxu0 0
      %716 = vmatprep.subr.bf16.mxu0 0
      %717 = vmatpush2.bf16.xpose.msra.mxu0 0
      %718 = vmatprep.subr.bf16.mxu0 0
      %719 = vmatpush2.bf16.xpose.msra.mxu0 0
      %720 = vmatprep.subr.bf16.mxu0 0
      %721 = vmatpush2.bf16.xpose.msra.mxu0 0
      %722 = vmatprep.mubr.bf16.mxu0 0
      %723 = vmatmul.mubr.bf16.gmra.mxu0 %v685
      %v724 = vpop.f32.mrf.mxu0
      %v725 = vadd.f32 0.0, %v724
      %v726 = vpop.f32.mrf.mxu0
      %v727 = vpop.f32.mrf.mxu0
      %v728 = vpop.f32.mrf.mxu0
      %729 = vdwg.mxu0
      %v731 = vsel %vm315, %v292, 0
      %v734 = vsel %vm315, %v308, 0
      %736 = vmatprep.subr.bf16.mxu0 0
      %737 = vmatpush1.bf16.xpose.msra.mxu0 0
      %738 = vmatprep.subr.bf16.mxu0 0
      %739 = vmatpush1.bf16.xpose.msra.mxu0 0
      %740 = vmatprep.subr.bf16.mxu0 0
      %741 = vmatpush1.bf16.xpose.msra.mxu0 0
      %742 = vmatprep.subr.bf16.mxu0 0
      %743 = vmatpush1.bf16.xpose.msra.mxu0 0
      %744 = vmatprep.subr.bf16.mxu0 0
      %745 = vmatpush1.bf16.xpose.msra.mxu0 0
      %746 = vmatprep.subr.bf16.mxu0 0
      %747 = vmatpush1.bf16.xpose.msra.mxu0 0
      %748 = vmatprep.subr.bf16.mxu0 0
      %749 = vmatpush1.bf16.xpose.msra.mxu0 0
      %750 = vmatprep.subr.bf16.mxu0 0
      %751 = vmatpush1.bf16.xpose.msra.mxu0 %v734
      %752 = vmatprep.subr.bf16.mxu0 0
      %753 = vmatpush2.bf16.xpose.msra.mxu0 0
      %754 = vmatprep.subr.bf16.mxu0 0
      %755 = vmatpush2.bf16.xpose.msra.mxu0 0
      %756 = vmatprep.subr.bf16.mxu0 0
      %757 = vmatpush2.bf16.xpose.msra.mxu0 0
      %758 = vmatprep.subr.bf16.mxu0 0
      %759 = vmatpush2.bf16.xpose.msra.mxu0 0
      %760 = vmatprep.subr.bf16.mxu0 0
      %761 = vmatpush2.bf16.xpose.msra.mxu0 0
      %762 = vmatprep.subr.bf16.mxu0 0
      %763 = vmatpush2.bf16.xpose.msra.mxu0 0
      %764 = vmatprep.subr.bf16.mxu0 0
      %765 = vmatpush2.bf16.xpose.msra.mxu0 0
      %766 = vmatprep.subr.bf16.mxu0 0
      %767 = vmatpush2.bf16.xpose.msra.mxu0 0
      %768 = vmatprep.mubr.bf16.mxu0 0
      %769 = vmatmul.mubr.bf16.gmra.mxu0 %v731
      %v770 = vpop.f32.mrf.mxu0
      %v771 = vadd.f32 0.0, %v770
      %v772 = vpop.f32.mrf.mxu0
      %v773 = vpop.f32.mrf.mxu0
      %v774 = vpop.f32.mrf.mxu0
      %775 = vdwg.mxu0
      %v777 = vsel %vm315, %v293, 0
      %v780 = vsel %vm315, %v309, 0
      %782 = vmatprep.subr.bf16.mxu0 0
      %783 = vmatpush1.bf16.xpose.msra.mxu0 0
      %784 = vmatprep.subr.bf16.mxu0 0
      %785 = vmatpush1.bf16.xpose.msra.mxu0 0
      %786 = vmatprep.subr.bf16.mxu0 0
      %787 = vmatpush1.bf16.xpose.msra.mxu0 0
      %788 = vmatprep.subr.bf16.mxu0 0
      %789 = vmatpush1.bf16.xpose.msra.mxu0 0
      %790 = vmatprep.subr.bf16.mxu0 0
      %791 = vmatpush1.bf16.xpose.msra.mxu0 0
      %792 = vmatprep.subr.bf16.mxu0 0
      %793 = vmatpush1.bf16.xpose.msra.mxu0 0
      %794 = vmatprep.subr.bf16.mxu0 0
      %795 = vmatpush1.bf16.xpose.msra.mxu0 0
      %796 = vmatprep.subr.bf16.mxu0 0
      %797 = vmatpush1.bf16.xpose.msra.mxu0 %v780
      %798 = vmatprep.subr.bf16.mxu0 0
      %799 = vmatpush2.bf16.xpose.msra.mxu0 0
      %800 = vmatprep.subr.bf16.mxu0 0
      %801 = vmatpush2.bf16.xpose.msra.mxu0 0
      %802 = vmatprep.subr.bf16.mxu0 0
      %803 = vmatpush2.bf16.xpose.msra.mxu0 0
      %804 = vmatprep.subr.bf16.mxu0 0
      %805 = vmatpush2.bf16.xpose.msra.mxu0 0
      %806 = vmatprep.subr.bf16.mxu0 0
      %807 = vmatpush2.bf16.xpose.msra.mxu0 0
      %808 = vmatprep.subr.bf16.mxu0 0
      %809 = vmatpush2.bf16.xpose.msra.mxu0 0
      %810 = vmatprep.subr.bf16.mxu0 0
      %811 = vmatpush2.bf16.xpose.msra.mxu0 0
      %812 = vmatprep.subr.bf16.mxu0 0
      %813 = vmatpush2.bf16.xpose.msra.mxu0 0
      %814 = vmatprep.mubr.bf16.mxu0 0
      %815 = vmatmul.mubr.bf16.gmra.mxu0 %v777
      %v816 = vpop.f32.mrf.mxu0
      %v817 = vadd.f32 0.0, %v816
      %v818 = vpop.f32.mrf.mxu0
      %v819 = vpop.f32.mrf.mxu0
      %v820 = vpop.f32.mrf.mxu0
      %821 = vdwg.mxu0
      %v823 = vsel %vm315, %v294, 0
      %v826 = vsel %vm315, %v310, 0
      %828 = vmatprep.subr.bf16.mxu0 0
      %829 = vmatpush1.bf16.xpose.msra.mxu0 0
      %830 = vmatprep.subr.bf16.mxu0 0
      %831 = vmatpush1.bf16.xpose.msra.mxu0 0
      %832 = vmatprep.subr.bf16.mxu0 0
      %833 = vmatpush1.bf16.xpose.msra.mxu0 0
      %834 = vmatprep.subr.bf16.mxu0 0
      %835 = vmatpush1.bf16.xpose.msra.mxu0 0
      %836 = vmatprep.subr.bf16.mxu0 0
      %837 = vmatpush1.bf16.xpose.msra.mxu0 0
      %838 = vmatprep.subr.bf16.mxu0 0
      %839 = vmatpush1.bf16.xpose.msra.mxu0 0
      %840 = vmatprep.subr.bf16.mxu0 0
      %841 = vmatpush1.bf16.xpose.msra.mxu0 0
      %842 = vmatprep.subr.bf16.mxu0 0
      %843 = vmatpush1.bf16.xpose.msra.mxu0 %v826
      %844 = vmatprep.subr.bf16.mxu0 0
      %845 = vmatpush2.bf16.xpose.msra.mxu0 0
      %846 = vmatprep.subr.bf16.mxu0 0
      %847 = vmatpush2.bf16.xpose.msra.mxu0 0
      %848 = vmatprep.subr.bf16.mxu0 0
      %849 = vmatpush2.bf16.xpose.msra.mxu0 0
      %850 = vmatprep.subr.bf16.mxu0 0
      %851 = vmatpush2.bf16.xpose.msra.mxu0 0
      %852 = vmatprep.subr.bf16.mxu0 0
      %853 = vmatpush2.bf16.xpose.msra.mxu0 0
      %854 = vmatprep.subr.bf16.mxu0 0
      %855 = vmatpush2.bf16.xpose.msra.mxu0 0
      %856 = vmatprep.subr.bf16.mxu0 0
      %857 = vmatpush2.bf16.xpose.msra.mxu0 0
      %858 = vmatprep.subr.bf16.mxu0 0
      %859 = vmatpush2.bf16.xpose.msra.mxu0 0
      %860 = vmatprep.mubr.bf16.mxu0 0
      %861 = vmatmul.mubr.bf16.gmra.mxu0 %v823
      %v862 = vpop.f32.mrf.mxu0
      %v863 = vadd.f32 0.0, %v862
      %v864 = vpop.f32.mrf.mxu0
      %v865 = vpop.f32.mrf.mxu0
      %v866 = vpop.f32.mrf.mxu0
      %867 = vdwg.mxu0
      %v869 = vsel %vm315, %v295, 0
      %v872 = vsel %vm315, %v311, 0
      %874 = vmatprep.subr.bf16.mxu0 0
      %875 = vmatpush1.bf16.xpose.msra.mxu0 0
      %876 = vmatprep.subr.bf16.mxu0 0
      %877 = vmatpush1.bf16.xpose.msra.mxu0 0
      %878 = vmatprep.subr.bf16.mxu0 0
      %879 = vmatpush1.bf16.xpose.msra.mxu0 0
      %880 = vmatprep.subr.bf16.mxu0 0
      %881 = vmatpush1.bf16.xpose.msra.mxu0 0
      %882 = vmatprep.subr.bf16.mxu0 0
      %883 = vmatpush1.bf16.xpose.msra.mxu0 0
      %884 = vmatprep.subr.bf16.mxu0 0
      %885 = vmatpush1.bf16.xpose.msra.mxu0 0
      %886 = vmatprep.subr.bf16.mxu0 0
      %887 = vmatpush1.bf16.xpose.msra.mxu0 0
      %888 = vmatprep.subr.bf16.mxu0 0
      %889 = vmatpush1.bf16.xpose.msra.mxu0 %v872
      %890 = vmatprep.subr.bf16.mxu0 0
      %891 = vmatpush2.bf16.xpose.msra.mxu0 0
      %892 = vmatprep.subr.bf16.mxu0 0
      %893 = vmatpush2.bf16.xpose.msra.mxu0 0
      %894 = vmatprep.subr.bf16.mxu0 0
      %895 = vmatpush2.bf16.xpose.msra.mxu0 0
      %896 = vmatprep.subr.bf16.mxu0 0
      %897 = vmatpush2.bf16.xpose.msra.mxu0 0
      %898 = vmatprep.subr.bf16.mxu0 0
      %899 = vmatpush2.bf16.xpose.msra.mxu0 0
      %900 = vmatprep.subr.bf16.mxu0 0
      %901 = vmatpush2.bf16.xpose.msra.mxu0 0
      %902 = vmatprep.subr.bf16.mxu0 0
      %903 = vmatpush2.bf16.xpose.msra.mxu0 0
      %904 = vmatprep.subr.bf16.mxu0 0
      %905 = vmatpush2.bf16.xpose.msra.mxu0 0
      %906 = vmatprep.mubr.bf16.mxu0 0
      %907 = vmatmul.mubr.bf16.gmra.mxu0 %v869
      %v908 = vpop.f32.mrf.mxu0
      %v909 = vadd.f32 0.0, %v908
      %v910 = vpop.f32.mrf.mxu0
      %v911 = vpop.f32.mrf.mxu0
      %v912 = vpop.f32.mrf.mxu0
      %913 = vdwg.mxu0
      %v915 = vsel %vm315, %v296, 0
      %v918 = vsel %vm315, %v312, 0
      %920 = vmatprep.subr.bf16.mxu0 0
      %921 = vmatpush1.bf16.xpose.msra.mxu0 0
      %922 = vmatprep.subr.bf16.mxu0 0
      %923 = vmatpush1.bf16.xpose.msra.mxu0 0
      %924 = vmatprep.subr.bf16.mxu0 0
      %925 = vmatpush1.bf16.xpose.msra.mxu0 0
      %926 = vmatprep.subr.bf16.mxu0 0
      %927 = vmatpush1.bf16.xpose.msra.mxu0 0
      %928 = vmatprep.subr.bf16.mxu0 0
      %929 = vmatpush1.bf16.xpose.msra.mxu0 0
      %930 = vmatprep.subr.bf16.mxu0 0
      %931 = vmatpush1.bf16.xpose.msra.mxu0 0
      %932 = vmatprep.subr.bf16.mxu0 0
      %933 = vmatpush1.bf16.xpose.msra.mxu0 0
      %934 = vmatprep.subr.bf16.mxu0 0
      %935 = vmatpush1.bf16.xpose.msra.mxu0 %v918
      %936 = vmatprep.subr.bf16.mxu0 0
      %937 = vmatpush2.bf16.xpose.msra.mxu0 0
      %938 = vmatprep.subr.bf16.mxu0 0
      %939 = vmatpush2.bf16.xpose.msra.mxu0 0
      %940 = vmatprep.subr.bf16.mxu0 0
      %941 = vmatpush2.bf16.xpose.msra.mxu0 0
      %942 = vmatprep.subr.bf16.mxu0 0
      %943 = vmatpush2.bf16.xpose.msra.mxu0 0
      %944 = vmatprep.subr.bf16.mxu0 0
      %945 = vmatpush2.bf16.xpose.msra.mxu0 0
      %946 = vmatprep.subr.bf16.mxu0 0
      %947 = vmatpush2.bf16.xpose.msra.mxu0 0
      %948 = vmatprep.subr.bf16.mxu0 0
      %949 = vmatpush2.bf16.xpose.msra.mxu0 0
      %950 = vmatprep.subr.bf16.mxu0 0
      %951 = vmatpush2.bf16.xpose.msra.mxu0 0
      %952 = vmatprep.mubr.bf16.mxu0 0
      %953 = vmatmul.mubr.bf16.gmra.mxu0 %v915
      %v954 = vpop.f32.mrf.mxu0
      %v955 = vadd.f32 0.0, %v954
      %v956 = vpop.f32.mrf.mxu0
      %v957 = vpop.f32.mrf.mxu0
      %v958 = vpop.f32.mrf.mxu0
      %959 = vdwg.mxu0
      %v961 = vsel %vm315, %v297, 0
      %v964 = vsel %vm315, %v313, 0
      %966 = vmatprep.subr.bf16.mxu0 0
      %967 = vmatpush1.bf16.xpose.msra.mxu0 0
      %968 = vmatprep.subr.bf16.mxu0 0
      %969 = vmatpush1.bf16.xpose.msra.mxu0 0
      %970 = vmatprep.subr.bf16.mxu0 0
      %971 = vmatpush1.bf16.xpose.msra.mxu0 0
      %972 = vmatprep.subr.bf16.mxu0 0
      %973 = vmatpush1.bf16.xpose.msra.mxu0 0
      %974 = vmatprep.subr.bf16.mxu0 0
      %975 = vmatpush1.bf16.xpose.msra.mxu0 0
      %976 = vmatprep.subr.bf16.mxu0 0
      %977 = vmatpush1.bf16.xpose.msra.mxu0 0
      %978 = vmatprep.subr.bf16.mxu0 0
      %979 = vmatpush1.bf16.xpose.msra.mxu0 0
      %980 = vmatprep.subr.bf16.mxu0 0
      %981 = vmatpush1.bf16.xpose.msra.mxu0 %v964
      %982 = vmatprep.subr.bf16.mxu0 0
      %983 = vmatpush2.bf16.xpose.msra.mxu0 0
      %984 = vmatprep.subr.bf16.mxu0 0
      %985 = vmatpush2.bf16.xpose.msra.mxu0 0
      %986 = vmatprep.subr.bf16.mxu0 0
      %987 = vmatpush2.bf16.xpose.msra.mxu0 0
      %988 = vmatprep.subr.bf16.mxu0 0
      %989 = vmatpush2.bf16.xpose.msra.mxu0 0
      %990 = vmatprep.subr.bf16.mxu0 0
      %991 = vmatpush2.bf16.xpose.msra.mxu0 0
      %992 = vmatprep.subr.bf16.mxu0 0
      %993 = vmatpush2.bf16.xpose.msra.mxu0 0
      %994 = vmatprep.subr.bf16.mxu0 0
      %995 = vmatpush2.bf16.xpose.msra.mxu0 0
      %996 = vmatprep.subr.bf16.mxu0 0
      %997 = vmatpush2.bf16.xpose.msra.mxu0 0
      %998 = vmatprep.mubr.bf16.mxu0 0
      %999 = vmatmul.mubr.bf16.gmra.mxu0 %v961
      %v1000 = vpop.f32.mrf.mxu0
      %v1001 = vadd.f32 0.0, %v1000
      %v1002 = vpop.f32.mrf.mxu0
      %v1003 = vpop.f32.mrf.mxu0
      %v1004 = vpop.f32.mrf.mxu0
      %1005 = vdwg.mxu0
      %v1007 = vsel %vm315, %v298, 0
      %v1010 = vsel %vm315, %v314, 0
      %1012 = vmatprep.subr.bf16.mxu0 0
      %1013 = vmatpush1.bf16.xpose.msra.mxu0 0
      %1014 = vmatprep.subr.bf16.mxu0 0
      %1015 = vmatpush1.bf16.xpose.msra.mxu0 0
      %1016 = vmatprep.subr.bf16.mxu0 0
      %1017 = vmatpush1.bf16.xpose.msra.mxu0 0
      %1018 = vmatprep.subr.bf16.mxu0 0
      %1019 = vmatpush1.bf16.xpose.msra.mxu0 0
      %1020 = vmatprep.subr.bf16.mxu0 0
      %1021 = vmatpush1.bf16.xpose.msra.mxu0 0
      %1022 = vmatprep.subr.bf16.mxu0 0
      %1023 = vmatpush1.bf16.xpose.msra.mxu0 0
      %1024 = vmatprep.subr.bf16.mxu0 0
      %1025 = vmatpush1.bf16.xpose.msra.mxu0 0
      %1026 = vmatprep.subr.bf16.mxu0 0
      %1027 = vmatpush1.bf16.xpose.msra.mxu0 %v1010
      %1028 = vmatprep.subr.bf16.mxu0 0
      %1029 = vmatpush2.bf16.xpose.msra.mxu0 0
      %1030 = vmatprep.subr.bf16.mxu0 0
      %1031 = vmatpush2.bf16.xpose.msra.mxu0 0
      %1032 = vmatprep.subr.bf16.mxu0 0
      %1033 = vmatpush2.bf16.xpose.msra.mxu0 0
      %1034 = vmatprep.subr.bf16.mxu0 0
      %1035 = vmatpush2.bf16.xpose.msra.mxu0 0
      %1036 = vmatprep.subr.bf16.mxu0 0
      %1037 = vmatpush2.bf16.xpose.msra.mxu0 0
      %1038 = vmatprep.subr.bf16.mxu0 0
      %1039 = vmatpush2.bf16.xpose.msra.mxu0 0
      %1040 = vmatprep.subr.bf16.mxu0 0
      %1041 = vmatpush2.bf16.xpose.msra.mxu0 0
      %1042 = vmatprep.subr.bf16.mxu0 0
      %1043 = vmatpush2.bf16.xpose.msra.mxu0 0
      %1044 = vmatprep.mubr.bf16.mxu0 0
      %1045 = vmatmul.mubr.bf16.gmra.mxu0 %v1007
      %v1046 = vpop.f32.mrf.mxu0
      %v1047 = vadd.f32 0.0, %v1046
      %v1048 = vpop.f32.mrf.mxu0
      %v1049 = vpop.f32.mrf.mxu0
      %v1050 = vpop.f32.mrf.mxu0
      %1051 = vdwg.mxu0
      %v1052 = vsel %vm315, %v357, -inf
      %1053 = vmax.xlane.f32.xlu0 %v1052
      %v1054 = vpop.xlane.xlu0 %1053
      %v1055 = vsel %vm315, %v403, -inf
      %1056 = vmax.xlane.f32.xlu0 %v1055
      %v1057 = vpop.xlane.xlu0 %1056
      %v1058 = vsel %vm315, %v449, -inf
      %1059 = vmax.xlane.f32.xlu0 %v1058
      %v1060 = vpop.xlane.xlu0 %1059
      %v1061 = vsel %vm315, %v495, -inf
      %1062 = vmax.xlane.f32.xlu0 %v1061
      %v1063 = vpop.xlane.xlu0 %1062
      %v1064 = vsel %vm315, %v541, -inf
      %1065 = vmax.xlane.f32.xlu0 %v1064
      %v1066 = vpop.xlane.xlu0 %1065
      %v1067 = vsel %vm315, %v587, -inf
      %1068 = vmax.xlane.f32.xlu0 %v1067
      %v1069 = vpop.xlane.xlu0 %1068
      %v1070 = vsel %vm315, %v633, -inf
      %1071 = vmax.xlane.f32.xlu0 %v1070
      %v1072 = vpop.xlane.xlu0 %1071
      %v1073 = vsel %vm315, %v679, -inf
      %1074 = vmax.xlane.f32.xlu0 %v1073
      %v1075 = vpop.xlane.xlu0 %1074
      %v1076 = vsel %vm315, %v725, -inf
      %1077 = vmax.xlane.f32.xlu0 %v1076
      %v1078 = vpop.xlane.xlu0 %1077
      %v1079 = vsel %vm315, %v771, -inf
      %1080 = vmax.xlane.f32.xlu0 %v1079
      %v1081 = vpop.xlane.xlu0 %1080
      %v1082 = vsel %vm315, %v817, -inf
      %1083 = vmax.xlane.f32.xlu0 %v1082
      %v1084 = vpop.xlane.xlu0 %1083
      %v1085 = vsel %vm315, %v863, -inf
      %1086 = vmax.xlane.f32.xlu0 %v1085
      %v1087 = vpop.xlane.xlu0 %1086
      %v1088 = vsel %vm315, %v909, -inf
      %1089 = vmax.xlane.f32.xlu0 %v1088
      %v1090 = vpop.xlane.xlu0 %1089
      %v1091 = vsel %vm315, %v955, -inf
      %1092 = vmax.xlane.f32.xlu0 %v1091
      %v1093 = vpop.xlane.xlu0 %1092
      %v1094 = vsel %vm315, %v1001, -inf
      %1095 = vmax.xlane.f32.xlu0 %v1094
      %v1096 = vpop.xlane.xlu0 %1095
      %v1097 = vsel %vm315, %v1047, -inf
      %1098 = vmax.xlane.f32.xlu0 %v1097
      %v1099 = vpop.xlane.xlu0 %1098
      %v1100 = vsub.f32 %v357, %v1054
      %v1101 = vsub.f32 %v403, %v1057
      %v1102 = vsub.f32 %v449, %v1060
      %v1103 = vsub.f32 %v495, %v1063
      %v1104 = vsub.f32 %v541, %v1066
      %v1105 = vsub.f32 %v587, %v1069
      %v1106 = vsub.f32 %v633, %v1072
      %v1107 = vsub.f32 %v679, %v1075
      %v1108 = vsub.f32 %v725, %v1078
      %v1109 = vsub.f32 %v771, %v1081
      %v1110 = vsub.f32 %v817, %v1084
      %v1111 = vsub.f32 %v863, %v1087
      %v1112 = vsub.f32 %v909, %v1090
      %v1113 = vsub.f32 %v955, %v1093
      %v1114 = vsub.f32 %v1001, %v1096
      %v1115 = vsub.f32 %v1047, %v1099
      %v1116 = vmul.f32 %v1100, 1.442695
      %v1117 = vpow.pop %v1116
      %v1118 = vmul.f32 %v1101, 1.442695
      %v1119 = vpow.pop %v1118
      %v1120 = vmul.f32 %v1102, 1.442695
      %v1121 = vpow.pop %v1120
      %v1122 = vmul.f32 %v1103, 1.442695
      %v1123 = vpow.pop %v1122
      %v1124 = vmul.f32 %v1104, 1.442695
      %v1125 = vpow.pop %v1124
      %v1126 = vmul.f32 %v1105, 1.442695
      %v1127 = vpow.pop %v1126
      %v1128 = vmul.f32 %v1106, 1.442695
      %v1129 = vpow.pop %v1128
      %v1130 = vmul.f32 %v1107, 1.442695
      %v1131 = vpow.pop %v1130
      %v1132 = vmul.f32 %v1108, 1.442695
      %v1133 = vpow.pop %v1132
      %v1134 = vmul.f32 %v1109, 1.442695
      %v1135 = vpow.pop %v1134
      %v1136 = vmul.f32 %v1110, 1.442695
      %v1137 = vpow.pop %v1136
      %v1138 = vmul.f32 %v1111, 1.442695
      %v1139 = vpow.pop %v1138
      %v1140 = vmul.f32 %v1112, 1.442695
      %v1141 = vpow.pop %v1140
      %v1142 = vmul.f32 %v1113, 1.442695
      %v1143 = vpow.pop %v1142
      %v1144 = vmul.f32 %v1114, 1.442695
      %v1145 = vpow.pop %v1144
      %v1146 = vmul.f32 %v1115, 1.442695
      %v1147 = vpow.pop %v1146
      %v1148 = vsel %vm315, %v1117, 0.0
      %1149 = vadd.xlane.f32.xlu0 %v1148
      %v1150 = vpop.xlane.xlu0 %1149
      %v1151 = vsel %vm315, %v1119, 0.0
      %1152 = vadd.xlane.f32.xlu0 %v1151
      %v1153 = vpop.xlane.xlu0 %1152
      %v1154 = vsel %vm315, %v1121, 0.0
      %1155 = vadd.xlane.f32.xlu0 %v1154
      %v1156 = vpop.xlane.xlu0 %1155
      %v1157 = vsel %vm315, %v1123, 0.0
      %1158 = vadd.xlane.f32.xlu0 %v1157
      %v1159 = vpop.xlane.xlu0 %1158
      %v1160 = vsel %vm315, %v1125, 0.0
      %1161 = vadd.xlane.f32.xlu0 %v1160
      %v1162 = vpop.xlane.xlu0 %1161
      %v1163 = vsel %vm315, %v1127, 0.0
      %1164 = vadd.xlane.f32.xlu0 %v1163
      %v1165 = vpop.xlane.xlu0 %1164
      %v1166 = vsel %vm315, %v1129, 0.0
      %1167 = vadd.xlane.f32.xlu0 %v1166
      %v1168 = vpop.xlane.xlu0 %1167
      %v1169 = vsel %vm315, %v1131, 0.0
      %1170 = vadd.xlane.f32.xlu0 %v1169
      %v1171 = vpop.xlane.xlu0 %1170
      %v1172 = vsel %vm315, %v1133, 0.0
      %1173 = vadd.xlane.f32.xlu0 %v1172
      %v1174 = vpop.xlane.xlu0 %1173
      %v1175 = vsel %vm315, %v1135, 0.0
      %1176 = vadd.xlane.f32.xlu0 %v1175
      %v1177 = vpop.xlane.xlu0 %1176
      %v1178 = vsel %vm315, %v1137, 0.0
      %1179 = vadd.xlane.f32.xlu0 %v1178
      %v1180 = vpop.xlane.xlu0 %1179
      %v1181 = vsel %vm315, %v1139, 0.0
      %1182 = vadd.xlane.f32.xlu0 %v1181
      %v1183 = vpop.xlane.xlu0 %1182
      %v1184 = vsel %vm315, %v1141, 0.0
      %1185 = vadd.xlane.f32.xlu0 %v1184
      %v1186 = vpop.xlane.xlu0 %1185
      %v1187 = vsel %vm315, %v1143, 0.0
      %1188 = vadd.xlane.f32.xlu0 %v1187
      %v1189 = vpop.xlane.xlu0 %1188
      %v1190 = vsel %vm315, %v1145, 0.0
      %1191 = vadd.xlane.f32.xlu0 %v1190
      %v1192 = vpop.xlane.xlu0 %1191
      %v1193 = vsel %vm315, %v1147, 0.0
      %1194 = vadd.xlane.f32.xlu0 %v1193
      %v1195 = vpop.xlane.xlu0 %1194
      %v1196 = vpack.c.bf16 %v1117, %v1117
      %v1197 = vpack.c.bf16 %v1119, %v1119
      %v1198 = vpack.c.bf16 %v1121, %v1121
      %v1199 = vpack.c.bf16 %v1123, %v1123
      %v1200 = vpack.c.bf16 %v1125, %v1125
      %v1201 = vpack.c.bf16 %v1127, %v1127
      %v1202 = vpack.c.bf16 %v1129, %v1129
      %v1203 = vpack.c.bf16 %v1131, %v1131
      %v1204 = vpack.c.bf16 %v1133, %v1133
      %v1205 = vpack.c.bf16 %v1135, %v1135
      %v1206 = vpack.c.bf16 %v1137, %v1137
      %v1207 = vpack.c.bf16 %v1139, %v1139
      %v1208 = vpack.c.bf16 %v1141, %v1141
      %v1209 = vpack.c.bf16 %v1143, %v1143
      %v1210 = vpack.c.bf16 %v1145, %v1145
      %v1211 = vpack.c.bf16 %v1147, %v1147
      %v1212 = vpack.c.bf16 %v267, %v267
      %v1213 = vpack.c.bf16 %v268, %v268
      %v1214 = vpack.c.bf16 %v269, %v269
      %v1215 = vpack.c.bf16 %v270, %v270
      %v1216 = vpack.c.bf16 %v271, %v271
      %v1217 = vpack.c.bf16 %v272, %v272
      %v1218 = vpack.c.bf16 %v273, %v273
      %v1219 = vpack.c.bf16 %v274, %v274
      %v1220 = vpack.c.bf16 %v275, %v275
      %v1221 = vpack.c.bf16 %v276, %v276
      %v1222 = vpack.c.bf16 %v277, %v277
      %v1223 = vpack.c.bf16 %v278, %v278
      %v1224 = vpack.c.bf16 %v279, %v279
      %v1225 = vpack.c.bf16 %v280, %v280
      %v1226 = vpack.c.bf16 %v281, %v281
      %v1227 = vpack.c.bf16 %v282, %v282
      %v1229 = vsel %vm315, %v1196, 0
      %vm1231 = vcmask 1043456
      %v1233 = vsel %vm1231, %v1212, 0
      %1235 = vmatprep.subr.bf16.mxu0 0
      %1236 = vmatpush1.bf16.msra.mxu0 0
      %1237 = vmatprep.subr.bf16.mxu0 0
      %1238 = vmatpush1.bf16.msra.mxu0 0
      %1239 = vmatprep.subr.bf16.mxu0 0
      %1240 = vmatpush1.bf16.msra.mxu0 0
      %1241 = vmatprep.subr.bf16.mxu0 0
      %1242 = vmatpush1.bf16.msra.mxu0 0
      %1243 = vmatprep.subr.bf16.mxu0 0
      %1244 = vmatpush1.bf16.msra.mxu0 0
      %1245 = vmatprep.subr.bf16.mxu0 0
      %1246 = vmatpush1.bf16.msra.mxu0 0
      %1247 = vmatprep.subr.bf16.mxu0 0
      %1248 = vmatpush1.bf16.msra.mxu0 0
      %1249 = vmatprep.subr.bf16.mxu0 0
      %1250 = vmatpush1.bf16.msra.mxu0 %v1233
      %1251 = vmatprep.subr.bf16.mxu0 0
      %1252 = vmatpush2.bf16.msra.mxu0 0
      %1253 = vmatprep.subr.bf16.mxu0 0
      %1254 = vmatpush2.bf16.msra.mxu0 0
      %1255 = vmatprep.subr.bf16.mxu0 0
      %1256 = vmatpush2.bf16.msra.mxu0 0
      %1257 = vmatprep.subr.bf16.mxu0 0
      %1258 = vmatpush2.bf16.msra.mxu0 0
      %1259 = vmatprep.subr.bf16.mxu0 0
      %1260 = vmatpush2.bf16.msra.mxu0 0
      %1261 = vmatprep.subr.bf16.mxu0 0
      %1262 = vmatpush2.bf16.msra.mxu0 0
      %1263 = vmatprep.subr.bf16.mxu0 0
      %1264 = vmatpush2.bf16.msra.mxu0 0
      %1265 = vmatprep.subr.bf16.mxu0 0
      %1266 = vmatpush2.bf16.msra.mxu0 0
      %1267 = vmatprep.mubr.bf16.mxu0 0
      %1268 = vmatmul.mubr.bf16.gmra.mxu0 %v1229
      %v1269 = vpop.f32.mrf.mxu0
      %v1270 = vadd.f32 0.0, %v1269
      %v1271 = vpop.f32.mrf.mxu0
      %v1272 = vpop.f32.mrf.mxu0
      %v1273 = vpop.f32.mrf.mxu0
      %1274 = vdwg.mxu0
      %v1276 = vsel %vm315, %v1197, 0
      %v1279 = vsel %vm1231, %v1213, 0
      %1281 = vmatprep.subr.bf16.mxu0 0
      %1282 = vmatpush1.bf16.msra.mxu0 0
      %1283 = vmatprep.subr.bf16.mxu0 0
      %1284 = vmatpush1.bf16.msra.mxu0 0
      %1285 = vmatprep.subr.bf16.mxu0 0
      %1286 = vmatpush1.bf16.msra.mxu0 0
      %1287 = vmatprep.subr.bf16.mxu0 0
      %1288 = vmatpush1.bf16.msra.mxu0 0
      %1289 = vmatprep.subr.bf16.mxu0 0
      %1290 = vmatpush1.bf16.msra.mxu0 0
      %1291 = vmatprep.subr.bf16.mxu0 0
      %1292 = vmatpush1.bf16.msra.mxu0 0
      %1293 = vmatprep.subr.bf16.mxu0 0
      %1294 = vmatpush1.bf16.msra.mxu0 0
      %1295 = vmatprep.subr.bf16.mxu0 0
      %1296 = vmatpush1.bf16.msra.mxu0 %v1279
      %1297 = vmatprep.subr.bf16.mxu0 0
      %1298 = vmatpush2.bf16.msra.mxu0 0
      %1299 = vmatprep.subr.bf16.mxu0 0
      %1300 = vmatpush2.bf16.msra.mxu0 0
      %1301 = vmatprep.subr.bf16.mxu0 0
      %1302 = vmatpush2.bf16.msra.mxu0 0
      %1303 = vmatprep.subr.bf16.mxu0 0
      %1304 = vmatpush2.bf16.msra.mxu0 0
      %1305 = vmatprep.subr.bf16.mxu0 0
      %1306 = vmatpush2.bf16.msra.mxu0 0
      %1307 = vmatprep.subr.bf16.mxu0 0
      %1308 = vmatpush2.bf16.msra.mxu0 0
      %1309 = vmatprep.subr.bf16.mxu0 0
      %1310 = vmatpush2.bf16.msra.mxu0 0
      %1311 = vmatprep.subr.bf16.mxu0 0
      %1312 = vmatpush2.bf16.msra.mxu0 0
      %1313 = vmatprep.mubr.bf16.mxu0 0
      %1314 = vmatmul.mubr.bf16.gmra.mxu0 %v1276
      %v1315 = vpop.f32.mrf.mxu0
      %v1316 = vadd.f32 0.0, %v1315
      %v1317 = vpop.f32.mrf.mxu0
      %v1318 = vpop.f32.mrf.mxu0
      %v1319 = vpop.f32.mrf.mxu0
      %1320 = vdwg.mxu0
      %v1322 = vsel %vm315, %v1198, 0
      %v1325 = vsel %vm1231, %v1214, 0
      %1327 = vmatprep.subr.bf16.mxu0 0
      %1328 = vmatpush1.bf16.msra.mxu0 0
      %1329 = vmatprep.subr.bf16.mxu0 0
      %1330 = vmatpush1.bf16.msra.mxu0 0
      %1331 = vmatprep.subr.bf16.mxu0 0
      %1332 = vmatpush1.bf16.msra.mxu0 0
      %1333 = vmatprep.subr.bf16.mxu0 0
      %1334 = vmatpush1.bf16.msra.mxu0 0
      %1335 = vmatprep.subr.bf16.mxu0 0
      %1336 = vmatpush1.bf16.msra.mxu0 0
      %1337 = vmatprep.subr.bf16.mxu0 0
      %1338 = vmatpush1.bf16.msra.mxu0 0
      %1339 = vmatprep.subr.bf16.mxu0 0
      %1340 = vmatpush1.bf16.msra.mxu0 0
      %1341 = vmatprep.subr.bf16.mxu0 0
      %1342 = vmatpush1.bf16.msra.mxu0 %v1325
      %1343 = vmatprep.subr.bf16.mxu0 0
      %1344 = vmatpush2.bf16.msra.mxu0 0
      %1345 = vmatprep.subr.bf16.mxu0 0
      %1346 = vmatpush2.bf16.msra.mxu0 0
      %1347 = vmatprep.subr.bf16.mxu0 0
      %1348 = vmatpush2.bf16.msra.mxu0 0
      %1349 = vmatprep.subr.bf16.mxu0 0
      %1350 = vmatpush2.bf16.msra.mxu0 0
      %1351 = vmatprep.subr.bf16.mxu0 0
      %1352 = vmatpush2.bf16.msra.mxu0 0
      %1353 = vmatprep.subr.bf16.mxu0 0
      %1354 = vmatpush2.bf16.msra.mxu0 0
      %1355 = vmatprep.subr.bf16.mxu0 0
      %1356 = vmatpush2.bf16.msra.mxu0 0
      %1357 = vmatprep.subr.bf16.mxu0 0
      %1358 = vmatpush2.bf16.msra.mxu0 0
      %1359 = vmatprep.mubr.bf16.mxu0 0
      %1360 = vmatmul.mubr.bf16.gmra.mxu0 %v1322
      %v1361 = vpop.f32.mrf.mxu0
      %v1362 = vadd.f32 0.0, %v1361
      %v1363 = vpop.f32.mrf.mxu0
      %v1364 = vpop.f32.mrf.mxu0
      %v1365 = vpop.f32.mrf.mxu0
      %1366 = vdwg.mxu0
      %v1368 = vsel %vm315, %v1199, 0
      %v1371 = vsel %vm1231, %v1215, 0
      %1373 = vmatprep.subr.bf16.mxu0 0
      %1374 = vmatpush1.bf16.msra.mxu0 0
      %1375 = vmatprep.subr.bf16.mxu0 0
      %1376 = vmatpush1.bf16.msra.mxu0 0
      %1377 = vmatprep.subr.bf16.mxu0 0
      %1378 = vmatpush1.bf16.msra.mxu0 0
      %1379 = vmatprep.subr.bf16.mxu0 0
      %1380 = vmatpush1.bf16.msra.mxu0 0
      %1381 = vmatprep.subr.bf16.mxu0 0
      %1382 = vmatpush1.bf16.msra.mxu0 0
      %1383 = vmatprep.subr.bf16.mxu0 0
      %1384 = vmatpush1.bf16.msra.mxu0 0
      %1385 = vmatprep.subr.bf16.mxu0 0
      %1386 = vmatpush1.bf16.msra.mxu0 0
      %1387 = vmatprep.subr.bf16.mxu0 0
      %1388 = vmatpush1.bf16.msra.mxu0 %v1371
      %1389 = vmatprep.subr.bf16.mxu0 0
      %1390 = vmatpush2.bf16.msra.mxu0 0
      %1391 = vmatprep.subr.bf16.mxu0 0
      %1392 = vmatpush2.bf16.msra.mxu0 0
      %1393 = vmatprep.subr.bf16.mxu0 0
      %1394 = vmatpush2.bf16.msra.mxu0 0
      %1395 = vmatprep.subr.bf16.mxu0 0
      %1396 = vmatpush2.bf16.msra.mxu0 0
      %1397 = vmatprep.subr.bf16.mxu0 0
      %1398 = vmatpush2.bf16.msra.mxu0 0
      %1399 = vmatprep.subr.bf16.mxu0 0
      %1400 = vmatpush2.bf16.msra.mxu0 0
      %1401 = vmatprep.subr.bf16.mxu0 0
      %1402 = vmatpush2.bf16.msra.mxu0 0
      %1403 = vmatprep.subr.bf16.mxu0 0
      %1404 = vmatpush2.bf16.msra.mxu0 0
      %1405 = vmatprep.mubr.bf16.mxu0 0
      %1406 = vmatmul.mubr.bf16.gmra.mxu0 %v1368
      %v1407 = vpop.f32.mrf.mxu0
      %v1408 = vadd.f32 0.0, %v1407
      %v1409 = vpop.f32.mrf.mxu0
      %v1410 = vpop.f32.mrf.mxu0
      %v1411 = vpop.f32.mrf.mxu0
      %1412 = vdwg.mxu0
      %v1414 = vsel %vm315, %v1200, 0
      %v1417 = vsel %vm1231, %v1216, 0
      %1419 = vmatprep.subr.bf16.mxu0 0
      %1420 = vmatpush1.bf16.msra.mxu0 0
      %1421 = vmatprep.subr.bf16.mxu0 0
      %1422 = vmatpush1.bf16.msra.mxu0 0
      %1423 = vmatprep.subr.bf16.mxu0 0
      %1424 = vmatpush1.bf16.msra.mxu0 0
      %1425 = vmatprep.subr.bf16.mxu0 0
      %1426 = vmatpush1.bf16.msra.mxu0 0
      %1427 = vmatprep.subr.bf16.mxu0 0
      %1428 = vmatpush1.bf16.msra.mxu0 0
      %1429 = vmatprep.subr.bf16.mxu0 0
      %1430 = vmatpush1.bf16.msra.mxu0 0
      %1431 = vmatprep.subr.bf16.mxu0 0
      %1432 = vmatpush1.bf16.msra.mxu0 0
      %1433 = vmatprep.subr.bf16.mxu0 0
      %1434 = vmatpush1.bf16.msra.mxu0 %v1417
      %1435 = vmatprep.subr.bf16.mxu0 0
      %1436 = vmatpush2.bf16.msra.mxu0 0
      %1437 = vmatprep.subr.bf16.mxu0 0
      %1438 = vmatpush2.bf16.msra.mxu0 0
      %1439 = vmatprep.subr.bf16.mxu0 0
      %1440 = vmatpush2.bf16.msra.mxu0 0
      %1441 = vmatprep.subr.bf16.mxu0 0
      %1442 = vmatpush2.bf16.msra.mxu0 0
      %1443 = vmatprep.subr.bf16.mxu0 0
      %1444 = vmatpush2.bf16.msra.mxu0 0
      %1445 = vmatprep.subr.bf16.mxu0 0
      %1446 = vmatpush2.bf16.msra.mxu0 0
      %1447 = vmatprep.subr.bf16.mxu0 0
      %1448 = vmatpush2.bf16.msra.mxu0 0
      %1449 = vmatprep.subr.bf16.mxu0 0
      %1450 = vmatpush2.bf16.msra.mxu0 0
      %1451 = vmatprep.mubr.bf16.mxu0 0
      %1452 = vmatmul.mubr.bf16.gmra.mxu0 %v1414
      %v1453 = vpop.f32.mrf.mxu0
      %v1454 = vadd.f32 0.0, %v1453
      %v1455 = vpop.f32.mrf.mxu0
      %v1456 = vpop.f32.mrf.mxu0
      %v1457 = vpop.f32.mrf.mxu0
      %1458 = vdwg.mxu0
      %v1460 = vsel %vm315, %v1201, 0
      %v1463 = vsel %vm1231, %v1217, 0
      %1465 = vmatprep.subr.bf16.mxu0 0
      %1466 = vmatpush1.bf16.msra.mxu0 0
      %1467 = vmatprep.subr.bf16.mxu0 0
      %1468 = vmatpush1.bf16.msra.mxu0 0
      %1469 = vmatprep.subr.bf16.mxu0 0
      %1470 = vmatpush1.bf16.msra.mxu0 0
      %1471 = vmatprep.subr.bf16.mxu0 0
      %1472 = vmatpush1.bf16.msra.mxu0 0
      %1473 = vmatprep.subr.bf16.mxu0 0
      %1474 = vmatpush1.bf16.msra.mxu0 0
      %1475 = vmatprep.subr.bf16.mxu0 0
      %1476 = vmatpush1.bf16.msra.mxu0 0
      %1477 = vmatprep.subr.bf16.mxu0 0
      %1478 = vmatpush1.bf16.msra.mxu0 0
      %1479 = vmatprep.subr.bf16.mxu0 0
      %1480 = vmatpush1.bf16.msra.mxu0 %v1463
      %1481 = vmatprep.subr.bf16.mxu0 0
      %1482 = vmatpush2.bf16.msra.mxu0 0
      %1483 = vmatprep.subr.bf16.mxu0 0
      %1484 = vmatpush2.bf16.msra.mxu0 0
      %1485 = vmatprep.subr.bf16.mxu0 0
      %1486 = vmatpush2.bf16.msra.mxu0 0
      %1487 = vmatprep.subr.bf16.mxu0 0
      %1488 = vmatpush2.bf16.msra.mxu0 0
      %1489 = vmatprep.subr.bf16.mxu0 0
      %1490 = vmatpush2.bf16.msra.mxu0 0
      %1491 = vmatprep.subr.bf16.mxu0 0
      %1492 = vmatpush2.bf16.msra.mxu0 0
      %1493 = vmatprep.subr.bf16.mxu0 0
      %1494 = vmatpush2.bf16.msra.mxu0 0
      %1495 = vmatprep.subr.bf16.mxu0 0
      %1496 = vmatpush2.bf16.msra.mxu0 0
      %1497 = vmatprep.mubr.bf16.mxu0 0
      %1498 = vmatmul.mubr.bf16.gmra.mxu0 %v1460
      %v1499 = vpop.f32.mrf.mxu0
      %v1500 = vadd.f32 0.0, %v1499
      %v1501 = vpop.f32.mrf.mxu0
      %v1502 = vpop.f32.mrf.mxu0
      %v1503 = vpop.f32.mrf.mxu0
      %1504 = vdwg.mxu0
      %v1506 = vsel %vm315, %v1202, 0
      %v1509 = vsel %vm1231, %v1218, 0
      %1511 = vmatprep.subr.bf16.mxu0 0
      %1512 = vmatpush1.bf16.msra.mxu0 0
      %1513 = vmatprep.subr.bf16.mxu0 0
      %1514 = vmatpush1.bf16.msra.mxu0 0
      %1515 = vmatprep.subr.bf16.mxu0 0
      %1516 = vmatpush1.bf16.msra.mxu0 0
      %1517 = vmatprep.subr.bf16.mxu0 0
      %1518 = vmatpush1.bf16.msra.mxu0 0
      %1519 = vmatprep.subr.bf16.mxu0 0
      %1520 = vmatpush1.bf16.msra.mxu0 0
      %1521 = vmatprep.subr.bf16.mxu0 0
      %1522 = vmatpush1.bf16.msra.mxu0 0
      %1523 = vmatprep.subr.bf16.mxu0 0
      %1524 = vmatpush1.bf16.msra.mxu0 0
      %1525 = vmatprep.subr.bf16.mxu0 0
      %1526 = vmatpush1.bf16.msra.mxu0 %v1509
      %1527 = vmatprep.subr.bf16.mxu0 0
      %1528 = vmatpush2.bf16.msra.mxu0 0
      %1529 = vmatprep.subr.bf16.mxu0 0
      %1530 = vmatpush2.bf16.msra.mxu0 0
      %1531 = vmatprep.subr.bf16.mxu0 0
      %1532 = vmatpush2.bf16.msra.mxu0 0
      %1533 = vmatprep.subr.bf16.mxu0 0
      %1534 = vmatpush2.bf16.msra.mxu0 0
      %1535 = vmatprep.subr.bf16.mxu0 0
      %1536 = vmatpush2.bf16.msra.mxu0 0
      %1537 = vmatprep.subr.bf16.mxu0 0
      %1538 = vmatpush2.bf16.msra.mxu0 0
      %1539 = vmatprep.subr.bf16.mxu0 0
      %1540 = vmatpush2.bf16.msra.mxu0 0
      %1541 = vmatprep.subr.bf16.mxu0 0
      %1542 = vmatpush2.bf16.msra.mxu0 0
      %1543 = vmatprep.mubr.bf16.mxu0 0
      %1544 = vmatmul.mubr.bf16.gmra.mxu0 %v1506
      %v1545 = vpop.f32.mrf.mxu0
      %v1546 = vadd.f32 0.0, %v1545
      %v1547 = vpop.f32.mrf.mxu0
      %v1548 = vpop.f32.mrf.mxu0
      %v1549 = vpop.f32.mrf.mxu0
      %1550 = vdwg.mxu0
      %v1552 = vsel %vm315, %v1203, 0
      %v1555 = vsel %vm1231, %v1219, 0
      %1557 = vmatprep.subr.bf16.mxu0 0
      %1558 = vmatpush1.bf16.msra.mxu0 0
      %1559 = vmatprep.subr.bf16.mxu0 0
      %1560 = vmatpush1.bf16.msra.mxu0 0
      %1561 = vmatprep.subr.bf16.mxu0 0
      %1562 = vmatpush1.bf16.msra.mxu0 0
      %1563 = vmatprep.subr.bf16.mxu0 0
      %1564 = vmatpush1.bf16.msra.mxu0 0
      %1565 = vmatprep.subr.bf16.mxu0 0
      %1566 = vmatpush1.bf16.msra.mxu0 0
      %1567 = vmatprep.subr.bf16.mxu0 0
      %1568 = vmatpush1.bf16.msra.mxu0 0
      %1569 = vmatprep.subr.bf16.mxu0 0
      %1570 = vmatpush1.bf16.msra.mxu0 0
      %1571 = vmatprep.subr.bf16.mxu0 0
      %1572 = vmatpush1.bf16.msra.mxu0 %v1555
      %1573 = vmatprep.subr.bf16.mxu0 0
      %1574 = vmatpush2.bf16.msra.mxu0 0
      %1575 = vmatprep.subr.bf16.mxu0 0
      %1576 = vmatpush2.bf16.msra.mxu0 0
      %1577 = vmatprep.subr.bf16.mxu0 0
      %1578 = vmatpush2.bf16.msra.mxu0 0
      %1579 = vmatprep.subr.bf16.mxu0 0
      %1580 = vmatpush2.bf16.msra.mxu0 0
      %1581 = vmatprep.subr.bf16.mxu0 0
      %1582 = vmatpush2.bf16.msra.mxu0 0
      %1583 = vmatprep.subr.bf16.mxu0 0
      %1584 = vmatpush2.bf16.msra.mxu0 0
      %1585 = vmatprep.subr.bf16.mxu0 0
      %1586 = vmatpush2.bf16.msra.mxu0 0
      %1587 = vmatprep.subr.bf16.mxu0 0
      %1588 = vmatpush2.bf16.msra.mxu0 0
      %1589 = vmatprep.mubr.bf16.mxu0 0
      %1590 = vmatmul.mubr.bf16.gmra.mxu0 %v1552
      %v1591 = vpop.f32.mrf.mxu0
      %v1592 = vadd.f32 0.0, %v1591
      %v1593 = vpop.f32.mrf.mxu0
      %v1594 = vpop.f32.mrf.mxu0
      %v1595 = vpop.f32.mrf.mxu0
      %1596 = vdwg.mxu0
      %v1598 = vsel %vm315, %v1204, 0
      %v1601 = vsel %vm1231, %v1220, 0
      %1603 = vmatprep.subr.bf16.mxu0 0
      %1604 = vmatpush1.bf16.msra.mxu0 0
      %1605 = vmatprep.subr.bf16.mxu0 0
      %1606 = vmatpush1.bf16.msra.mxu0 0
      %1607 = vmatprep.subr.bf16.mxu0 0
      %1608 = vmatpush1.bf16.msra.mxu0 0
      %1609 = vmatprep.subr.bf16.mxu0 0
      %1610 = vmatpush1.bf16.msra.mxu0 0
      %1611 = vmatprep.subr.bf16.mxu0 0
      %1612 = vmatpush1.bf16.msra.mxu0 0
      %1613 = vmatprep.subr.bf16.mxu0 0
      %1614 = vmatpush1.bf16.msra.mxu0 0
      %1615 = vmatprep.subr.bf16.mxu0 0
      %1616 = vmatpush1.bf16.msra.mxu0 0
      %1617 = vmatprep.subr.bf16.mxu0 0
      %1618 = vmatpush1.bf16.msra.mxu0 %v1601
      %1619 = vmatprep.subr.bf16.mxu0 0
      %1620 = vmatpush2.bf16.msra.mxu0 0
      %1621 = vmatprep.subr.bf16.mxu0 0
      %1622 = vmatpush2.bf16.msra.mxu0 0
      %1623 = vmatprep.subr.bf16.mxu0 0
      %1624 = vmatpush2.bf16.msra.mxu0 0
      %1625 = vmatprep.subr.bf16.mxu0 0
      %1626 = vmatpush2.bf16.msra.mxu0 0
      %1627 = vmatprep.subr.bf16.mxu0 0
      %1628 = vmatpush2.bf16.msra.mxu0 0
      %1629 = vmatprep.subr.bf16.mxu0 0
      %1630 = vmatpush2.bf16.msra.mxu0 0
      %1631 = vmatprep.subr.bf16.mxu0 0
      %1632 = vmatpush2.bf16.msra.mxu0 0
      %1633 = vmatprep.subr.bf16.mxu0 0
      %1634 = vmatpush2.bf16.msra.mxu0 0
      %1635 = vmatprep.mubr.bf16.mxu0 0
      %1636 = vmatmul.mubr.bf16.gmra.mxu0 %v1598
      %v1637 = vpop.f32.mrf.mxu0
      %v1638 = vadd.f32 0.0, %v1637
      %v1639 = vpop.f32.mrf.mxu0
      %v1640 = vpop.f32.mrf.mxu0
      %v1641 = vpop.f32.mrf.mxu0
      %1642 = vdwg.mxu0
      %v1644 = vsel %vm315, %v1205, 0
      %v1647 = vsel %vm1231, %v1221, 0
      %1649 = vmatprep.subr.bf16.mxu0 0
      %1650 = vmatpush1.bf16.msra.mxu0 0
      %1651 = vmatprep.subr.bf16.mxu0 0
      %1652 = vmatpush1.bf16.msra.mxu0 0
      %1653 = vmatprep.subr.bf16.mxu0 0
      %1654 = vmatpush1.bf16.msra.mxu0 0
      %1655 = vmatprep.subr.bf16.mxu0 0
      %1656 = vmatpush1.bf16.msra.mxu0 0
      %1657 = vmatprep.subr.bf16.mxu0 0
      %1658 = vmatpush1.bf16.msra.mxu0 0
      %1659 = vmatprep.subr.bf16.mxu0 0
      %1660 = vmatpush1.bf16.msra.mxu0 0
      %1661 = vmatprep.subr.bf16.mxu0 0
      %1662 = vmatpush1.bf16.msra.mxu0 0
      %1663 = vmatprep.subr.bf16.mxu0 0
      %1664 = vmatpush1.bf16.msra.mxu0 %v1647
      %1665 = vmatprep.subr.bf16.mxu0 0
      %1666 = vmatpush2.bf16.msra.mxu0 0
      %1667 = vmatprep.subr.bf16.mxu0 0
      %1668 = vmatpush2.bf16.msra.mxu0 0
      %1669 = vmatprep.subr.bf16.mxu0 0
      %1670 = vmatpush2.bf16.msra.mxu0 0
      %1671 = vmatprep.subr.bf16.mxu0 0
      %1672 = vmatpush2.bf16.msra.mxu0 0
      %1673 = vmatprep.subr.bf16.mxu0 0
      %1674 = vmatpush2.bf16.msra.mxu0 0
      %1675 = vmatprep.subr.bf16.mxu0 0
      %1676 = vmatpush2.bf16.msra.mxu0 0
      %1677 = vmatprep.subr.bf16.mxu0 0
      %1678 = vmatpush2.bf16.msra.mxu0 0
      %1679 = vmatprep.subr.bf16.mxu0 0
      %1680 = vmatpush2.bf16.msra.mxu0 0
      %1681 = vmatprep.mubr.bf16.mxu0 0
      %1682 = vmatmul.mubr.bf16.gmra.mxu0 %v1644
      %v1683 = vpop.f32.mrf.mxu0
      %v1684 = vadd.f32 0.0, %v1683
      %v1685 = vpop.f32.mrf.mxu0
      %v1686 = vpop.f32.mrf.mxu0
      %v1687 = vpop.f32.mrf.mxu0
      %1688 = vdwg.mxu0
      %v1690 = vsel %vm315, %v1206, 0
      %v1693 = vsel %vm1231, %v1222, 0
      %1695 = vmatprep.subr.bf16.mxu0 0
      %1696 = vmatpush1.bf16.msra.mxu0 0
      %1697 = vmatprep.subr.bf16.mxu0 0
      %1698 = vmatpush1.bf16.msra.mxu0 0
      %1699 = vmatprep.subr.bf16.mxu0 0
      %1700 = vmatpush1.bf16.msra.mxu0 0
      %1701 = vmatprep.subr.bf16.mxu0 0
      %1702 = vmatpush1.bf16.msra.mxu0 0
      %1703 = vmatprep.subr.bf16.mxu0 0
      %1704 = vmatpush1.bf16.msra.mxu0 0
      %1705 = vmatprep.subr.bf16.mxu0 0
      %1706 = vmatpush1.bf16.msra.mxu0 0
      %1707 = vmatprep.subr.bf16.mxu0 0
      %1708 = vmatpush1.bf16.msra.mxu0 0
      %1709 = vmatprep.subr.bf16.mxu0 0
      %1710 = vmatpush1.bf16.msra.mxu0 %v1693
      %1711 = vmatprep.subr.bf16.mxu0 0
      %1712 = vmatpush2.bf16.msra.mxu0 0
      %1713 = vmatprep.subr.bf16.mxu0 0
      %1714 = vmatpush2.bf16.msra.mxu0 0
      %1715 = vmatprep.subr.bf16.mxu0 0
      %1716 = vmatpush2.bf16.msra.mxu0 0
      %1717 = vmatprep.subr.bf16.mxu0 0
      %1718 = vmatpush2.bf16.msra.mxu0 0
      %1719 = vmatprep.subr.bf16.mxu0 0
      %1720 = vmatpush2.bf16.msra.mxu0 0
      %1721 = vmatprep.subr.bf16.mxu0 0
      %1722 = vmatpush2.bf16.msra.mxu0 0
      %1723 = vmatprep.subr.bf16.mxu0 0
      %1724 = vmatpush2.bf16.msra.mxu0 0
      %1725 = vmatprep.subr.bf16.mxu0 0
      %1726 = vmatpush2.bf16.msra.mxu0 0
      %1727 = vmatprep.mubr.bf16.mxu0 0
      %1728 = vmatmul.mubr.bf16.gmra.mxu0 %v1690
      %v1729 = vpop.f32.mrf.mxu0
      %v1730 = vadd.f32 0.0, %v1729
      %v1731 = vpop.f32.mrf.mxu0
      %v1732 = vpop.f32.mrf.mxu0
      %v1733 = vpop.f32.mrf.mxu0
      %1734 = vdwg.mxu0
      %v1736 = vsel %vm315, %v1207, 0
      %v1739 = vsel %vm1231, %v1223, 0
      %1741 = vmatprep.subr.bf16.mxu0 0
      %1742 = vmatpush1.bf16.msra.mxu0 0
      %1743 = vmatprep.subr.bf16.mxu0 0
      %1744 = vmatpush1.bf16.msra.mxu0 0
      %1745 = vmatprep.subr.bf16.mxu0 0
      %1746 = vmatpush1.bf16.msra.mxu0 0
      %1747 = vmatprep.subr.bf16.mxu0 0
      %1748 = vmatpush1.bf16.msra.mxu0 0
      %1749 = vmatprep.subr.bf16.mxu0 0
      %1750 = vmatpush1.bf16.msra.mxu0 0
      %1751 = vmatprep.subr.bf16.mxu0 0
      %1752 = vmatpush1.bf16.msra.mxu0 0
      %1753 = vmatprep.subr.bf16.mxu0 0
      %1754 = vmatpush1.bf16.msra.mxu0 0
      %1755 = vmatprep.subr.bf16.mxu0 0
      %1756 = vmatpush1.bf16.msra.mxu0 %v1739
      %1757 = vmatprep.subr.bf16.mxu0 0
      %1758 = vmatpush2.bf16.msra.mxu0 0
      %1759 = vmatprep.subr.bf16.mxu0 0
      %1760 = vmatpush2.bf16.msra.mxu0 0
      %1761 = vmatprep.subr.bf16.mxu0 0
      %1762 = vmatpush2.bf16.msra.mxu0 0
      %1763 = vmatprep.subr.bf16.mxu0 0
      %1764 = vmatpush2.bf16.msra.mxu0 0
      %1765 = vmatprep.subr.bf16.mxu0 0
      %1766 = vmatpush2.bf16.msra.mxu0 0
      %1767 = vmatprep.subr.bf16.mxu0 0
      %1768 = vmatpush2.bf16.msra.mxu0 0
      %1769 = vmatprep.subr.bf16.mxu0 0
      %1770 = vmatpush2.bf16.msra.mxu0 0
      %1771 = vmatprep.subr.bf16.mxu0 0
      %1772 = vmatpush2.bf16.msra.mxu0 0
      %1773 = vmatprep.mubr.bf16.mxu0 0
      %1774 = vmatmul.mubr.bf16.gmra.mxu0 %v1736
      %v1775 = vpop.f32.mrf.mxu0
      %v1776 = vadd.f32 0.0, %v1775
      %v1777 = vpop.f32.mrf.mxu0
      %v1778 = vpop.f32.mrf.mxu0
      %v1779 = vpop.f32.mrf.mxu0
      %1780 = vdwg.mxu0
      %v1782 = vsel %vm315, %v1208, 0
      %v1785 = vsel %vm1231, %v1224, 0
      %1787 = vmatprep.subr.bf16.mxu0 0
      %1788 = vmatpush1.bf16.msra.mxu0 0
      %1789 = vmatprep.subr.bf16.mxu0 0
      %1790 = vmatpush1.bf16.msra.mxu0 0
      %1791 = vmatprep.subr.bf16.mxu0 0
      %1792 = vmatpush1.bf16.msra.mxu0 0
      %1793 = vmatprep.subr.bf16.mxu0 0
      %1794 = vmatpush1.bf16.msra.mxu0 0
      %1795 = vmatprep.subr.bf16.mxu0 0
      %1796 = vmatpush1.bf16.msra.mxu0 0
      %1797 = vmatprep.subr.bf16.mxu0 0
      %1798 = vmatpush1.bf16.msra.mxu0 0
      %1799 = vmatprep.subr.bf16.mxu0 0
      %1800 = vmatpush1.bf16.msra.mxu0 0
      %1801 = vmatprep.subr.bf16.mxu0 0
      %1802 = vmatpush1.bf16.msra.mxu0 %v1785
      %1803 = vmatprep.subr.bf16.mxu0 0
      %1804 = vmatpush2.bf16.msra.mxu0 0
      %1805 = vmatprep.subr.bf16.mxu0 0
      %1806 = vmatpush2.bf16.msra.mxu0 0
      %1807 = vmatprep.subr.bf16.mxu0 0
      %1808 = vmatpush2.bf16.msra.mxu0 0
      %1809 = vmatprep.subr.bf16.mxu0 0
      %1810 = vmatpush2.bf16.msra.mxu0 0
      %1811 = vmatprep.subr.bf16.mxu0 0
      %1812 = vmatpush2.bf16.msra.mxu0 0
      %1813 = vmatprep.subr.bf16.mxu0 0
      %1814 = vmatpush2.bf16.msra.mxu0 0
      %1815 = vmatprep.subr.bf16.mxu0 0
      %1816 = vmatpush2.bf16.msra.mxu0 0
      %1817 = vmatprep.subr.bf16.mxu0 0
      %1818 = vmatpush2.bf16.msra.mxu0 0
      %1819 = vmatprep.mubr.bf16.mxu0 0
      %1820 = vmatmul.mubr.bf16.gmra.mxu0 %v1782
      %v1821 = vpop.f32.mrf.mxu0
      %v1822 = vadd.f32 0.0, %v1821
      %v1823 = vpop.f32.mrf.mxu0
      %v1824 = vpop.f32.mrf.mxu0
      %v1825 = vpop.f32.mrf.mxu0
      %1826 = vdwg.mxu0
      %v1828 = vsel %vm315, %v1209, 0
      %v1831 = vsel %vm1231, %v1225, 0
      %1833 = vmatprep.subr.bf16.mxu0 0
      %1834 = vmatpush1.bf16.msra.mxu0 0
      %1835 = vmatprep.subr.bf16.mxu0 0
      %1836 = vmatpush1.bf16.msra.mxu0 0
      %1837 = vmatprep.subr.bf16.mxu0 0
      %1838 = vmatpush1.bf16.msra.mxu0 0
      %1839 = vmatprep.subr.bf16.mxu0 0
      %1840 = vmatpush1.bf16.msra.mxu0 0
      %1841 = vmatprep.subr.bf16.mxu0 0
      %1842 = vmatpush1.bf16.msra.mxu0 0
      %1843 = vmatprep.subr.bf16.mxu0 0
      %1844 = vmatpush1.bf16.msra.mxu0 0
      %1845 = vmatprep.subr.bf16.mxu0 0
      %1846 = vmatpush1.bf16.msra.mxu0 0
      %1847 = vmatprep.subr.bf16.mxu0 0
      %1848 = vmatpush1.bf16.msra.mxu0 %v1831
      %1849 = vmatprep.subr.bf16.mxu0 0
      %1850 = vmatpush2.bf16.msra.mxu0 0
      %1851 = vmatprep.subr.bf16.mxu0 0
      %1852 = vmatpush2.bf16.msra.mxu0 0
      %1853 = vmatprep.subr.bf16.mxu0 0
      %1854 = vmatpush2.bf16.msra.mxu0 0
      %1855 = vmatprep.subr.bf16.mxu0 0
      %1856 = vmatpush2.bf16.msra.mxu0 0
      %1857 = vmatprep.subr.bf16.mxu0 0
      %1858 = vmatpush2.bf16.msra.mxu0 0
      %1859 = vmatprep.subr.bf16.mxu0 0
      %1860 = vmatpush2.bf16.msra.mxu0 0
      %1861 = vmatprep.subr.bf16.mxu0 0
      %1862 = vmatpush2.bf16.msra.mxu0 0
      %1863 = vmatprep.subr.bf16.mxu0 0
      %1864 = vmatpush2.bf16.msra.mxu0 0
      %1865 = vmatprep.mubr.bf16.mxu0 0
      %1866 = vmatmul.mubr.bf16.gmra.mxu0 %v1828
      %v1867 = vpop.f32.mrf.mxu0
      %v1868 = vadd.f32 0.0, %v1867
      %v1869 = vpop.f32.mrf.mxu0
      %v1870 = vpop.f32.mrf.mxu0
      %v1871 = vpop.f32.mrf.mxu0
      %1872 = vdwg.mxu0
      %v1874 = vsel %vm315, %v1210, 0
      %v1877 = vsel %vm1231, %v1226, 0
      %1879 = vmatprep.subr.bf16.mxu0 0
      %1880 = vmatpush1.bf16.msra.mxu0 0
      %1881 = vmatprep.subr.bf16.mxu0 0
      %1882 = vmatpush1.bf16.msra.mxu0 0
      %1883 = vmatprep.subr.bf16.mxu0 0
      %1884 = vmatpush1.bf16.msra.mxu0 0
      %1885 = vmatprep.subr.bf16.mxu0 0
      %1886 = vmatpush1.bf16.msra.mxu0 0
      %1887 = vmatprep.subr.bf16.mxu0 0
      %1888 = vmatpush1.bf16.msra.mxu0 0
      %1889 = vmatprep.subr.bf16.mxu0 0
      %1890 = vmatpush1.bf16.msra.mxu0 0
      %1891 = vmatprep.subr.bf16.mxu0 0
      %1892 = vmatpush1.bf16.msra.mxu0 0
      %1893 = vmatprep.subr.bf16.mxu0 0
      %1894 = vmatpush1.bf16.msra.mxu0 %v1877
      %1895 = vmatprep.subr.bf16.mxu0 0
      %1896 = vmatpush2.bf16.msra.mxu0 0
      %1897 = vmatprep.subr.bf16.mxu0 0
      %1898 = vmatpush2.bf16.msra.mxu0 0
      %1899 = vmatprep.subr.bf16.mxu0 0
      %1900 = vmatpush2.bf16.msra.mxu0 0
      %1901 = vmatprep.subr.bf16.mxu0 0
      %1902 = vmatpush2.bf16.msra.mxu0 0
      %1903 = vmatprep.subr.bf16.mxu0 0
      %1904 = vmatpush2.bf16.msra.mxu0 0
      %1905 = vmatprep.subr.bf16.mxu0 0
      %1906 = vmatpush2.bf16.msra.mxu0 0
      %1907 = vmatprep.subr.bf16.mxu0 0
      %1908 = vmatpush2.bf16.msra.mxu0 0
      %1909 = vmatprep.subr.bf16.mxu0 0
      %1910 = vmatpush2.bf16.msra.mxu0 0
      %1911 = vmatprep.mubr.bf16.mxu0 0
      %1912 = vmatmul.mubr.bf16.gmra.mxu0 %v1874
      %v1913 = vpop.f32.mrf.mxu0
      %v1914 = vadd.f32 0.0, %v1913
      %v1915 = vpop.f32.mrf.mxu0
      %v1916 = vpop.f32.mrf.mxu0
      %v1917 = vpop.f32.mrf.mxu0
      %1918 = vdwg.mxu0
      %v1920 = vsel %vm315, %v1211, 0
      %v1923 = vsel %vm1231, %v1227, 0
      %1925 = vmatprep.subr.bf16.mxu0 0
      %1926 = vmatpush1.bf16.msra.mxu0 0
      %1927 = vmatprep.subr.bf16.mxu0 0
      %1928 = vmatpush1.bf16.msra.mxu0 0
      %1929 = vmatprep.subr.bf16.mxu0 0
      %1930 = vmatpush1.bf16.msra.mxu0 0
      %1931 = vmatprep.subr.bf16.mxu0 0
      %1932 = vmatpush1.bf16.msra.mxu0 0
      %1933 = vmatprep.subr.bf16.mxu0 0
      %1934 = vmatpush1.bf16.msra.mxu0 0
      %1935 = vmatprep.subr.bf16.mxu0 0
      %1936 = vmatpush1.bf16.msra.mxu0 0
      %1937 = vmatprep.subr.bf16.mxu0 0
      %1938 = vmatpush1.bf16.msra.mxu0 0
      %1939 = vmatprep.subr.bf16.mxu0 0
      %1940 = vmatpush1.bf16.msra.mxu0 %v1923
      %1941 = vmatprep.subr.bf16.mxu0 0
      %1942 = vmatpush2.bf16.msra.mxu0 0
      %1943 = vmatprep.subr.bf16.mxu0 0
      %1944 = vmatpush2.bf16.msra.mxu0 0
      %1945 = vmatprep.subr.bf16.mxu0 0
      %1946 = vmatpush2.bf16.msra.mxu0 0
      %1947 = vmatprep.subr.bf16.mxu0 0
      %1948 = vmatpush2.bf16.msra.mxu0 0
      %1949 = vmatprep.subr.bf16.mxu0 0
      %1950 = vmatpush2.bf16.msra.mxu0 0
      %1951 = vmatprep.subr.bf16.mxu0 0
      %1952 = vmatpush2.bf16.msra.mxu0 0
      %1953 = vmatprep.subr.bf16.mxu0 0
      %1954 = vmatpush2.bf16.msra.mxu0 0
      %1955 = vmatprep.subr.bf16.mxu0 0
      %1956 = vmatpush2.bf16.msra.mxu0 0
      %1957 = vmatprep.mubr.bf16.mxu0 0
      %1958 = vmatmul.mubr.bf16.gmra.mxu0 %v1920
      %v1959 = vpop.f32.mrf.mxu0
      %v1960 = vadd.f32 0.0, %v1959
      %v1961 = vpop.f32.mrf.mxu0
      %v1962 = vpop.f32.mrf.mxu0
      %v1963 = vpop.f32.mrf.mxu0
      %1964 = vdwg.mxu0
      %v1965 = vrcp.pop %v1150
      %v1966 = vrcp.pop %v1153
      %v1967 = vrcp.pop %v1156
      %v1968 = vrcp.pop %v1159
      %v1969 = vrcp.pop %v1162
      %v1970 = vrcp.pop %v1165
      %v1971 = vrcp.pop %v1168
      %v1972 = vrcp.pop %v1171
      %v1973 = vrcp.pop %v1174
      %v1974 = vrcp.pop %v1177
      %v1975 = vrcp.pop %v1180
      %v1976 = vrcp.pop %v1183
      %v1977 = vrcp.pop %v1186
      %v1978 = vrcp.pop %v1189
      %v1979 = vrcp.pop %v1192
      %v1980 = vrcp.pop %v1195
      %v1981 = vmul.f32 %v1270, %v1965
      %v1982 = vmul.f32 %v1316, %v1966
      %v1983 = vmul.f32 %v1362, %v1967
      %v1984 = vmul.f32 %v1408, %v1968
      %v1985 = vmul.f32 %v1454, %v1969
      %v1986 = vmul.f32 %v1500, %v1970
      %v1987 = vmul.f32 %v1546, %v1971
      %v1988 = vmul.f32 %v1592, %v1972
      %v1989 = vmul.f32 %v1638, %v1973
      %v1990 = vmul.f32 %v1684, %v1974
      %v1991 = vmul.f32 %v1730, %v1975
      %v1992 = vmul.f32 %v1776, %v1976
      %v1993 = vmul.f32 %v1822, %v1977
      %v1994 = vmul.f32 %v1868, %v1978
      %v1995 = vmul.f32 %v1914, %v1979
      %v1996 = vmul.f32 %v1960, %v1980
      %1997 = vst.msk [vmem:[%s216] sm:$0xff] %vm315, %v1981
      %1998 = vst.msk [vmem:[%s216 + $0x8] sm:$0xff] %vm315, %v1982
      %1999 = vst.msk [vmem:[%s216 + $0x10] sm:$0xff] %vm315, %v1983
      %2000 = vst.msk [vmem:[%s216 + $0x18] sm:$0xff] %vm315, %v1984
      %2001 = vst.msk [vmem:[%s216 + $0x20] sm:$0xff] %vm315, %v1985
      %2002 = vst.msk [vmem:[%s216 + $0x28] sm:$0xff] %vm315, %v1986
      %2003 = vst.msk [vmem:[%s216 + $0x30] sm:$0xff] %vm315, %v1987
      %2004 = vst.msk [vmem:[%s216 + $0x38] sm:$0xff] %vm315, %v1988
      %2005 = vst.msk [vmem:[%s216 + $0x40] sm:$0xff] %vm315, %v1989
      %2006 = vst.msk [vmem:[%s216 + $0x48] sm:$0xff] %vm315, %v1990
      %2007 = vst.msk [vmem:[%s216 + $0x50] sm:$0xff] %vm315, %v1991
      %2008 = vst.msk [vmem:[%s216 + $0x58] sm:$0xff] %vm315, %v1992
      %2009 = vst.msk [vmem:[%s216 + $0x60] sm:$0xff] %vm315, %v1993
      %2010 = vst.msk [vmem:[%s216 + $0x68] sm:$0xff] %vm315, %v1994
      %2011 = vst.msk [vmem:[%s216 + $0x70] sm:$0xff] %vm315, %v1995
      %2012 = vst.msk [vmem:[%s216 + $0x78] sm:$0xff] %vm315, %v1996
      %s2013 = smul.u32 16, %s14
      %p2014 = scmp.lt.s32.totalorder %s2013, 31
      %s2015 = scalar_select %p2014, %s2013, 31
      %s2016 = smul.addr %s2015, 8
      %s2017 = scalar_lea.vmem %s3, %s2016
      // Predicated region
      $region33: #{_lambda_.44} parent=31 // pred_check
        %p2018 = pneg %p110
      $region34: #{_lambda_.44} parent=31 // pred_check_branch
        %2020 = sbr.rel (%p2018) target = $region36
      $region35: #{_lambda_.44} parent=31 // pred_region
        %s2021 = smul.u32 16, %s14
      $region36: #{_lambda_.44} parent=31 // pred_fallthru
        _
    $region32: #{_lambda_.44} parent=5 // pred_fallthru
      _
    %p2022 = scmp.le.s32.totalorder 2, %s9
    // Predicated region
    $region37: #{_lambda_.44} parent=5 // pred_check
      %p2023 = pneg %p2022
    $region38: #{_lambda_.44} parent=5 // pred_check_branch
      %2025 = sbr.rel (%p2023) target = $region40
    $region39: #{_lambda_.44} parent=5 // pred_region
      %s2026 = ssub.s32 %s9, 2
      // Predicated region
      $region41: #{_lambda_.44} parent=39 // pred_check
        %p2027 = pneg %p116
      $region42: #{_lambda_.44} parent=39 // pred_check_branch
        %2029 = sbr.rel (%p2027) target = $region44
      $region43: #{_lambda_.44} parent=39 // pred_region
        %s2030 = smul.u32 16, %s15
        %p2031 = scmp.lt.s32.totalorder %s2030, 31
        %s2032 = scalar_select %p2031, %s2030, 31
        %s2033 = smul.addr %s2032, 8
        %s2034 = scalar_lea.vmem %s3, %s2033
      $region44: #{_lambda_.44} parent=39 // pred_fallthru
        _
    $region40: #{_lambda_.44} parent=5 // pred_fallthru
      _
  $region6: #{_lambda_.44} parent=0 // loop_footer
    %s13 = sadd.s32 1, %s9
  $region7: #{_lambda_.44} parent=0 // loop_footer_branch
    %8 = sbr.rel target = $region3
  $region8: #{_lambda_.44} parent=0 // loop_exit
    _

// kernel: _lambda_.56
$region0: #{_lambda_.56}
  #allocation0 [shape = 'u32[]', space=smem, size = 0x4, offset = 0x4, fixed_abs, tag = 'smem constant byte address 0x4 - core index']
  #allocation1 [shape = 'u32[144,128]{1,0:T(1,128)}', space=vmem, size = 0x12000, scoped, tag = 'internal scratch']
  %s0 = inlined_call_operand.vmem [shape: f32[64,32], index: 0, kind: input, shape index: {}]
  %s1 = inlined_call_operand.vmem [shape: f32[1,32], index: 1, kind: input, shape index: {}]
  %s2 = inlined_call_operand.vmem [shape: f32[1,32], index: 2, kind: input, shape index: {}]
  %s3 = inlined_call_operand.vmem [shape: f32[32,128], index: 3, kind: input, shape index: {}]
  %s4 = inlined_call_operand.vmem [shape: f32[1,128], index: 4, kind: input, shape index: {}]
  %s5 = inlined_call_operand.vmem [shape: f32[64,128], index: 5, kind: output, shape index: {}]
  %s6 = sld [smem:[#allocation0]]
  $region30: #{_lambda_.56} parent=0
    _
  %s8 = ssub.s32 1, %s6
  %s9 = scalar_select 0, %s8, %s6
  // Predicated region
  $region2: #{_lambda_.56} parent=0 // pred_check
    _
  $region3: #{_lambda_.56} parent=0 // pred_check_branch
    %11 = sbr.rel (0) target = $region5
  $region4: #{_lambda_.56} parent=0 // pred_region
    _
  $region5: #{_lambda_.56} parent=0 // pred_fallthru
    _
  // Predicated region
  $region6: #{_lambda_.56} parent=0 // pred_check
    _
  $region7: #{_lambda_.56} parent=0 // pred_check_branch
    %13 = sbr.rel (0) target = $region9
  $region8: #{_lambda_.56} parent=0 // pred_region
    _
  $region9: #{_lambda_.56} parent=0 // pred_fallthru
    _
  // Predicated region
  $region10: #{_lambda_.56} parent=0 // pred_check
    _
  $region11: #{_lambda_.56} parent=0 // pred_check_branch
    %15 = sbr.rel (0) target = $region13
  $region12: #{_lambda_.56} parent=0 // pred_region
    _
  $region13: #{_lambda_.56} parent=0 // pred_fallthru
    _
  // Predicated region
  $region14: #{_lambda_.56} parent=0 // pred_check
    _
  $region15: #{_lambda_.56} parent=0 // pred_check_branch
    %17 = sbr.rel (0) target = $region17
  $region16: #{_lambda_.56} parent=0 // pred_region
    _
  $region17: #{_lambda_.56} parent=0 // pred_fallthru
    _
  // Predicated region
  $region18: #{_lambda_.56} parent=0 // pred_check
    _
  $region19: #{_lambda_.56} parent=0 // pred_check_branch
    %19 = sbr.rel (0) target = $region21
  $region20: #{_lambda_.56} parent=0 // pred_region
    _
  $region21: #{_lambda_.56} parent=0 // pred_fallthru
    _
  %v21 = vld [vmem:[%s0] sm:$0xff]
  %v22 = vld [vmem:[%s0 + $0x8] sm:$0xff]
  %v23 = vld [vmem:[%s0 + $0x10] sm:$0xff]
  %v24 = vld [vmem:[%s0 + $0x18] sm:$0xff]
  %v25 = vld [vmem:[%s0 + $0x20] sm:$0xff]
  %v26 = vld [vmem:[%s0 + $0x28] sm:$0xff]
  %v27 = vld [vmem:[%s0 + $0x30] sm:$0xff]
  %v28 = vld [vmem:[%s0 + $0x38] sm:$0xff]
  %vm29 = vcmask 261120
  %v30 = vsel %vm29, %v21, 0.0
  %31 = vadd.xlane.f32.xlu0 %v30
  %v32 = vpop.xlane.xlu0 %31
  %v33 = vsel %vm29, %v22, 0.0
  %34 = vadd.xlane.f32.xlu0 %v33
  %v35 = vpop.xlane.xlu0 %34
  %v36 = vsel %vm29, %v23, 0.0
  %37 = vadd.xlane.f32.xlu0 %v36
  %v38 = vpop.xlane.xlu0 %37
  %v39 = vsel %vm29, %v24, 0.0
  %40 = vadd.xlane.f32.xlu0 %v39
  %v41 = vpop.xlane.xlu0 %40
  %v42 = vsel %vm29, %v25, 0.0
  %43 = vadd.xlane.f32.xlu0 %v42
  %v44 = vpop.xlane.xlu0 %43
  %v45 = vsel %vm29, %v26, 0.0
  %46 = vadd.xlane.f32.xlu0 %v45
  %v47 = vpop.xlane.xlu0 %46
  %v48 = vsel %vm29, %v27, 0.0
  %49 = vadd.xlane.f32.xlu0 %v48
  %v50 = vpop.xlane.xlu0 %49
  %v51 = vsel %vm29, %v28, 0.0
  %52 = vadd.xlane.f32.xlu0 %v51
  %v53 = vpop.xlane.xlu0 %52
  %v54 = vrcp.pop 32.0
  %v55 = vmul.f32 %v32, %v54
  %v56 = vmul.f32 %v35, %v54
  %v57 = vmul.f32 %v38, %v54
  %v58 = vmul.f32 %v41, %v54
  %v59 = vmul.f32 %v44, %v54
  %v60 = vmul.f32 %v47, %v54
  %v61 = vmul.f32 %v50, %v54
  %v62 = vmul.f32 %v53, %v54
  %v63 = vsub.f32 %v21, %v55
  %v64 = vsub.f32 %v22, %v56
  %v65 = vsub.f32 %v23, %v57
  %v66 = vsub.f32 %v24, %v58
  %v67 = vsub.f32 %v25, %v59
  %v68 = vsub.f32 %v26, %v60
  %v69 = vsub.f32 %v27, %v61
  %v70 = vsub.f32 %v28, %v62
  %v71 = vmul.f32 %v63, %v63
  %v72 = vmul.f32 %v64, %v64
  %v73 = vmul.f32 %v65, %v65
  %v74 = vmul.f32 %v66, %v66
  %v75 = vmul.f32 %v67, %v67
  %v76 = vmul.f32 %v68, %v68
  %v77 = vmul.f32 %v69, %v69
  %v78 = vmul.f32 %v70, %v70
  %v79 = vsel %vm29, %v71, 0.0
  %80 = vadd.xlane.f32.xlu0 %v79
  %v81 = vpop.xlane.xlu0 %80
  %v82 = vsel %vm29, %v72, 0.0
  %83 = vadd.xlane.f32.xlu0 %v82
  %v84 = vpop.xlane.xlu0 %83
  %v85 = vsel %vm29, %v73, 0.0
  %86 = vadd.xlane.f32.xlu0 %v85
  %v87 = vpop.xlane.xlu0 %86
  %v88 = vsel %vm29, %v74, 0.0
  %89 = vadd.xlane.f32.xlu0 %v88
  %v90 = vpop.xlane.xlu0 %89
  %v91 = vsel %vm29, %v75, 0.0
  %92 = vadd.xlane.f32.xlu0 %v91
  %v93 = vpop.xlane.xlu0 %92
  %v94 = vsel %vm29, %v76, 0.0
  %95 = vadd.xlane.f32.xlu0 %v94
  %v96 = vpop.xlane.xlu0 %95
  %v97 = vsel %vm29, %v77, 0.0
  %98 = vadd.xlane.f32.xlu0 %v97
  %v99 = vpop.xlane.xlu0 %98
  %v100 = vsel %vm29, %v78, 0.0
  %101 = vadd.xlane.f32.xlu0 %v100
  %v102 = vpop.xlane.xlu0 %101
  %v103 = vmul.f32 %v81, %v54
  %v104 = vmul.f32 %v84, %v54
  %v105 = vmul.f32 %v87, %v54
  %v106 = vmul.f32 %v90, %v54
  %v107 = vmul.f32 %v93, %v54
  %v108 = vmul.f32 %v96, %v54
  %v109 = vmul.f32 %v99, %v54
  %v110 = vmul.f32 %v102, %v54
  %v111 = vadd.f32 %v103, 1e-05
  %v112 = vadd.f32 %v104, 1e-05
  %v113 = vadd.f32 %v105, 1e-05
  %v114 = vadd.f32 %v106, 1e-05
  %v115 = vadd.f32 %v107, 1e-05
  %v116 = vadd.f32 %v108, 1e-05
  %v117 = vadd.f32 %v109, 1e-05
  %v118 = vadd.f32 %v110, 1e-05
  %v119 = vrsqrt.pop %v111
  %v120 = vrsqrt.pop %v112
  %v121 = vrsqrt.pop %v113
  %v122 = vrsqrt.pop %v114
  %v123 = vrsqrt.pop %v115
  %v124 = vrsqrt.pop %v116
  %v125 = vrsqrt.pop %v117
  %v126 = vrsqrt.pop %v118
  %v127 = vmul.f32 %v63, %v119
  %v128 = vmul.f32 %v64, %v120
  %v129 = vmul.f32 %v65, %v121
  %v130 = vmul.f32 %v66, %v122
  %v131 = vmul.f32 %v67, %v123
  %v132 = vmul.f32 %v68, %v124
  %v133 = vmul.f32 %v69, %v125
  %v134 = vmul.f32 %v70, %v126
  %v135 = vld [vmem:[%s1] sm:$0x1]
  %v137 = vlaneseq
  %v138 = vshrl.u32 %v137, 7
  %v139 = vsub.s32 0, %v138
  %v140 = vrot.slane %v135, %v139
  %v142 = vmul.f32 %v127, %v140
  %v143 = vmul.f32 %v128, %v140
  %v144 = vmul.f32 %v129, %v140
  %v145 = vmul.f32 %v130, %v140
  %v146 = vmul.f32 %v131, %v140
  %v147 = vmul.f32 %v132, %v140
  %v148 = vmul.f32 %v133, %v140
  %v149 = vmul.f32 %v134, %v140
  %v150 = vld [vmem:[%s2] sm:$0x1]
  %v152 = vlaneseq
  %v153 = vshrl.u32 %v152, 7
  %v154 = vsub.s32 0, %v153
  %v155 = vrot.slane %v150, %v154
  %v157 = vadd.f32 %v142, %v155
  %v158 = vadd.f32 %v143, %v155
  %v159 = vadd.f32 %v144, %v155
  %v160 = vadd.f32 %v145, %v155
  %v161 = vadd.f32 %v146, %v155
  %v162 = vadd.f32 %v147, %v155
  %v163 = vadd.f32 %v148, %v155
  %v164 = vadd.f32 %v149, %v155
  %v165 = vpack.c.bf16 %v158, %v157
  %v166 = vpack.c.bf16 %v160, %v159
  %v167 = vpack.c.bf16 %v162, %v161
  %v168 = vpack.c.bf16 %v164, %v163
  %v169 = vld [vmem:[%s3] sm:$0xff]
  %v170 = vld [vmem:[%s3 + $0x8] sm:$0xff]
  %v171 = vld [vmem:[%s3 + $0x10] sm:$0xff]
  %v172 = vld [vmem:[%s3 + $0x18] sm:$0xff]
  %v173 = vpack.c.bf16 %v170, %v169
  %v174 = vpack.c.bf16 %v172, %v171
  %v175 = vld [vmem:[%s4] sm:$0x1]
  %v177 = vlaneseq
  %v178 = vshrl.u32 %v177, 7
  %v179 = vsub.s32 0, %v178
  %v180 = vrot.slane %v175, %v179
  %v183 = vsel %vm29, %v165, 0
  %v186 = vsel %vm29, %v166, 0
  %v189 = vsel %vm29, %v167, 0
  %v192 = vsel %vm29, %v168, 0
  %194 = vmatprep.subr.bf16.mxu0 0
  %195 = vmatpush1.bf16.msra.mxu0 0
  %196 = vmatprep.subr.bf16.mxu0 0
  %197 = vmatpush1.bf16.msra.mxu0 0
  %198 = vmatprep.subr.bf16.mxu0 0
  %199 = vmatpush1.bf16.msra.mxu0 0
  %200 = vmatprep.subr.bf16.mxu0 0
  %201 = vmatpush1.bf16.msra.mxu0 0
  %202 = vmatprep.subr.bf16.mxu0 0
  %203 = vmatpush1.bf16.msra.mxu0 0
  %204 = vmatprep.subr.bf16.mxu0 0
  %205 = vmatpush1.bf16.msra.mxu0 0
  %206 = vmatprep.subr.bf16.mxu0 0
  %207 = vmatpush1.bf16.msra.mxu0 %v174
  %208 = vmatprep.subr.bf16.mxu0 0
  %209 = vmatpush1.bf16.msra.mxu0 %v173
  %210 = vmatprep.subr.bf16.mxu0 0
  %211 = vmatpush2.bf16.msra.mxu0 0
  %212 = vmatprep.subr.bf16.mxu0 0
  %213 = vmatpush2.bf16.msra.mxu0 0
  %214 = vmatprep.subr.bf16.mxu0 0
  %215 = vmatpush2.bf16.msra.mxu0 0
  %216 = vmatprep.subr.bf16.mxu0 0
  %217 = vmatpush2.bf16.msra.mxu0 0
  %218 = vmatprep.subr.bf16.mxu0 0
  %219 = vmatpush2.bf16.msra.mxu0 0
  %220 = vmatprep.subr.bf16.mxu0 0
  %221 = vmatpush2.bf16.msra.mxu0 0
  %222 = vmatprep.subr.bf16.mxu0 0
  %223 = vmatpush2.bf16.msra.mxu0 0
  %224 = vmatprep.subr.bf16.mxu0 0
  %225 = vmatpush2.bf16.msra.mxu0 0
  %226 = vmatprep.mubr.bf16.mxu0 0
  %227 = vmatmul.mubr.bf16.gmra.mxu0 %v183
  %v228 = vpop.f32.mrf.mxu0
  %v229 = vadd.f32 %v180, %v228
  %v230 = vpop.f32.mrf.mxu0
  %v231 = vpop.f32.mrf.mxu0
  %v232 = vadd.f32 %v180, %v231
  %v233 = vpop.f32.mrf.mxu0
  %234 = vmatprep.mubr.bf16.mxu0 0
  %235 = vmatmul.mubr.bf16.gmra.mxu0 %v186
  %v236 = vpop.f32.mrf.mxu0
  %v237 = vadd.f32 %v180, %v236
  %v238 = vpop.f32.mrf.mxu0
  %v239 = vpop.f32.mrf.mxu0
  %v240 = vadd.f32 %v180, %v239
  %v241 = vpop.f32.mrf.mxu0
  %242 = vmatprep.mubr.bf16.mxu0 0
  %243 = vmatmul.mubr.bf16.gmra.mxu0 %v189
  %v244 = vpop.f32.mrf.mxu0
  %v245 = vadd.f32 %v180, %v244
  %v246 = vpop.f32.mrf.mxu0
  %v247 = vpop.f32.mrf.mxu0
  %v248 = vadd.f32 %v180, %v247
  %v249 = vpop.f32.mrf.mxu0
  %250 = vmatprep.mubr.bf16.mxu0 0
  %251 = vmatmul.mubr.bf16.gmra.mxu0 %v192
  %v252 = vpop.f32.mrf.mxu0
  %v253 = vadd.f32 %v180, %v252
  %v254 = vpop.f32.mrf.mxu0
  %v255 = vpop.f32.mrf.mxu0
  %v256 = vadd.f32 %v180, %v255
  %v257 = vpop.f32.mrf.mxu0
  %258 = vdwg.mxu0
  %v259 = vmul.f32 %v229, 0.5
  %v260 = vmul.f32 %v232, 0.5
  %v261 = vmul.f32 %v237, 0.5
  %v262 = vmul.f32 %v240, 0.5
  %v263 = vmul.f32 %v245, 0.5
  %v264 = vmul.f32 %v248, 0.5
  %v265 = vmul.f32 %v253, 0.5
  %v266 = vmul.f32 %v256, 0.5
  %v267 = vmul.f32 %v229, 0.70710677
  %v268 = vmul.f32 %v232, 0.70710677
  %v269 = vmul.f32 %v237, 0.70710677
  %v270 = vmul.f32 %v240, 0.70710677
  %v271 = vmul.f32 %v245, 0.70710677
  %v272 = vmul.f32 %v248, 0.70710677
  %v273 = vmul.f32 %v253, 0.70710677
  %v274 = vmul.f32 %v256, 0.70710677
  %v275 = vand.u32 2147483647, %v267
  %v276 = vand.u32 2147483647, %v268
  %v277 = vand.u32 2147483647, %v269
  %v278 = vand.u32 2147483647, %v270
  %v279 = vand.u32 2147483647, %v271
  %v280 = vand.u32 2147483647, %v272
  %v281 = vand.u32 2147483647, %v273
  %v282 = vand.u32 2147483647, %v274
  %v283 = vmul.f32 %v275, 0.3275911
  %v284 = vmul.f32 %v276, 0.3275911
  %v285 = vmul.f32 %v277, 0.3275911
  %v286 = vmul.f32 %v278, 0.3275911
  %v287 = vmul.f32 %v279, 0.3275911
  %v288 = vmul.f32 %v280, 0.3275911
  %v289 = vmul.f32 %v281, 0.3275911
  %v290 = vmul.f32 %v282, 0.3275911
  %v291 = vadd.f32 %v283, 1.0
  %v292 = vadd.f32 %v284, 1.0
  %v293 = vadd.f32 %v285, 1.0
  %v294 = vadd.f32 %v286, 1.0
  %v295 = vadd.f32 %v287, 1.0
  %v296 = vadd.f32 %v288, 1.0
  %v297 = vadd.f32 %v289, 1.0
  %v298 = vadd.f32 %v290, 1.0
  %v299 = vrcp.pop %v291
  %v300 = vmul.f32 1.0, %v299
  %v301 = vrcp.pop %v292
  %v302 = vmul.f32 1.0, %v301
  %v303 = vrcp.pop %v293
  %v304 = vmul.f32 1.0, %v303
  %v305 = vrcp.pop %v294
  %v306 = vmul.f32 1.0, %v305
  %v307 = vrcp.pop %v295
  %v308 = vmul.f32 1.0, %v307
  %v309 = vrcp.pop %v296
  %v310 = vmul.f32 1.0, %v309
  %v311 = vrcp.pop %v297
  %v312 = vmul.f32 1.0, %v311
  %v313 = vrcp.pop %v298
  %v314 = vmul.f32 1.0, %v313
  %v315 = vmul.f32 %v300, 1.0614054
  %v316 = vmul.f32 %v302, 1.0614054
  %v317 = vmul.f32 %v304, 1.0614054
  %v318 = vmul.f32 %v306, 1.0614054
  %v319 = vmul.f32 %v308, 1.0614054
  %v320 = vmul.f32 %v310, 1.0614054
  %v321 = vmul.f32 %v312, 1.0614054
  %v322 = vmul.f32 %v314, 1.0614054
  %v323 = vadd.f32 %v315, -1.4531521
  %v324 = vadd.f32 %v316, -1.4531521
  %v325 = vadd.f32 %v317, -1.4531521
  %v326 = vadd.f32 %v318, -1.4531521
  %v327 = vadd.f32 %v319, -1.4531521
  %v328 = vadd.f32 %v320, -1.4531521
  %v329 = vadd.f32 %v321, -1.4531521
  %v330 = vadd.f32 %v322, -1.4531521
  %v331 = vmul.f32 %v323, %v300
  %v332 = vmul.f32 %v324, %v302
  %v333 = vmul.f32 %v325, %v304
  %v334 = vmul.f32 %v326, %v306
  %v335 = vmul.f32 %v327, %v308
  %v336 = vmul.f32 %v328, %v310
  %v337 = vmul.f32 %v329, %v312
  %v338 = vmul.f32 %v330, %v314
  %v339 = vadd.f32 %v331, 1.4214138
  %v340 = vadd.f32 %v332, 1.4214138
  %v341 = vadd.f32 %v333, 1.4214138
  %v342 = vadd.f32 %v334, 1.4214138
  %v343 = vadd.f32 %v335, 1.4214138
  %v344 = vadd.f32 %v336, 1.4214138
  %v345 = vadd.f32 %v337, 1.4214138
  %v346 = vadd.f32 %v338, 1.4214138
  %v347 = vmul.f32 %v339, %v300
  %v348 = vmul.f32 %v340, %v302
  %v349 = vmul.f32 %v341, %v304
  %v350 = vmul.f32 %v342, %v306
  %v351 = vmul.f32 %v343, %v308
  %v352 = vmul.f32 %v344, %v310
  %v353 = vmul.f32 %v345, %v312
  %v354 = vmul.f32 %v346, %v314
  %v355 = vadd.f32 %v347, -0.28449672
  %v356 = vadd.f32 %v348, -0.28449672
  %v357 = vadd.f32 %v349, -0.28449672
  %v358 = vadd.f32 %v350, -0.28449672
  %v359 = vadd.f32 %v351, -0.28449672
  %v360 = vadd.f32 %v352, -0.28449672
  %v361 = vadd.f32 %v353, -0.28449672
  %v362 = vadd.f32 %v354, -0.28449672
  %v363 = vmul.f32 %v355, %v300
  %v364 = vmul.f32 %v356, %v302
  %v365 = vmul.f32 %v357, %v304
  %v366 = vmul.f32 %v358, %v306
  %v367 = vmul.f32 %v359, %v308
  %v368 = vmul.f32 %v360, %v310
  %v369 = vmul.f32 %v361, %v312
  %v370 = vmul.f32 %v362, %v314
  %v371 = vadd.f32 %v363, 0.2548296
  %v372 = vadd.f32 %v364, 0.2548296
  %v373 = vadd.f32 %v365, 0.2548296
  %v374 = vadd.f32 %v366, 0.2548296
  %v375 = vadd.f32 %v367, 0.2548296
  %v376 = vadd.f32 %v368, 0.2548296
  %v377 = vadd.f32 %v369, 0.2548296
  %v378 = vadd.f32 %v370, 0.2548296
  %v379 = vmul.f32 %v371, %v300
  %v380 = vmul.f32 %v372, %v302
  %v381 = vmul.f32 %v373, %v304
  %v382 = vmul.f32 %v374, %v306
  %v383 = vmul.f32 %v375, %v308
  %v384 = vmul.f32 %v376, %v310
  %v385 = vmul.f32 %v377, %v312
  %v386 = vmul.f32 %v378, %v314
  %v387 = vsub.f32 0.0, %v275
  %v388 = vsub.f32 0.0, %v276
  %v389 = vsub.f32 0.0, %v277
  %v390 = vsub.f32 0.0, %v278
  %v391 = vsub.f32 0.0, %v279
  %v392 = vsub.f32 0.0, %v280
  %v393 = vsub.f32 0.0, %v281
  %v394 = vsub.f32 0.0, %v282
  %v395 = vmul.f32 %v387, %v275
  %v396 = vmul.f32 %v388, %v276
  %v397 = vmul.f32 %v389, %v277
  %v398 = vmul.f32 %v390, %v278
  %v399 = vmul.f32 %v391, %v279
  %v400 = vmul.f32 %v392, %v280
  %v401 = vmul.f32 %v393, %v281
  %v402 = vmul.f32 %v394, %v282
  %v403 = vmul.f32 %v395, 1.442695
  %v404 = vpow.pop %v403
  %v405 = vmul.f32 %v396, 1.442695
  %v406 = vpow.pop %v405
  %v407 = vmul.f32 %v397, 1.442695
  %v408 = vpow.pop %v407
  %v409 = vmul.f32 %v398, 1.442695
  %v410 = vpow.pop %v409
  %v411 = vmul.f32 %v399, 1.442695
  %v412 = vpow.pop %v411
  %v413 = vmul.f32 %v400, 1.442695
  %v414 = vpow.pop %v413
  %v415 = vmul.f32 %v401, 1.442695
  %v416 = vpow.pop %v415
  %v417 = vmul.f32 %v402, 1.442695
  %v418 = vpow.pop %v417
  %v419 = vmul.f32 %v379, %v404
  %v420 = vmul.f32 %v380, %v406
  %v421 = vmul.f32 %v381, %v408
  %v422 = vmul.f32 %v382, %v410
  %v423 = vmul.f32 %v383, %v412
  %v424 = vmul.f32 %v384, %v414
  %v425 = vmul.f32 %v385, %v416
  %v426 = vmul.f32 %v386, %v418
  %v427 = vsub.f32 1.0, %v419
  %v428 = vsub.f32 1.0, %v420
  %v429 = vsub.f32 1.0, %v421
  %v430 = vsub.f32 1.0, %v422
  %v431 = vsub.f32 1.0, %v423
  %v432 = vsub.f32 1.0, %v424
  %v433 = vsub.f32 1.0, %v425
  %v434 = vsub.f32 1.0, %v426
  %vm435 = vcmp.lt.f32.partialorder %v267, 0.0
  %vm436 = vcmp.lt.f32.partialorder %v268, 0.0
  %vm437 = vcmp.lt.f32.partialorder %v269, 0.0
  %vm438 = vcmp.lt.f32.partialorder %v270, 0.0
  %vm439 = vcmp.lt.f32.partialorder %v271, 0.0
  %vm440 = vcmp.lt.f32.partialorder %v272, 0.0
  %vm441 = vcmp.lt.f32.partialorder %v273, 0.0
  %vm442 = vcmp.lt.f32.partialorder %v274, 0.0
  %v443 = vsub.f32 0.0, %v427
  %v444 = vsub.f32 0.0, %v428
  %v445 = vsub.f32 0.0, %v429
  %v446 = vsub.f32 0.0, %v430
  %v447 = vsub.f32 0.0, %v431
  %v448 = vsub.f32 0.0, %v432
  %v449 = vsub.f32 0.0, %v433
  %v450 = vsub.f32 0.0, %v434
  %v451 = vsel %vm435, %v443, %v427
  %v452 = vsel %vm436, %v444, %v428
  %v453 = vsel %vm437, %v445, %v429
  %v454 = vsel %vm438, %v446, %v430
  %v455 = vsel %vm439, %v447, %v431
  %v456 = vsel %vm440, %v448, %v432
  %v457 = vsel %vm441, %v449, %v433
  %v458 = vsel %vm442, %v450, %v434
  %v459 = vadd.f32 %v451, 1.0
  %v460 = vadd.f32 %v452, 1.0
  %v461 = vadd.f32 %v453, 1.0
  %v462 = vadd.f32 %v454, 1.0
  %v463 = vadd.f32 %v455, 1.0
  %v464 = vadd.f32 %v456, 1.0
  %v465 = vadd.f32 %v457, 1.0
  %v466 = vadd.f32 %v458, 1.0
  %v467 = vmul.f32 %v259, %v459
  %v468 = vmul.f32 %v260, %v460
  %v469 = vmul.f32 %v261, %v461
  %v470 = vmul.f32 %v262, %v462
  %v471 = vmul.f32 %v263, %v463
  %v472 = vmul.f32 %v264, %v464
  %v473 = vmul.f32 %v265, %v465
  %v474 = vmul.f32 %v266, %v466
  %475 = vst [vmem:[%s5] sm:$0xff] %v467
  %476 = vst [vmem:[%s5 + $0x8] sm:$0xff] %v468
  %477 = vst [vmem:[%s5 + $0x10] sm:$0xff] %v469
  %478 = vst [vmem:[%s5 + $0x18] sm:$0xff] %v470
  %479 = vst [vmem:[%s5 + $0x20] sm:$0xff] %v471
  %480 = vst [vmem:[%s5 + $0x28] sm:$0xff] %v472
  %481 = vst [vmem:[%s5 + $0x30] sm:$0xff] %v473
  %482 = vst [vmem:[%s5 + $0x38] sm:$0xff] %v474
  // Predicated region
  $region22: #{_lambda_.56} parent=0 // pred_check
    _
  $region23: #{_lambda_.56} parent=0 // pred_check_branch
    %484 = sbr.rel (0) target = $region25
  $region24: #{_lambda_.56} parent=0 // pred_region
    _
  $region25: #{_lambda_.56} parent=0 // pred_fallthru
    _
  // Predicated region
  $region26: #{_lambda_.56} parent=0 // pred_check
    _
  $region27: #{_lambda_.56} parent=0 // pred_check_branch
    %486 = sbr.rel (0) target = $region29
  $region28: #{_lambda_.56} parent=0 // pred_region
    _
  $region29: #{_lambda_.56} parent=0 // pred_fallthru
    _

// kernel: _lambda_.54
$region0: #{_lambda_.54}
  #allocation0 [shape = 'u32[]', space=smem, size = 0x4, offset = 0x4, fixed_abs, tag = 'smem constant byte address 0x4 - core index']
  #allocation1 [shape = 'u32[144,128]{1,0:T(1,128)}', space=vmem, size = 0x12000, scoped, tag = 'internal scratch']
  %s0 = inlined_call_operand.vmem [shape: f32[64,4,8], index: 0, kind: input, shape index: {}]
  %s1 = inlined_call_operand.vmem [shape: f32[64,4,8], index: 1, kind: input, shape index: {}]
  %s2 = inlined_call_operand.vmem [shape: f32[64,4,8], index: 2, kind: input, shape index: {}]
  %s3 = inlined_call_operand.vmem [shape: f32[64,4,8], index: 3, kind: output, shape index: {}]
  %s4 = sld [smem:[#allocation0]]
  $region45: #{_lambda_.54} parent=0
    _
  %s6 = ssub.s32 1, %s4
  %s7 = scalar_select 0, %s6, %s4
  loop: start=0, step=1, limit=6
  $region2: #{_lambda_.54} parent=0 // loop_pre_header
    _
  $region3: #{_lambda_.54} parent=0 // loop_header
    %s9 = sphi 0, %s13
    %p10 = scmp.ge.s32.totalorder %s9, 6
    %s19 = sphi 0, %s21
    %s22 = sphi 0, %s19
    %s23 = sphi 0, %s22
    %s39 = sphi 0, %s23
    %s45 = sphi 0, %s47
    %s48 = sphi 0, %s45
    %s49 = sphi 0, %s48
    %s65 = sphi 0, %s49
    %s71 = sphi 0, %s73
    %s74 = sphi 0, %s71
    %s75 = sphi 0, %s74
    %s91 = sphi 0, %s75
    %s97 = sphi 0, %s99
    %s100 = sphi 0, %s97
    %s101 = sphi 0, %s100
    %s117 = sphi 0, %s101
  $region4: #{_lambda_.54} parent=0 // loop_header_branch
    %12 = sbr.rel (%p10) target = $region8
  $region5: #{_lambda_.54} parent=0 // loop_body
    %s14 = ssub.s32 %s9, 1
    %s15 = ssub.s32 %s9, 2
    %s16 = sadd.s32 %s9, 1
    %s17 = ssub.s32 %s9, %s16
    %p18 = scmp.eq.s32.totalorder %s17, 0
    %s20 = sadd.s32 %s19, 1
    %s21 = scalar_select %p18, %s19, %s20
    %p24 = pneg %p18
    %p25 = scmp.eq.s32.totalorder %s9, 3
    %p26 = por %p24, %p25
    %p27 = scmp.ne.s32.totalorder %s19, %s22
    %p28 = scmp.eq.s32.totalorder %s9, 0
    %p29 = por %p27, %p28
    %p30 = scmp.ne.s32.totalorder %s19, %s22
    %p31 = scmp.eq.s32.totalorder %s14, 3
    %p32 = por %p30, %p31
    %p33 = scmp.ne.s32.totalorder %s22, %s23
    %p34 = scmp.eq.s32.totalorder %s14, 0
    %p35 = por %p33, %p34
    %p36 = scmp.ne.s32.totalorder %s22, %s23
    %p37 = scmp.eq.s32.totalorder %s15, 3
    %p38 = por %p36, %p37
    %p40 = scmp.ne.s32.totalorder %s23, %s39
    %p41 = scmp.eq.s32.totalorder %s15, 0
    %p42 = por %p40, %p41
    %s43 = ssub.s32 %s9, %s16
    %p44 = scmp.eq.s32.totalorder %s43, 0
    %s46 = sadd.s32 %s45, 1
    %s47 = scalar_select %p44, %s45, %s46
    %p50 = pneg %p44
    %p51 = scmp.eq.s32.totalorder %s9, 3
    %p52 = por %p50, %p51
    %p53 = scmp.ne.s32.totalorder %s45, %s48
    %p54 = scmp.eq.s32.totalorder %s9, 0
    %p55 = por %p53, %p54
    %p56 = scmp.ne.s32.totalorder %s45, %s48
    %p57 = scmp.eq.s32.totalorder %s14, 3
    %p58 = por %p56, %p57
    %p59 = scmp.ne.s32.totalorder %s48, %s49
    %p60 = scmp.eq.s32.totalorder %s14, 0
    %p61 = por %p59, %p60
    %p62 = scmp.ne.s32.totalorder %s48, %s49
    %p63 = scmp.eq.s32.totalorder %s15, 3
    %p64 = por %p62, %p63
    %p66 = scmp.ne.s32.totalorder %s49, %s65
    %p67 = scmp.eq.s32.totalorder %s15, 0
    %p68 = por %p66, %p67
    %s69 = ssub.s32 %s9, %s16
    %p70 = scmp.eq.s32.totalorder %s69, 0
    %s72 = sadd.s32 %s71, 1
    %s73 = scalar_select %p70, %s71, %s72
    %p76 = pneg %p70
    %p77 = scmp.eq.s32.totalorder %s9, 3
    %p78 = por %p76, %p77
    %p79 = scmp.ne.s32.totalorder %s71, %s74
    %p80 = scmp.eq.s32.totalorder %s9, 0
    %p81 = por %p79, %p80
    %p82 = scmp.ne.s32.totalorder %s71, %s74
    %p83 = scmp.eq.s32.totalorder %s14, 3
    %p84 = por %p82, %p83
    %p85 = scmp.ne.s32.totalorder %s74, %s75
    %p86 = scmp.eq.s32.totalorder %s14, 0
    %p87 = por %p85, %p86
    %p88 = scmp.ne.s32.totalorder %s74, %s75
    %p89 = scmp.eq.s32.totalorder %s15, 3
    %p90 = por %p88, %p89
    %p92 = scmp.ne.s32.totalorder %s75, %s91
    %p93 = scmp.eq.s32.totalorder %s15, 0
    %p94 = por %p92, %p93
    %s95 = ssub.s32 %s9, %s16
    %p96 = scmp.eq.s32.totalorder %s95, 0
    %s98 = sadd.s32 %s97, 1
    %s99 = scalar_select %p96, %s97, %s98
    %p102 = pneg %p96
    %p103 = scmp.eq.s32.totalorder %s9, 3
    %p104 = por %p102, %p103
    %p105 = scmp.ne.s32.totalorder %s97, %s100
    %p106 = scmp.eq.s32.totalorder %s9, 0
    %p107 = por %p105, %p106
    %p108 = scmp.ne.s32.totalorder %s97, %s100
    %p109 = scmp.eq.s32.totalorder %s14, 3
    %p110 = por %p108, %p109
    %p111 = scmp.ne.s32.totalorder %s100, %s101
    %p112 = scmp.eq.s32.totalorder %s14, 0
    %p113 = por %p111, %p112
    %p114 = scmp.ne.s32.totalorder %s100, %s101
    %p115 = scmp.eq.s32.totalorder %s15, 3
    %p116 = por %p114, %p115
    %p118 = scmp.ne.s32.totalorder %s101, %s117
    %p119 = scmp.eq.s32.totalorder %s15, 0
    %p120 = por %p118, %p119
    %p121 = scmp.le.s32.totalorder 1, %s9
    %p122 = scmp.lt.s32.totalorder %s9, 5
    %p123 = pnand %p121, %p122
    %p124 = pneg %p123
    // Predicated region
    $region9: #{_lambda_.54} parent=5 // pred_check
      _
    $region10: #{_lambda_.54} parent=5 // pred_check_branch
      %126 = sbr.rel (%p123) target = $region12
    $region11: #{_lambda_.54} parent=5 // pred_region
      %s127 = ssub.s32 %s9, 1
    $region12: #{_lambda_.54} parent=5 // pred_fallthru
      _
    %p128 = scmp.lt.s32.totalorder %s9, 4
    // Predicated region
    $region13: #{_lambda_.54} parent=5 // pred_check
      %p129 = pneg %p128
    $region14: #{_lambda_.54} parent=5 // pred_check_branch
      %131 = sbr.rel (%p129) target = $region16
    $region15: #{_lambda_.54} parent=5 // pred_region
      // Predicated region
      $region17: #{_lambda_.54} parent=15 // pred_check
        %p132 = pneg %p29
      $region18: #{_lambda_.54} parent=15 // pred_check_branch
        %134 = sbr.rel (%p132) target = $region20
      $region19: #{_lambda_.54} parent=15 // pred_region
        %s135 = smul.u32 16, %s9
        %p136 = scmp.lt.s32.totalorder %s135, 63
        %s137 = scalar_select %p136, %s135, 63
        %s138 = smul.addr %s137, 4
        %s139 = scalar_lea.vmem %s0, %s138
        %s140 = smul.u32 16, %s9
      $region20: #{_lambda_.54} parent=15 // pred_fallthru
        _
      // Predicated region
      $region21: #{_lambda_.54} parent=15 // pred_check
        %p141 = pneg %p55
      $region22: #{_lambda_.54} parent=15 // pred_check_branch
        %143 = sbr.rel (%p141) target = $region24
      $region23: #{_lambda_.54} parent=15 // pred_region
        %s144 = smul.u32 16, %s9
        %p145 = scmp.lt.s32.totalorder %s144, 63
        %s146 = scalar_select %p145, %s144, 63
        %s147 = smul.addr %s146, 4
        %s148 = scalar_lea.vmem %s1, %s147
        %s149 = smul.u32 16, %s9
      $region24: #{_lambda_.54} parent=15 // pred_fallthru
        _
      // Predicated region
      $region25: #{_lambda_.54} parent=15 // pred_check
        %p150 = pneg %p81
      $region26: #{_lambda_.54} parent=15 // pred_check_branch
        %152 = sbr.rel (%p150) target = $region28
      $region27: #{_lambda_.54} parent=15 // pred_region
        %s153 = smul.u32 16, %s9
        %p154 = scmp.lt.s32.totalorder %s153, 63
        %s155 = scalar_select %p154, %s153, 63
        %s156 = smul.addr %s155, 4
        %s157 = scalar_lea.vmem %s2, %s156
        %s158 = smul.u32 16, %s9
      $region28: #{_lambda_.54} parent=15 // pred_fallthru
        _
    $region16: #{_lambda_.54} parent=5 // pred_fallthru
      _
    %p159 = scmp.le.s32.totalorder 1, %s9
    %p160 = scmp.lt.s32.totalorder %s9, 5
    %p161 = pnand %p159, %p160
    %p162 = pneg %p161
    // Predicated region
    $region29: #{_lambda_.54} parent=5 // pred_check
      _
    $region30: #{_lambda_.54} parent=5 // pred_check_branch
      %164 = sbr.rel (%p161) target = $region32
    $region31: #{_lambda_.54} parent=5 // pred_region
      %s165 = ssub.s32 %s9, 1
      %s166 = smul.u32 16, %s14
      %p167 = scmp.lt.s32.totalorder %s166, 63
      %s168 = scalar_select %p167, %s166, 63
      %s169 = smul.addr %s168, 4
      %s170 = scalar_lea.vmem %s0, %s169
      %p171 = pneg %p35
      %p172 = pneg %p32
      %s173 = smul.u32 16, %s14
      %p174 = scmp.lt.s32.totalorder %s173, 63
      %s175 = scalar_select %p174, %s173, 63
      %s176 = smul.addr %s175, 4
      %s177 = scalar_lea.vmem %s1, %s176
      %p178 = pneg %p61
      %p179 = pneg %p58
      %s180 = smul.u32 16, %s14
      %p181 = scmp.lt.s32.totalorder %s180, 63
      %s182 = scalar_select %p181, %s180, 63
      %s183 = smul.addr %s182, 4
      %s184 = scalar_lea.vmem %s2, %s183
      %p185 = pneg %p87
      %p186 = pneg %p84
      %p187 = pneg %p113
      %p188 = pneg %p110
      %s189 = smul.u32 16, %s14
      %p190 = scmp.lt.s32.totalorder %s189, 63
      %s191 = scalar_select %p190, %s189, 63
      %s192 = smul.addr %s191, 4
      %s193 = scalar_lea.vmem %s3, %s192
      %s194 = smul.u32 16, %s14
      %p195 = scmp.lt.s32.totalorder %s194, 63
      %s196 = scalar_select %p195, %s194, 63
      %s197 = smul.addr %s196, 4
      %s198 = scalar_lea.vmem %s0, %s197
      %s199 = smul.u32 16, %s14
      %s200 = smul.u32 16, %s14
      %p201 = scmp.lt.s32.totalorder %s200, 63
      %s202 = scalar_select %p201, %s200, 63
      %s203 = smul.addr %s202, 4
      %s204 = scalar_lea.vmem %s1, %s203
      %s205 = smul.u32 16, %s14
      %s206 = smul.u32 16, %s14
      %p207 = scmp.lt.s32.totalorder %s206, 63
      %s208 = scalar_select %p207, %s206, 63
      %s209 = smul.addr %s208, 4
      %s210 = scalar_lea.vmem %s2, %s209
      %s211 = smul.u32 16, %s14
      %s212 = smul.u32 16, %s14
      %p213 = scmp.lt.s32.totalorder %s212, 63
      %s214 = scalar_select %p213, %s212, 63
      %s215 = smul.addr %s214, 4
      %s216 = scalar_lea.vmem %s3, %s215
      %s217 = smul.u32 16, %s14
      %v219 = vld [vmem:[%s198] sm:$0xf]
      %v220 = vld [vmem:[%s198 + $0x4] sm:$0xf]
      %v221 = vld [vmem:[%s198 + $0x8] sm:$0xf]
      %v222 = vld [vmem:[%s198 + $0xc] sm:$0xf]
      %v223 = vld [vmem:[%s198 + $0x10] sm:$0xf]
      %v224 = vld [vmem:[%s198 + $0x14] sm:$0xf]
      %v225 = vld [vmem:[%s198 + $0x18] sm:$0xf]
      %v226 = vld [vmem:[%s198 + $0x1c] sm:$0xf]
      %v227 = vld [vmem:[%s198 + $0x20] sm:$0xf]
      %v228 = vld [vmem:[%s198 + $0x24] sm:$0xf]
      %v229 = vld [vmem:[%s198 + $0x28] sm:$0xf]
      %v230 = vld [vmem:[%s198 + $0x2c] sm:$0xf]
      %v231 = vld [vmem:[%s198 + $0x30] sm:$0xf]
      %v232 = vld [vmem:[%s198 + $0x34] sm:$0xf]
      %v233 = vld [vmem:[%s198 + $0x38] sm:$0xf]
      %v234 = vld [vmem:[%s198 + $0x3c] sm:$0xf]
      %v235 = vmul.f32 %v219, 0.35355338
      %v236 = vmul.f32 %v220, 0.35355338
      %v237 = vmul.f32 %v221, 0.35355338
      %v238 = vmul.f32 %v222, 0.35355338
      %v239 = vmul.f32 %v223, 0.35355338
      %v240 = vmul.f32 %v224, 0.35355338
      %v241 = vmul.f32 %v225, 0.35355338
      %v242 = vmul.f32 %v226, 0.35355338
      %v243 = vmul.f32 %v227, 0.35355338
      %v244 = vmul.f32 %v228, 0.35355338
      %v245 = vmul.f32 %v229, 0.35355338
      %v246 = vmul.f32 %v230, 0.35355338
      %v247 = vmul.f32 %v231, 0.35355338
      %v248 = vmul.f32 %v232, 0.35355338
      %v249 = vmul.f32 %v233, 0.35355338
      %v250 = vmul.f32 %v234, 0.35355338
      %v251 = vld [vmem:[%s204] sm:$0xf]
      %v252 = vld [vmem:[%s204 + $0x4] sm:$0xf]
      %v253 = vld [vmem:[%s204 + $0x8] sm:$0xf]
      %v254 = vld [vmem:[%s204 + $0xc] sm:$0xf]
      %v255 = vld [vmem:[%s204 + $0x10] sm:$0xf]
      %v256 = vld [vmem:[%s204 + $0x14] sm:$0xf]
      %v257 = vld [vmem:[%s204 + $0x18] sm:$0xf]
      %v258 = vld [vmem:[%s204 + $0x1c] sm:$0xf]
      %v259 = vld [vmem:[%s204 + $0x20] sm:$0xf]
      %v260 = vld [vmem:[%s204 + $0x24] sm:$0xf]
      %v261 = vld [vmem:[%s204 + $0x28] sm:$0xf]
      %v262 = vld [vmem:[%s204 + $0x2c] sm:$0xf]
      %v263 = vld [vmem:[%s204 + $0x30] sm:$0xf]
      %v264 = vld [vmem:[%s204 + $0x34] sm:$0xf]
      %v265 = vld [vmem:[%s204 + $0x38] sm:$0xf]
      %v266 = vld [vmem:[%s204 + $0x3c] sm:$0xf]
      %v267 = vld [vmem:[%s210] sm:$0xf]
      %v268 = vld [vmem:[%s210 + $0x4] sm:$0xf]
      %v269 = vld [vmem:[%s210 + $0x8] sm:$0xf]
      %v270 = vld [vmem:[%s210 + $0xc] sm:$0xf]
      %v271 = vld [vmem:[%s210 + $0x10] sm:$0xf]
      %v272 = vld [vmem:[%s210 + $0x14] sm:$0xf]
      %v273 = vld [vmem:[%s210 + $0x18] sm:$0xf]
      %v274 = vld [vmem:[%s210 + $0x1c] sm:$0xf]
      %v275 = vld [vmem:[%s210 + $0x20] sm:$0xf]
      %v276 = vld [vmem:[%s210 + $0x24] sm:$0xf]
      %v277 = vld [vmem:[%s210 + $0x28] sm:$0xf]
      %v278 = vld [vmem:[%s210 + $0x2c] sm:$0xf]
      %v279 = vld [vmem:[%s210 + $0x30] sm:$0xf]
      %v280 = vld [vmem:[%s210 + $0x34] sm:$0xf]
      %v281 = vld [vmem:[%s210 + $0x38] sm:$0xf]
      %v282 = vld [vmem:[%s210 + $0x3c] sm:$0xf]
      %v283 = vpack.c.bf16 %v235, %v235
      %v284 = vpack.c.bf16 %v236, %v236
      %v285 = vpack.c.bf16 %v237, %v237
      %v286 = vpack.c.bf16 %v238, %v238
      %v287 = vpack.c.bf16 %v239, %v239
      %v288 = vpack.c.bf16 %v240, %v240
      %v289 = vpack.c.bf16 %v241, %v241
      %v290 = vpack.c.bf16 %v242, %v242
      %v291 = vpack.c.bf16 %v243, %v243
      %v292 = vpack.c.bf16 %v244, %v244
      %v293 = vpack.c.bf16 %v245, %v245
      %v294 = vpack.c.bf16 %v246, %v246
      %v295 = vpack.c.bf16 %v247, %v247
      %v296 = vpack.c.bf16 %v248, %v248
      %v297 = vpack.c.bf16 %v249, %v249
      %v298 = vpack.c.bf16 %v250, %v250
      %v299 = vpack.c.bf16 %v251, %v251
      %v300 = vpack.c.bf16 %v252, %v252
      %v301 = vpack.c.bf16 %v253, %v253
      %v302 = vpack.c.bf16 %v254, %v254
      %v303 = vpack.c.bf16 %v255, %v255
      %v304 = vpack.c.bf16 %v256, %v256
      %v305 = vpack.c.bf16 %v257, %v257
      %v306 = vpack.c.bf16 %v258, %v258
      %v307 = vpack.c.bf16 %v259, %v259
      %v308 = vpack.c.bf16 %v260, %v260
      %v309 = vpack.c.bf16 %v261, %v261
      %v310 = vpack.c.bf16 %v262, %v262
      %v311 = vpack.c.bf16 %v263, %v263
      %v312 = vpack.c.bf16 %v264, %v264
      %v313 = vpack.c.bf16 %v265, %v265
      %v314 = vpack.c.bf16 %v266, %v266
      %vm315 = vcmask 64512
      %v317 = vsel %vm315, %v283, 0
      %v320 = vsel %vm315, %v299, 0
      %322 = vmatprep.subr.bf16.mxu0 0
      %323 = vmatpush1.bf16.xpose.msra.mxu0 0
      %324 = vmatprep.subr.bf16.mxu0 0
      %325 = vmatpush1.bf16.xpose.msra.mxu0 0
      %326 = vmatprep.subr.bf16.mxu0 0
      %327 = vmatpush1.bf16.xpose.msra.mxu0 0
      %328 = vmatprep.subr.bf16.mxu0 0
      %329 = vmatpush1.bf16.xpose.msra.mxu0 0
      %330 = vmatprep.subr.bf16.mxu0 0
      %331 = vmatpush1.bf16.xpose.msra.mxu0 0
      %332 = vmatprep.subr.bf16.mxu0 0
      %333 = vmatpush1.bf16.xpose.msra.mxu0 0
      %334 = vmatprep.subr.bf16.mxu0 0
      %335 = vmatpush1.bf16.xpose.msra.mxu0 0
      %336 = vmatprep.subr.bf16.mxu0 0
      %337 = vmatpush1.bf16.xpose.msra.mxu0 %v320
      %338 = vmatprep.subr.bf16.mxu0 0
      %339 = vmatpush2.bf16.xpose.msra.mxu0 0
      %340 = vmatprep.subr.bf16.mxu0 0
      %341 = vmatpush2.bf16.xpose.msra.mxu0 0
      %342 = vmatprep.subr.bf16.mxu0 0
      %343 = vmatpush2.bf16.xpose.msra.mxu0 0
      %344 = vmatprep.subr.bf16.mxu0 0
      %345 = vmatpush2.bf16.xpose.msra.mxu0 0
      %346 = vmatprep.subr.bf16.mxu0 0
      %347 = vmatpush2.bf16.xpose.msra.mxu0 0
      %348 = vmatprep.subr.bf16.mxu0 0
      %349 = vmatpush2.bf16.xpose.msra.mxu0 0
      %350 = vmatprep.subr.bf16.mxu0 0
      %351 = vmatpush2.bf16.xpose.msra.mxu0 0
      %352 = vmatprep.subr.bf16.mxu0 0
      %353 = vmatpush2.bf16.xpose.msra.mxu0 0
      %354 = vmatprep.mubr.bf16.mxu0 0
      %355 = vmatmul.mubr.bf16.gmra.mxu0 %v317
      %v356 = vpop.f32.mrf.mxu0
      %v357 = vadd.f32 0.0, %v356
      %v358 = vpop.f32.mrf.mxu0
      %v359 = vpop.f32.mrf.mxu0
      %v360 = vpop.f32.mrf.mxu0
      %361 = vdwg.mxu0
      %v363 = vsel %vm315, %v284, 0
      %v366 = vsel %vm315, %v300, 0
      %368 = vmatprep.subr.bf16.mxu0 0
      %369 = vmatpush1.bf16.xpose.msra.mxu0 0
      %370 = vmatprep.subr.bf16.mxu0 0
      %371 = vmatpush1.bf16.xpose.msra.mxu0 0
      %372 = vmatprep.subr.bf16.mxu0 0
      %373 = vmatpush1.bf16.xpose.msra.mxu0 0
      %374 = vmatprep.subr.bf16.mxu0 0
      %375 = vmatpush1.bf16.xpose.msra.mxu0 0
      %376 = vmatprep.subr.bf16.mxu0 0
      %377 = vmatpush1.bf16.xpose.msra.mxu0 0
      %378 = vmatprep.subr.bf16.mxu0 0
      %379 = vmatpush1.bf16.xpose.msra.mxu0 0
      %380 = vmatprep.subr.bf16.mxu0 0
      %381 = vmatpush1.bf16.xpose.msra.mxu0 0
      %382 = vmatprep.subr.bf16.mxu0 0
      %383 = vmatpush1.bf16.xpose.msra.mxu0 %v366
      %384 = vmatprep.subr.bf16.mxu0 0
      %385 = vmatpush2.bf16.xpose.msra.mxu0 0
      %386 = vmatprep.subr.bf16.mxu0 0
      %387 = vmatpush2.bf16.xpose.msra.mxu0 0
      %388 = vmatprep.subr.bf16.mxu0 0
      %389 = vmatpush2.bf16.xpose.msra.mxu0 0
      %390 = vmatprep.subr.bf16.mxu0 0
      %391 = vmatpush2.bf16.xpose.msra.mxu0 0
      %392 = vmatprep.subr.bf16.mxu0 0
      %393 = vmatpush2.bf16.xpose.msra.mxu0 0
      %394 = vmatprep.subr.bf16.mxu0 0
      %395 = vmatpush2.bf16.xpose.msra.mxu0 0
      %396 = vmatprep.subr.bf16.mxu0 0
      %397 = vmatpush2.bf16.xpose.msra.mxu0 0
      %398 = vmatprep.subr.bf16.mxu0 0
      %399 = vmatpush2.bf16.xpose.msra.mxu0 0
      %400 = vmatprep.mubr.bf16.mxu0 0
      %401 = vmatmul.mubr.bf16.gmra.mxu0 %v363
      %v402 = vpop.f32.mrf.mxu0
      %v403 = vadd.f32 0.0, %v402
      %v404 = vpop.f32.mrf.mxu0
      %v405 = vpop.f32.mrf.mxu0
      %v406 = vpop.f32.mrf.mxu0
      %407 = vdwg.mxu0
      %v409 = vsel %vm315, %v285, 0
      %v412 = vsel %vm315, %v301, 0
      %414 = vmatprep.subr.bf16.mxu0 0
      %415 = vmatpush1.bf16.xpose.msra.mxu0 0
      %416 = vmatprep.subr.bf16.mxu0 0
      %417 = vmatpush1.bf16.xpose.msra.mxu0 0
      %418 = vmatprep.subr.bf16.mxu0 0
      %419 = vmatpush1.bf16.xpose.msra.mxu0 0
      %420 = vmatprep.subr.bf16.mxu0 0
      %421 = vmatpush1.bf16.xpose.msra.mxu0 0
      %422 = vmatprep.subr.bf16.mxu0 0
      %423 = vmatpush1.bf16.xpose.msra.mxu0 0
      %424 = vmatprep.subr.bf16.mxu0 0
      %425 = vmatpush1.bf16.xpose.msra.mxu0 0
      %426 = vmatprep.subr.bf16.mxu0 0
      %427 = vmatpush1.bf16.xpose.msra.mxu0 0
      %428 = vmatprep.subr.bf16.mxu0 0
      %429 = vmatpush1.bf16.xpose.msra.mxu0 %v412
      %430 = vmatprep.subr.bf16.mxu0 0
      %431 = vmatpush2.bf16.xpose.msra.mxu0 0
      %432 = vmatprep.subr.bf16.mxu0 0
      %433 = vmatpush2.bf16.xpose.msra.mxu0 0
      %434 = vmatprep.subr.bf16.mxu0 0
      %435 = vmatpush2.bf16.xpose.msra.mxu0 0
      %436 = vmatprep.subr.bf16.mxu0 0
      %437 = vmatpush2.bf16.xpose.msra.mxu0 0
      %438 = vmatprep.subr.bf16.mxu0 0
      %439 = vmatpush2.bf16.xpose.msra.mxu0 0
      %440 = vmatprep.subr.bf16.mxu0 0
      %441 = vmatpush2.bf16.xpose.msra.mxu0 0
      %442 = vmatprep.subr.bf16.mxu0 0
      %443 = vmatpush2.bf16.xpose.msra.mxu0 0
      %444 = vmatprep.subr.bf16.mxu0 0
      %445 = vmatpush2.bf16.xpose.msra.mxu0 0
      %446 = vmatprep.mubr.bf16.mxu0 0
      %447 = vmatmul.mubr.bf16.gmra.mxu0 %v409
      %v448 = vpop.f32.mrf.mxu0
      %v449 = vadd.f32 0.0, %v448
      %v450 = vpop.f32.mrf.mxu0
      %v451 = vpop.f32.mrf.mxu0
      %v452 = vpop.f32.mrf.mxu0
      %453 = vdwg.mxu0
      %v455 = vsel %vm315, %v286, 0
      %v458 = vsel %vm315, %v302, 0
      %460 = vmatprep.subr.bf16.mxu0 0
      %461 = vmatpush1.bf16.xpose.msra.mxu0 0
      %462 = vmatprep.subr.bf16.mxu0 0
      %463 = vmatpush1.bf16.xpose.msra.mxu0 0
      %464 = vmatprep.subr.bf16.mxu0 0
      %465 = vmatpush1.bf16.xpose.msra.mxu0 0
      %466 = vmatprep.subr.bf16.mxu0 0
      %467 = vmatpush1.bf16.xpose.msra.mxu0 0
      %468 = vmatprep.subr.bf16.mxu0 0
      %469 = vmatpush1.bf16.xpose.msra.mxu0 0
      %470 = vmatprep.subr.bf16.mxu0 0
      %471 = vmatpush1.bf16.xpose.msra.mxu0 0
      %472 = vmatprep.subr.bf16.mxu0 0
      %473 = vmatpush1.bf16.xpose.msra.mxu0 0
      %474 = vmatprep.subr.bf16.mxu0 0
      %475 = vmatpush1.bf16.xpose.msra.mxu0 %v458
      %476 = vmatprep.subr.bf16.mxu0 0
      %477 = vmatpush2.bf16.xpose.msra.mxu0 0
      %478 = vmatprep.subr.bf16.mxu0 0
      %479 = vmatpush2.bf16.xpose.msra.mxu0 0
      %480 = vmatprep.subr.bf16.mxu0 0
      %481 = vmatpush2.bf16.xpose.msra.mxu0 0
      %482 = vmatprep.subr.bf16.mxu0 0
      %483 = vmatpush2.bf16.xpose.msra.mxu0 0
      %484 = vmatprep.subr.bf16.mxu0 0
      %485 = vmatpush2.bf16.xpose.msra.mxu0 0
      %486 = vmatprep.subr.bf16.mxu0 0
      %487 = vmatpush2.bf16.xpose.msra.mxu0 0
      %488 = vmatprep.subr.bf16.mxu0 0
      %489 = vmatpush2.bf16.xpose.msra.mxu0 0
      %490 = vmatprep.subr.bf16.mxu0 0
      %491 = vmatpush2.bf16.xpose.msra.mxu0 0
      %492 = vmatprep.mubr.bf16.mxu0 0
      %493 = vmatmul.mubr.bf16.gmra.mxu0 %v455
      %v494 = vpop.f32.mrf.mxu0
      %v495 = vadd.f32 0.0, %v494
      %v496 = vpop.f32.mrf.mxu0
      %v497 = vpop.f32.mrf.mxu0
      %v498 = vpop.f32.mrf.mxu0
      %499 = vdwg.mxu0
      %v501 = vsel %vm315, %v287, 0
      %v504 = vsel %vm315, %v303, 0
      %506 = vmatprep.subr.bf16.mxu0 0
      %507 = vmatpush1.bf16.xpose.msra.mxu0 0
      %508 = vmatprep.subr.bf16.mxu0 0
      %509 = vmatpush1.bf16.xpose.msra.mxu0 0
      %510 = vmatprep.subr.bf16.mxu0 0
      %511 = vmatpush1.bf16.xpose.msra.mxu0 0
      %512 = vmatprep.subr.bf16.mxu0 0
      %513 = vmatpush1.bf16.xpose.msra.mxu0 0
      %514 = vmatprep.subr.bf16.mxu0 0
      %515 = vmatpush1.bf16.xpose.msra.mxu0 0
      %516 = vmatprep.subr.bf16.mxu0 0
      %517 = vmatpush1.bf16.xpose.msra.mxu0 0
      %518 = vmatprep.subr.bf16.mxu0 0
      %519 = vmatpush1.bf16.xpose.msra.mxu0 0
      %520 = vmatprep.subr.bf16.mxu0 0
      %521 = vmatpush1.bf16.xpose.msra.mxu0 %v504
      %522 = vmatprep.subr.bf16.mxu0 0
      %523 = vmatpush2.bf16.xpose.msra.mxu0 0
      %524 = vmatprep.subr.bf16.mxu0 0
      %525 = vmatpush2.bf16.xpose.msra.mxu0 0
      %526 = vmatprep.subr.bf16.mxu0 0
      %527 = vmatpush2.bf16.xpose.msra.mxu0 0
      %528 = vmatprep.subr.bf16.mxu0 0
      %529 = vmatpush2.bf16.xpose.msra.mxu0 0
      %530 = vmatprep.subr.bf16.mxu0 0
      %531 = vmatpush2.bf16.xpose.msra.mxu0 0
      %532 = vmatprep.subr.bf16.mxu0 0
      %533 = vmatpush2.bf16.xpose.msra.mxu0 0
      %534 = vmatprep.subr.bf16.mxu0 0
      %535 = vmatpush2.bf16.xpose.msra.mxu0 0
      %536 = vmatprep.subr.bf16.mxu0 0
      %537 = vmatpush2.bf16.xpose.msra.mxu0 0
      %538 = vmatprep.mubr.bf16.mxu0 0
      %539 = vmatmul.mubr.bf16.gmra.mxu0 %v501
      %v540 = vpop.f32.mrf.mxu0
      %v541 = vadd.f32 0.0, %v540
      %v542 = vpop.f32.mrf.mxu0
      %v543 = vpop.f32.mrf.mxu0
      %v544 = vpop.f32.mrf.mxu0
      %545 = vdwg.mxu0
      %v547 = vsel %vm315, %v288, 0
      %v550 = vsel %vm315, %v304, 0
      %552 = vmatprep.subr.bf16.mxu0 0
      %553 = vmatpush1.bf16.xpose.msra.mxu0 0
      %554 = vmatprep.subr.bf16.mxu0 0
      %555 = vmatpush1.bf16.xpose.msra.mxu0 0
      %556 = vmatprep.subr.bf16.mxu0 0
      %557 = vmatpush1.bf16.xpose.msra.mxu0 0
      %558 = vmatprep.subr.bf16.mxu0 0
      %559 = vmatpush1.bf16.xpose.msra.mxu0 0
      %560 = vmatprep.subr.bf16.mxu0 0
      %561 = vmatpush1.bf16.xpose.msra.mxu0 0
      %562 = vmatprep.subr.bf16.mxu0 0
      %563 = vmatpush1.bf16.xpose.msra.mxu0 0
      %564 = vmatprep.subr.bf16.mxu0 0
      %565 = vmatpush1.bf16.xpose.msra.mxu0 0
      %566 = vmatprep.subr.bf16.mxu0 0
      %567 = vmatpush1.bf16.xpose.msra.mxu0 %v550
      %568 = vmatprep.subr.bf16.mxu0 0
      %569 = vmatpush2.bf16.xpose.msra.mxu0 0
      %570 = vmatprep.subr.bf16.mxu0 0
      %571 = vmatpush2.bf16.xpose.msra.mxu0 0
      %572 = vmatprep.subr.bf16.mxu0 0
      %573 = vmatpush2.bf16.xpose.msra.mxu0 0
      %574 = vmatprep.subr.bf16.mxu0 0
      %575 = vmatpush2.bf16.xpose.msra.mxu0 0
      %576 = vmatprep.subr.bf16.mxu0 0
      %577 = vmatpush2.bf16.xpose.msra.mxu0 0
      %578 = vmatprep.subr.bf16.mxu0 0
      %579 = vmatpush2.bf16.xpose.msra.mxu0 0
      %580 = vmatprep.subr.bf16.mxu0 0
      %581 = vmatpush2.bf16.xpose.msra.mxu0 0
      %582 = vmatprep.subr.bf16.mxu0 0
      %583 = vmatpush2.bf16.xpose.msra.mxu0 0
      %584 = vmatprep.mubr.bf16.mxu0 0
      %585 = vmatmul.mubr.bf16.gmra.mxu0 %v547
      %v586 = vpop.f32.mrf.mxu0
      %v587 = vadd.f32 0.0, %v586
      %v588 = vpop.f32.mrf.mxu0
      %v589 = vpop.f32.mrf.mxu0
      %v590 = vpop.f32.mrf.mxu0
      %591 = vdwg.mxu0
      %v593 = vsel %vm315, %v289, 0
      %v596 = vsel %vm315, %v305, 0
      %598 = vmatprep.subr.bf16.mxu0 0
      %599 = vmatpush1.bf16.xpose.msra.mxu0 0
      %600 = vmatprep.subr.bf16.mxu0 0
      %601 = vmatpush1.bf16.xpose.msra.mxu0 0
      %602 = vmatprep.subr.bf16.mxu0 0
      %603 = vmatpush1.bf16.xpose.msra.mxu0 0
      %604 = vmatprep.subr.bf16.mxu0 0
      %605 = vmatpush1.bf16.xpose.msra.mxu0 0
      %606 = vmatprep.subr.bf16.mxu0 0
      %607 = vmatpush1.bf16.xpose.msra.mxu0 0
      %608 = vmatprep.subr.bf16.mxu0 0
      %609 = vmatpush1.bf16.xpose.msra.mxu0 0
      %610 = vmatprep.subr.bf16.mxu0 0
      %611 = vmatpush1.bf16.xpose.msra.mxu0 0
      %612 = vmatprep.subr.bf16.mxu0 0
      %613 = vmatpush1.bf16.xpose.msra.mxu0 %v596
      %614 = vmatprep.subr.bf16.mxu0 0
      %615 = vmatpush2.bf16.xpose.msra.mxu0 0
      %616 = vmatprep.subr.bf16.mxu0 0
      %617 = vmatpush2.bf16.xpose.msra.mxu0 0
      %618 = vmatprep.subr.bf16.mxu0 0
      %619 = vmatpush2.bf16.xpose.msra.mxu0 0
      %620 = vmatprep.subr.bf16.mxu0 0
      %621 = vmatpush2.bf16.xpose.msra.mxu0 0
      %622 = vmatprep.subr.bf16.mxu0 0
      %623 = vmatpush2.bf16.xpose.msra.mxu0 0
      %624 = vmatprep.subr.bf16.mxu0 0
      %625 = vmatpush2.bf16.xpose.msra.mxu0 0
      %626 = vmatprep.subr.bf16.mxu0 0
      %627 = vmatpush2.bf16.xpose.msra.mxu0 0
      %628 = vmatprep.subr.bf16.mxu0 0
      %629 = vmatpush2.bf16.xpose.msra.mxu0 0
      %630 = vmatprep.mubr.bf16.mxu0 0
      %631 = vmatmul.mubr.bf16.gmra.mxu0 %v593
      %v632 = vpop.f32.mrf.mxu0
      %v633 = vadd.f32 0.0, %v632
      %v634 = vpop.f32.mrf.mxu0
      %v635 = vpop.f32.mrf.mxu0
      %v636 = vpop.f32.mrf.mxu0
      %637 = vdwg.mxu0
      %v639 = vsel %vm315, %v290, 0
      %v642 = vsel %vm315, %v306, 0
      %644 = vmatprep.subr.bf16.mxu0 0
      %645 = vmatpush1.bf16.xpose.msra.mxu0 0
      %646 = vmatprep.subr.bf16.mxu0 0
      %647 = vmatpush1.bf16.xpose.msra.mxu0 0
      %648 = vmatprep.subr.bf16.mxu0 0
      %649 = vmatpush1.bf16.xpose.msra.mxu0 0
      %650 = vmatprep.subr.bf16.mxu0 0
      %651 = vmatpush1.bf16.xpose.msra.mxu0 0
      %652 = vmatprep.subr.bf16.mxu0 0
      %653 = vmatpush1.bf16.xpose.msra.mxu0 0
      %654 = vmatprep.subr.bf16.mxu0 0
      %655 = vmatpush1.bf16.xpose.msra.mxu0 0
      %656 = vmatprep.subr.bf16.mxu0 0
      %657 = vmatpush1.bf16.xpose.msra.mxu0 0
      %658 = vmatprep.subr.bf16.mxu0 0
      %659 = vmatpush1.bf16.xpose.msra.mxu0 %v642
      %660 = vmatprep.subr.bf16.mxu0 0
      %661 = vmatpush2.bf16.xpose.msra.mxu0 0
      %662 = vmatprep.subr.bf16.mxu0 0
      %663 = vmatpush2.bf16.xpose.msra.mxu0 0
      %664 = vmatprep.subr.bf16.mxu0 0
      %665 = vmatpush2.bf16.xpose.msra.mxu0 0
      %666 = vmatprep.subr.bf16.mxu0 0
      %667 = vmatpush2.bf16.xpose.msra.mxu0 0
      %668 = vmatprep.subr.bf16.mxu0 0
      %669 = vmatpush2.bf16.xpose.msra.mxu0 0
      %670 = vmatprep.subr.bf16.mxu0 0
      %671 = vmatpush2.bf16.xpose.msra.mxu0 0
      %672 = vmatprep.subr.bf16.mxu0 0
      %673 = vmatpush2.bf16.xpose.msra.mxu0 0
      %674 = vmatprep.subr.bf16.mxu0 0
      %675 = vmatpush2.bf16.xpose.msra.mxu0 0
      %676 = vmatprep.mubr.bf16.mxu0 0
      %677 = vmatmul.mubr.bf16.gmra.mxu0 %v639
      %v678 = vpop.f32.mrf.mxu0
      %v679 = vadd.f32 0.0, %v678
      %v680 = vpop.f32.mrf.mxu0
      %v681 = vpop.f32.mrf.mxu0
      %v682 = vpop.f32.mrf.mxu0
      %683 = vdwg.mxu0
      %v685 = vsel %vm315, %v291, 0
      %v688 = vsel %vm315, %v307, 0
      %690 = vmatprep.subr.bf16.mxu0 0
      %691 = vmatpush1.bf16.xpose.msra.mxu0 0
      %692 = vmatprep.subr.bf16.mxu0 0
      %693 = vmatpush1.bf16.xpose.msra.mxu0 0
      %694 = vmatprep.subr.bf16.mxu0 0
      %695 = vmatpush1.bf16.xpose.msra.mxu0 0
      %696 = vmatprep.subr.bf16.mxu0 0
      %697 = vmatpush1.bf16.xpose.msra.mxu0 0
      %698 = vmatprep.subr.bf16.mxu0 0
      %699 = vmatpush1.bf16.xpose.msra.mxu0 0
      %700 = vmatprep.subr.bf16.mxu0 0
      %701 = vmatpush1.bf16.xpose.msra.mxu0 0
      %702 = vmatprep.subr.bf16.mxu0 0
      %703 = vmatpush1.bf16.xpose.msra.mxu0 0
      %704 = vmatprep.subr.bf16.mxu0 0
      %705 = vmatpush1.bf16.xpose.msra.mxu0 %v688
      %706 = vmatprep.subr.bf16.mxu0 0
      %707 = vmatpush2.bf16.xpose.msra.mxu0 0
      %708 = vmatprep.subr.bf16.mxu0 0
      %709 = vmatpush2.bf16.xpose.msra.mxu0 0
      %710 = vmatprep.subr.bf16.mxu0 0
      %711 = vmatpush2.bf16.xpose.msra.mxu0 0
      %712 = vmatprep.subr.bf16.mxu0 0
      %713 = vmatpush2.bf16.xpose.msra.mxu0 0
      %714 = vmatprep.subr.bf16.mxu0 0
      %715 = vmatpush2.bf16.xpose.msra.mxu0 0
      %716 = vmatprep.subr.bf16.mxu0 0
      %717 = vmatpush2.bf16.xpose.msra.mxu0 0
      %718 = vmatprep.subr.bf16.mxu0 0
      %719 = vmatpush2.bf16.xpose.msra.mxu0 0
      %720 = vmatprep.subr.bf16.mxu0 0
      %721 = vmatpush2.bf16.xpose.msra.mxu0 0
      %722 = vmatprep.mubr.bf16.mxu0 0
      %723 = vmatmul.mubr.bf16.gmra.mxu0 %v685
      %v724 = vpop.f32.mrf.mxu0
      %v725 = vadd.f32 0.0, %v724
      %v726 = vpop.f32.mrf.mxu0
      %v727 = vpop.f32.mrf.mxu0
      %v728 = vpop.f32.mrf.mxu0
      %729 = vdwg.mxu0
      %v731 = vsel %vm315, %v292, 0
      %v734 = vsel %vm315, %v308, 0
      %736 = vmatprep.subr.bf16.mxu0 0
      %737 = vmatpush1.bf16.xpose.msra.mxu0 0
      %738 = vmatprep.subr.bf16.mxu0 0
      %739 = vmatpush1.bf16.xpose.msra.mxu0 0
      %740 = vmatprep.subr.bf16.mxu0 0
      %741 = vmatpush1.bf16.xpose.msra.mxu0 0
      %742 = vmatprep.subr.bf16.mxu0 0
      %743 = vmatpush1.bf16.xpose.msra.mxu0 0
      %744 = vmatprep.subr.bf16.mxu0 0
      %745 = vmatpush1.bf16.xpose.msra.mxu0 0
      %746 = vmatprep.subr.bf16.mxu0 0
      %747 = vmatpush1.bf16.xpose.msra.mxu0 0
      %748 = vmatprep.subr.bf16.mxu0 0
      %749 = vmatpush1.bf16.xpose.msra.mxu0 0
      %750 = vmatprep.subr.bf16.mxu0 0
      %751 = vmatpush1.bf16.xpose.msra.mxu0 %v734
      %752 = vmatprep.subr.bf16.mxu0 0
      %753 = vmatpush2.bf16.xpose.msra.mxu0 0
      %754 = vmatprep.subr.bf16.mxu0 0
      %755 = vmatpush2.bf16.xpose.msra.mxu0 0
      %756 = vmatprep.subr.bf16.mxu0 0
      %757 = vmatpush2.bf16.xpose.msra.mxu0 0
      %758 = vmatprep.subr.bf16.mxu0 0
      %759 = vmatpush2.bf16.xpose.msra.mxu0 0
      %760 = vmatprep.subr.bf16.mxu0 0
      %761 = vmatpush2.bf16.xpose.msra.mxu0 0
      %762 = vmatprep.subr.bf16.mxu0 0
      %763 = vmatpush2.bf16.xpose.msra.mxu0 0
      %764 = vmatprep.subr.bf16.mxu0 0
      %765 = vmatpush2.bf16.xpose.msra.mxu0 0
      %766 = vmatprep.subr.bf16.mxu0 0
      %767 = vmatpush2.bf16.xpose.msra.mxu0 0
      %768 = vmatprep.mubr.bf16.mxu0 0
      %769 = vmatmul.mubr.bf16.gmra.mxu0 %v731
      %v770 = vpop.f32.mrf.mxu0
      %v771 = vadd.f32 0.0, %v770
      %v772 = vpop.f32.mrf.mxu0
      %v773 = vpop.f32.mrf.mxu0
      %v774 = vpop.f32.mrf.mxu0
      %775 = vdwg.mxu0
      %v777 = vsel %vm315, %v293, 0
      %v780 = vsel %vm315, %v309, 0
      %782 = vmatprep.subr.bf16.mxu0 0
      %783 = vmatpush1.bf16.xpose.msra.mxu0 0
      %784 = vmatprep.subr.bf16.mxu0 0
      %785 = vmatpush1.bf16.xpose.msra.mxu0 0
      %786 = vmatprep.subr.bf16.mxu0 0
      %787 = vmatpush1.bf16.xpose.msra.mxu0 0
      %788 = vmatprep.subr.bf16.mxu0 0
      %789 = vmatpush1.bf16.xpose.msra.mxu0 0
      %790 = vmatprep.subr.bf16.mxu0 0
      %791 = vmatpush1.bf16.xpose.msra.mxu0 0
      %792 = vmatprep.subr.bf16.mxu0 0
      %793 = vmatpush1.bf16.xpose.msra.mxu0 0
      %794 = vmatprep.subr.bf16.mxu0 0
      %795 = vmatpush1.bf16.xpose.msra.mxu0 0
      %796 = vmatprep.subr.bf16.mxu0 0
      %797 = vmatpush1.bf16.xpose.msra.mxu0 %v780
      %798 = vmatprep.subr.bf16.mxu0 0
      %799 = vmatpush2.bf16.xpose.msra.mxu0 0
      %800 = vmatprep.subr.bf16.mxu0 0
      %801 = vmatpush2.bf16.xpose.msra.mxu0 0
      %802 = vmatprep.subr.bf16.mxu0 0
      %803 = vmatpush2.bf16.xpose.msra.mxu0 0
      %804 = vmatprep.subr.bf16.mxu0 0
      %805 = vmatpush2.bf16.xpose.msra.mxu0 0
      %806 = vmatprep.subr.bf16.mxu0 0
      %807 = vmatpush2.bf16.xpose.msra.mxu0 0
      %808 = vmatprep.subr.bf16.mxu0 0
      %809 = vmatpush2.bf16.xpose.msra.mxu0 0
      %810 = vmatprep.subr.bf16.mxu0 0
      %811 = vmatpush2.bf16.xpose.msra.mxu0 0
      %812 = vmatprep.subr.bf16.mxu0 0
      %813 = vmatpush2.bf16.xpose.msra.mxu0 0
      %814 = vmatprep.mubr.bf16.mxu0 0
      %815 = vmatmul.mubr.bf16.gmra.mxu0 %v777
      %v816 = vpop.f32.mrf.mxu0
      %v817 = vadd.f32 0.0, %v816
      %v818 = vpop.f32.mrf.mxu0
      %v819 = vpop.f32.mrf.mxu0
      %v820 = vpop.f32.mrf.mxu0
      %821 = vdwg.mxu0
      %v823 = vsel %vm315, %v294, 0
      %v826 = vsel %vm315, %v310, 0
      %828 = vmatprep.subr.bf16.mxu0 0
      %829 = vmatpush1.bf16.xpose.msra.mxu0 0
      %830 = vmatprep.subr.bf16.mxu0 0
      %831 = vmatpush1.bf16.xpose.msra.mxu0 0
      %832 = vmatprep.subr.bf16.mxu0 0
      %833 = vmatpush1.bf16.xpose.msra.mxu0 0
      %834 = vmatprep.subr.bf16.mxu0 0
      %835 = vmatpush1.bf16.xpose.msra.mxu0 0
      %836 = vmatprep.subr.bf16.mxu0 0
      %837 = vmatpush1.bf16.xpose.msra.mxu0 0
      %838 = vmatprep.subr.bf16.mxu0 0
      %839 = vmatpush1.bf16.xpose.msra.mxu0 0
      %840 = vmatprep.subr.bf16.mxu0 0
      %841 = vmatpush1.bf16.xpose.msra.mxu0 0
      %842 = vmatprep.subr.bf16.mxu0 0
      %843 = vmatpush1.bf16.xpose.msra.mxu0 %v826
      %844 = vmatprep.subr.bf16.mxu0 0
      %845 = vmatpush2.bf16.xpose.msra.mxu0 0
      %846 = vmatprep.subr.bf16.mxu0 0
      %847 = vmatpush2.bf16.xpose.msra.mxu0 0
      %848 = vmatprep.subr.bf16.mxu0 0
      %849 = vmatpush2.bf16.xpose.msra.mxu0 0
      %850 = vmatprep.subr.bf16.mxu0 0
      %851 = vmatpush2.bf16.xpose.msra.mxu0 0
      %852 = vmatprep.subr.bf16.mxu0 0
      %853 = vmatpush2.bf16.xpose.msra.mxu0 0
      %854 = vmatprep.subr.bf16.mxu0 0
      %855 = vmatpush2.bf16.xpose.msra.mxu0 0
      %856 = vmatprep.subr.bf16.mxu0 0
      %857 = vmatpush2.bf16.xpose.msra.mxu0 0
      %858 = vmatprep.subr.bf16.mxu0 0
      %859 = vmatpush2.bf16.xpose.msra.mxu0 0
      %860 = vmatprep.mubr.bf16.mxu0 0
      %861 = vmatmul.mubr.bf16.gmra.mxu0 %v823
      %v862 = vpop.f32.mrf.mxu0
      %v863 = vadd.f32 0.0, %v862
      %v864 = vpop.f32.mrf.mxu0
      %v865 = vpop.f32.mrf.mxu0
      %v866 = vpop.f32.mrf.mxu0
      %867 = vdwg.mxu0
      %v869 = vsel %vm315, %v295, 0
      %v872 = vsel %vm315, %v311, 0
      %874 = vmatprep.subr.bf16.mxu0 0
      %875 = vmatpush1.bf16.xpose.msra.mxu0 0
      %876 = vmatprep.subr.bf16.mxu0 0
      %877 = vmatpush1.bf16.xpose.msra.mxu0 0
      %878 = vmatprep.subr.bf16.mxu0 0
      %879 = vmatpush1.bf16.xpose.msra.mxu0 0
      %880 = vmatprep.subr.bf16.mxu0 0
      %881 = vmatpush1.bf16.xpose.msra.mxu0 0
      %882 = vmatprep.subr.bf16.mxu0 0
      %883 = vmatpush1.bf16.xpose.msra.mxu0 0
      %884 = vmatprep.subr.bf16.mxu0 0
      %885 = vmatpush1.bf16.xpose.msra.mxu0 0
      %886 = vmatprep.subr.bf16.mxu0 0
      %887 = vmatpush1.bf16.xpose.msra.mxu0 0
      %888 = vmatprep.subr.bf16.mxu0 0
      %889 = vmatpush1.bf16.xpose.msra.mxu0 %v872
      %890 = vmatprep.subr.bf16.mxu0 0
      %891 = vmatpush2.bf16.xpose.msra.mxu0 0
      %892 = vmatprep.subr.bf16.mxu0 0
      %893 = vmatpush2.bf16.xpose.msra.mxu0 0
      %894 = vmatprep.subr.bf16.mxu0 0
      %895 = vmatpush2.bf16.xpose.msra.mxu0 0
      %896 = vmatprep.subr.bf16.mxu0 0
      %897 = vmatpush2.bf16.xpose.msra.mxu0 0
      %898 = vmatprep.subr.bf16.mxu0 0
      %899 = vmatpush2.bf16.xpose.msra.mxu0 0
      %900 = vmatprep.subr.bf16.mxu0 0
      %901 = vmatpush2.bf16.xpose.msra.mxu0 0
      %902 = vmatprep.subr.bf16.mxu0 0
      %903 = vmatpush2.bf16.xpose.msra.mxu0 0
      %904 = vmatprep.subr.bf16.mxu0 0
      %905 = vmatpush2.bf16.xpose.msra.mxu0 0
      %906 = vmatprep.mubr.bf16.mxu0 0
      %907 = vmatmul.mubr.bf16.gmra.mxu0 %v869
      %v908 = vpop.f32.mrf.mxu0
      %v909 = vadd.f32 0.0, %v908
      %v910 = vpop.f32.mrf.mxu0
      %v911 = vpop.f32.mrf.mxu0
      %v912 = vpop.f32.mrf.mxu0
      %913 = vdwg.mxu0
      %v915 = vsel %vm315, %v296, 0
      %v918 = vsel %vm315, %v312, 0
      %920 = vmatprep.subr.bf16.mxu0 0
      %921 = vmatpush1.bf16.xpose.msra.mxu0 0
      %922 = vmatprep.subr.bf16.mxu0 0
      %923 = vmatpush1.bf16.xpose.msra.mxu0 0
      %924 = vmatprep.subr.bf16.mxu0 0
      %925 = vmatpush1.bf16.xpose.msra.mxu0 0
      %926 = vmatprep.subr.bf16.mxu0 0
      %927 = vmatpush1.bf16.xpose.msra.mxu0 0
      %928 = vmatprep.subr.bf16.mxu0 0
      %929 = vmatpush1.bf16.xpose.msra.mxu0 0
      %930 = vmatprep.subr.bf16.mxu0 0
      %931 = vmatpush1.bf16.xpose.msra.mxu0 0
      %932 = vmatprep.subr.bf16.mxu0 0
      %933 = vmatpush1.bf16.xpose.msra.mxu0 0
      %934 = vmatprep.subr.bf16.mxu0 0
      %935 = vmatpush1.bf16.xpose.msra.mxu0 %v918
      %936 = vmatprep.subr.bf16.mxu0 0
      %937 = vmatpush2.bf16.xpose.msra.mxu0 0
      %938 = vmatprep.subr.bf16.mxu0 0
      %939 = vmatpush2.bf16.xpose.msra.mxu0 0
      %940 = vmatprep.subr.bf16.mxu0 0
      %941 = vmatpush2.bf16.xpose.msra.mxu0 0
      %942 = vmatprep.subr.bf16.mxu0 0
      %943 = vmatpush2.bf16.xpose.msra.mxu0 0
      %944 = vmatprep.subr.bf16.mxu0 0
      %945 = vmatpush2.bf16.xpose.msra.mxu0 0
      %946 = vmatprep.subr.bf16.mxu0 0
      %947 = vmatpush2.bf16.xpose.msra.mxu0 0
      %948 = vmatprep.subr.bf16.mxu0 0
      %949 = vmatpush2.bf16.xpose.msra.mxu0 0
      %950 = vmatprep.subr.bf16.mxu0 0
      %951 = vmatpush2.bf16.xpose.msra.mxu0 0
      %952 = vmatprep.mubr.bf16.mxu0 0
      %953 = vmatmul.mubr.bf16.gmra.mxu0 %v915
      %v954 = vpop.f32.mrf.mxu0
      %v955 = vadd.f32 0.0, %v954
      %v956 = vpop.f32.mrf.mxu0
      %v957 = vpop.f32.mrf.mxu0
      %v958 = vpop.f32.mrf.mxu0
      %959 = vdwg.mxu0
      %v961 = vsel %vm315, %v297, 0
      %v964 = vsel %vm315, %v313, 0
      %966 = vmatprep.subr.bf16.mxu0 0
      %967 = vmatpush1.bf16.xpose.msra.mxu0 0
      %968 = vmatprep.subr.bf16.mxu0 0
      %969 = vmatpush1.bf16.xpose.msra.mxu0 0
      %970 = vmatprep.subr.bf16.mxu0 0
      %971 = vmatpush1.bf16.xpose.msra.mxu0 0
      %972 = vmatprep.subr.bf16.mxu0 0
      %973 = vmatpush1.bf16.xpose.msra.mxu0 0
      %974 = vmatprep.subr.bf16.mxu0 0
      %975 = vmatpush1.bf16.xpose.msra.mxu0 0
      %976 = vmatprep.subr.bf16.mxu0 0
      %977 = vmatpush1.bf16.xpose.msra.mxu0 0
      %978 = vmatprep.subr.bf16.mxu0 0
      %979 = vmatpush1.bf16.xpose.msra.mxu0 0
      %980 = vmatprep.subr.bf16.mxu0 0
      %981 = vmatpush1.bf16.xpose.msra.mxu0 %v964
      %982 = vmatprep.subr.bf16.mxu0 0
      %983 = vmatpush2.bf16.xpose.msra.mxu0 0
      %984 = vmatprep.subr.bf16.mxu0 0
      %985 = vmatpush2.bf16.xpose.msra.mxu0 0
      %986 = vmatprep.subr.bf16.mxu0 0
      %987 = vmatpush2.bf16.xpose.msra.mxu0 0
      %988 = vmatprep.subr.bf16.mxu0 0
      %989 = vmatpush2.bf16.xpose.msra.mxu0 0
      %990 = vmatprep.subr.bf16.mxu0 0
      %991 = vmatpush2.bf16.xpose.msra.mxu0 0
      %992 = vmatprep.subr.bf16.mxu0 0
      %993 = vmatpush2.bf16.xpose.msra.mxu0 0
      %994 = vmatprep.subr.bf16.mxu0 0
      %995 = vmatpush2.bf16.xpose.msra.mxu0 0
      %996 = vmatprep.subr.bf16.mxu0 0
      %997 = vmatpush2.bf16.xpose.msra.mxu0 0
      %998 = vmatprep.mubr.bf16.mxu0 0
      %999 = vmatmul.mubr.bf16.gmra.mxu0 %v961
      %v1000 = vpop.f32.mrf.mxu0
      %v1001 = vadd.f32 0.0, %v1000
      %v1002 = vpop.f32.mrf.mxu0
      %v1003 = vpop.f32.mrf.mxu0
      %v1004 = vpop.f32.mrf.mxu0
      %1005 = vdwg.mxu0
      %v1007 = vsel %vm315, %v298, 0
      %v1010 = vsel %vm315, %v314, 0
      %1012 = vmatprep.subr.bf16.mxu0 0
      %1013 = vmatpush1.bf16.xpose.msra.mxu0 0
      %1014 = vmatprep.subr.bf16.mxu0 0
      %1015 = vmatpush1.bf16.xpose.msra.mxu0 0
      %1016 = vmatprep.subr.bf16.mxu0 0
      %1017 = vmatpush1.bf16.xpose.msra.mxu0 0
      %1018 = vmatprep.subr.bf16.mxu0 0
      %1019 = vmatpush1.bf16.xpose.msra.mxu0 0
      %1020 = vmatprep.subr.bf16.mxu0 0
      %1021 = vmatpush1.bf16.xpose.msra.mxu0 0
      %1022 = vmatprep.subr.bf16.mxu0 0
      %1023 = vmatpush1.bf16.xpose.msra.mxu0 0
      %1024 = vmatprep.subr.bf16.mxu0 0
      %1025 = vmatpush1.bf16.xpose.msra.mxu0 0
      %1026 = vmatprep.subr.bf16.mxu0 0
      %1027 = vmatpush1.bf16.xpose.msra.mxu0 %v1010
      %1028 = vmatprep.subr.bf16.mxu0 0
      %1029 = vmatpush2.bf16.xpose.msra.mxu0 0
      %1030 = vmatprep.subr.bf16.mxu0 0
      %1031 = vmatpush2.bf16.xpose.msra.mxu0 0
      %1032 = vmatprep.subr.bf16.mxu0 0
      %1033 = vmatpush2.bf16.xpose.msra.mxu0 0
      %1034 = vmatprep.subr.bf16.mxu0 0
      %1035 = vmatpush2.bf16.xpose.msra.mxu0 0
      %1036 = vmatprep.subr.bf16.mxu0 0
      %1037 = vmatpush2.bf16.xpose.msra.mxu0 0
      %1038 = vmatprep.subr.bf16.mxu0 0
      %1039 = vmatpush2.bf16.xpose.msra.mxu0 0
      %1040 = vmatprep.subr.bf16.mxu0 0
      %1041 = vmatpush2.bf16.xpose.msra.mxu0 0
      %1042 = vmatprep.subr.bf16.mxu0 0
      %1043 = vmatpush2.bf16.xpose.msra.mxu0 0
      %1044 = vmatprep.mubr.bf16.mxu0 0
      %1045 = vmatmul.mubr.bf16.gmra.mxu0 %v1007
      %v1046 = vpop.f32.mrf.mxu0
      %v1047 = vadd.f32 0.0, %v1046
      %v1048 = vpop.f32.mrf.mxu0
      %v1049 = vpop.f32.mrf.mxu0
      %v1050 = vpop.f32.mrf.mxu0
      %1051 = vdwg.mxu0
      %vm1052 = vcmask 27648
      %v1053 = vsel %vm1052, %v357, -inf
      %1054 = vmax.xlane.f32.xlu0 %v1053
      %v1055 = vpop.xlane.xlu0 %1054
      %v1056 = vsel %vm1052, %v403, -inf
      %1057 = vmax.xlane.f32.xlu0 %v1056
      %v1058 = vpop.xlane.xlu0 %1057
      %v1059 = vsel %vm1052, %v449, -inf
      %1060 = vmax.xlane.f32.xlu0 %v1059
      %v1061 = vpop.xlane.xlu0 %1060
      %v1062 = vsel %vm1052, %v495, -inf
      %1063 = vmax.xlane.f32.xlu0 %v1062
      %v1064 = vpop.xlane.xlu0 %1063
      %v1065 = vsel %vm1052, %v541, -inf
      %1066 = vmax.xlane.f32.xlu0 %v1065
      %v1067 = vpop.xlane.xlu0 %1066
      %v1068 = vsel %vm1052, %v587, -inf
      %1069 = vmax.xlane.f32.xlu0 %v1068
      %v1070 = vpop.xlane.xlu0 %1069
      %v1071 = vsel %vm1052, %v633, -inf
      %1072 = vmax.xlane.f32.xlu0 %v1071
      %v1073 = vpop.xlane.xlu0 %1072
      %v1074 = vsel %vm1052, %v679, -inf
      %1075 = vmax.xlane.f32.xlu0 %v1074
      %v1076 = vpop.xlane.xlu0 %1075
      %v1077 = vsel %vm1052, %v725, -inf
      %1078 = vmax.xlane.f32.xlu0 %v1077
      %v1079 = vpop.xlane.xlu0 %1078
      %v1080 = vsel %vm1052, %v771, -inf
      %1081 = vmax.xlane.f32.xlu0 %v1080
      %v1082 = vpop.xlane.xlu0 %1081
      %v1083 = vsel %vm1052, %v817, -inf
      %1084 = vmax.xlane.f32.xlu0 %v1083
      %v1085 = vpop.xlane.xlu0 %1084
      %v1086 = vsel %vm1052, %v863, -inf
      %1087 = vmax.xlane.f32.xlu0 %v1086
      %v1088 = vpop.xlane.xlu0 %1087
      %v1089 = vsel %vm1052, %v909, -inf
      %1090 = vmax.xlane.f32.xlu0 %v1089
      %v1091 = vpop.xlane.xlu0 %1090
      %v1092 = vsel %vm1052, %v955, -inf
      %1093 = vmax.xlane.f32.xlu0 %v1092
      %v1094 = vpop.xlane.xlu0 %1093
      %v1095 = vsel %vm1052, %v1001, -inf
      %1096 = vmax.xlane.f32.xlu0 %v1095
      %v1097 = vpop.xlane.xlu0 %1096
      %v1098 = vsel %vm1052, %v1047, -inf
      %1099 = vmax.xlane.f32.xlu0 %v1098
      %v1100 = vpop.xlane.xlu0 %1099
      %v1101 = vsub.f32 %v357, %v1055
      %v1102 = vsub.f32 %v403, %v1058
      %v1103 = vsub.f32 %v449, %v1061
      %v1104 = vsub.f32 %v495, %v1064
      %v1105 = vsub.f32 %v541, %v1067
      %v1106 = vsub.f32 %v587, %v1070
      %v1107 = vsub.f32 %v633, %v1073
      %v1108 = vsub.f32 %v679, %v1076
      %v1109 = vsub.f32 %v725, %v1079
      %v1110 = vsub.f32 %v771, %v1082
      %v1111 = vsub.f32 %v817, %v1085
      %v1112 = vsub.f32 %v863, %v1088
      %v1113 = vsub.f32 %v909, %v1091
      %v1114 = vsub.f32 %v955, %v1094
      %v1115 = vsub.f32 %v1001, %v1097
      %v1116 = vsub.f32 %v1047, %v1100
      %v1117 = vmul.f32 %v1101, 1.442695
      %v1118 = vpow.pop %v1117
      %v1119 = vmul.f32 %v1102, 1.442695
      %v1120 = vpow.pop %v1119
      %v1121 = vmul.f32 %v1103, 1.442695
      %v1122 = vpow.pop %v1121
      %v1123 = vmul.f32 %v1104, 1.442695
      %v1124 = vpow.pop %v1123
      %v1125 = vmul.f32 %v1105, 1.442695
      %v1126 = vpow.pop %v1125
      %v1127 = vmul.f32 %v1106, 1.442695
      %v1128 = vpow.pop %v1127
      %v1129 = vmul.f32 %v1107, 1.442695
      %v1130 = vpow.pop %v1129
      %v1131 = vmul.f32 %v1108, 1.442695
      %v1132 = vpow.pop %v1131
      %v1133 = vmul.f32 %v1109, 1.442695
      %v1134 = vpow.pop %v1133
      %v1135 = vmul.f32 %v1110, 1.442695
      %v1136 = vpow.pop %v1135
      %v1137 = vmul.f32 %v1111, 1.442695
      %v1138 = vpow.pop %v1137
      %v1139 = vmul.f32 %v1112, 1.442695
      %v1140 = vpow.pop %v1139
      %v1141 = vmul.f32 %v1113, 1.442695
      %v1142 = vpow.pop %v1141
      %v1143 = vmul.f32 %v1114, 1.442695
      %v1144 = vpow.pop %v1143
      %v1145 = vmul.f32 %v1115, 1.442695
      %v1146 = vpow.pop %v1145
      %v1147 = vmul.f32 %v1116, 1.442695
      %v1148 = vpow.pop %v1147
      %v1149 = vsel %vm1052, %v1118, 0.0
      %1150 = vadd.xlane.f32.xlu0 %v1149
      %v1151 = vpop.xlane.xlu0 %1150
      %v1152 = vsel %vm1052, %v1120, 0.0
      %1153 = vadd.xlane.f32.xlu0 %v1152
      %v1154 = vpop.xlane.xlu0 %1153
      %v1155 = vsel %vm1052, %v1122, 0.0
      %1156 = vadd.xlane.f32.xlu0 %v1155
      %v1157 = vpop.xlane.xlu0 %1156
      %v1158 = vsel %vm1052, %v1124, 0.0
      %1159 = vadd.xlane.f32.xlu0 %v1158
      %v1160 = vpop.xlane.xlu0 %1159
      %v1161 = vsel %vm1052, %v1126, 0.0
      %1162 = vadd.xlane.f32.xlu0 %v1161
      %v1163 = vpop.xlane.xlu0 %1162
      %v1164 = vsel %vm1052, %v1128, 0.0
      %1165 = vadd.xlane.f32.xlu0 %v1164
      %v1166 = vpop.xlane.xlu0 %1165
      %v1167 = vsel %vm1052, %v1130, 0.0
      %1168 = vadd.xlane.f32.xlu0 %v1167
      %v1169 = vpop.xlane.xlu0 %1168
      %v1170 = vsel %vm1052, %v1132, 0.0
      %1171 = vadd.xlane.f32.xlu0 %v1170
      %v1172 = vpop.xlane.xlu0 %1171
      %v1173 = vsel %vm1052, %v1134, 0.0
      %1174 = vadd.xlane.f32.xlu0 %v1173
      %v1175 = vpop.xlane.xlu0 %1174
      %v1176 = vsel %vm1052, %v1136, 0.0
      %1177 = vadd.xlane.f32.xlu0 %v1176
      %v1178 = vpop.xlane.xlu0 %1177
      %v1179 = vsel %vm1052, %v1138, 0.0
      %1180 = vadd.xlane.f32.xlu0 %v1179
      %v1181 = vpop.xlane.xlu0 %1180
      %v1182 = vsel %vm1052, %v1140, 0.0
      %1183 = vadd.xlane.f32.xlu0 %v1182
      %v1184 = vpop.xlane.xlu0 %1183
      %v1185 = vsel %vm1052, %v1142, 0.0
      %1186 = vadd.xlane.f32.xlu0 %v1185
      %v1187 = vpop.xlane.xlu0 %1186
      %v1188 = vsel %vm1052, %v1144, 0.0
      %1189 = vadd.xlane.f32.xlu0 %v1188
      %v1190 = vpop.xlane.xlu0 %1189
      %v1191 = vsel %vm1052, %v1146, 0.0
      %1192 = vadd.xlane.f32.xlu0 %v1191
      %v1193 = vpop.xlane.xlu0 %1192
      %v1194 = vsel %vm1052, %v1148, 0.0
      %1195 = vadd.xlane.f32.xlu0 %v1194
      %v1196 = vpop.xlane.xlu0 %1195
      %v1197 = vpack.c.bf16 %v1118, %v1118
      %v1198 = vpack.c.bf16 %v1120, %v1120
      %v1199 = vpack.c.bf16 %v1122, %v1122
      %v1200 = vpack.c.bf16 %v1124, %v1124
      %v1201 = vpack.c.bf16 %v1126, %v1126
      %v1202 = vpack.c.bf16 %v1128, %v1128
      %v1203 = vpack.c.bf16 %v1130, %v1130
      %v1204 = vpack.c.bf16 %v1132, %v1132
      %v1205 = vpack.c.bf16 %v1134, %v1134
      %v1206 = vpack.c.bf16 %v1136, %v1136
      %v1207 = vpack.c.bf16 %v1138, %v1138
      %v1208 = vpack.c.bf16 %v1140, %v1140
      %v1209 = vpack.c.bf16 %v1142, %v1142
      %v1210 = vpack.c.bf16 %v1144, %v1144
      %v1211 = vpack.c.bf16 %v1146, %v1146
      %v1212 = vpack.c.bf16 %v1148, %v1148
      %v1213 = vpack.c.bf16 %v267, %v267
      %v1214 = vpack.c.bf16 %v268, %v268
      %v1215 = vpack.c.bf16 %v269, %v269
      %v1216 = vpack.c.bf16 %v270, %v270
      %v1217 = vpack.c.bf16 %v271, %v271
      %v1218 = vpack.c.bf16 %v272, %v272
      %v1219 = vpack.c.bf16 %v273, %v273
      %v1220 = vpack.c.bf16 %v274, %v274
      %v1221 = vpack.c.bf16 %v275, %v275
      %v1222 = vpack.c.bf16 %v276, %v276
      %v1223 = vpack.c.bf16 %v277, %v277
      %v1224 = vpack.c.bf16 %v278, %v278
      %v1225 = vpack.c.bf16 %v279, %v279
      %v1226 = vpack.c.bf16 %v280, %v280
      %v1227 = vpack.c.bf16 %v281, %v281
      %v1228 = vpack.c.bf16 %v282, %v282
      %vm1229 = vcmask 31744
      %v1231 = vsel %vm1229, %v1197, 0
      %vm1233 = vcmask 1041408
      %v1235 = vsel %vm1233, %v1213, 0
      %1237 = vmatprep.subr.bf16.mxu0 0
      %1238 = vmatpush1.bf16.msra.mxu0 0
      %1239 = vmatprep.subr.bf16.mxu0 0
      %1240 = vmatpush1.bf16.msra.mxu0 0
      %1241 = vmatprep.subr.bf16.mxu0 0
      %1242 = vmatpush1.bf16.msra.mxu0 0
      %1243 = vmatprep.subr.bf16.mxu0 0
      %1244 = vmatpush1.bf16.msra.mxu0 0
      %1245 = vmatprep.subr.bf16.mxu0 0
      %1246 = vmatpush1.bf16.msra.mxu0 0
      %1247 = vmatprep.subr.bf16.mxu0 0
      %1248 = vmatpush1.bf16.msra.mxu0 0
      %1249 = vmatprep.subr.bf16.mxu0 0
      %1250 = vmatpush1.bf16.msra.mxu0 0
      %1251 = vmatprep.subr.bf16.mxu0 0
      %1252 = vmatpush1.bf16.msra.mxu0 %v1235
      %1253 = vmatprep.subr.bf16.mxu0 0
      %1254 = vmatpush2.bf16.msra.mxu0 0
      %1255 = vmatprep.subr.bf16.mxu0 0
      %1256 = vmatpush2.bf16.msra.mxu0 0
      %1257 = vmatprep.subr.bf16.mxu0 0
      %1258 = vmatpush2.bf16.msra.mxu0 0
      %1259 = vmatprep.subr.bf16.mxu0 0
      %1260 = vmatpush2.bf16.msra.mxu0 0
      %1261 = vmatprep.subr.bf16.mxu0 0
      %1262 = vmatpush2.bf16.msra.mxu0 0
      %1263 = vmatprep.subr.bf16.mxu0 0
      %1264 = vmatpush2.bf16.msra.mxu0 0
      %1265 = vmatprep.subr.bf16.mxu0 0
      %1266 = vmatpush2.bf16.msra.mxu0 0
      %1267 = vmatprep.subr.bf16.mxu0 0
      %1268 = vmatpush2.bf16.msra.mxu0 0
      %1269 = vmatprep.mubr.bf16.mxu0 0
      %1270 = vmatmul.mubr.bf16.gmra.mxu0 %v1231
      %v1271 = vpop.f32.mrf.mxu0
      %v1272 = vadd.f32 0.0, %v1271
      %v1273 = vpop.f32.mrf.mxu0
      %v1274 = vpop.f32.mrf.mxu0
      %v1275 = vpop.f32.mrf.mxu0
      %1276 = vdwg.mxu0
      %v1278 = vsel %vm1229, %v1198, 0
      %v1281 = vsel %vm1233, %v1214, 0
      %1283 = vmatprep.subr.bf16.mxu0 0
      %1284 = vmatpush1.bf16.msra.mxu0 0
      %1285 = vmatprep.subr.bf16.mxu0 0
      %1286 = vmatpush1.bf16.msra.mxu0 0
      %1287 = vmatprep.subr.bf16.mxu0 0
      %1288 = vmatpush1.bf16.msra.mxu0 0
      %1289 = vmatprep.subr.bf16.mxu0 0
      %1290 = vmatpush1.bf16.msra.mxu0 0
      %1291 = vmatprep.subr.bf16.mxu0 0
      %1292 = vmatpush1.bf16.msra.mxu0 0
      %1293 = vmatprep.subr.bf16.mxu0 0
      %1294 = vmatpush1.bf16.msra.mxu0 0
      %1295 = vmatprep.subr.bf16.mxu0 0
      %1296 = vmatpush1.bf16.msra.mxu0 0
      %1297 = vmatprep.subr.bf16.mxu0 0
      %1298 = vmatpush1.bf16.msra.mxu0 %v1281
      %1299 = vmatprep.subr.bf16.mxu0 0
      %1300 = vmatpush2.bf16.msra.mxu0 0
      %1301 = vmatprep.subr.bf16.mxu0 0
      %1302 = vmatpush2.bf16.msra.mxu0 0
      %1303 = vmatprep.subr.bf16.mxu0 0
      %1304 = vmatpush2.bf16.msra.mxu0 0
      %1305 = vmatprep.subr.bf16.mxu0 0
      %1306 = vmatpush2.bf16.msra.mxu0 0
      %1307 = vmatprep.subr.bf16.mxu0 0
      %1308 = vmatpush2.bf16.msra.mxu0 0
      %1309 = vmatprep.subr.bf16.mxu0 0
      %1310 = vmatpush2.bf16.msra.mxu0 0
      %1311 = vmatprep.subr.bf16.mxu0 0
      %1312 = vmatpush2.bf16.msra.mxu0 0
      %1313 = vmatprep.subr.bf16.mxu0 0
      %1314 = vmatpush2.bf16.msra.mxu0 0
      %1315 = vmatprep.mubr.bf16.mxu0 0
      %1316 = vmatmul.mubr.bf16.gmra.mxu0 %v1278
      %v1317 = vpop.f32.mrf.mxu0
      %v1318 = vadd.f32 0.0, %v1317
      %v1319 = vpop.f32.mrf.mxu0
      %v1320 = vpop.f32.mrf.mxu0
      %v1321 = vpop.f32.mrf.mxu0
      %1322 = vdwg.mxu0
      %v1324 = vsel %vm1229, %v1199, 0
      %v1327 = vsel %vm1233, %v1215, 0
      %1329 = vmatprep.subr.bf16.mxu0 0
      %1330 = vmatpush1.bf16.msra.mxu0 0
      %1331 = vmatprep.subr.bf16.mxu0 0
      %1332 = vmatpush1.bf16.msra.mxu0 0
      %1333 = vmatprep.subr.bf16.mxu0 0
      %1334 = vmatpush1.bf16.msra.mxu0 0
      %1335 = vmatprep.subr.bf16.mxu0 0
      %1336 = vmatpush1.bf16.msra.mxu0 0
      %1337 = vmatprep.subr.bf16.mxu0 0
      %1338 = vmatpush1.bf16.msra.mxu0 0
      %1339 = vmatprep.subr.bf16.mxu0 0
      %1340 = vmatpush1.bf16.msra.mxu0 0
      %1341 = vmatprep.subr.bf16.mxu0 0
      %1342 = vmatpush1.bf16.msra.mxu0 0
      %1343 = vmatprep.subr.bf16.mxu0 0
      %1344 = vmatpush1.bf16.msra.mxu0 %v1327
      %1345 = vmatprep.subr.bf16.mxu0 0
      %1346 = vmatpush2.bf16.msra.mxu0 0
      %1347 = vmatprep.subr.bf16.mxu0 0
      %1348 = vmatpush2.bf16.msra.mxu0 0
      %1349 = vmatprep.subr.bf16.mxu0 0
      %1350 = vmatpush2.bf16.msra.mxu0 0
      %1351 = vmatprep.subr.bf16.mxu0 0
      %1352 = vmatpush2.bf16.msra.mxu0 0
      %1353 = vmatprep.subr.bf16.mxu0 0
      %1354 = vmatpush2.bf16.msra.mxu0 0
      %1355 = vmatprep.subr.bf16.mxu0 0
      %1356 = vmatpush2.bf16.msra.mxu0 0
      %1357 = vmatprep.subr.bf16.mxu0 0
      %1358 = vmatpush2.bf16.msra.mxu0 0
      %1359 = vmatprep.subr.bf16.mxu0 0
      %1360 = vmatpush2.bf16.msra.mxu0 0
      %1361 = vmatprep.mubr.bf16.mxu0 0
      %1362 = vmatmul.mubr.bf16.gmra.mxu0 %v1324
      %v1363 = vpop.f32.mrf.mxu0
      %v1364 = vadd.f32 0.0, %v1363
      %v1365 = vpop.f32.mrf.mxu0
      %v1366 = vpop.f32.mrf.mxu0
      %v1367 = vpop.f32.mrf.mxu0
      %1368 = vdwg.mxu0
      %v1370 = vsel %vm1229, %v1200, 0
      %v1373 = vsel %vm1233, %v1216, 0
      %1375 = vmatprep.subr.bf16.mxu0 0
      %1376 = vmatpush1.bf16.msra.mxu0 0
      %1377 = vmatprep.subr.bf16.mxu0 0
      %1378 = vmatpush1.bf16.msra.mxu0 0
      %1379 = vmatprep.subr.bf16.mxu0 0
      %1380 = vmatpush1.bf16.msra.mxu0 0
      %1381 = vmatprep.subr.bf16.mxu0 0
      %1382 = vmatpush1.bf16.msra.mxu0 0
      %1383 = vmatprep.subr.bf16.mxu0 0
      %1384 = vmatpush1.bf16.msra.mxu0 0
      %1385 = vmatprep.subr.bf16.mxu0 0
      %1386 = vmatpush1.bf16.msra.mxu0 0
      %1387 = vmatprep.subr.bf16.mxu0 0
      %1388 = vmatpush1.bf16.msra.mxu0 0
      %1389 = vmatprep.subr.bf16.mxu0 0
      %1390 = vmatpush1.bf16.msra.mxu0 %v1373
      %1391 = vmatprep.subr.bf16.mxu0 0
      %1392 = vmatpush2.bf16.msra.mxu0 0
      %1393 = vmatprep.subr.bf16.mxu0 0
      %1394 = vmatpush2.bf16.msra.mxu0 0
      %1395 = vmatprep.subr.bf16.mxu0 0
      %1396 = vmatpush2.bf16.msra.mxu0 0
      %1397 = vmatprep.subr.bf16.mxu0 0
      %1398 = vmatpush2.bf16.msra.mxu0 0
      %1399 = vmatprep.subr.bf16.mxu0 0
      %1400 = vmatpush2.bf16.msra.mxu0 0
      %1401 = vmatprep.subr.bf16.mxu0 0
      %1402 = vmatpush2.bf16.msra.mxu0 0
      %1403 = vmatprep.subr.bf16.mxu0 0
      %1404 = vmatpush2.bf16.msra.mxu0 0
      %1405 = vmatprep.subr.bf16.mxu0 0
      %1406 = vmatpush2.bf16.msra.mxu0 0
      %1407 = vmatprep.mubr.bf16.mxu0 0
      %1408 = vmatmul.mubr.bf16.gmra.mxu0 %v1370
      %v1409 = vpop.f32.mrf.mxu0
      %v1410 = vadd.f32 0.0, %v1409
      %v1411 = vpop.f32.mrf.mxu0
      %v1412 = vpop.f32.mrf.mxu0
      %v1413 = vpop.f32.mrf.mxu0
      %1414 = vdwg.mxu0
      %v1416 = vsel %vm1229, %v1201, 0
      %v1419 = vsel %vm1233, %v1217, 0
      %1421 = vmatprep.subr.bf16.mxu0 0
      %1422 = vmatpush1.bf16.msra.mxu0 0
      %1423 = vmatprep.subr.bf16.mxu0 0
      %1424 = vmatpush1.bf16.msra.mxu0 0
      %1425 = vmatprep.subr.bf16.mxu0 0
      %1426 = vmatpush1.bf16.msra.mxu0 0
      %1427 = vmatprep.subr.bf16.mxu0 0
      %1428 = vmatpush1.bf16.msra.mxu0 0
      %1429 = vmatprep.subr.bf16.mxu0 0
      %1430 = vmatpush1.bf16.msra.mxu0 0
      %1431 = vmatprep.subr.bf16.mxu0 0
      %1432 = vmatpush1.bf16.msra.mxu0 0
      %1433 = vmatprep.subr.bf16.mxu0 0
      %1434 = vmatpush1.bf16.msra.mxu0 0
      %1435 = vmatprep.subr.bf16.mxu0 0
      %1436 = vmatpush1.bf16.msra.mxu0 %v1419
      %1437 = vmatprep.subr.bf16.mxu0 0
      %1438 = vmatpush2.bf16.msra.mxu0 0
      %1439 = vmatprep.subr.bf16.mxu0 0
      %1440 = vmatpush2.bf16.msra.mxu0 0
      %1441 = vmatprep.subr.bf16.mxu0 0
      %1442 = vmatpush2.bf16.msra.mxu0 0
      %1443 = vmatprep.subr.bf16.mxu0 0
      %1444 = vmatpush2.bf16.msra.mxu0 0
      %1445 = vmatprep.subr.bf16.mxu0 0
      %1446 = vmatpush2.bf16.msra.mxu0 0
      %1447 = vmatprep.subr.bf16.mxu0 0
      %1448 = vmatpush2.bf16.msra.mxu0 0
      %1449 = vmatprep.subr.bf16.mxu0 0
      %1450 = vmatpush2.bf16.msra.mxu0 0
      %1451 = vmatprep.subr.bf16.mxu0 0
      %1452 = vmatpush2.bf16.msra.mxu0 0
      %1453 = vmatprep.mubr.bf16.mxu0 0
      %1454 = vmatmul.mubr.bf16.gmra.mxu0 %v1416
      %v1455 = vpop.f32.mrf.mxu0
      %v1456 = vadd.f32 0.0, %v1455
      %v1457 = vpop.f32.mrf.mxu0
      %v1458 = vpop.f32.mrf.mxu0
      %v1459 = vpop.f32.mrf.mxu0
      %1460 = vdwg.mxu0
      %v1462 = vsel %vm1229, %v1202, 0
      %v1465 = vsel %vm1233, %v1218, 0
      %1467 = vmatprep.subr.bf16.mxu0 0
      %1468 = vmatpush1.bf16.msra.mxu0 0
      %1469 = vmatprep.subr.bf16.mxu0 0
      %1470 = vmatpush1.bf16.msra.mxu0 0
      %1471 = vmatprep.subr.bf16.mxu0 0
      %1472 = vmatpush1.bf16.msra.mxu0 0
      %1473 = vmatprep.subr.bf16.mxu0 0
      %1474 = vmatpush1.bf16.msra.mxu0 0
      %1475 = vmatprep.subr.bf16.mxu0 0
      %1476 = vmatpush1.bf16.msra.mxu0 0
      %1477 = vmatprep.subr.bf16.mxu0 0
      %1478 = vmatpush1.bf16.msra.mxu0 0
      %1479 = vmatprep.subr.bf16.mxu0 0
      %1480 = vmatpush1.bf16.msra.mxu0 0
      %1481 = vmatprep.subr.bf16.mxu0 0
      %1482 = vmatpush1.bf16.msra.mxu0 %v1465
      %1483 = vmatprep.subr.bf16.mxu0 0
      %1484 = vmatpush2.bf16.msra.mxu0 0
      %1485 = vmatprep.subr.bf16.mxu0 0
      %1486 = vmatpush2.bf16.msra.mxu0 0
      %1487 = vmatprep.subr.bf16.mxu0 0
      %1488 = vmatpush2.bf16.msra.mxu0 0
      %1489 = vmatprep.subr.bf16.mxu0 0
      %1490 = vmatpush2.bf16.msra.mxu0 0
      %1491 = vmatprep.subr.bf16.mxu0 0
      %1492 = vmatpush2.bf16.msra.mxu0 0
      %1493 = vmatprep.subr.bf16.mxu0 0
      %1494 = vmatpush2.bf16.msra.mxu0 0
      %1495 = vmatprep.subr.bf16.mxu0 0
      %1496 = vmatpush2.bf16.msra.mxu0 0
      %1497 = vmatprep.subr.bf16.mxu0 0
      %1498 = vmatpush2.bf16.msra.mxu0 0
      %1499 = vmatprep.mubr.bf16.mxu0 0
      %1500 = vmatmul.mubr.bf16.gmra.mxu0 %v1462
      %v1501 = vpop.f32.mrf.mxu0
      %v1502 = vadd.f32 0.0, %v1501
      %v1503 = vpop.f32.mrf.mxu0
      %v1504 = vpop.f32.mrf.mxu0
      %v1505 = vpop.f32.mrf.mxu0
      %1506 = vdwg.mxu0
      %v1508 = vsel %vm1229, %v1203, 0
      %v1511 = vsel %vm1233, %v1219, 0
      %1513 = vmatprep.subr.bf16.mxu0 0
      %1514 = vmatpush1.bf16.msra.mxu0 0
      %1515 = vmatprep.subr.bf16.mxu0 0
      %1516 = vmatpush1.bf16.msra.mxu0 0
      %1517 = vmatprep.subr.bf16.mxu0 0
      %1518 = vmatpush1.bf16.msra.mxu0 0
      %1519 = vmatprep.subr.bf16.mxu0 0
      %1520 = vmatpush1.bf16.msra.mxu0 0
      %1521 = vmatprep.subr.bf16.mxu0 0
      %1522 = vmatpush1.bf16.msra.mxu0 0
      %1523 = vmatprep.subr.bf16.mxu0 0
      %1524 = vmatpush1.bf16.msra.mxu0 0
      %1525 = vmatprep.subr.bf16.mxu0 0
      %1526 = vmatpush1.bf16.msra.mxu0 0
      %1527 = vmatprep.subr.bf16.mxu0 0
      %1528 = vmatpush1.bf16.msra.mxu0 %v1511
      %1529 = vmatprep.subr.bf16.mxu0 0
      %1530 = vmatpush2.bf16.msra.mxu0 0
      %1531 = vmatprep.subr.bf16.mxu0 0
      %1532 = vmatpush2.bf16.msra.mxu0 0
      %1533 = vmatprep.subr.bf16.mxu0 0
      %1534 = vmatpush2.bf16.msra.mxu0 0
      %1535 = vmatprep.subr.bf16.mxu0 0
      %1536 = vmatpush2.bf16.msra.mxu0 0
      %1537 = vmatprep.subr.bf16.mxu0 0
      %1538 = vmatpush2.bf16.msra.mxu0 0
      %1539 = vmatprep.subr.bf16.mxu0 0
      %1540 = vmatpush2.bf16.msra.mxu0 0
      %1541 = vmatprep.subr.bf16.mxu0 0
      %1542 = vmatpush2.bf16.msra.mxu0 0
      %1543 = vmatprep.subr.bf16.mxu0 0
      %1544 = vmatpush2.bf16.msra.mxu0 0
      %1545 = vmatprep.mubr.bf16.mxu0 0
      %1546 = vmatmul.mubr.bf16.gmra.mxu0 %v1508
      %v1547 = vpop.f32.mrf.mxu0
      %v1548 = vadd.f32 0.0, %v1547
      %v1549 = vpop.f32.mrf.mxu0
      %v1550 = vpop.f32.mrf.mxu0
      %v1551 = vpop.f32.mrf.mxu0
      %1552 = vdwg.mxu0
      %v1554 = vsel %vm1229, %v1204, 0
      %v1557 = vsel %vm1233, %v1220, 0
      %1559 = vmatprep.subr.bf16.mxu0 0
      %1560 = vmatpush1.bf16.msra.mxu0 0
      %1561 = vmatprep.subr.bf16.mxu0 0
      %1562 = vmatpush1.bf16.msra.mxu0 0
      %1563 = vmatprep.subr.bf16.mxu0 0
      %1564 = vmatpush1.bf16.msra.mxu0 0
      %1565 = vmatprep.subr.bf16.mxu0 0
      %1566 = vmatpush1.bf16.msra.mxu0 0
      %1567 = vmatprep.subr.bf16.mxu0 0
      %1568 = vmatpush1.bf16.msra.mxu0 0
      %1569 = vmatprep.subr.bf16.mxu0 0
      %1570 = vmatpush1.bf16.msra.mxu0 0
      %1571 = vmatprep.subr.bf16.mxu0 0
      %1572 = vmatpush1.bf16.msra.mxu0 0
      %1573 = vmatprep.subr.bf16.mxu0 0
      %1574 = vmatpush1.bf16.msra.mxu0 %v1557
      %1575 = vmatprep.subr.bf16.mxu0 0
      %1576 = vmatpush2.bf16.msra.mxu0 0
      %1577 = vmatprep.subr.bf16.mxu0 0
      %1578 = vmatpush2.bf16.msra.mxu0 0
      %1579 = vmatprep.subr.bf16.mxu0 0
      %1580 = vmatpush2.bf16.msra.mxu0 0
      %1581 = vmatprep.subr.bf16.mxu0 0
      %1582 = vmatpush2.bf16.msra.mxu0 0
      %1583 = vmatprep.subr.bf16.mxu0 0
      %1584 = vmatpush2.bf16.msra.mxu0 0
      %1585 = vmatprep.subr.bf16.mxu0 0
      %1586 = vmatpush2.bf16.msra.mxu0 0
      %1587 = vmatprep.subr.bf16.mxu0 0
      %1588 = vmatpush2.bf16.msra.mxu0 0
      %1589 = vmatprep.subr.bf16.mxu0 0
      %1590 = vmatpush2.bf16.msra.mxu0 0
      %1591 = vmatprep.mubr.bf16.mxu0 0
      %1592 = vmatmul.mubr.bf16.gmra.mxu0 %v1554
      %v1593 = vpop.f32.mrf.mxu0
      %v1594 = vadd.f32 0.0, %v1593
      %v1595 = vpop.f32.mrf.mxu0
      %v1596 = vpop.f32.mrf.mxu0
      %v1597 = vpop.f32.mrf.mxu0
      %1598 = vdwg.mxu0
      %v1600 = vsel %vm1229, %v1205, 0
      %v1603 = vsel %vm1233, %v1221, 0
      %1605 = vmatprep.subr.bf16.mxu0 0
      %1606 = vmatpush1.bf16.msra.mxu0 0
      %1607 = vmatprep.subr.bf16.mxu0 0
      %1608 = vmatpush1.bf16.msra.mxu0 0
      %1609 = vmatprep.subr.bf16.mxu0 0
      %1610 = vmatpush1.bf16.msra.mxu0 0
      %1611 = vmatprep.subr.bf16.mxu0 0
      %1612 = vmatpush1.bf16.msra.mxu0 0
      %1613 = vmatprep.subr.bf16.mxu0 0
      %1614 = vmatpush1.bf16.msra.mxu0 0
      %1615 = vmatprep.subr.bf16.mxu0 0
      %1616 = vmatpush1.bf16.msra.mxu0 0
      %1617 = vmatprep.subr.bf16.mxu0 0
      %1618 = vmatpush1.bf16.msra.mxu0 0
      %1619 = vmatprep.subr.bf16.mxu0 0
      %1620 = vmatpush1.bf16.msra.mxu0 %v1603
      %1621 = vmatprep.subr.bf16.mxu0 0
      %1622 = vmatpush2.bf16.msra.mxu0 0
      %1623 = vmatprep.subr.bf16.mxu0 0
      %1624 = vmatpush2.bf16.msra.mxu0 0
      %1625 = vmatprep.subr.bf16.mxu0 0
      %1626 = vmatpush2.bf16.msra.mxu0 0
      %1627 = vmatprep.subr.bf16.mxu0 0
      %1628 = vmatpush2.bf16.msra.mxu0 0
      %1629 = vmatprep.subr.bf16.mxu0 0
      %1630 = vmatpush2.bf16.msra.mxu0 0
      %1631 = vmatprep.subr.bf16.mxu0 0
      %1632 = vmatpush2.bf16.msra.mxu0 0
      %1633 = vmatprep.subr.bf16.mxu0 0
      %1634 = vmatpush2.bf16.msra.mxu0 0
      %1635 = vmatprep.subr.bf16.mxu0 0
      %1636 = vmatpush2.bf16.msra.mxu0 0
      %1637 = vmatprep.mubr.bf16.mxu0 0
      %1638 = vmatmul.mubr.bf16.gmra.mxu0 %v1600
      %v1639 = vpop.f32.mrf.mxu0
      %v1640 = vadd.f32 0.0, %v1639
      %v1641 = vpop.f32.mrf.mxu0
      %v1642 = vpop.f32.mrf.mxu0
      %v1643 = vpop.f32.mrf.mxu0
      %1644 = vdwg.mxu0
      %v1646 = vsel %vm1229, %v1206, 0
      %v1649 = vsel %vm1233, %v1222, 0
      %1651 = vmatprep.subr.bf16.mxu0 0
      %1652 = vmatpush1.bf16.msra.mxu0 0
      %1653 = vmatprep.subr.bf16.mxu0 0
      %1654 = vmatpush1.bf16.msra.mxu0 0
      %1655 = vmatprep.subr.bf16.mxu0 0
      %1656 = vmatpush1.bf16.msra.mxu0 0
      %1657 = vmatprep.subr.bf16.mxu0 0
      %1658 = vmatpush1.bf16.msra.mxu0 0
      %1659 = vmatprep.subr.bf16.mxu0 0
      %1660 = vmatpush1.bf16.msra.mxu0 0
      %1661 = vmatprep.subr.bf16.mxu0 0
      %1662 = vmatpush1.bf16.msra.mxu0 0
      %1663 = vmatprep.subr.bf16.mxu0 0
      %1664 = vmatpush1.bf16.msra.mxu0 0
      %1665 = vmatprep.subr.bf16.mxu0 0
      %1666 = vmatpush1.bf16.msra.mxu0 %v1649
      %1667 = vmatprep.subr.bf16.mxu0 0
      %1668 = vmatpush2.bf16.msra.mxu0 0
      %1669 = vmatprep.subr.bf16.mxu0 0
      %1670 = vmatpush2.bf16.msra.mxu0 0
      %1671 = vmatprep.subr.bf16.mxu0 0
      %1672 = vmatpush2.bf16.msra.mxu0 0
      %1673 = vmatprep.subr.bf16.mxu0 0
      %1674 = vmatpush2.bf16.msra.mxu0 0
      %1675 = vmatprep.subr.bf16.mxu0 0
      %1676 = vmatpush2.bf16.msra.mxu0 0
      %1677 = vmatprep.subr.bf16.mxu0 0
      %1678 = vmatpush2.bf16.msra.mxu0 0
      %1679 = vmatprep.subr.bf16.mxu0 0
      %1680 = vmatpush2.bf16.msra.mxu0 0
      %1681 = vmatprep.subr.bf16.mxu0 0
      %1682 = vmatpush2.bf16.msra.mxu0 0
      %1683 = vmatprep.mubr.bf16.mxu0 0
      %1684 = vmatmul.mubr.bf16.gmra.mxu0 %v1646
      %v1685 = vpop.f32.mrf.mxu0
      %v1686 = vadd.f32 0.0, %v1685
      %v1687 = vpop.f32.mrf.mxu0
      %v1688 = vpop.f32.mrf.mxu0
      %v1689 = vpop.f32.mrf.mxu0
      %1690 = vdwg.mxu0
      %v1692 = vsel %vm1229, %v1207, 0
      %v1695 = vsel %vm1233, %v1223, 0
      %1697 = vmatprep.subr.bf16.mxu0 0
      %1698 = vmatpush1.bf16.msra.mxu0 0
      %1699 = vmatprep.subr.bf16.mxu0 0
      %1700 = vmatpush1.bf16.msra.mxu0 0
      %1701 = vmatprep.subr.bf16.mxu0 0
      %1702 = vmatpush1.bf16.msra.mxu0 0
      %1703 = vmatprep.subr.bf16.mxu0 0
      %1704 = vmatpush1.bf16.msra.mxu0 0
      %1705 = vmatprep.subr.bf16.mxu0 0
      %1706 = vmatpush1.bf16.msra.mxu0 0
      %1707 = vmatprep.subr.bf16.mxu0 0
      %1708 = vmatpush1.bf16.msra.mxu0 0
      %1709 = vmatprep.subr.bf16.mxu0 0
      %1710 = vmatpush1.bf16.msra.mxu0 0
      %1711 = vmatprep.subr.bf16.mxu0 0
      %1712 = vmatpush1.bf16.msra.mxu0 %v1695
      %1713 = vmatprep.subr.bf16.mxu0 0
      %1714 = vmatpush2.bf16.msra.mxu0 0
      %1715 = vmatprep.subr.bf16.mxu0 0
      %1716 = vmatpush2.bf16.msra.mxu0 0
      %1717 = vmatprep.subr.bf16.mxu0 0
      %1718 = vmatpush2.bf16.msra.mxu0 0
      %1719 = vmatprep.subr.bf16.mxu0 0
      %1720 = vmatpush2.bf16.msra.mxu0 0
      %1721 = vmatprep.subr.bf16.mxu0 0
      %1722 = vmatpush2.bf16.msra.mxu0 0
      %1723 = vmatprep.subr.bf16.mxu0 0
      %1724 = vmatpush2.bf16.msra.mxu0 0
      %1725 = vmatprep.subr.bf16.mxu0 0
      %1726 = vmatpush2.bf16.msra.mxu0 0
      %1727 = vmatprep.subr.bf16.mxu0 0
      %1728 = vmatpush2.bf16.msra.mxu0 0
      %1729 = vmatprep.mubr.bf16.mxu0 0
      %1730 = vmatmul.mubr.bf16.gmra.mxu0 %v1692
      %v1731 = vpop.f32.mrf.mxu0
      %v1732 = vadd.f32 0.0, %v1731
      %v1733 = vpop.f32.mrf.mxu0
      %v1734 = vpop.f32.mrf.mxu0
      %v1735 = vpop.f32.mrf.mxu0
      %1736 = vdwg.mxu0
      %v1738 = vsel %vm1229, %v1208, 0
      %v1741 = vsel %vm1233, %v1224, 0
      %1743 = vmatprep.subr.bf16.mxu0 0
      %1744 = vmatpush1.bf16.msra.mxu0 0
      %1745 = vmatprep.subr.bf16.mxu0 0
      %1746 = vmatpush1.bf16.msra.mxu0 0
      %1747 = vmatprep.subr.bf16.mxu0 0
      %1748 = vmatpush1.bf16.msra.mxu0 0
      %1749 = vmatprep.subr.bf16.mxu0 0
      %1750 = vmatpush1.bf16.msra.mxu0 0
      %1751 = vmatprep.subr.bf16.mxu0 0
      %1752 = vmatpush1.bf16.msra.mxu0 0
      %1753 = vmatprep.subr.bf16.mxu0 0
      %1754 = vmatpush1.bf16.msra.mxu0 0
      %1755 = vmatprep.subr.bf16.mxu0 0
      %1756 = vmatpush1.bf16.msra.mxu0 0
      %1757 = vmatprep.subr.bf16.mxu0 0
      %1758 = vmatpush1.bf16.msra.mxu0 %v1741
      %1759 = vmatprep.subr.bf16.mxu0 0
      %1760 = vmatpush2.bf16.msra.mxu0 0
      %1761 = vmatprep.subr.bf16.mxu0 0
      %1762 = vmatpush2.bf16.msra.mxu0 0
      %1763 = vmatprep.subr.bf16.mxu0 0
      %1764 = vmatpush2.bf16.msra.mxu0 0
      %1765 = vmatprep.subr.bf16.mxu0 0
      %1766 = vmatpush2.bf16.msra.mxu0 0
      %1767 = vmatprep.subr.bf16.mxu0 0
      %1768 = vmatpush2.bf16.msra.mxu0 0
      %1769 = vmatprep.subr.bf16.mxu0 0
      %1770 = vmatpush2.bf16.msra.mxu0 0
      %1771 = vmatprep.subr.bf16.mxu0 0
      %1772 = vmatpush2.bf16.msra.mxu0 0
      %1773 = vmatprep.subr.bf16.mxu0 0
      %1774 = vmatpush2.bf16.msra.mxu0 0
      %1775 = vmatprep.mubr.bf16.mxu0 0
      %1776 = vmatmul.mubr.bf16.gmra.mxu0 %v1738
      %v1777 = vpop.f32.mrf.mxu0
      %v1778 = vadd.f32 0.0, %v1777
      %v1779 = vpop.f32.mrf.mxu0
      %v1780 = vpop.f32.mrf.mxu0
      %v1781 = vpop.f32.mrf.mxu0
      %1782 = vdwg.mxu0
      %v1784 = vsel %vm1229, %v1209, 0
      %v1787 = vsel %vm1233, %v1225, 0
      %1789 = vmatprep.subr.bf16.mxu0 0
      %1790 = vmatpush1.bf16.msra.mxu0 0
      %1791 = vmatprep.subr.bf16.mxu0 0
      %1792 = vmatpush1.bf16.msra.mxu0 0
      %1793 = vmatprep.subr.bf16.mxu0 0
      %1794 = vmatpush1.bf16.msra.mxu0 0
      %1795 = vmatprep.subr.bf16.mxu0 0
      %1796 = vmatpush1.bf16.msra.mxu0 0
      %1797 = vmatprep.subr.bf16.mxu0 0
      %1798 = vmatpush1.bf16.msra.mxu0 0
      %1799 = vmatprep.subr.bf16.mxu0 0
      %1800 = vmatpush1.bf16.msra.mxu0 0
      %1801 = vmatprep.subr.bf16.mxu0 0
      %1802 = vmatpush1.bf16.msra.mxu0 0
      %1803 = vmatprep.subr.bf16.mxu0 0
      %1804 = vmatpush1.bf16.msra.mxu0 %v1787
      %1805 = vmatprep.subr.bf16.mxu0 0
      %1806 = vmatpush2.bf16.msra.mxu0 0
      %1807 = vmatprep.subr.bf16.mxu0 0
      %1808 = vmatpush2.bf16.msra.mxu0 0
      %1809 = vmatprep.subr.bf16.mxu0 0
      %1810 = vmatpush2.bf16.msra.mxu0 0
      %1811 = vmatprep.subr.bf16.mxu0 0
      %1812 = vmatpush2.bf16.msra.mxu0 0
      %1813 = vmatprep.subr.bf16.mxu0 0
      %1814 = vmatpush2.bf16.msra.mxu0 0
      %1815 = vmatprep.subr.bf16.mxu0 0
      %1816 = vmatpush2.bf16.msra.mxu0 0
      %1817 = vmatprep.subr.bf16.mxu0 0
      %1818 = vmatpush2.bf16.msra.mxu0 0
      %1819 = vmatprep.subr.bf16.mxu0 0
      %1820 = vmatpush2.bf16.msra.mxu0 0
      %1821 = vmatprep.mubr.bf16.mxu0 0
      %1822 = vmatmul.mubr.bf16.gmra.mxu0 %v1784
      %v1823 = vpop.f32.mrf.mxu0
      %v1824 = vadd.f32 0.0, %v1823
      %v1825 = vpop.f32.mrf.mxu0
      %v1826 = vpop.f32.mrf.mxu0
      %v1827 = vpop.f32.mrf.mxu0
      %1828 = vdwg.mxu0
      %v1830 = vsel %vm1229, %v1210, 0
      %v1833 = vsel %vm1233, %v1226, 0
      %1835 = vmatprep.subr.bf16.mxu0 0
      %1836 = vmatpush1.bf16.msra.mxu0 0
      %1837 = vmatprep.subr.bf16.mxu0 0
      %1838 = vmatpush1.bf16.msra.mxu0 0
      %1839 = vmatprep.subr.bf16.mxu0 0
      %1840 = vmatpush1.bf16.msra.mxu0 0
      %1841 = vmatprep.subr.bf16.mxu0 0
      %1842 = vmatpush1.bf16.msra.mxu0 0
      %1843 = vmatprep.subr.bf16.mxu0 0
      %1844 = vmatpush1.bf16.msra.mxu0 0
      %1845 = vmatprep.subr.bf16.mxu0 0
      %1846 = vmatpush1.bf16.msra.mxu0 0
      %1847 = vmatprep.subr.bf16.mxu0 0
      %1848 = vmatpush1.bf16.msra.mxu0 0
      %1849 = vmatprep.subr.bf16.mxu0 0
      %1850 = vmatpush1.bf16.msra.mxu0 %v1833
      %1851 = vmatprep.subr.bf16.mxu0 0
      %1852 = vmatpush2.bf16.msra.mxu0 0
      %1853 = vmatprep.subr.bf16.mxu0 0
      %1854 = vmatpush2.bf16.msra.mxu0 0
      %1855 = vmatprep.subr.bf16.mxu0 0
      %1856 = vmatpush2.bf16.msra.mxu0 0
      %1857 = vmatprep.subr.bf16.mxu0 0
      %1858 = vmatpush2.bf16.msra.mxu0 0
      %1859 = vmatprep.subr.bf16.mxu0 0
      %1860 = vmatpush2.bf16.msra.mxu0 0
      %1861 = vmatprep.subr.bf16.mxu0 0
      %1862 = vmatpush2.bf16.msra.mxu0 0
      %1863 = vmatprep.subr.bf16.mxu0 0
      %1864 = vmatpush2.bf16.msra.mxu0 0
      %1865 = vmatprep.subr.bf16.mxu0 0
      %1866 = vmatpush2.bf16.msra.mxu0 0
      %1867 = vmatprep.mubr.bf16.mxu0 0
      %1868 = vmatmul.mubr.bf16.gmra.mxu0 %v1830
      %v1869 = vpop.f32.mrf.mxu0
      %v1870 = vadd.f32 0.0, %v1869
      %v1871 = vpop.f32.mrf.mxu0
      %v1872 = vpop.f32.mrf.mxu0
      %v1873 = vpop.f32.mrf.mxu0
      %1874 = vdwg.mxu0
      %v1876 = vsel %vm1229, %v1211, 0
      %v1879 = vsel %vm1233, %v1227, 0
      %1881 = vmatprep.subr.bf16.mxu0 0
      %1882 = vmatpush1.bf16.msra.mxu0 0
      %1883 = vmatprep.subr.bf16.mxu0 0
      %1884 = vmatpush1.bf16.msra.mxu0 0
      %1885 = vmatprep.subr.bf16.mxu0 0
      %1886 = vmatpush1.bf16.msra.mxu0 0
      %1887 = vmatprep.subr.bf16.mxu0 0
      %1888 = vmatpush1.bf16.msra.mxu0 0
      %1889 = vmatprep.subr.bf16.mxu0 0
      %1890 = vmatpush1.bf16.msra.mxu0 0
      %1891 = vmatprep.subr.bf16.mxu0 0
      %1892 = vmatpush1.bf16.msra.mxu0 0
      %1893 = vmatprep.subr.bf16.mxu0 0
      %1894 = vmatpush1.bf16.msra.mxu0 0
      %1895 = vmatprep.subr.bf16.mxu0 0
      %1896 = vmatpush1.bf16.msra.mxu0 %v1879
      %1897 = vmatprep.subr.bf16.mxu0 0
      %1898 = vmatpush2.bf16.msra.mxu0 0
      %1899 = vmatprep.subr.bf16.mxu0 0
      %1900 = vmatpush2.bf16.msra.mxu0 0
      %1901 = vmatprep.subr.bf16.mxu0 0
      %1902 = vmatpush2.bf16.msra.mxu0 0
      %1903 = vmatprep.subr.bf16.mxu0 0
      %1904 = vmatpush2.bf16.msra.mxu0 0
      %1905 = vmatprep.subr.bf16.mxu0 0
      %1906 = vmatpush2.bf16.msra.mxu0 0
      %1907 = vmatprep.subr.bf16.mxu0 0
      %1908 = vmatpush2.bf16.msra.mxu0 0
      %1909 = vmatprep.subr.bf16.mxu0 0
      %1910 = vmatpush2.bf16.msra.mxu0 0
      %1911 = vmatprep.subr.bf16.mxu0 0
      %1912 = vmatpush2.bf16.msra.mxu0 0
      %1913 = vmatprep.mubr.bf16.mxu0 0
      %1914 = vmatmul.mubr.bf16.gmra.mxu0 %v1876
      %v1915 = vpop.f32.mrf.mxu0
      %v1916 = vadd.f32 0.0, %v1915
      %v1917 = vpop.f32.mrf.mxu0
      %v1918 = vpop.f32.mrf.mxu0
      %v1919 = vpop.f32.mrf.mxu0
      %1920 = vdwg.mxu0
      %v1922 = vsel %vm1229, %v1212, 0
      %v1925 = vsel %vm1233, %v1228, 0
      %1927 = vmatprep.subr.bf16.mxu0 0
      %1928 = vmatpush1.bf16.msra.mxu0 0
      %1929 = vmatprep.subr.bf16.mxu0 0
      %1930 = vmatpush1.bf16.msra.mxu0 0
      %1931 = vmatprep.subr.bf16.mxu0 0
      %1932 = vmatpush1.bf16.msra.mxu0 0
      %1933 = vmatprep.subr.bf16.mxu0 0
      %1934 = vmatpush1.bf16.msra.mxu0 0
      %1935 = vmatprep.subr.bf16.mxu0 0
      %1936 = vmatpush1.bf16.msra.mxu0 0
      %1937 = vmatprep.subr.bf16.mxu0 0
      %1938 = vmatpush1.bf16.msra.mxu0 0
      %1939 = vmatprep.subr.bf16.mxu0 0
      %1940 = vmatpush1.bf16.msra.mxu0 0
      %1941 = vmatprep.subr.bf16.mxu0 0
      %1942 = vmatpush1.bf16.msra.mxu0 %v1925
      %1943 = vmatprep.subr.bf16.mxu0 0
      %1944 = vmatpush2.bf16.msra.mxu0 0
      %1945 = vmatprep.subr.bf16.mxu0 0
      %1946 = vmatpush2.bf16.msra.mxu0 0
      %1947 = vmatprep.subr.bf16.mxu0 0
      %1948 = vmatpush2.bf16.msra.mxu0 0
      %1949 = vmatprep.subr.bf16.mxu0 0
      %1950 = vmatpush2.bf16.msra.mxu0 0
      %1951 = vmatprep.subr.bf16.mxu0 0
      %1952 = vmatpush2.bf16.msra.mxu0 0
      %1953 = vmatprep.subr.bf16.mxu0 0
      %1954 = vmatpush2.bf16.msra.mxu0 0
      %1955 = vmatprep.subr.bf16.mxu0 0
      %1956 = vmatpush2.bf16.msra.mxu0 0
      %1957 = vmatprep.subr.bf16.mxu0 0
      %1958 = vmatpush2.bf16.msra.mxu0 0
      %1959 = vmatprep.mubr.bf16.mxu0 0
      %1960 = vmatmul.mubr.bf16.gmra.mxu0 %v1922
      %v1961 = vpop.f32.mrf.mxu0
      %v1962 = vadd.f32 0.0, %v1961
      %v1963 = vpop.f32.mrf.mxu0
      %v1964 = vpop.f32.mrf.mxu0
      %v1965 = vpop.f32.mrf.mxu0
      %1966 = vdwg.mxu0
      %v1967 = vrcp.pop %v1151
      %v1968 = vrcp.pop %v1154
      %v1969 = vrcp.pop %v1157
      %v1970 = vrcp.pop %v1160
      %v1971 = vrcp.pop %v1163
      %v1972 = vrcp.pop %v1166
      %v1973 = vrcp.pop %v1169
      %v1974 = vrcp.pop %v1172
      %v1975 = vrcp.pop %v1175
      %v1976 = vrcp.pop %v1178
      %v1977 = vrcp.pop %v1181
      %v1978 = vrcp.pop %v1184
      %v1979 = vrcp.pop %v1187
      %v1980 = vrcp.pop %v1190
      %v1981 = vrcp.pop %v1193
      %v1982 = vrcp.pop %v1196
      %v1983 = vmul.f32 %v1272, %v1967
      %v1984 = vmul.f32 %v1318, %v1968
      %v1985 = vmul.f32 %v1364, %v1969
      %v1986 = vmul.f32 %v1410, %v1970
      %v1987 = vmul.f32 %v1456, %v1971
      %v1988 = vmul.f32 %v1502, %v1972
      %v1989 = vmul.f32 %v1548, %v1973
      %v1990 = vmul.f32 %v1594, %v1974
      %v1991 = vmul.f32 %v1640, %v1975
      %v1992 = vmul.f32 %v1686, %v1976
      %v1993 = vmul.f32 %v1732, %v1977
      %v1994 = vmul.f32 %v1778, %v1978
      %v1995 = vmul.f32 %v1824, %v1979
      %v1996 = vmul.f32 %v1870, %v1980
      %v1997 = vmul.f32 %v1916, %v1981
      %v1998 = vmul.f32 %v1962, %v1982
      %vm1999 = vcmask 60416
      %2000 = vst.msk [vmem:[%s216] sm:$0xf] %vm1999, %v1983
      %2001 = vst.msk [vmem:[%s216 + $0x4] sm:$0xf] %vm1999, %v1984
      %2002 = vst.msk [vmem:[%s216 + $0x8] sm:$0xf] %vm1999, %v1985
      %2003 = vst.msk [vmem:[%s216 + $0xc] sm:$0xf] %vm1999, %v1986
      %2004 = vst.msk [vmem:[%s216 + $0x10] sm:$0xf] %vm1999, %v1987
      %2005 = vst.msk [vmem:[%s216 + $0x14] sm:$0xf] %vm1999, %v1988
      %2006 = vst.msk [vmem:[%s216 + $0x18] sm:$0xf] %vm1999, %v1989
      %2007 = vst.msk [vmem:[%s216 + $0x1c] sm:$0xf] %vm1999, %v1990
      %2008 = vst.msk [vmem:[%s216 + $0x20] sm:$0xf] %vm1999, %v1991
      %2009 = vst.msk [vmem:[%s216 + $0x24] sm:$0xf] %vm1999, %v1992
      %2010 = vst.msk [vmem:[%s216 + $0x28] sm:$0xf] %vm1999, %v1993
      %2011 = vst.msk [vmem:[%s216 + $0x2c] sm:$0xf] %vm1999, %v1994
      %2012 = vst.msk [vmem:[%s216 + $0x30] sm:$0xf] %vm1999, %v1995
      %2013 = vst.msk [vmem:[%s216 + $0x34] sm:$0xf] %vm1999, %v1996
      %2014 = vst.msk [vmem:[%s216 + $0x38] sm:$0xf] %vm1999, %v1997
      %2015 = vst.msk [vmem:[%s216 + $0x3c] sm:$0xf] %vm1999, %v1998
      %s2016 = smul.u32 16, %s14
      %p2017 = scmp.lt.s32.totalorder %s2016, 63
      %s2018 = scalar_select %p2017, %s2016, 63
      %s2019 = smul.addr %s2018, 4
      %s2020 = scalar_lea.vmem %s3, %s2019
      // Predicated region
      $region33: #{_lambda_.54} parent=31 // pred_check
        %p2021 = pneg %p110
      $region34: #{_lambda_.54} parent=31 // pred_check_branch
        %2023 = sbr.rel (%p2021) target = $region36
      $region35: #{_lambda_.54} parent=31 // pred_region
        %s2024 = smul.u32 16, %s14
      $region36: #{_lambda_.54} parent=31 // pred_fallthru
        _
    $region32: #{_lambda_.54} parent=5 // pred_fallthru
      _
    %p2025 = scmp.le.s32.totalorder 2, %s9
    // Predicated region
    $region37: #{_lambda_.54} parent=5 // pred_check
      %p2026 = pneg %p2025
    $region38: #{_lambda_.54} parent=5 // pred_check_branch
      %2028 = sbr.rel (%p2026) target = $region40
    $region39: #{_lambda_.54} parent=5 // pred_region
      %s2029 = ssub.s32 %s9, 2
      // Predicated region
      $region41: #{_lambda_.54} parent=39 // pred_check
        %p2030 = pneg %p116
      $region42: #{_lambda_.54} parent=39 // pred_check_branch
        %2032 = sbr.rel (%p2030) target = $region44
      $region43: #{_lambda_.54} parent=39 // pred_region
        %s2033 = smul.u32 16, %s15
        %p2034 = scmp.lt.s32.totalorder %s2033, 63
        %s2035 = scalar_select %p2034, %s2033, 63
        %s2036 = smul.addr %s2035, 4
        %s2037 = scalar_lea.vmem %s3, %s2036
      $region44: #{_lambda_.54} parent=39 // pred_fallthru
        _
    $region40: #{_lambda_.54} parent=5 // pred_fallthru
      _
  $region6: #{_lambda_.54} parent=0 // loop_footer
    %s13 = sadd.s32 1, %s9
  $region7: #{_lambda_.54} parent=0 // loop_footer_branch
    %8 = sbr.rel target = $region3
  $region8: #{_lambda_.54} parent=0 // loop_exit
    _

// kernel: _lambda_.57
$region0: #{_lambda_.57}
  #allocation0 [shape = 'u32[]', space=smem, size = 0x4, offset = 0x4, fixed_abs, tag = 'smem constant byte address 0x4 - core index']
  #allocation1 [shape = 'u32[144,128]{1,0:T(1,128)}', space=vmem, size = 0x12000, scoped, tag = 'internal scratch']
  %s0 = inlined_call_operand.vmem [shape: f32[64,128], index: 0, kind: input, shape index: {}]
  %s1 = inlined_call_operand.vmem [shape: f32[128,32], index: 1, kind: input, shape index: {}]
  %s2 = inlined_call_operand.vmem [shape: f32[1,32], index: 2, kind: input, shape index: {}]
  %s3 = inlined_call_operand.vmem [shape: f32[64,32], index: 3, kind: output, shape index: {}]
  %s4 = sld [smem:[#allocation0]]
  $region22: #{_lambda_.57} parent=0
    _
  %s6 = ssub.s32 1, %s4
  %s7 = scalar_select 0, %s6, %s4
  // Predicated region
  $region2: #{_lambda_.57} parent=0 // pred_check
    _
  $region3: #{_lambda_.57} parent=0 // pred_check_branch
    %9 = sbr.rel (0) target = $region5
  $region4: #{_lambda_.57} parent=0 // pred_region
    _
  $region5: #{_lambda_.57} parent=0 // pred_fallthru
    _
  // Predicated region
  $region6: #{_lambda_.57} parent=0 // pred_check
    _
  $region7: #{_lambda_.57} parent=0 // pred_check_branch
    %11 = sbr.rel (0) target = $region9
  $region8: #{_lambda_.57} parent=0 // pred_region
    _
  $region9: #{_lambda_.57} parent=0 // pred_fallthru
    _
  // Predicated region
  $region10: #{_lambda_.57} parent=0 // pred_check
    _
  $region11: #{_lambda_.57} parent=0 // pred_check_branch
    %13 = sbr.rel (0) target = $region13
  $region12: #{_lambda_.57} parent=0 // pred_region
    _
  $region13: #{_lambda_.57} parent=0 // pred_fallthru
    _
  %v15 = vld [vmem:[%s0] sm:$0xff]
  %v16 = vld [vmem:[%s0 + $0x8] sm:$0xff]
  %v17 = vld [vmem:[%s0 + $0x10] sm:$0xff]
  %v18 = vld [vmem:[%s0 + $0x18] sm:$0xff]
  %v19 = vld [vmem:[%s0 + $0x20] sm:$0xff]
  %v20 = vld [vmem:[%s0 + $0x28] sm:$0xff]
  %v21 = vld [vmem:[%s0 + $0x30] sm:$0xff]
  %v22 = vld [vmem:[%s0 + $0x38] sm:$0xff]
  %v23 = vpack.c.bf16 %v16, %v15
  %v24 = vpack.c.bf16 %v18, %v17
  %v25 = vpack.c.bf16 %v20, %v19
  %v26 = vpack.c.bf16 %v22, %v21
  %v27 = vld [vmem:[%s1] sm:$0xff]
  %v28 = vld [vmem:[%s1 + $0x8] sm:$0xff]
  %v29 = vld [vmem:[%s1 + $0x10] sm:$0xff]
  %v30 = vld [vmem:[%s1 + $0x18] sm:$0xff]
  %v31 = vld [vmem:[%s1 + $0x20] sm:$0xff]
  %v32 = vld [vmem:[%s1 + $0x28] sm:$0xff]
  %v33 = vld [vmem:[%s1 + $0x30] sm:$0xff]
  %v34 = vld [vmem:[%s1 + $0x38] sm:$0xff]
  %v35 = vld [vmem:[%s1 + $0x40] sm:$0xff]
  %v36 = vld [vmem:[%s1 + $0x48] sm:$0xff]
  %v37 = vld [vmem:[%s1 + $0x50] sm:$0xff]
  %v38 = vld [vmem:[%s1 + $0x58] sm:$0xff]
  %v39 = vld [vmem:[%s1 + $0x60] sm:$0xff]
  %v40 = vld [vmem:[%s1 + $0x68] sm:$0xff]
  %v41 = vld [vmem:[%s1 + $0x70] sm:$0xff]
  %v42 = vld [vmem:[%s1 + $0x78] sm:$0xff]
  %v43 = vpack.c.bf16 %v28, %v27
  %v44 = vpack.c.bf16 %v30, %v29
  %v45 = vpack.c.bf16 %v32, %v31
  %v46 = vpack.c.bf16 %v34, %v33
  %v47 = vpack.c.bf16 %v36, %v35
  %v48 = vpack.c.bf16 %v38, %v37
  %v49 = vpack.c.bf16 %v40, %v39
  %v50 = vpack.c.bf16 %v42, %v41
  %v51 = vld [vmem:[%s2] sm:$0x1]
  %v53 = vlaneseq
  %v54 = vshrl.u32 %v53, 7
  %v55 = vsub.s32 0, %v54
  %v56 = vrot.slane %v51, %v55
  %58 = vmatprep.subr.bf16.mxu0 0
  %59 = vmatpush1.bf16.msra.mxu0 %v50
  %60 = vmatprep.subr.bf16.mxu0 0
  %61 = vmatpush1.bf16.msra.mxu0 %v49
  %62 = vmatprep.subr.bf16.mxu0 0
  %63 = vmatpush1.bf16.msra.mxu0 %v48
  %64 = vmatprep.subr.bf16.mxu0 0
  %65 = vmatpush1.bf16.msra.mxu0 %v47
  %66 = vmatprep.subr.bf16.mxu0 0
  %67 = vmatpush1.bf16.msra.mxu0 %v46
  %68 = vmatprep.subr.bf16.mxu0 0
  %69 = vmatpush1.bf16.msra.mxu0 %v45
  %70 = vmatprep.subr.bf16.mxu0 0
  %71 = vmatpush1.bf16.msra.mxu0 %v44
  %72 = vmatprep.subr.bf16.mxu0 0
  %73 = vmatpush1.bf16.msra.mxu0 %v43
  %74 = vmatprep.subr.bf16.mxu0 0
  %75 = vmatpush2.bf16.msra.mxu0 0
  %76 = vmatprep.subr.bf16.mxu0 0
  %77 = vmatpush2.bf16.msra.mxu0 0
  %78 = vmatprep.subr.bf16.mxu0 0
  %79 = vmatpush2.bf16.msra.mxu0 0
  %80 = vmatprep.subr.bf16.mxu0 0
  %81 = vmatpush2.bf16.msra.mxu0 0
  %82 = vmatprep.subr.bf16.mxu0 0
  %83 = vmatpush2.bf16.msra.mxu0 0
  %84 = vmatprep.subr.bf16.mxu0 0
  %85 = vmatpush2.bf16.msra.mxu0 0
  %86 = vmatprep.subr.bf16.mxu0 0
  %87 = vmatpush2.bf16.msra.mxu0 0
  %88 = vmatprep.subr.bf16.mxu0 0
  %89 = vmatpush2.bf16.msra.mxu0 0
  %90 = vmatprep.mubr.bf16.mxu0 0
  %91 = vmatmul.mubr.bf16.gmra.mxu0 %v23
  %v92 = vpop.f32.mrf.mxu0
  %v93 = vadd.f32 %v56, %v92
  %v94 = vpop.f32.mrf.mxu0
  %v95 = vpop.f32.mrf.mxu0
  %v96 = vadd.f32 %v56, %v95
  %v97 = vpop.f32.mrf.mxu0
  %98 = vmatprep.mubr.bf16.mxu0 0
  %99 = vmatmul.mubr.bf16.gmra.mxu0 %v24
  %v100 = vpop.f32.mrf.mxu0
  %v101 = vadd.f32 %v56, %v100
  %v102 = vpop.f32.mrf.mxu0
  %v103 = vpop.f32.mrf.mxu0
  %v104 = vadd.f32 %v56, %v103
  %v105 = vpop.f32.mrf.mxu0
  %106 = vmatprep.mubr.bf16.mxu0 0
  %107 = vmatmul.mubr.bf16.gmra.mxu0 %v25
  %v108 = vpop.f32.mrf.mxu0
  %v109 = vadd.f32 %v56, %v108
  %v110 = vpop.f32.mrf.mxu0
  %v111 = vpop.f32.mrf.mxu0
  %v112 = vadd.f32 %v56, %v111
  %v113 = vpop.f32.mrf.mxu0
  %114 = vmatprep.mubr.bf16.mxu0 0
  %115 = vmatmul.mubr.bf16.gmra.mxu0 %v26
  %v116 = vpop.f32.mrf.mxu0
  %v117 = vadd.f32 %v56, %v116
  %v118 = vpop.f32.mrf.mxu0
  %v119 = vpop.f32.mrf.mxu0
  %v120 = vadd.f32 %v56, %v119
  %v121 = vpop.f32.mrf.mxu0
  %122 = vdwg.mxu0
  %vm123 = vcmask 261120
  %124 = vst.msk [vmem:[%s3] sm:$0xff] %vm123, %v93
  %125 = vst.msk [vmem:[%s3 + $0x8] sm:$0xff] %vm123, %v96
  %126 = vst.msk [vmem:[%s3 + $0x10] sm:$0xff] %vm123, %v101
  %127 = vst.msk [vmem:[%s3 + $0x18] sm:$0xff] %vm123, %v104
  %128 = vst.msk [vmem:[%s3 + $0x20] sm:$0xff] %vm123, %v109
  %129 = vst.msk [vmem:[%s3 + $0x28] sm:$0xff] %vm123, %v112
  %130 = vst.msk [vmem:[%s3 + $0x30] sm:$0xff] %vm123, %v117
  %131 = vst.msk [vmem:[%s3 + $0x38] sm:$0xff] %vm123, %v120
  // Predicated region
  $region14: #{_lambda_.57} parent=0 // pred_check
    _
  $region15: #{_lambda_.57} parent=0 // pred_check_branch
    %133 = sbr.rel (0) target = $region17
  $region16: #{_lambda_.57} parent=0 // pred_region
    _
  $region17: #{_lambda_.57} parent=0 // pred_fallthru
    _
  // Predicated region
  $region18: #{_lambda_.57} parent=0 // pred_check
    _
  $region19: #{_lambda_.57} parent=0 // pred_check_branch
    %135 = sbr.rel (0) target = $region21
  $region20: #{_lambda_.57} parent=0 // pred_region
    _
  $region21: #{_lambda_.57} parent=0 // pred_fallthru
    _

// kernel: _lambda_.85
$region0: #{_lambda_.85}
  #allocation0 [shape = 'u32[]', space=smem, size = 0x4, offset = 0x4, fixed_abs, tag = 'smem constant byte address 0x4 - core index']
  #allocation1 [shape = 'u32[144,128]{1,0:T(1,128)}', space=vmem, size = 0x12000, scoped, tag = 'internal scratch']
  %s0 = inlined_call_operand.vmem [shape: f32[64,32], index: 0, kind: input, shape index: {}]
  %s1 = inlined_call_operand.vmem [shape: f32[1,32], index: 1, kind: input, shape index: {}]
  %s2 = inlined_call_operand.vmem [shape: f32[1,32], index: 2, kind: input, shape index: {}]
  %s3 = inlined_call_operand.vmem [shape: f32[32,64], index: 3, kind: input, shape index: {}]
  %s4 = inlined_call_operand.vmem [shape: f32[1,64], index: 4, kind: input, shape index: {}]
  %s5 = inlined_call_operand.vmem [shape: f32[64,64], index: 5, kind: output, shape index: {}]
  %s6 = sld [smem:[#allocation0]]
  $region30: #{_lambda_.85} parent=0
    _
  %s8 = ssub.s32 1, %s6
  %s9 = scalar_select 0, %s8, %s6
  // Predicated region
  $region2: #{_lambda_.85} parent=0 // pred_check
    _
  $region3: #{_lambda_.85} parent=0 // pred_check_branch
    %11 = sbr.rel (0) target = $region5
  $region4: #{_lambda_.85} parent=0 // pred_region
    _
  $region5: #{_lambda_.85} parent=0 // pred_fallthru
    _
  // Predicated region
  $region6: #{_lambda_.85} parent=0 // pred_check
    _
  $region7: #{_lambda_.85} parent=0 // pred_check_branch
    %13 = sbr.rel (0) target = $region9
  $region8: #{_lambda_.85} parent=0 // pred_region
    _
  $region9: #{_lambda_.85} parent=0 // pred_fallthru
    _
  // Predicated region
  $region10: #{_lambda_.85} parent=0 // pred_check
    _
  $region11: #{_lambda_.85} parent=0 // pred_check_branch
    %15 = sbr.rel (0) target = $region13
  $region12: #{_lambda_.85} parent=0 // pred_region
    _
  $region13: #{_lambda_.85} parent=0 // pred_fallthru
    _
  // Predicated region
  $region14: #{_lambda_.85} parent=0 // pred_check
    _
  $region15: #{_lambda_.85} parent=0 // pred_check_branch
    %17 = sbr.rel (0) target = $region17
  $region16: #{_lambda_.85} parent=0 // pred_region
    _
  $region17: #{_lambda_.85} parent=0 // pred_fallthru
    _
  // Predicated region
  $region18: #{_lambda_.85} parent=0 // pred_check
    _
  $region19: #{_lambda_.85} parent=0 // pred_check_branch
    %19 = sbr.rel (0) target = $region21
  $region20: #{_lambda_.85} parent=0 // pred_region
    _
  $region21: #{_lambda_.85} parent=0 // pred_fallthru
    _
  %v21 = vld [vmem:[%s0] sm:$0xff]
  %v22 = vld [vmem:[%s0 + $0x8] sm:$0xff]
  %v23 = vld [vmem:[%s0 + $0x10] sm:$0xff]
  %v24 = vld [vmem:[%s0 + $0x18] sm:$0xff]
  %v25 = vld [vmem:[%s0 + $0x20] sm:$0xff]
  %v26 = vld [vmem:[%s0 + $0x28] sm:$0xff]
  %v27 = vld [vmem:[%s0 + $0x30] sm:$0xff]
  %v28 = vld [vmem:[%s0 + $0x38] sm:$0xff]
  %vm29 = vcmask 261120
  %v30 = vsel %vm29, %v21, 0.0
  %31 = vadd.xlane.f32.xlu0 %v30
  %v32 = vpop.xlane.xlu0 %31
  %v33 = vsel %vm29, %v22, 0.0
  %34 = vadd.xlane.f32.xlu0 %v33
  %v35 = vpop.xlane.xlu0 %34
  %v36 = vsel %vm29, %v23, 0.0
  %37 = vadd.xlane.f32.xlu0 %v36
  %v38 = vpop.xlane.xlu0 %37
  %v39 = vsel %vm29, %v24, 0.0
  %40 = vadd.xlane.f32.xlu0 %v39
  %v41 = vpop.xlane.xlu0 %40
  %v42 = vsel %vm29, %v25, 0.0
  %43 = vadd.xlane.f32.xlu0 %v42
  %v44 = vpop.xlane.xlu0 %43
  %v45 = vsel %vm29, %v26, 0.0
  %46 = vadd.xlane.f32.xlu0 %v45
  %v47 = vpop.xlane.xlu0 %46
  %v48 = vsel %vm29, %v27, 0.0
  %49 = vadd.xlane.f32.xlu0 %v48
  %v50 = vpop.xlane.xlu0 %49
  %v51 = vsel %vm29, %v28, 0.0
  %52 = vadd.xlane.f32.xlu0 %v51
  %v53 = vpop.xlane.xlu0 %52
  %v54 = vrcp.pop 32.0
  %v55 = vmul.f32 %v32, %v54
  %v56 = vmul.f32 %v35, %v54
  %v57 = vmul.f32 %v38, %v54
  %v58 = vmul.f32 %v41, %v54
  %v59 = vmul.f32 %v44, %v54
  %v60 = vmul.f32 %v47, %v54
  %v61 = vmul.f32 %v50, %v54
  %v62 = vmul.f32 %v53, %v54
  %v63 = vsub.f32 %v21, %v55
  %v64 = vsub.f32 %v22, %v56
  %v65 = vsub.f32 %v23, %v57
  %v66 = vsub.f32 %v24, %v58
  %v67 = vsub.f32 %v25, %v59
  %v68 = vsub.f32 %v26, %v60
  %v69 = vsub.f32 %v27, %v61
  %v70 = vsub.f32 %v28, %v62
  %v71 = vmul.f32 %v63, %v63
  %v72 = vmul.f32 %v64, %v64
  %v73 = vmul.f32 %v65, %v65
  %v74 = vmul.f32 %v66, %v66
  %v75 = vmul.f32 %v67, %v67
  %v76 = vmul.f32 %v68, %v68
  %v77 = vmul.f32 %v69, %v69
  %v78 = vmul.f32 %v70, %v70
  %v79 = vsel %vm29, %v71, 0.0
  %80 = vadd.xlane.f32.xlu0 %v79
  %v81 = vpop.xlane.xlu0 %80
  %v82 = vsel %vm29, %v72, 0.0
  %83 = vadd.xlane.f32.xlu0 %v82
  %v84 = vpop.xlane.xlu0 %83
  %v85 = vsel %vm29, %v73, 0.0
  %86 = vadd.xlane.f32.xlu0 %v85
  %v87 = vpop.xlane.xlu0 %86
  %v88 = vsel %vm29, %v74, 0.0
  %89 = vadd.xlane.f32.xlu0 %v88
  %v90 = vpop.xlane.xlu0 %89
  %v91 = vsel %vm29, %v75, 0.0
  %92 = vadd.xlane.f32.xlu0 %v91
  %v93 = vpop.xlane.xlu0 %92
  %v94 = vsel %vm29, %v76, 0.0
  %95 = vadd.xlane.f32.xlu0 %v94
  %v96 = vpop.xlane.xlu0 %95
  %v97 = vsel %vm29, %v77, 0.0
  %98 = vadd.xlane.f32.xlu0 %v97
  %v99 = vpop.xlane.xlu0 %98
  %v100 = vsel %vm29, %v78, 0.0
  %101 = vadd.xlane.f32.xlu0 %v100
  %v102 = vpop.xlane.xlu0 %101
  %v103 = vmul.f32 %v81, %v54
  %v104 = vmul.f32 %v84, %v54
  %v105 = vmul.f32 %v87, %v54
  %v106 = vmul.f32 %v90, %v54
  %v107 = vmul.f32 %v93, %v54
  %v108 = vmul.f32 %v96, %v54
  %v109 = vmul.f32 %v99, %v54
  %v110 = vmul.f32 %v102, %v54
  %v111 = vadd.f32 %v103, 1e-05
  %v112 = vadd.f32 %v104, 1e-05
  %v113 = vadd.f32 %v105, 1e-05
  %v114 = vadd.f32 %v106, 1e-05
  %v115 = vadd.f32 %v107, 1e-05
  %v116 = vadd.f32 %v108, 1e-05
  %v117 = vadd.f32 %v109, 1e-05
  %v118 = vadd.f32 %v110, 1e-05
  %v119 = vrsqrt.pop %v111
  %v120 = vrsqrt.pop %v112
  %v121 = vrsqrt.pop %v113
  %v122 = vrsqrt.pop %v114
  %v123 = vrsqrt.pop %v115
  %v124 = vrsqrt.pop %v116
  %v125 = vrsqrt.pop %v117
  %v126 = vrsqrt.pop %v118
  %v127 = vmul.f32 %v63, %v119
  %v128 = vmul.f32 %v64, %v120
  %v129 = vmul.f32 %v65, %v121
  %v130 = vmul.f32 %v66, %v122
  %v131 = vmul.f32 %v67, %v123
  %v132 = vmul.f32 %v68, %v124
  %v133 = vmul.f32 %v69, %v125
  %v134 = vmul.f32 %v70, %v126
  %v135 = vld [vmem:[%s1] sm:$0x1]
  %v137 = vlaneseq
  %v138 = vshrl.u32 %v137, 7
  %v139 = vsub.s32 0, %v138
  %v140 = vrot.slane %v135, %v139
  %v142 = vmul.f32 %v127, %v140
  %v143 = vmul.f32 %v128, %v140
  %v144 = vmul.f32 %v129, %v140
  %v145 = vmul.f32 %v130, %v140
  %v146 = vmul.f32 %v131, %v140
  %v147 = vmul.f32 %v132, %v140
  %v148 = vmul.f32 %v133, %v140
  %v149 = vmul.f32 %v134, %v140
  %v150 = vld [vmem:[%s2] sm:$0x1]
  %v152 = vlaneseq
  %v153 = vshrl.u32 %v152, 7
  %v154 = vsub.s32 0, %v153
  %v155 = vrot.slane %v150, %v154
  %v157 = vadd.f32 %v142, %v155
  %v158 = vadd.f32 %v143, %v155
  %v159 = vadd.f32 %v144, %v155
  %v160 = vadd.f32 %v145, %v155
  %v161 = vadd.f32 %v146, %v155
  %v162 = vadd.f32 %v147, %v155
  %v163 = vadd.f32 %v148, %v155
  %v164 = vadd.f32 %v149, %v155
  %v165 = vpack.c.bf16 %v158, %v157
  %v166 = vpack.c.bf16 %v160, %v159
  %v167 = vpack.c.bf16 %v162, %v161
  %v168 = vpack.c.bf16 %v164, %v163
  %v169 = vld [vmem:[%s3] sm:$0xff]
  %v170 = vld [vmem:[%s3 + $0x8] sm:$0xff]
  %v171 = vld [vmem:[%s3 + $0x10] sm:$0xff]
  %v172 = vld [vmem:[%s3 + $0x18] sm:$0xff]
  %v173 = vpack.c.bf16 %v170, %v169
  %v174 = vpack.c.bf16 %v172, %v171
  %v175 = vld [vmem:[%s4] sm:$0x1]
  %v177 = vlaneseq
  %v178 = vshrl.u32 %v177, 7
  %v179 = vsub.s32 0, %v178
  %v180 = vrot.slane %v175, %v179
  %v183 = vsel %vm29, %v165, 0
  %v186 = vsel %vm29, %v166, 0
  %v189 = vsel %vm29, %v167, 0
  %v192 = vsel %vm29, %v168, 0
  %194 = vmatprep.subr.bf16.mxu0 0
  %195 = vmatpush1.bf16.msra.mxu0 0
  %196 = vmatprep.subr.bf16.mxu0 0
  %197 = vmatpush1.bf16.msra.mxu0 0
  %198 = vmatprep.subr.bf16.mxu0 0
  %199 = vmatpush1.bf16.msra.mxu0 0
  %200 = vmatprep.subr.bf16.mxu0 0
  %201 = vmatpush1.bf16.msra.mxu0 0
  %202 = vmatprep.subr.bf16.mxu0 0
  %203 = vmatpush1.bf16.msra.mxu0 0
  %204 = vmatprep.subr.bf16.mxu0 0
  %205 = vmatpush1.bf16.msra.mxu0 0
  %206 = vmatprep.subr.bf16.mxu0 0
  %207 = vmatpush1.bf16.msra.mxu0 %v174
  %208 = vmatprep.subr.bf16.mxu0 0
  %209 = vmatpush1.bf16.msra.mxu0 %v173
  %210 = vmatprep.subr.bf16.mxu0 0
  %211 = vmatpush2.bf16.msra.mxu0 0
  %212 = vmatprep.subr.bf16.mxu0 0
  %213 = vmatpush2.bf16.msra.mxu0 0
  %214 = vmatprep.subr.bf16.mxu0 0
  %215 = vmatpush2.bf16.msra.mxu0 0
  %216 = vmatprep.subr.bf16.mxu0 0
  %217 = vmatpush2.bf16.msra.mxu0 0
  %218 = vmatprep.subr.bf16.mxu0 0
  %219 = vmatpush2.bf16.msra.mxu0 0
  %220 = vmatprep.subr.bf16.mxu0 0
  %221 = vmatpush2.bf16.msra.mxu0 0
  %222 = vmatprep.subr.bf16.mxu0 0
  %223 = vmatpush2.bf16.msra.mxu0 0
  %224 = vmatprep.subr.bf16.mxu0 0
  %225 = vmatpush2.bf16.msra.mxu0 0
  %226 = vmatprep.mubr.bf16.mxu0 0
  %227 = vmatmul.mubr.bf16.gmra.mxu0 %v183
  %v228 = vpop.f32.mrf.mxu0
  %v229 = vadd.f32 %v180, %v228
  %v230 = vpop.f32.mrf.mxu0
  %v231 = vpop.f32.mrf.mxu0
  %v232 = vadd.f32 %v180, %v231
  %v233 = vpop.f32.mrf.mxu0
  %234 = vmatprep.mubr.bf16.mxu0 0
  %235 = vmatmul.mubr.bf16.gmra.mxu0 %v186
  %v236 = vpop.f32.mrf.mxu0
  %v237 = vadd.f32 %v180, %v236
  %v238 = vpop.f32.mrf.mxu0
  %v239 = vpop.f32.mrf.mxu0
  %v240 = vadd.f32 %v180, %v239
  %v241 = vpop.f32.mrf.mxu0
  %242 = vmatprep.mubr.bf16.mxu0 0
  %243 = vmatmul.mubr.bf16.gmra.mxu0 %v189
  %v244 = vpop.f32.mrf.mxu0
  %v245 = vadd.f32 %v180, %v244
  %v246 = vpop.f32.mrf.mxu0
  %v247 = vpop.f32.mrf.mxu0
  %v248 = vadd.f32 %v180, %v247
  %v249 = vpop.f32.mrf.mxu0
  %250 = vmatprep.mubr.bf16.mxu0 0
  %251 = vmatmul.mubr.bf16.gmra.mxu0 %v192
  %v252 = vpop.f32.mrf.mxu0
  %v253 = vadd.f32 %v180, %v252
  %v254 = vpop.f32.mrf.mxu0
  %v255 = vpop.f32.mrf.mxu0
  %v256 = vadd.f32 %v180, %v255
  %v257 = vpop.f32.mrf.mxu0
  %258 = vdwg.mxu0
  %v259 = vtanh.pop %v229
  %v260 = vtanh.pop %v232
  %v261 = vtanh.pop %v237
  %v262 = vtanh.pop %v240
  %v263 = vtanh.pop %v245
  %v264 = vtanh.pop %v248
  %v265 = vtanh.pop %v253
  %v266 = vtanh.pop %v256
  %vm267 = vcmask 523264
  %268 = vst.msk [vmem:[%s5] sm:$0xff] %vm267, %v259
  %269 = vst.msk [vmem:[%s5 + $0x8] sm:$0xff] %vm267, %v260
  %270 = vst.msk [vmem:[%s5 + $0x10] sm:$0xff] %vm267, %v261
  %271 = vst.msk [vmem:[%s5 + $0x18] sm:$0xff] %vm267, %v262
  %272 = vst.msk [vmem:[%s5 + $0x20] sm:$0xff] %vm267, %v263
  %273 = vst.msk [vmem:[%s5 + $0x28] sm:$0xff] %vm267, %v264
  %274 = vst.msk [vmem:[%s5 + $0x30] sm:$0xff] %vm267, %v265
  %275 = vst.msk [vmem:[%s5 + $0x38] sm:$0xff] %vm267, %v266
  // Predicated region
  $region22: #{_lambda_.85} parent=0 // pred_check
    _
  $region23: #{_lambda_.85} parent=0 // pred_check_branch
    %277 = sbr.rel (0) target = $region25
  $region24: #{_lambda_.85} parent=0 // pred_region
    _
  $region25: #{_lambda_.85} parent=0 // pred_fallthru
    _
  // Predicated region
  $region26: #{_lambda_.85} parent=0 // pred_check
    _
  $region27: #{_lambda_.85} parent=0 // pred_check_branch
    %279 = sbr.rel (0) target = $region29
  $region28: #{_lambda_.85} parent=0 // pred_region
    _
  $region29: #{_lambda_.85} parent=0 // pred_fallthru
    _

// kernel: _lambda_.63
$region0: #{_lambda_.63}
  #allocation0 [shape = 'u32[]', space=smem, size = 0x4, offset = 0x4, fixed_abs, tag = 'smem constant byte address 0x4 - core index']
  #allocation1 [shape = 'u32[144,128]{1,0:T(1,128)}', space=vmem, size = 0x12000, scoped, tag = 'internal scratch']
  %s0 = inlined_call_operand.vmem [shape: f32[64,32], index: 0, kind: input, shape index: {}]
  %s1 = inlined_call_operand.vmem [shape: f32[64,32], index: 1, kind: input, shape index: {}]
  %s2 = inlined_call_operand.vmem [shape: f32[32,2], index: 2, kind: input, shape index: {}]
  %s3 = inlined_call_operand.vmem [shape: f32[32,2], index: 3, kind: input, shape index: {}]
  %s4 = inlined_call_operand.vmem [shape: f32[1,2], index: 4, kind: input, shape index: {}]
  %s5 = inlined_call_operand.vmem [shape: f32[64,32], index: 5, kind: output, shape index: {}]
  %s6 = sld [smem:[#allocation0]]
  $region30: #{_lambda_.63} parent=0
    _
  %s8 = ssub.s32 1, %s6
  %s9 = scalar_select 0, %s8, %s6
  // Predicated region
  $region2: #{_lambda_.63} parent=0 // pred_check
    _
  $region3: #{_lambda_.63} parent=0 // pred_check_branch
    %11 = sbr.rel (0) target = $region5
  $region4: #{_lambda_.63} parent=0 // pred_region
    _
  $region5: #{_lambda_.63} parent=0 // pred_fallthru
    _
  // Predicated region
  $region6: #{_lambda_.63} parent=0 // pred_check
    _
  $region7: #{_lambda_.63} parent=0 // pred_check_branch
    %13 = sbr.rel (0) target = $region9
  $region8: #{_lambda_.63} parent=0 // pred_region
    _
  $region9: #{_lambda_.63} parent=0 // pred_fallthru
    _
  // Predicated region
  $region10: #{_lambda_.63} parent=0 // pred_check
    _
  $region11: #{_lambda_.63} parent=0 // pred_check_branch
    %15 = sbr.rel (0) target = $region13
  $region12: #{_lambda_.63} parent=0 // pred_region
    _
  $region13: #{_lambda_.63} parent=0 // pred_fallthru
    _
  // Predicated region
  $region14: #{_lambda_.63} parent=0 // pred_check
    _
  $region15: #{_lambda_.63} parent=0 // pred_check_branch
    %17 = sbr.rel (0) target = $region17
  $region16: #{_lambda_.63} parent=0 // pred_region
    _
  $region17: #{_lambda_.63} parent=0 // pred_fallthru
    _
  // Predicated region
  $region18: #{_lambda_.63} parent=0 // pred_check
    _
  $region19: #{_lambda_.63} parent=0 // pred_check_branch
    %19 = sbr.rel (0) target = $region21
  $region20: #{_lambda_.63} parent=0 // pred_region
    _
  $region21: #{_lambda_.63} parent=0 // pred_fallthru
    _
  %v21 = vld [vmem:[%s0] sm:$0xff]
  %v22 = vld [vmem:[%s0 + $0x8] sm:$0xff]
  %v23 = vld [vmem:[%s0 + $0x10] sm:$0xff]
  %v24 = vld [vmem:[%s0 + $0x18] sm:$0xff]
  %v25 = vld [vmem:[%s0 + $0x20] sm:$0xff]
  %v26 = vld [vmem:[%s0 + $0x28] sm:$0xff]
  %v27 = vld [vmem:[%s0 + $0x30] sm:$0xff]
  %v28 = vld [vmem:[%s0 + $0x38] sm:$0xff]
  %v29 = vld [vmem:[%s1] sm:$0xff]
  %v30 = vld [vmem:[%s1 + $0x8] sm:$0xff]
  %v31 = vld [vmem:[%s1 + $0x10] sm:$0xff]
  %v32 = vld [vmem:[%s1 + $0x18] sm:$0xff]
  %v33 = vld [vmem:[%s1 + $0x20] sm:$0xff]
  %v34 = vld [vmem:[%s1 + $0x28] sm:$0xff]
  %v35 = vld [vmem:[%s1 + $0x30] sm:$0xff]
  %v36 = vld [vmem:[%s1 + $0x38] sm:$0xff]
  %v37 = vpack.c.bf16 %v22, %v21
  %v38 = vpack.c.bf16 %v24, %v23
  %v39 = vpack.c.bf16 %v26, %v25
  %v40 = vpack.c.bf16 %v28, %v27
  %v41 = vld [vmem:[%s2] sm:$0xff]
  %v42 = vld [vmem:[%s2 + $0x8] sm:$0xff]
  %v43 = vld [vmem:[%s2 + $0x10] sm:$0xff]
  %v44 = vld [vmem:[%s2 + $0x18] sm:$0xff]
  %v45 = vpack.c.bf16 %v42, %v41
  %v46 = vpack.c.bf16 %v44, %v43
  %v47 = vpack.c.bf16 %v30, %v29
  %v48 = vpack.c.bf16 %v32, %v31
  %v49 = vpack.c.bf16 %v34, %v33
  %v50 = vpack.c.bf16 %v36, %v35
  %v51 = vld [vmem:[%s3] sm:$0xff]
  %v52 = vld [vmem:[%s3 + $0x8] sm:$0xff]
  %v53 = vld [vmem:[%s3 + $0x10] sm:$0xff]
  %v54 = vld [vmem:[%s3 + $0x18] sm:$0xff]
  %v55 = vpack.c.bf16 %v52, %v51
  %v56 = vpack.c.bf16 %v54, %v53
  %vm57 = vcmask 261120
  %v59 = vsel %vm57, %v47, 0
  %v62 = vsel %vm57, %v48, 0
  %v65 = vsel %vm57, %v49, 0
  %v68 = vsel %vm57, %v50, 0
  %70 = vmatprep.subr.bf16.mxu0 0
  %71 = vmatpush1.bf16.msra.mxu0 0
  %72 = vmatprep.subr.bf16.mxu0 0
  %73 = vmatpush1.bf16.msra.mxu0 0
  %74 = vmatprep.subr.bf16.mxu0 0
  %75 = vmatpush1.bf16.msra.mxu0 0
  %76 = vmatprep.subr.bf16.mxu0 0
  %77 = vmatpush1.bf16.msra.mxu0 0
  %78 = vmatprep.subr.bf16.mxu0 0
  %79 = vmatpush1.bf16.msra.mxu0 0
  %80 = vmatprep.subr.bf16.mxu0 0
  %81 = vmatpush1.bf16.msra.mxu0 0
  %82 = vmatprep.subr.bf16.mxu0 0
  %83 = vmatpush1.bf16.msra.mxu0 %v56
  %84 = vmatprep.subr.bf16.mxu0 0
  %85 = vmatpush1.bf16.msra.mxu0 %v55
  %86 = vmatprep.subr.bf16.mxu0 0
  %87 = vmatpush2.bf16.msra.mxu0 0
  %88 = vmatprep.subr.bf16.mxu0 0
  %89 = vmatpush2.bf16.msra.mxu0 0
  %90 = vmatprep.subr.bf16.mxu0 0
  %91 = vmatpush2.bf16.msra.mxu0 0
  %92 = vmatprep.subr.bf16.mxu0 0
  %93 = vmatpush2.bf16.msra.mxu0 0
  %94 = vmatprep.subr.bf16.mxu0 0
  %95 = vmatpush2.bf16.msra.mxu0 0
  %96 = vmatprep.subr.bf16.mxu0 0
  %97 = vmatpush2.bf16.msra.mxu0 0
  %98 = vmatprep.subr.bf16.mxu0 0
  %99 = vmatpush2.bf16.msra.mxu0 0
  %100 = vmatprep.subr.bf16.mxu0 0
  %101 = vmatpush2.bf16.msra.mxu0 0
  %102 = vmatprep.mubr.bf16.mxu0 0
  %103 = vmatmul.mubr.bf16.gmra.mxu0 %v59
  %v104 = vpop.f32.mrf.mxu0
  %v105 = vadd.f32 0.0, %v104
  %v106 = vpop.f32.mrf.mxu0
  %v107 = vpop.f32.mrf.mxu0
  %v108 = vadd.f32 0.0, %v107
  %v109 = vpop.f32.mrf.mxu0
  %110 = vmatprep.mubr.bf16.mxu0 0
  %111 = vmatmul.mubr.bf16.gmra.mxu0 %v62
  %v112 = vpop.f32.mrf.mxu0
  %v113 = vadd.f32 0.0, %v112
  %v114 = vpop.f32.mrf.mxu0
  %v115 = vpop.f32.mrf.mxu0
  %v116 = vadd.f32 0.0, %v115
  %v117 = vpop.f32.mrf.mxu0
  %118 = vmatprep.mubr.bf16.mxu0 0
  %119 = vmatmul.mubr.bf16.gmra.mxu0 %v65
  %v120 = vpop.f32.mrf.mxu0
  %v121 = vadd.f32 0.0, %v120
  %v122 = vpop.f32.mrf.mxu0
  %v123 = vpop.f32.mrf.mxu0
  %v124 = vadd.f32 0.0, %v123
  %v125 = vpop.f32.mrf.mxu0
  %126 = vmatprep.mubr.bf16.mxu0 0
  %127 = vmatmul.mubr.bf16.gmra.mxu0 %v68
  %v128 = vpop.f32.mrf.mxu0
  %v129 = vadd.f32 0.0, %v128
  %v130 = vpop.f32.mrf.mxu0
  %v131 = vpop.f32.mrf.mxu0
  %v132 = vadd.f32 0.0, %v131
  %v133 = vpop.f32.mrf.mxu0
  %134 = vdwg.mxu0
  %v136 = vsel %vm57, %v37, 0
  %v139 = vsel %vm57, %v38, 0
  %v142 = vsel %vm57, %v39, 0
  %v145 = vsel %vm57, %v40, 0
  %147 = vmatprep.subr.bf16.mxu0 0
  %148 = vmatpush1.bf16.msra.mxu0 0
  %149 = vmatprep.subr.bf16.mxu0 0
  %150 = vmatpush1.bf16.msra.mxu0 0
  %151 = vmatprep.subr.bf16.mxu0 0
  %152 = vmatpush1.bf16.msra.mxu0 0
  %153 = vmatprep.subr.bf16.mxu0 0
  %154 = vmatpush1.bf16.msra.mxu0 0
  %155 = vmatprep.subr.bf16.mxu0 0
  %156 = vmatpush1.bf16.msra.mxu0 0
  %157 = vmatprep.subr.bf16.mxu0 0
  %158 = vmatpush1.bf16.msra.mxu0 0
  %159 = vmatprep.subr.bf16.mxu0 0
  %160 = vmatpush1.bf16.msra.mxu0 %v46
  %161 = vmatprep.subr.bf16.mxu0 0
  %162 = vmatpush1.bf16.msra.mxu0 %v45
  %163 = vmatprep.subr.bf16.mxu0 0
  %164 = vmatpush2.bf16.msra.mxu0 0
  %165 = vmatprep.subr.bf16.mxu0 0
  %166 = vmatpush2.bf16.msra.mxu0 0
  %167 = vmatprep.subr.bf16.mxu0 0
  %168 = vmatpush2.bf16.msra.mxu0 0
  %169 = vmatprep.subr.bf16.mxu0 0
  %170 = vmatpush2.bf16.msra.mxu0 0
  %171 = vmatprep.subr.bf16.mxu0 0
  %172 = vmatpush2.bf16.msra.mxu0 0
  %173 = vmatprep.subr.bf16.mxu0 0
  %174 = vmatpush2.bf16.msra.mxu0 0
  %175 = vmatprep.subr.bf16.mxu0 0
  %176 = vmatpush2.bf16.msra.mxu0 0
  %177 = vmatprep.subr.bf16.mxu0 0
  %178 = vmatpush2.bf16.msra.mxu0 0
  %179 = vmatprep.mubr.bf16.mxu0 0
  %180 = vmatmul.mubr.bf16.gmra.mxu0 %v136
  %v181 = vpop.f32.mrf.mxu0
  %v182 = vadd.f32 %v105, %v181
  %v183 = vpop.f32.mrf.mxu0
  %v184 = vpop.f32.mrf.mxu0
  %v185 = vadd.f32 %v108, %v184
  %v186 = vpop.f32.mrf.mxu0
  %187 = vmatprep.mubr.bf16.mxu0 0
  %188 = vmatmul.mubr.bf16.gmra.mxu0 %v139
  %v189 = vpop.f32.mrf.mxu0
  %v190 = vadd.f32 %v113, %v189
  %v191 = vpop.f32.mrf.mxu0
  %v192 = vpop.f32.mrf.mxu0
  %v193 = vadd.f32 %v116, %v192
  %v194 = vpop.f32.mrf.mxu0
  %195 = vmatprep.mubr.bf16.mxu0 0
  %196 = vmatmul.mubr.bf16.gmra.mxu0 %v142
  %v197 = vpop.f32.mrf.mxu0
  %v198 = vadd.f32 %v121, %v197
  %v199 = vpop.f32.mrf.mxu0
  %v200 = vpop.f32.mrf.mxu0
  %v201 = vadd.f32 %v124, %v200
  %v202 = vpop.f32.mrf.mxu0
  %203 = vmatprep.mubr.bf16.mxu0 0
  %204 = vmatmul.mubr.bf16.gmra.mxu0 %v145
  %v205 = vpop.f32.mrf.mxu0
  %v206 = vadd.f32 %v129, %v205
  %v207 = vpop.f32.mrf.mxu0
  %v208 = vpop.f32.mrf.mxu0
  %v209 = vadd.f32 %v132, %v208
  %v210 = vpop.f32.mrf.mxu0
  %211 = vdwg.mxu0
  %v212 = vld [vmem:[%s4] sm:$0x1]
  %v214 = vlaneseq
  %v215 = vshrl.u32 %v214, 7
  %v216 = vsub.s32 0, %v215
  %v217 = vrot.slane %v212, %v216
  %v219 = vadd.f32 %v182, %v217
  %v220 = vadd.f32 %v185, %v217
  %v221 = vadd.f32 %v190, %v217
  %v222 = vadd.f32 %v193, %v217
  %v223 = vadd.f32 %v198, %v217
  %v224 = vadd.f32 %v201, %v217
  %v225 = vadd.f32 %v206, %v217
  %v226 = vadd.f32 %v209, %v217
  %235 = vrot.lane.b32.xlu0 %v219, 127
  %v236 = vpop.permute.xlu0 %235
  %237 = vrot.lane.b32.xlu0 %v220, 127
  %v238 = vpop.permute.xlu0 %237
  %239 = vrot.lane.b32.xlu0 %v221, 127
  %v240 = vpop.permute.xlu0 %239
  %241 = vrot.lane.b32.xlu0 %v222, 127
  %v242 = vpop.permute.xlu0 %241
  %243 = vrot.lane.b32.xlu0 %v223, 127
  %v244 = vpop.permute.xlu0 %243
  %245 = vrot.lane.b32.xlu0 %v224, 127
  %v246 = vpop.permute.xlu0 %245
  %247 = vrot.lane.b32.xlu0 %v225, 127
  %v248 = vpop.permute.xlu0 %247
  %249 = vrot.lane.b32.xlu0 %v226, 127
  %v250 = vpop.permute.xlu0 %249
  %v259 = vmax.f32 %v219, %v236
  %v260 = vmax.f32 %v220, %v238
  %v261 = vmax.f32 %v221, %v240
  %v262 = vmax.f32 %v222, %v242
  %v263 = vmax.f32 %v223, %v244
  %v264 = vmax.f32 %v224, %v246
  %v265 = vmax.f32 %v225, %v248
  %v266 = vmax.f32 %v226, %v250
  %v267 = vsub.f32 %v219, %v259
  %v268 = vsub.f32 %v220, %v260
  %v269 = vsub.f32 %v221, %v261
  %v270 = vsub.f32 %v222, %v262
  %v271 = vsub.f32 %v223, %v263
  %v272 = vsub.f32 %v224, %v264
  %v273 = vsub.f32 %v225, %v265
  %v274 = vsub.f32 %v226, %v266
  %v275 = vmul.f32 %v267, 1.442695
  %v276 = vpow.pop %v275
  %v277 = vmul.f32 %v268, 1.442695
  %v278 = vpow.pop %v277
  %v279 = vmul.f32 %v269, 1.442695
  %v280 = vpow.pop %v279
  %v281 = vmul.f32 %v270, 1.442695
  %v282 = vpow.pop %v281
  %v283 = vmul.f32 %v271, 1.442695
  %v284 = vpow.pop %v283
  %v285 = vmul.f32 %v272, 1.442695
  %v286 = vpow.pop %v285
  %v287 = vmul.f32 %v273, 1.442695
  %v288 = vpow.pop %v287
  %v289 = vmul.f32 %v274, 1.442695
  %v290 = vpow.pop %v289
  %299 = vrot.lane.b32.xlu0 %v259, 1
  %v300 = vpop.permute.xlu0 %299
  %301 = vrot.lane.b32.xlu0 %v260, 1
  %v302 = vpop.permute.xlu0 %301
  %303 = vrot.lane.b32.xlu0 %v261, 1
  %v304 = vpop.permute.xlu0 %303
  %305 = vrot.lane.b32.xlu0 %v262, 1
  %v306 = vpop.permute.xlu0 %305
  %307 = vrot.lane.b32.xlu0 %v263, 1
  %v308 = vpop.permute.xlu0 %307
  %309 = vrot.lane.b32.xlu0 %v264, 1
  %v310 = vpop.permute.xlu0 %309
  %311 = vrot.lane.b32.xlu0 %v265, 1
  %v312 = vpop.permute.xlu0 %311
  %313 = vrot.lane.b32.xlu0 %v266, 1
  %v314 = vpop.permute.xlu0 %313
  %v323 = vsub.f32 %v219, %v300
  %v324 = vsub.f32 %v220, %v302
  %v325 = vsub.f32 %v221, %v304
  %v326 = vsub.f32 %v222, %v306
  %v327 = vsub.f32 %v223, %v308
  %v328 = vsub.f32 %v224, %v310
  %v329 = vsub.f32 %v225, %v312
  %v330 = vsub.f32 %v226, %v314
  %v331 = vmul.f32 %v323, 1.442695
  %v332 = vpow.pop %v331
  %v333 = vmul.f32 %v324, 1.442695
  %v334 = vpow.pop %v333
  %v335 = vmul.f32 %v325, 1.442695
  %v336 = vpow.pop %v335
  %v337 = vmul.f32 %v326, 1.442695
  %v338 = vpow.pop %v337
  %v339 = vmul.f32 %v327, 1.442695
  %v340 = vpow.pop %v339
  %v341 = vmul.f32 %v328, 1.442695
  %v342 = vpow.pop %v341
  %v343 = vmul.f32 %v329, 1.442695
  %v344 = vpow.pop %v343
  %v345 = vmul.f32 %v330, 1.442695
  %v346 = vpow.pop %v345
  %355 = vrot.lane.b32.xlu0 %v332, 127
  %v356 = vpop.permute.xlu0 %355
  %357 = vrot.lane.b32.xlu0 %v334, 127
  %v358 = vpop.permute.xlu0 %357
  %359 = vrot.lane.b32.xlu0 %v336, 127
  %v360 = vpop.permute.xlu0 %359
  %361 = vrot.lane.b32.xlu0 %v338, 127
  %v362 = vpop.permute.xlu0 %361
  %363 = vrot.lane.b32.xlu0 %v340, 127
  %v364 = vpop.permute.xlu0 %363
  %365 = vrot.lane.b32.xlu0 %v342, 127
  %v366 = vpop.permute.xlu0 %365
  %367 = vrot.lane.b32.xlu0 %v344, 127
  %v368 = vpop.permute.xlu0 %367
  %369 = vrot.lane.b32.xlu0 %v346, 127
  %v370 = vpop.permute.xlu0 %369
  %v379 = vadd.f32 %v276, %v356
  %v380 = vadd.f32 %v278, %v358
  %v381 = vadd.f32 %v280, %v360
  %v382 = vadd.f32 %v282, %v362
  %v383 = vadd.f32 %v284, %v364
  %v384 = vadd.f32 %v286, %v366
  %v385 = vadd.f32 %v288, %v368
  %v386 = vadd.f32 %v290, %v370
  %v387 = vrcp.pop %v379
  %v388 = vmul.f32 1.0, %v387
  %v389 = vrcp.pop %v380
  %v390 = vmul.f32 1.0, %v389
  %v391 = vrcp.pop %v381
  %v392 = vmul.f32 1.0, %v391
  %v393 = vrcp.pop %v382
  %v394 = vmul.f32 1.0, %v393
  %v395 = vrcp.pop %v383
  %v396 = vmul.f32 1.0, %v395
  %v397 = vrcp.pop %v384
  %v398 = vmul.f32 1.0, %v397
  %v399 = vrcp.pop %v385
  %v400 = vmul.f32 1.0, %v399
  %v401 = vrcp.pop %v386
  %v402 = vmul.f32 1.0, %v401
  %v403 = vmul.f32 %v276, %v388
  %v404 = vmul.f32 %v278, %v390
  %v405 = vmul.f32 %v280, %v392
  %v406 = vmul.f32 %v282, %v394
  %v407 = vmul.f32 %v284, %v396
  %v408 = vmul.f32 %v286, %v398
  %v409 = vmul.f32 %v288, %v400
  %v410 = vmul.f32 %v290, %v402
  %412 = vset.pattern.permute.xlu0 0
  %413 = vperm.xlu0 %412, %v403
  %v414 = vpop.permute.xlu0 %413
  %417 = vset.pattern.permute.xlu0 0
  %418 = vperm.xlu0 %417, %v404
  %v419 = vpop.permute.xlu0 %418
  %422 = vset.pattern.permute.xlu0 0
  %423 = vperm.xlu0 %422, %v405
  %v424 = vpop.permute.xlu0 %423
  %427 = vset.pattern.permute.xlu0 0
  %428 = vperm.xlu0 %427, %v406
  %v429 = vpop.permute.xlu0 %428
  %432 = vset.pattern.permute.xlu0 0
  %433 = vperm.xlu0 %432, %v407
  %v434 = vpop.permute.xlu0 %433
  %437 = vset.pattern.permute.xlu0 0
  %438 = vperm.xlu0 %437, %v408
  %v439 = vpop.permute.xlu0 %438
  %442 = vset.pattern.permute.xlu0 0
  %443 = vperm.xlu0 %442, %v409
  %v444 = vpop.permute.xlu0 %443
  %447 = vset.pattern.permute.xlu0 0
  %448 = vperm.xlu0 %447, %v410
  %v449 = vpop.permute.xlu0 %448
  %v451 = vmul.f32 %v21, %v414
  %v452 = vmul.f32 %v22, %v419
  %v453 = vmul.f32 %v23, %v424
  %v454 = vmul.f32 %v24, %v429
  %v455 = vmul.f32 %v25, %v434
  %v456 = vmul.f32 %v26, %v439
  %v457 = vmul.f32 %v27, %v444
  %v458 = vmul.f32 %v28, %v449
  %467 = vrot.lane.b32.xlu0 %v388, 1
  %v468 = vpop.permute.xlu0 %467
  %469 = vrot.lane.b32.xlu0 %v390, 1
  %v470 = vpop.permute.xlu0 %469
  %471 = vrot.lane.b32.xlu0 %v392, 1
  %v472 = vpop.permute.xlu0 %471
  %473 = vrot.lane.b32.xlu0 %v394, 1
  %v474 = vpop.permute.xlu0 %473
  %475 = vrot.lane.b32.xlu0 %v396, 1
  %v476 = vpop.permute.xlu0 %475
  %477 = vrot.lane.b32.xlu0 %v398, 1
  %v478 = vpop.permute.xlu0 %477
  %479 = vrot.lane.b32.xlu0 %v400, 1
  %v480 = vpop.permute.xlu0 %479
  %481 = vrot.lane.b32.xlu0 %v402, 1
  %v482 = vpop.permute.xlu0 %481
  %v491 = vmul.f32 %v332, %v468
  %v492 = vmul.f32 %v334, %v470
  %v493 = vmul.f32 %v336, %v472
  %v494 = vmul.f32 %v338, %v474
  %v495 = vmul.f32 %v340, %v476
  %v496 = vmul.f32 %v342, %v478
  %v497 = vmul.f32 %v344, %v480
  %v498 = vmul.f32 %v346, %v482
  %500 = vset.pattern.permute.xlu0 1
  %501 = vperm.xlu0 %500, %v491
  %v502 = vpop.permute.xlu0 %501
  %505 = vset.pattern.permute.xlu0 1
  %506 = vperm.xlu0 %505, %v492
  %v507 = vpop.permute.xlu0 %506
  %510 = vset.pattern.permute.xlu0 1
  %511 = vperm.xlu0 %510, %v493
  %v512 = vpop.permute.xlu0 %511
  %515 = vset.pattern.permute.xlu0 1
  %516 = vperm.xlu0 %515, %v494
  %v517 = vpop.permute.xlu0 %516
  %520 = vset.pattern.permute.xlu0 1
  %521 = vperm.xlu0 %520, %v495
  %v522 = vpop.permute.xlu0 %521
  %525 = vset.pattern.permute.xlu0 1
  %526 = vperm.xlu0 %525, %v496
  %v527 = vpop.permute.xlu0 %526
  %530 = vset.pattern.permute.xlu0 1
  %531 = vperm.xlu0 %530, %v497
  %v532 = vpop.permute.xlu0 %531
  %535 = vset.pattern.permute.xlu0 1
  %536 = vperm.xlu0 %535, %v498
  %v537 = vpop.permute.xlu0 %536
  %v539 = vmul.f32 %v29, %v502
  %v540 = vmul.f32 %v30, %v507
  %v541 = vmul.f32 %v31, %v512
  %v542 = vmul.f32 %v32, %v517
  %v543 = vmul.f32 %v33, %v522
  %v544 = vmul.f32 %v34, %v527
  %v545 = vmul.f32 %v35, %v532
  %v546 = vmul.f32 %v36, %v537
  %v547 = vadd.f32 %v451, %v539
  %v548 = vadd.f32 %v452, %v540
  %v549 = vadd.f32 %v453, %v541
  %v550 = vadd.f32 %v454, %v542
  %v551 = vadd.f32 %v455, %v543
  %v552 = vadd.f32 %v456, %v544
  %v553 = vadd.f32 %v457, %v545
  %v554 = vadd.f32 %v458, %v546
  %555 = vst.msk [vmem:[%s5] sm:$0xff] %vm57, %v547
  %556 = vst.msk [vmem:[%s5 + $0x8] sm:$0xff] %vm57, %v548
  %557 = vst.msk [vmem:[%s5 + $0x10] sm:$0xff] %vm57, %v549
  %558 = vst.msk [vmem:[%s5 + $0x18] sm:$0xff] %vm57, %v550
  %559 = vst.msk [vmem:[%s5 + $0x20] sm:$0xff] %vm57, %v551
  %560 = vst.msk [vmem:[%s5 + $0x28] sm:$0xff] %vm57, %v552
  %561 = vst.msk [vmem:[%s5 + $0x30] sm:$0xff] %vm57, %v553
  %562 = vst.msk [vmem:[%s5 + $0x38] sm:$0xff] %vm57, %v554
  // Predicated region
  $region22: #{_lambda_.63} parent=0 // pred_check
    _
  $region23: #{_lambda_.63} parent=0 // pred_check_branch
    %564 = sbr.rel (0) target = $region25
  $region24: #{_lambda_.63} parent=0 // pred_region
    _
  $region25: #{_lambda_.63} parent=0 // pred_fallthru
    _
  // Predicated region
  $region26: #{_lambda_.63} parent=0 // pred_check
    _
  $region27: #{_lambda_.63} parent=0 // pred_check_branch
    %566 = sbr.rel (0) target = $region29
  $region28: #{_lambda_.63} parent=0 // pred_region
    _
  $region29: #{_lambda_.63} parent=0 // pred_fallthru
    _

</llo_original>
